<compile_context>
chip_gen: v7x
topology: tpu7x:2x2x1
jax: 0.10.0
libtpu: 0.0.40
codegen_flags: <defaults>
</compile_context>

<pallas_src>
import math
from functools import partial

import jax
import jax.numpy as jnp
from jax.experimental import pallas as pl
from jax.experimental.pallas import tpu as pltpu


# ---------------------------------------------------------------------------
# Pallas kernel: fused projection (x_scaled, z, lin_scaled) + Gabor activation
# ---------------------------------------------------------------------------
def _swinr_kernel(x_ref, w_ref, g_ref, out_ref, *, k_lin, k_lin2, refine_recip):
    feats = x_ref[...]                                     # (TN, F)  F = tpdim+4

    # Three tiny-K MXU pushes (K = tpdim+4).  Per-channel scales and the
    # linear bias are pre-folded into the weight slabs by the wrapper.
    x_s = jnp.dot(feats, w_ref[0], preferred_element_type=jnp.float32)  # omega*2*e^dil * x
    z = jnp.dot(feats, w_ref[1], preferred_element_type=jnp.float32)    # unscaled z
    lin = jnp.dot(feats, w_ref[2], preferred_element_type=jnp.float32)  # sigma*(W tp + b)

    g = g_ref[...]                                         # (1, TW): -4*sigma^2*e^(2*dil)

    denom = z + (1.0 + 1e-6)
    inv = pl.reciprocal(denom, approx=True)                # EUP vrcp
    if refine_recip:
        # One Newton step (3 VALU ops) keeps ~f32 accuracy near z ~ -1.
        inv = inv * (2.0 - denom * inv)

    freq_phase = x_s * inv + k_lin * lin                   # = omega*(2*dil*x/denom + lin_tp)
    gm = g * ((1.0 - z) * inv)                             # = -4*sigma^2*dil^2*(1-z)/denom
    if k_lin2 == -1.0:                                     # sigma folded into lin slab
        gauss_exp = gm - lin * lin
    elif k_lin2 == 0.0:                                    # sigma == 0
        gauss_exp = gm
    else:
        gauss_exp = gm + k_lin2 * (lin * lin)

    out_ref[...] = (jnp.cos(freq_phase) * jnp.exp(gauss_exp)).astype(out_ref.dtype)


# ---------------------------------------------------------------------------
# Wrapper: plain-JAX parameter folding + pallas_call
# ---------------------------------------------------------------------------
def spherical_gabor_forward(inp, params, *, omega=0.01, sigma=0.1, tpdim=2,
                            tile_n=1024, tile_w=256, out_dtype=jnp.float32,
                            refine_recip=True):
    """inp: (..., tpdim+3) float32. Returns (..., width) in out_dtype."""
    dilate, u, v, w, lin_w, lin_b = (params["dilate"], params["u"], params["v"],
                                     params["w"], params["lin_w"], params["lin_b"])
    width = dilate.shape[-1]
    assert width % 128 == 0, "width must be a multiple of 128 (lane-slab slicing)"
    tile_w = min(tile_w, width)
    assert tile_w % 128 == 0 and width % tile_w == 0

    # --- plain-JAX glue: per-channel rotation, rows 0 and 2 of R ------------
    pi = math.pi
    alpha = 2.0 * pi * u
    beta = jnp.arccos(jnp.clip(2.0 * v - 1.0, -1.0 + 1e-6, 1.0 - 1e-6))
    gamma = 2.0 * pi * w
    ca, cb, cg = jnp.cos(alpha), jnp.cos(beta), jnp.cos(gamma)
    sa, sb, sg = jnp.sin(alpha), jnp.sin(beta), jnp.sin(gamma)
    zeros = jnp.zeros_like(u)
    ones = jnp.ones_like(u)
    Rz_alpha = jnp.stack([jnp.stack([ca, -sa, zeros], 1),
                          jnp.stack([sa, ca, zeros], 1),
                          jnp.stack([zeros, zeros, ones], 1)], 1)   # (Wd,3,3)
    Rx_beta = jnp.stack([jnp.stack([ones, zeros, zeros], 1),
                         jnp.stack([zeros, cb, -sb], 1),
                         jnp.stack([zeros, sb, cb], 1)], 1)
    Rz_gamma = jnp.stack([jnp.stack([cg, -sg, zeros], 1),
                          jnp.stack([sg, cg, zeros], 1),
                          jnp.stack([zeros, zeros, ones], 1)], 1)
    R = jnp.matmul(jnp.matmul(Rz_gamma, Rx_beta), Rz_alpha)          # (Wd,3,3)
    rx = jnp.transpose(R[:, 0, :]).astype(jnp.float32)               # (3, Wd)
    rz = jnp.transpose(R[:, 2, :]).astype(jnp.float32)               # (3, Wd)

    exp_dil = jnp.exp(dilate.reshape(1, width)).astype(jnp.float32)  # (1, Wd)
    x_scale = (2.0 * omega) * exp_dil                                # fold omega+2*e^dil
    g_row = (-4.0 * sigma * sigma) * (exp_dil * exp_dil)             # (1, Wd)

    if sigma != 0.0:
        ls, k_lin, k_lin2 = sigma, omega / sigma, -1.0
    else:
        ls, k_lin, k_lin2 = 1.0, omega, 0.0

    # Packed weight: (3, F, width), slabs = [x_scaled | z | lin_scaled].
    # Feature order in the input rows: [tp (tpdim), xyz (3), ones (1)].
    F = tpdim + 4
    w_packed = jnp.zeros((3, F, width), jnp.float32)
    w_packed = w_packed.at[0, tpdim:tpdim + 3, :].set(rx * x_scale)
    w_packed = w_packed.at[1, tpdim:tpdim + 3, :].set(rz)
    w_packed = w_packed.at[2, :tpdim, :].set(ls * jnp.transpose(lin_w).astype(jnp.float32))
    w_packed = w_packed.at[2, tpdim + 3, :].set(ls * lin_b.astype(jnp.float32))

    # --- flatten batch dims, append ones column, pad rows -------------------
    lead_shape = inp.shape[:-1]
    n = math.prod(lead_shape) if lead_shape else 1
    flat = inp.reshape(n, tpdim + 3).astype(jnp.float32)
    flat = jnp.concatenate([flat, jnp.ones((n, 1), jnp.float32)], axis=-1)  # (n, F)

    tile_n = max(8, min(tile_n, ((n + 7) // 8) * 8))     # avoid over-padding tiny N
    n_blocks = pl.cdiv(n, tile_n)
    n_pad = n_blocks * tile_n
    if n_pad != n:
        flat = jnp.pad(flat, ((0, n_pad - n), (0, 0)))   # zero rows: z=0 -> denom~2, safe
    w_blocks = width // tile_w

    cost = pl.CostEstimate(
        flops=2 * n_pad * F * 3 * width + 12 * n_pad * width,
        transcendentals=3 * n_pad * width,                # cos + exp + recip per element
        bytes_accessed=4 * (n_pad * F + n_pad * width + 3 * F * width + width))

    out = pl.pallas_call(
        partial(_swinr_kernel, k_lin=k_lin, k_lin2=k_lin2, refine_recip=refine_recip),
        out_shape=jax.ShapeDtypeStruct((n_pad, width), out_dtype),
        grid_spec=pltpu.PrefetchScalarGridSpec(
            num_scalar_prefetch=0,
            grid=(n_blocks, w_blocks),
            in_specs=[
                pl.BlockSpec((tile_n, F), lambda i, j: (i, 0)),        # features
                pl.BlockSpec((3, F, tile_w), lambda i, j: (0, 0, j)),  # packed W slabs
                pl.BlockSpec((1, tile_w), lambda i, j: (0, j)),        # g row constant
            ],
            out_specs=pl.BlockSpec((tile_n, tile_w), lambda i, j: (i, j)),
        ),
        compiler_params=pltpu.CompilerParams(
            dimension_semantics=("parallel", "parallel"),
            vmem_limit_bytes=48 * 1024 * 1024),
        cost_estimate=cost,
    )(flat, w_packed, g_row)

    if n_pad != n:
        out = out[:n]
    return out.reshape(*lead_shape, width)


# ---------------------------------------------------------------------------
# Pure-JAX reference (mirrors the PyTorch forward exactly) for validation.
# ---------------------------------------------------------------------------
def spherical_gabor_reference(inp, params, *, omega=0.01, sigma=0.1, tpdim=2):
    pi = math.pi
    u, v, w = params["u"], params["v"], params["w"]
    alpha = 2.0 * pi * u
    beta = jnp.arccos(jnp.clip(2.0 * v - 1.0, -1.0 + 1e-6, 1.0 - 1e-6))
    gamma = 2.0 * pi * w
    ca, cb, cg = jnp.cos(alpha), jnp.cos(beta), jnp.cos(gamma)
    sa, sb, sg = jnp.sin(alpha), jnp.sin(beta), jnp.sin(gamma)
    zeros, ones = jnp.zeros_like(u), jnp.ones_like(u)
    Rz_a = jnp.stack([jnp.stack([ca, -sa, zeros], 1),
                      jnp.stack([sa, ca, zeros], 1),
                      jnp.stack([zeros, zeros, ones], 1)], 1)
    Rx_b = jnp.stack([jnp.stack([ones, zeros, zeros], 1),
                      jnp.stack([zeros, cb, -sb], 1),
                      jnp.stack([zeros, sb, cb], 1)], 1)
    Rz_g = jnp.stack([jnp.stack([cg, -sg, zeros], 1),
                      jnp.stack([sg, cg, zeros], 1),
                      jnp.stack([zeros, zeros, ones], 1)], 1)
    R = jnp.matmul(jnp.matmul(Rz_g, Rx_b), Rz_a)                 # (Wd,3,3)
    points = inp[..., -3:]
    pts = jnp.matmul(R, points[..., None, :, None])              # (...,Wd,3,1)
    pts = jnp.squeeze(pts, -1)
    x, z = pts[..., 0], pts[..., 2]
    dilate = jnp.exp(params["dilate"])
    freq_arg = 2.0 * dilate * x / (1e-6 + 1.0 + z)
    gauss_arg = 4.0 * dilate * dilate * (1.0 - z) / (1e-6 + 1.0 + z)
    tp = inp[..., :-3]
    lin = jnp.matmul(tp, jnp.transpose(params["lin_w"])) + params["lin_b"]
    freq_arg = freq_arg + lin
    gauss_arg = gauss_arg + lin * lin
    return jnp.cos(omega * freq_arg) * jnp.exp(-(sigma * sigma) * gauss_arg)


if __name__ == "__main__":
    # Small shapes consistent with the module: width=256, tpdim=2,
    # input = (batch=2, H=16, W=16, tpdim+3=5).
    width, tpdim = 256, 2
    omega, sigma = 0.01, 0.1

    key = jax.random.PRNGKey(0)
    k_in, k_dil, k_u, k_v, k_w, k_lw, k_lb = jax.random.split(key, 7)

    # deterministic parameter init (mirrors module __init__ shapes/distributions)
    params = {
        "dilate": jax.random.normal(k_dil, (1, width), jnp.float32),      # N(0,1)
        "u": jax.random.uniform(k_u, (width,), jnp.float32),              # U[0,1)
        "v": jax.random.uniform(k_v, (width,), jnp.float32),
        "w": jax.random.uniform(k_w, (width,), jnp.float32),
        "lin_w": jax.random.uniform(k_lw, (width, tpdim), jnp.float32,
                                    -1.0 / math.sqrt(tpdim), 1.0 / math.sqrt(tpdim)),
        "lin_b": jax.random.uniform(k_lb, (width,), jnp.float32,
                                    -1.0 / math.sqrt(tpdim), 1.0 / math.sqrt(tpdim)),
    }

    # input: time/pressure in [0,1), xyz on the unit sphere
    B, H, W = 2, 16, 16
    k_tp, k_pt = jax.random.split(k_in)
    tp_in = jax.random.uniform(k_tp, (B, H, W, tpdim), jnp.float32)
    raw_pts = jax.random.normal(k_pt, (B, H, W, 3), jnp.float32)
    pts_in = raw_pts / jnp.linalg.norm(raw_pts, axis=-1, keepdims=True)
    x_in = jnp.concatenate([tp_in, pts_in], axis=-1)                      # (2,16,16,5)

    # tile_n=256 at this small N=512 keeps the grid >= 2 row blocks (both v7x
    # TCs get work); real WeatherBench grids should use tile_n=1024-2048.
    out = spherical_gabor_forward(x_in, params, omega=omega, sigma=sigma,
                                  tpdim=tpdim, tile_n=256, tile_w=256)
    out = jax.block_until_ready(out)

    ref = spherical_gabor_reference(x_in, params, omega=omega, sigma=sigma,
                                    tpdim=tpdim)
    assert out.shape == (B, H, W, width)
    assert jnp.max(jnp.abs(out - ref)) < 1e-4, "mismatch vs pure-JAX reference"

    print("KERNEL_OK")
</pallas_src>

<mosaic_0001>
module attributes {stable_mosaic.version = 11 : i64} {
  func.func @_swinr_kernel(%arg0: i32, %arg1: i32, %arg2: memref<256x6xf32, #tpu.memory_space<vmem>>, %arg3: memref<3x6x256xf32, #tpu.memory_space<vmem>>, %arg4: memref<1x256xf32, #tpu.memory_space<vmem>>, %arg5: memref<256x256xf32, #tpu.memory_space<vmem>>) attributes {dimension_semantics = [#tpu.dimension_semantics<parallel>, #tpu.dimension_semantics<parallel>], iteration_bounds = array<i64: 2, 1>, scalar_prefetch = 0 : i64, scratch_operands = 0 : i64, tpu.core_type = #tpu.core_type<tc>, window_params = [{transform_indices = @transform_0, window_bounds = array<i64: 256, 6>}, {transform_indices = @transform_1, window_bounds = array<i64: 3, 6, 256>}, {transform_indices = @transform_2, window_bounds = array<i64: 1, 256>}, {transform_indices = @transform_3, window_bounds = array<i64: 256, 256>}]} {
    %c0 = arith.constant 0 : index
    %c0_0 = arith.constant 0 : index
    %0 = vector.load %arg2[%c0, %c0_0] : memref<256x6xf32, #tpu.memory_space<vmem>>, vector<256x6xf32>
    %c0_1 = arith.constant 0 : index
    %c0_2 = arith.constant 0 : index
    %c0_3 = arith.constant 0 : index
    %1 = vector.load %arg3[%c0_1, %c0_2, %c0_3] : memref<3x6x256xf32, #tpu.memory_space<vmem>>, vector<1x6x256xf32>
    %2 = vector.shape_cast %1 : vector<1x6x256xf32> to vector<6x256xf32>
    %cst = arith.constant dense<0.000000e+00> : vector<256x256xf32>
    %3 = tpu.matmul %0, %2, %cst {dimension_numbers = #tpu.dot_dimension_numbers<[1], [0], [0], [1], [0, 0, 1, 1], [], []>} : vector<256x6xf32>, vector<6x256xf32>, vector<256x256xf32> -> vector<256x256xf32>
    %c1 = arith.constant 1 : index
    %c0_4 = arith.constant 0 : index
    %c0_5 = arith.constant 0 : index
    %4 = vector.load %arg3[%c1, %c0_4, %c0_5] : memref<3x6x256xf32, #tpu.memory_space<vmem>>, vector<1x6x256xf32>
    %5 = vector.shape_cast %4 : vector<1x6x256xf32> to vector<6x256xf32>
    %cst_6 = arith.constant dense<0.000000e+00> : vector<256x256xf32>
    %6 = tpu.matmul %0, %5, %cst_6 {dimension_numbers = #tpu.dot_dimension_numbers<[1], [0], [0], [1], [0, 0, 1, 1], [], []>} : vector<256x6xf32>, vector<6x256xf32>, vector<256x256xf32> -> vector<256x256xf32>
    %c2 = arith.constant 2 : index
    %c0_7 = arith.constant 0 : index
    %c0_8 = arith.constant 0 : index
    %7 = vector.load %arg3[%c2, %c0_7, %c0_8] : memref<3x6x256xf32, #tpu.memory_space<vmem>>, vector<1x6x256xf32>
    %8 = vector.shape_cast %7 : vector<1x6x256xf32> to vector<6x256xf32>
    %cst_9 = arith.constant dense<0.000000e+00> : vector<256x256xf32>
    %9 = tpu.matmul %0, %8, %cst_9 {dimension_numbers = #tpu.dot_dimension_numbers<[1], [0], [0], [1], [0, 0, 1, 1], [], []>} : vector<256x6xf32>, vector<6x256xf32>, vector<256x256xf32> -> vector<256x256xf32>
    %c0_10 = arith.constant 0 : index
    %c0_11 = arith.constant 0 : index
    %10 = vector.load %arg4[%c0_10, %c0_11] : memref<1x256xf32, #tpu.memory_space<vmem>>, vector<1x256xf32>
    %cst_12 = arith.constant 1.00000095 : f32
    %11 = vector.broadcast %cst_12 : f32 to vector<256x256xf32>
    %12 = arith.addf %6, %11 : vector<256x256xf32>
    %13 = tpu.reciprocal %12 {approx = true} : vector<256x256xf32> -> vector<256x256xf32>
    %14 = arith.mulf %12, %13 : vector<256x256xf32>
    %cst_13 = arith.constant 2.000000e+00 : f32
    %15 = vector.broadcast %cst_13 : f32 to vector<256x256xf32>
    %16 = arith.subf %15, %14 : vector<256x256xf32>
    %17 = arith.mulf %13, %16 : vector<256x256xf32>
    %18 = arith.mulf %3, %17 : vector<256x256xf32>
    %cst_14 = arith.constant 1.000000e-01 : f32
    %19 = vector.broadcast %cst_14 : f32 to vector<256x256xf32>
    %20 = arith.mulf %19, %9 : vector<256x256xf32>
    %21 = arith.addf %18, %20 : vector<256x256xf32>
    %cst_15 = arith.constant 1.000000e+00 : f32
    %22 = vector.broadcast %cst_15 : f32 to vector<256x256xf32>
    %23 = arith.subf %22, %6 : vector<256x256xf32>
    %24 = arith.mulf %23, %17 : vector<256x256xf32>
    %25 = vector.broadcast %10 : vector<1x256xf32> to vector<256x256xf32>
    %26 = arith.mulf %25, %24 : vector<256x256xf32>
    %27 = arith.mulf %9, %9 : vector<256x256xf32>
    %28 = arith.subf %26, %27 : vector<256x256xf32>
    %29 = math.cos %21 : vector<256x256xf32>
    %30 = math.exp %28 : vector<256x256xf32>
    %31 = arith.mulf %29, %30 : vector<256x256xf32>
    %c0_16 = arith.constant 0 : index
    %c0_17 = arith.constant 0 : index
    %32 = vector.load %arg5[%c0_16, %c0_17] : memref<256x256xf32, #tpu.memory_space<vmem>>, vector<256x256xf32>
    tpu.vector_store %arg5[%c0_16, %c0_17], %31 {strides = array<i32>} : memref<256x256xf32, #tpu.memory_space<vmem>>, vector<256x256xf32>,
    return
  }
  func.func @transform_0(%arg0: i32, %arg1: i32) -> (i32, i32) {
    %c0_i32 = arith.constant 0 : i32
    %c0_i32_0 = arith.constant 0 : i32
    return %arg0, %c0_i32 : i32, i32
  }
  func.func @transform_1(%arg0: i32, %arg1: i32) -> (i32, i32, i32) {
    %c0_i32 = arith.constant 0 : i32
    %c0_i32_0 = arith.constant 0 : i32
    %c0_i32_1 = arith.constant 0 : i32
    return %c0_i32, %c0_i32_0, %arg1 : i32, i32, i32
  }
  func.func @transform_2(%arg0: i32, %arg1: i32) -> (i32, i32) {
    %c0_i32 = arith.constant 0 : i32
    %c0_i32_0 = arith.constant 0 : i32
    return %c0_i32, %arg1 : i32, i32
  }
  func.func @transform_3(%arg0: i32, %arg1: i32) -> (i32, i32) {
    %c0_i32 = arith.constant 0 : i32
    return %arg0, %arg1 : i32, i32
  }
}

</mosaic_0001>

<llo_original>
// kernel: tpu_custom_call.1
$region0: #{tpu_custom_call.1}
  #allocation0 [shape = 'u32[]', space=smem, size = 0x4, offset = 0x4, fixed_abs, tag = 'smem constant byte address 0x4 - core index']
  #allocation1 [shape = 'u32[144,128]{1,0:T(1,128)}', space=vmem, size = 0x12000, scoped, tag = 'internal scratch']
  %s0 = inlined_call_operand.vmem [shape: f32[512,6], index: 0, kind: input, shape index: {}]
  %s1 = inlined_call_operand.vmem [shape: f32[3,6,256], index: 1, kind: input, shape index: {}]
  %s2 = inlined_call_operand.vmem [shape: f32[1,256], index: 2, kind: input, shape index: {}]
  %s3 = inlined_call_operand.hbm [shape: f32[512,256], index: 3, kind: output, shape index: {}]
  %s4 = sld [smem:[#allocation0]]
  $region45: #{tpu_custom_call.1} parent=0
    _
  %s6 = ssub.s32 1, %s4
  %s7 = scalar_select 0, %s6, %s4
  $region1: #{tpu_custom_call.1} parent=0
    #allocation2 [shape = 'u8[524288]{0}', space=vmem, size = 0x80000, scoped, tag = 'output window, operand 0']
    #allocation3 [shape = 's32[2]{0}', space=sflag, size = 0x8, scoped, tag = 'scoped memory for tpu_custom_call.1']
    %8 = vsyncpa [#allocation3], 0
    %s9 = scalar_lea.sflag [#allocation3], 1
    %10 = vsyncpa %s9, 0
    loop: start=0, step=1, limit=4
    $region2: #{tpu_custom_call.1} parent=1 // loop_pre_header
      _
    $region3: #{tpu_custom_call.1} parent=1 // loop_header
      %s12 = sphi 0, %s16
      %p13 = scmp.ge.s32.totalorder %s12, 4
      %s19 = sphi 0, %s31
      %s20 = sphi 0, %s27
      %s21 = sphi 0, %s19
      %s22 = sphi 0, %s20
      %s23 = sphi 0, %s21
      %s24 = sphi 0, %s22
      %s34 = sphi 0, %s36
      %s37 = sphi 0, %s34
      %s38 = sphi 0, %s37
      %s54 = sphi 0, %s38
      %s60 = sphi 0, %s62
      %s63 = sphi 0, %s60
      %s64 = sphi 0, %s63
      %s80 = sphi 0, %s64
      %s86 = sphi 0, %s88
      %s89 = sphi 0, %s86
      %s90 = sphi 0, %s89
      %s106 = sphi 0, %s90
      %s114 = sphi 0, %s116
      %s117 = sphi 0, %s114
      %s118 = sphi 0, %s117
      %s134 = sphi 0, %s118
    $region4: #{tpu_custom_call.1} parent=1 // loop_header_branch
      %15 = sbr.rel (%p13) target = $region8
    $region5: #{tpu_custom_call.1} parent=1 // loop_body
      %s17 = ssub.s32 %s12, 1
      %s18 = ssub.s32 %s12, 2
      %s25 = sadd.s32 1, %s20
      %p26 = scmp.ge.s32.totalorder %s25, 1
      %s27 = scalar_select %p26, 0, %s25
      %s28 = sadd.s32 1, %s19
      %s29 = scalar_select %p26, %s28, %s19
      %p30 = scmp.ge.s32.totalorder %s29, 2
      %s31 = scalar_select %p30, 0, %s29
      %s32 = ssub.s32 %s19, %s31
      %p33 = scmp.eq.s32.totalorder %s32, 0
      %s35 = sadd.s32 %s34, 1
      %s36 = scalar_select %p33, %s34, %s35
      %p39 = pneg %p33
      %p40 = scmp.eq.s32.totalorder %s12, 1
      %p41 = por %p39, %p40
      %p42 = scmp.ne.s32.totalorder %s34, %s37
      %p43 = scmp.eq.s32.totalorder %s12, 0
      %p44 = por %p42, %p43
      %p45 = scmp.ne.s32.totalorder %s34, %s37
      %p46 = scmp.eq.s32.totalorder %s17, 1
      %p47 = por %p45, %p46
      %p48 = scmp.ne.s32.totalorder %s37, %s38
      %p49 = scmp.eq.s32.totalorder %s17, 0
      %p50 = por %p48, %p49
      %p51 = scmp.ne.s32.totalorder %s37, %s38
      %p52 = scmp.eq.s32.totalorder %s18, 1
      %p53 = por %p51, %p52
      %p55 = scmp.ne.s32.totalorder %s38, %s54
      %p56 = scmp.eq.s32.totalorder %s18, 0
      %p57 = por %p55, %p56
      %s58 = ssub.s32 %s20, %s27
      %p59 = scmp.eq.s32.totalorder %s58, 0
      %s61 = sadd.s32 %s60, 1
      %s62 = scalar_select %p59, %s60, %s61
      %p65 = pneg %p59
      %p66 = scmp.eq.s32.totalorder %s12, 1
      %p67 = por %p65, %p66
      %p68 = scmp.ne.s32.totalorder %s60, %s63
      %p69 = scmp.eq.s32.totalorder %s12, 0
      %p70 = por %p68, %p69
      %p71 = scmp.ne.s32.totalorder %s60, %s63
      %p72 = scmp.eq.s32.totalorder %s17, 1
      %p73 = por %p71, %p72
      %p74 = scmp.ne.s32.totalorder %s63, %s64
      %p75 = scmp.eq.s32.totalorder %s17, 0
      %p76 = por %p74, %p75
      %p77 = scmp.ne.s32.totalorder %s63, %s64
      %p78 = scmp.eq.s32.totalorder %s18, 1
      %p79 = por %p77, %p78
      %p81 = scmp.ne.s32.totalorder %s64, %s80
      %p82 = scmp.eq.s32.totalorder %s18, 0
      %p83 = por %p81, %p82
      %s84 = ssub.s32 %s20, %s27
      %p85 = scmp.eq.s32.totalorder %s84, 0
      %s87 = sadd.s32 %s86, 1
      %s88 = scalar_select %p85, %s86, %s87
      %p91 = pneg %p85
      %p92 = scmp.eq.s32.totalorder %s12, 1
      %p93 = por %p91, %p92
      %p94 = scmp.ne.s32.totalorder %s86, %s89
      %p95 = scmp.eq.s32.totalorder %s12, 0
      %p96 = por %p94, %p95
      %p97 = scmp.ne.s32.totalorder %s86, %s89
      %p98 = scmp.eq.s32.totalorder %s17, 1
      %p99 = por %p97, %p98
      %p100 = scmp.ne.s32.totalorder %s89, %s90
      %p101 = scmp.eq.s32.totalorder %s17, 0
      %p102 = por %p100, %p101
      %p103 = scmp.ne.s32.totalorder %s89, %s90
      %p104 = scmp.eq.s32.totalorder %s18, 1
      %p105 = por %p103, %p104
      %p107 = scmp.ne.s32.totalorder %s90, %s106
      %p108 = scmp.eq.s32.totalorder %s18, 0
      %p109 = por %p107, %p108
      %s110 = ssub.s32 %s19, %s31
      %s111 = ssub.s32 %s20, %s27
      %s112 = sor.u32 %s110, %s111
      %p113 = scmp.eq.s32.totalorder %s112, 0
      %s115 = sadd.s32 %s114, 1
      %s116 = scalar_select %p113, %s114, %s115
      %p119 = pneg %p113
      %p120 = scmp.eq.s32.totalorder %s12, 1
      %p121 = por %p119, %p120
      %p122 = scmp.ne.s32.totalorder %s114, %s117
      %p123 = scmp.eq.s32.totalorder %s12, 0
      %p124 = por %p122, %p123
      %p125 = scmp.ne.s32.totalorder %s114, %s117
      %p126 = scmp.eq.s32.totalorder %s17, 1
      %p127 = por %p125, %p126
      %p128 = scmp.ne.s32.totalorder %s117, %s118
      %p129 = scmp.eq.s32.totalorder %s17, 0
      %p130 = por %p128, %p129
      %p131 = scmp.ne.s32.totalorder %s117, %s118
      %p132 = scmp.eq.s32.totalorder %s18, 1
      %p133 = por %p131, %p132
      %p135 = scmp.ne.s32.totalorder %s118, %s134
      %p136 = scmp.eq.s32.totalorder %s18, 0
      %p137 = por %p135, %p136
      %p138 = scmp.le.s32.totalorder 1, %s12
      %p139 = scmp.lt.s32.totalorder %s12, 3
      %p140 = pnand %p138, %p139
      %p141 = pneg %p140
      // Predicated region
      $region9: #{tpu_custom_call.1} parent=5 // pred_check
        _
      $region10: #{tpu_custom_call.1} parent=5 // pred_check_branch
        %143 = sbr.rel (%p140) target = $region12
      $region11: #{tpu_custom_call.1} parent=5 // pred_region
        %s144 = ssub.s32 %s12, 1
        // Predicated region
        $region13: #{tpu_custom_call.1} parent=11 // pred_check
          %p145 = pneg %p76
        $region14: #{tpu_custom_call.1} parent=11 // pred_check_branch
          %147 = sbr.rel (%p145) target = $region16
        $region15: #{tpu_custom_call.1} parent=11 // pred_region
          %s148 = smul.u32 2, %s22
          %p149 = scmp.lt.s32.totalorder %s148, 1
          %s150 = scalar_select %p149, %s148, 1
          %s151 = smul.addr %s150, 8
          %s152 = scalar_lea.vmem %s1, %s151
          %s153 = smul.u32 2, %s22
        $region16: #{tpu_custom_call.1} parent=11 // pred_fallthru
          _
        // Predicated region
        $region17: #{tpu_custom_call.1} parent=11 // pred_check
          %p154 = pneg %p102
        $region18: #{tpu_custom_call.1} parent=11 // pred_check_branch
          %156 = sbr.rel (%p154) target = $region20
        $region19: #{tpu_custom_call.1} parent=11 // pred_region
          %s157 = smul.u32 2, %s22
          %p158 = scmp.lt.s32.totalorder %s157, 1
          %s159 = scalar_select %p158, %s157, 1
          %s160 = scalar_lea.vmem %s2, %s159
          %s161 = smul.u32 2, %s22
        $region20: #{tpu_custom_call.1} parent=11 // pred_fallthru
          _
      $region12: #{tpu_custom_call.1} parent=5 // pred_fallthru
        _
      %p162 = scmp.lt.s32.totalorder %s12, 2
      // Predicated region
      $region21: #{tpu_custom_call.1} parent=5 // pred_check
        %p163 = pneg %p162
      $region22: #{tpu_custom_call.1} parent=5 // pred_check_branch
        %165 = sbr.rel (%p163) target = $region24
      $region23: #{tpu_custom_call.1} parent=5 // pred_region
        // Predicated region
        $region25: #{tpu_custom_call.1} parent=23 // pred_check
          %p166 = pneg %p44
        $region26: #{tpu_custom_call.1} parent=23 // pred_check_branch
          %168 = sbr.rel (%p166) target = $region28
        $region27: #{tpu_custom_call.1} parent=23 // pred_region
          %s169 = smul.u32 32, %s19
          %p170 = scmp.lt.s32.totalorder %s169, 63
          %s171 = scalar_select %p170, %s169, 63
          %s172 = smul.addr %s171, 8
          %s173 = scalar_lea.vmem %s0, %s172
          %s174 = smul.u32 32, %s19
        $region28: #{tpu_custom_call.1} parent=23 // pred_fallthru
          _
      $region24: #{tpu_custom_call.1} parent=5 // pred_fallthru
        _
      %p175 = scmp.le.s32.totalorder 1, %s12
      %p176 = scmp.lt.s32.totalorder %s12, 3
      %p177 = pnand %p175, %p176
      %p178 = pneg %p177
      // Predicated region
      $region29: #{tpu_custom_call.1} parent=5 // pred_check
        _
      $region30: #{tpu_custom_call.1} parent=5 // pred_check_branch
        %180 = sbr.rel (%p177) target = $region32
      $region31: #{tpu_custom_call.1} parent=5 // pred_region
        %s181 = ssub.s32 %s12, 1
        %s182 = smul.u32 32, %s21
        %p183 = scmp.lt.s32.totalorder %s182, 63
        %s184 = scalar_select %p183, %s182, 63
        %s185 = smul.addr %s184, 8
        %s186 = scalar_lea.vmem %s0, %s185
        %p187 = pneg %p50
        %p188 = pneg %p47
        %s189 = smul.u32 2, %s22
        %p190 = scmp.lt.s32.totalorder %s189, 1
        %s191 = scalar_select %p190, %s189, 1
        %s192 = smul.addr %s191, 8
        %s193 = scalar_lea.vmem %s1, %s192
        %p194 = pneg %p76
        %p195 = pneg %p73
        %s196 = smul.u32 2, %s22
        %p197 = scmp.lt.s32.totalorder %s196, 1
        %s198 = scalar_select %p197, %s196, 1
        %s199 = scalar_lea.vmem %s2, %s198
        %p200 = pneg %p102
        %p201 = pneg %p99
        %p202 = pneg %p130
        %p203 = pneg %p127
        %s204 = sand.u32 %s117, 1
        %s205 = scalar_lea.sflag [#allocation3], %s204
        %s206 = sand.u32 %s117, 1
        %s207 = smul.addr %s206, 512
        %s208 = scalar_lea.vmem [#allocation2], %s207
        %s209 = smul.u32 32, %s21
        %p210 = scmp.lt.s32.totalorder %s209, 63
        %s211 = scalar_select %p210, %s209, 63
        %s212 = smul.addr %s211, 8
        %s213 = scalar_lea.vmem %s0, %s212
        %s214 = smul.u32 32, %s21
        %s215 = smul.u32 2, %s22
        %p216 = scmp.lt.s32.totalorder %s215, 1
        %s217 = scalar_select %p216, %s215, 1
        %s218 = smul.addr %s217, 8
        %s219 = scalar_lea.vmem %s1, %s218
        %s220 = smul.u32 2, %s22
        %s221 = smul.u32 2, %s22
        %p222 = scmp.lt.s32.totalorder %s221, 1
        %s223 = scalar_select %p222, %s221, 1
        %s224 = scalar_lea.vmem %s2, %s223
        %s225 = smul.u32 2, %s22
        %s226 = smul.u32 32, %s21
        %s227 = smul.u32 2, %s22
        %v228 = vld [vmem:[%s213] sm:$0xff]
        %v229 = vld [vmem:[%s213 + $0x8] sm:$0xff]
        %v230 = vld [vmem:[%s213 + $0x10] sm:$0xff]
        %v231 = vld [vmem:[%s213 + $0x18] sm:$0xff]
        %v232 = vld [vmem:[%s213 + $0x20] sm:$0xff]
        %v233 = vld [vmem:[%s213 + $0x28] sm:$0xff]
        %v234 = vld [vmem:[%s213 + $0x30] sm:$0xff]
        %v235 = vld [vmem:[%s213 + $0x38] sm:$0xff]
        %v236 = vld [vmem:[%s213 + $0x40] sm:$0xff]
        %v237 = vld [vmem:[%s213 + $0x48] sm:$0xff]
        %v238 = vld [vmem:[%s213 + $0x50] sm:$0xff]
        %v239 = vld [vmem:[%s213 + $0x58] sm:$0xff]
        %v240 = vld [vmem:[%s213 + $0x60] sm:$0xff]
        %v241 = vld [vmem:[%s213 + $0x68] sm:$0xff]
        %v242 = vld [vmem:[%s213 + $0x70] sm:$0xff]
        %v243 = vld [vmem:[%s213 + $0x78] sm:$0xff]
        %v244 = vld [vmem:[%s213 + $0x80] sm:$0xff]
        %v245 = vld [vmem:[%s213 + $0x88] sm:$0xff]
        %v246 = vld [vmem:[%s213 + $0x90] sm:$0xff]
        %v247 = vld [vmem:[%s213 + $0x98] sm:$0xff]
        %v248 = vld [vmem:[%s213 + $0xa0] sm:$0xff]
        %v249 = vld [vmem:[%s213 + $0xa8] sm:$0xff]
        %v250 = vld [vmem:[%s213 + $0xb0] sm:$0xff]
        %v251 = vld [vmem:[%s213 + $0xb8] sm:$0xff]
        %v252 = vld [vmem:[%s213 + $0xc0] sm:$0xff]
        %v253 = vld [vmem:[%s213 + $0xc8] sm:$0xff]
        %v254 = vld [vmem:[%s213 + $0xd0] sm:$0xff]
        %v255 = vld [vmem:[%s213 + $0xd8] sm:$0xff]
        %v256 = vld [vmem:[%s213 + $0xe0] sm:$0xff]
        %v257 = vld [vmem:[%s213 + $0xe8] sm:$0xff]
        %v258 = vld [vmem:[%s213 + $0xf0] sm:$0xff]
        %v259 = vld [vmem:[%s213 + $0xf8] sm:$0xff]
        %v260 = vld [vmem:[%s219] sm:$0x3f]
        %v261 = vld [vmem:[%s219 + $0x8] sm:$0x3f]
        %vm262 = vcmask 48128
        %v264 = vsel %vm262, %v228, 0
        %v267 = vsel %vm262, %v229, 0
        %v270 = vsel %vm262, %v230, 0
        %v273 = vsel %vm262, %v231, 0
        %v276 = vsel %vm262, %v232, 0
        %v279 = vsel %vm262, %v233, 0
        %v282 = vsel %vm262, %v234, 0
        %v285 = vsel %vm262, %v235, 0
        %v288 = vsel %vm262, %v236, 0
        %v291 = vsel %vm262, %v237, 0
        %v294 = vsel %vm262, %v238, 0
        %v297 = vsel %vm262, %v239, 0
        %v300 = vsel %vm262, %v240, 0
        %v303 = vsel %vm262, %v241, 0
        %v306 = vsel %vm262, %v242, 0
        %v309 = vsel %vm262, %v243, 0
        %v312 = vsel %vm262, %v244, 0
        %v315 = vsel %vm262, %v245, 0
        %v318 = vsel %vm262, %v246, 0
        %v321 = vsel %vm262, %v247, 0
        %v324 = vsel %vm262, %v248, 0
        %v327 = vsel %vm262, %v249, 0
        %v330 = vsel %vm262, %v250, 0
        %v333 = vsel %vm262, %v251, 0
        %v336 = vsel %vm262, %v252, 0
        %v339 = vsel %vm262, %v253, 0
        %v342 = vsel %vm262, %v254, 0
        %v345 = vsel %vm262, %v255, 0
        %v348 = vsel %vm262, %v256, 0
        %v351 = vsel %vm262, %v257, 0
        %v354 = vsel %vm262, %v258, 0
        %v357 = vsel %vm262, %v259, 0
        %vm359 = vcmask 1045504
        %v361 = vsel %vm359, %v260, 0
        %v364 = vsel %vm359, %v261, 0
        %366 = vmatprep.subr.mxu0 %v364
        %367 = vmatpush1.msra.mxu0 %v361
        %368 = vmatprep.subr.mxu0 0.0
        %369 = vmatpush1.msra.mxu0 0.0
        %370 = vmatprep.subr.mxu0 0.0
        %371 = vmatpush1.msra.mxu0 0.0
        %372 = vmatprep.subr.mxu0 0.0
        %373 = vmatpush1.msra.mxu0 0.0
        %374 = vmatprep.subr.mxu0 0.0
        %375 = vmatpush1.msra.mxu0 0.0
        %376 = vmatprep.subr.mxu0 0.0
        %377 = vmatpush1.msra.mxu0 0.0
        %378 = vmatprep.subr.mxu0 0.0
        %379 = vmatpush1.msra.mxu0 0.0
        %380 = vmatprep.subr.mxu0 0.0
        %381 = vmatpush1.msra.mxu0 0.0
        %382 = vmatprep.subr.mxu0 0.0
        %383 = vmatpush1.msra.mxu0 0.0
        %384 = vmatprep.subr.mxu0 0.0
        %385 = vmatpush1.msra.mxu0 0.0
        %386 = vmatprep.subr.mxu0 0.0
        %387 = vmatpush1.msra.mxu0 0.0
        %388 = vmatprep.subr.mxu0 0.0
        %389 = vmatpush1.msra.mxu0 0.0
        %390 = vmatprep.subr.mxu0 0.0
        %391 = vmatpush1.msra.mxu0 0.0
        %392 = vmatprep.subr.mxu0 0.0
        %393 = vmatpush1.msra.mxu0 0.0
        %394 = vmatprep.subr.mxu0 0.0
        %395 = vmatpush1.msra.mxu0 0.0
        %396 = vmatprep.subr.mxu0 0.0
        %397 = vmatpush1.msra.mxu0 0.0
        %398 = vmatprep.subr.mxu0 0.0
        %399 = vmatpush1.msra.mxu0 0.0
        %400 = vmatprep.subr.mxu0 0.0
        %401 = vmatpush1.msra.mxu0 0.0
        %402 = vmatprep.subr.mxu0 0.0
        %403 = vmatpush1.msra.mxu0 0.0
        %404 = vmatprep.subr.mxu0 0.0
        %405 = vmatpush1.msra.mxu0 0.0
        %406 = vmatprep.subr.mxu0 0.0
        %407 = vmatpush1.msra.mxu0 0.0
        %408 = vmatprep.subr.mxu0 0.0
        %409 = vmatpush1.msra.mxu0 0.0
        %410 = vmatprep.subr.mxu0 0.0
        %411 = vmatpush1.msra.mxu0 0.0
        %412 = vmatprep.subr.mxu0 0.0
        %413 = vmatpush1.msra.mxu0 0.0
        %414 = vmatprep.subr.mxu0 0.0
        %415 = vmatpush1.msra.mxu0 0.0
        %416 = vmatprep.subr.mxu0 0.0
        %417 = vmatpush1.msra.mxu0 0.0
        %418 = vmatprep.subr.mxu0 0.0
        %419 = vmatpush1.msra.mxu0 0.0
        %420 = vmatprep.subr.mxu0 0.0
        %421 = vmatpush1.msra.mxu0 0.0
        %422 = vmatprep.subr.mxu0 0.0
        %423 = vmatpush1.msra.mxu0 0.0
        %424 = vmatprep.subr.mxu0 0.0
        %425 = vmatpush1.msra.mxu0 0.0
        %426 = vmatprep.subr.mxu0 0.0
        %427 = vmatpush1.msra.mxu0 0.0
        %428 = vmatprep.subr.mxu0 0.0
        %429 = vmatpush1.msra.mxu0 0.0
        %430 = vmatprep.mubr.f32.mxu0 0.0
        %431 = vmatmul.mubr.f32.gmra.mrb[0].mxu0 %v264
        %v432 = vpop.f32.mrb[0].mxu0
        %v433 = vadd.f32 0.0, %v432
        %v434 = vpop.f32.mrb[0].mxu0
        %v435 = vadd.f32 0.0, %v434
        %436 = vmatprep.mubr.f32.mxu0 0.0
        %437 = vmatmul.mubr.f32.gmra.mrb[0].mxu0 %v267
        %v438 = vpop.f32.mrb[0].mxu0
        %v439 = vadd.f32 0.0, %v438
        %v440 = vpop.f32.mrb[0].mxu0
        %v441 = vadd.f32 0.0, %v440
        %442 = vmatprep.mubr.f32.mxu0 0.0
        %443 = vmatmul.mubr.f32.gmra.mrb[0].mxu0 %v270
        %v444 = vpop.f32.mrb[0].mxu0
        %v445 = vadd.f32 0.0, %v444
        %v446 = vpop.f32.mrb[0].mxu0
        %v447 = vadd.f32 0.0, %v446
        %448 = vmatprep.mubr.f32.mxu0 0.0
        %449 = vmatmul.mubr.f32.gmra.mrb[0].mxu0 %v273
        %v450 = vpop.f32.mrb[0].mxu0
        %v451 = vadd.f32 0.0, %v450
        %v452 = vpop.f32.mrb[0].mxu0
        %v453 = vadd.f32 0.0, %v452
        %454 = vmatprep.mubr.f32.mxu0 0.0
        %455 = vmatmul.mubr.f32.gmra.mrb[0].mxu0 %v276
        %v456 = vpop.f32.mrb[0].mxu0
        %v457 = vadd.f32 0.0, %v456
        %v458 = vpop.f32.mrb[0].mxu0
        %v459 = vadd.f32 0.0, %v458
        %460 = vmatprep.mubr.f32.mxu0 0.0
        %461 = vmatmul.mubr.f32.gmra.mrb[0].mxu0 %v279
        %v462 = vpop.f32.mrb[0].mxu0
        %v463 = vadd.f32 0.0, %v462
        %v464 = vpop.f32.mrb[0].mxu0
        %v465 = vadd.f32 0.0, %v464
        %466 = vmatprep.mubr.f32.mxu0 0.0
        %467 = vmatmul.mubr.f32.gmra.mrb[0].mxu0 %v282
        %v468 = vpop.f32.mrb[0].mxu0
        %v469 = vadd.f32 0.0, %v468
        %v470 = vpop.f32.mrb[0].mxu0
        %v471 = vadd.f32 0.0, %v470
        %472 = vmatprep.mubr.f32.mxu0 0.0
        %473 = vmatmul.mubr.f32.gmra.mrb[0].mxu0 %v285
        %v474 = vpop.f32.mrb[0].mxu0
        %v475 = vadd.f32 0.0, %v474
        %v476 = vpop.f32.mrb[0].mxu0
        %v477 = vadd.f32 0.0, %v476
        %478 = vmatprep.mubr.f32.mxu0 0.0
        %479 = vmatmul.mubr.f32.gmra.mrb[0].mxu0 %v288
        %v480 = vpop.f32.mrb[0].mxu0
        %v481 = vadd.f32 0.0, %v480
        %v482 = vpop.f32.mrb[0].mxu0
        %v483 = vadd.f32 0.0, %v482
        %484 = vmatprep.mubr.f32.mxu0 0.0
        %485 = vmatmul.mubr.f32.gmra.mrb[0].mxu0 %v291
        %v486 = vpop.f32.mrb[0].mxu0
        %v487 = vadd.f32 0.0, %v486
        %v488 = vpop.f32.mrb[0].mxu0
        %v489 = vadd.f32 0.0, %v488
        %490 = vmatprep.mubr.f32.mxu0 0.0
        %491 = vmatmul.mubr.f32.gmra.mrb[0].mxu0 %v294
        %v492 = vpop.f32.mrb[0].mxu0
        %v493 = vadd.f32 0.0, %v492
        %v494 = vpop.f32.mrb[0].mxu0
        %v495 = vadd.f32 0.0, %v494
        %496 = vmatprep.mubr.f32.mxu0 0.0
        %497 = vmatmul.mubr.f32.gmra.mrb[0].mxu0 %v297
        %v498 = vpop.f32.mrb[0].mxu0
        %v499 = vadd.f32 0.0, %v498
        %v500 = vpop.f32.mrb[0].mxu0
        %v501 = vadd.f32 0.0, %v500
        %502 = vmatprep.mubr.f32.mxu0 0.0
        %503 = vmatmul.mubr.f32.gmra.mrb[0].mxu0 %v300
        %v504 = vpop.f32.mrb[0].mxu0
        %v505 = vadd.f32 0.0, %v504
        %v506 = vpop.f32.mrb[0].mxu0
        %v507 = vadd.f32 0.0, %v506
        %508 = vmatprep.mubr.f32.mxu0 0.0
        %509 = vmatmul.mubr.f32.gmra.mrb[0].mxu0 %v303
        %v510 = vpop.f32.mrb[0].mxu0
        %v511 = vadd.f32 0.0, %v510
        %v512 = vpop.f32.mrb[0].mxu0
        %v513 = vadd.f32 0.0, %v512
        %514 = vmatprep.mubr.f32.mxu0 0.0
        %515 = vmatmul.mubr.f32.gmra.mrb[0].mxu0 %v306
        %v516 = vpop.f32.mrb[0].mxu0
        %v517 = vadd.f32 0.0, %v516
        %v518 = vpop.f32.mrb[0].mxu0
        %v519 = vadd.f32 0.0, %v518
        %520 = vmatprep.mubr.f32.mxu0 0.0
        %521 = vmatmul.mubr.f32.gmra.mrb[0].mxu0 %v309
        %v522 = vpop.f32.mrb[0].mxu0
        %v523 = vadd.f32 0.0, %v522
        %v524 = vpop.f32.mrb[0].mxu0
        %v525 = vadd.f32 0.0, %v524
        %526 = vmatprep.mubr.f32.mxu0 0.0
        %527 = vmatmul.mubr.f32.gmra.mrb[0].mxu0 %v312
        %v528 = vpop.f32.mrb[0].mxu0
        %v529 = vadd.f32 0.0, %v528
        %v530 = vpop.f32.mrb[0].mxu0
        %v531 = vadd.f32 0.0, %v530
        %532 = vmatprep.mubr.f32.mxu0 0.0
        %533 = vmatmul.mubr.f32.gmra.mrb[0].mxu0 %v315
        %v534 = vpop.f32.mrb[0].mxu0
        %v535 = vadd.f32 0.0, %v534
        %v536 = vpop.f32.mrb[0].mxu0
        %v537 = vadd.f32 0.0, %v536
        %538 = vmatprep.mubr.f32.mxu0 0.0
        %539 = vmatmul.mubr.f32.gmra.mrb[0].mxu0 %v318
        %v540 = vpop.f32.mrb[0].mxu0
        %v541 = vadd.f32 0.0, %v540
        %v542 = vpop.f32.mrb[0].mxu0
        %v543 = vadd.f32 0.0, %v542
        %544 = vmatprep.mubr.f32.mxu0 0.0
        %545 = vmatmul.mubr.f32.gmra.mrb[0].mxu0 %v321
        %v546 = vpop.f32.mrb[0].mxu0
        %v547 = vadd.f32 0.0, %v546
        %v548 = vpop.f32.mrb[0].mxu0
        %v549 = vadd.f32 0.0, %v548
        %550 = vmatprep.mubr.f32.mxu0 0.0
        %551 = vmatmul.mubr.f32.gmra.mrb[0].mxu0 %v324
        %v552 = vpop.f32.mrb[0].mxu0
        %v553 = vadd.f32 0.0, %v552
        %v554 = vpop.f32.mrb[0].mxu0
        %v555 = vadd.f32 0.0, %v554
        %556 = vmatprep.mubr.f32.mxu0 0.0
        %557 = vmatmul.mubr.f32.gmra.mrb[0].mxu0 %v327
        %v558 = vpop.f32.mrb[0].mxu0
        %v559 = vadd.f32 0.0, %v558
        %v560 = vpop.f32.mrb[0].mxu0
        %v561 = vadd.f32 0.0, %v560
        %562 = vmatprep.mubr.f32.mxu0 0.0
        %563 = vmatmul.mubr.f32.gmra.mrb[0].mxu0 %v330
        %v564 = vpop.f32.mrb[0].mxu0
        %v565 = vadd.f32 0.0, %v564
        %v566 = vpop.f32.mrb[0].mxu0
        %v567 = vadd.f32 0.0, %v566
        %568 = vmatprep.mubr.f32.mxu0 0.0
        %569 = vmatmul.mubr.f32.gmra.mrb[0].mxu0 %v333
        %v570 = vpop.f32.mrb[0].mxu0
        %v571 = vadd.f32 0.0, %v570
        %v572 = vpop.f32.mrb[0].mxu0
        %v573 = vadd.f32 0.0, %v572
        %574 = vmatprep.mubr.f32.mxu0 0.0
        %575 = vmatmul.mubr.f32.gmra.mrb[0].mxu0 %v336
        %v576 = vpop.f32.mrb[0].mxu0
        %v577 = vadd.f32 0.0, %v576
        %v578 = vpop.f32.mrb[0].mxu0
        %v579 = vadd.f32 0.0, %v578
        %580 = vmatprep.mubr.f32.mxu0 0.0
        %581 = vmatmul.mubr.f32.gmra.mrb[0].mxu0 %v339
        %v582 = vpop.f32.mrb[0].mxu0
        %v583 = vadd.f32 0.0, %v582
        %v584 = vpop.f32.mrb[0].mxu0
        %v585 = vadd.f32 0.0, %v584
        %586 = vmatprep.mubr.f32.mxu0 0.0
        %587 = vmatmul.mubr.f32.gmra.mrb[0].mxu0 %v342
        %v588 = vpop.f32.mrb[0].mxu0
        %v589 = vadd.f32 0.0, %v588
        %v590 = vpop.f32.mrb[0].mxu0
        %v591 = vadd.f32 0.0, %v590
        %592 = vmatprep.mubr.f32.mxu0 0.0
        %593 = vmatmul.mubr.f32.gmra.mrb[0].mxu0 %v345
        %v594 = vpop.f32.mrb[0].mxu0
        %v595 = vadd.f32 0.0, %v594
        %v596 = vpop.f32.mrb[0].mxu0
        %v597 = vadd.f32 0.0, %v596
        %598 = vmatprep.mubr.f32.mxu0 0.0
        %599 = vmatmul.mubr.f32.gmra.mrb[0].mxu0 %v348
        %v600 = vpop.f32.mrb[0].mxu0
        %v601 = vadd.f32 0.0, %v600
        %v602 = vpop.f32.mrb[0].mxu0
        %v603 = vadd.f32 0.0, %v602
        %604 = vmatprep.mubr.f32.mxu0 0.0
        %605 = vmatmul.mubr.f32.gmra.mrb[0].mxu0 %v351
        %v606 = vpop.f32.mrb[0].mxu0
        %v607 = vadd.f32 0.0, %v606
        %v608 = vpop.f32.mrb[0].mxu0
        %v609 = vadd.f32 0.0, %v608
        %610 = vmatprep.mubr.f32.mxu0 0.0
        %611 = vmatmul.mubr.f32.gmra.mrb[0].mxu0 %v354
        %v612 = vpop.f32.mrb[0].mxu0
        %v613 = vadd.f32 0.0, %v612
        %v614 = vpop.f32.mrb[0].mxu0
        %v615 = vadd.f32 0.0, %v614
        %616 = vmatprep.mubr.f32.mxu0 0.0
        %617 = vmatmul.mubr.f32.gmra.mrb[0].mxu0 %v357
        %v618 = vpop.f32.mrb[0].mxu0
        %v619 = vadd.f32 0.0, %v618
        %v620 = vpop.f32.mrb[0].mxu0
        %v621 = vadd.f32 0.0, %v620
        %622 = vdwg.mxu0
        %s623 = scalar_lea.vmem %s219, 16
        %v624 = vld [vmem:[%s623] sm:$0x3f]
        %v625 = vld [vmem:[%s623 + $0x8] sm:$0x3f]
        %v627 = vsel %vm359, %v624, 0
        %v630 = vsel %vm359, %v625, 0
        %632 = vmatprep.subr.mxu0 %v630
        %633 = vmatpush1.msra.mxu0 %v627
        %634 = vmatprep.subr.mxu0 0.0
        %635 = vmatpush1.msra.mxu0 0.0
        %636 = vmatprep.subr.mxu0 0.0
        %637 = vmatpush1.msra.mxu0 0.0
        %638 = vmatprep.subr.mxu0 0.0
        %639 = vmatpush1.msra.mxu0 0.0
        %640 = vmatprep.subr.mxu0 0.0
        %641 = vmatpush1.msra.mxu0 0.0
        %642 = vmatprep.subr.mxu0 0.0
        %643 = vmatpush1.msra.mxu0 0.0
        %644 = vmatprep.subr.mxu0 0.0
        %645 = vmatpush1.msra.mxu0 0.0
        %646 = vmatprep.subr.mxu0 0.0
        %647 = vmatpush1.msra.mxu0 0.0
        %648 = vmatprep.subr.mxu0 0.0
        %649 = vmatpush1.msra.mxu0 0.0
        %650 = vmatprep.subr.mxu0 0.0
        %651 = vmatpush1.msra.mxu0 0.0
        %652 = vmatprep.subr.mxu0 0.0
        %653 = vmatpush1.msra.mxu0 0.0
        %654 = vmatprep.subr.mxu0 0.0
        %655 = vmatpush1.msra.mxu0 0.0
        %656 = vmatprep.subr.mxu0 0.0
        %657 = vmatpush1.msra.mxu0 0.0
        %658 = vmatprep.subr.mxu0 0.0
        %659 = vmatpush1.msra.mxu0 0.0
        %660 = vmatprep.subr.mxu0 0.0
        %661 = vmatpush1.msra.mxu0 0.0
        %662 = vmatprep.subr.mxu0 0.0
        %663 = vmatpush1.msra.mxu0 0.0
        %664 = vmatprep.subr.mxu0 0.0
        %665 = vmatpush1.msra.mxu0 0.0
        %666 = vmatprep.subr.mxu0 0.0
        %667 = vmatpush1.msra.mxu0 0.0
        %668 = vmatprep.subr.mxu0 0.0
        %669 = vmatpush1.msra.mxu0 0.0
        %670 = vmatprep.subr.mxu0 0.0
        %671 = vmatpush1.msra.mxu0 0.0
        %672 = vmatprep.subr.mxu0 0.0
        %673 = vmatpush1.msra.mxu0 0.0
        %674 = vmatprep.subr.mxu0 0.0
        %675 = vmatpush1.msra.mxu0 0.0
        %676 = vmatprep.subr.mxu0 0.0
        %677 = vmatpush1.msra.mxu0 0.0
        %678 = vmatprep.subr.mxu0 0.0
        %679 = vmatpush1.msra.mxu0 0.0
        %680 = vmatprep.subr.mxu0 0.0
        %681 = vmatpush1.msra.mxu0 0.0
        %682 = vmatprep.subr.mxu0 0.0
        %683 = vmatpush1.msra.mxu0 0.0
        %684 = vmatprep.subr.mxu0 0.0
        %685 = vmatpush1.msra.mxu0 0.0
        %686 = vmatprep.subr.mxu0 0.0
        %687 = vmatpush1.msra.mxu0 0.0
        %688 = vmatprep.subr.mxu0 0.0
        %689 = vmatpush1.msra.mxu0 0.0
        %690 = vmatprep.subr.mxu0 0.0
        %691 = vmatpush1.msra.mxu0 0.0
        %692 = vmatprep.subr.mxu0 0.0
        %693 = vmatpush1.msra.mxu0 0.0
        %694 = vmatprep.subr.mxu0 0.0
        %695 = vmatpush1.msra.mxu0 0.0
        %696 = vmatprep.mubr.f32.mxu0 0.0
        %697 = vmatmul.mubr.f32.gmra.mrb[0].mxu0 %v264
        %v698 = vpop.f32.mrb[0].mxu0
        %v699 = vadd.f32 0.0, %v698
        %v700 = vpop.f32.mrb[0].mxu0
        %v701 = vadd.f32 0.0, %v700
        %702 = vmatprep.mubr.f32.mxu0 0.0
        %703 = vmatmul.mubr.f32.gmra.mrb[0].mxu0 %v267
        %v704 = vpop.f32.mrb[0].mxu0
        %v705 = vadd.f32 0.0, %v704
        %v706 = vpop.f32.mrb[0].mxu0
        %v707 = vadd.f32 0.0, %v706
        %708 = vmatprep.mubr.f32.mxu0 0.0
        %709 = vmatmul.mubr.f32.gmra.mrb[0].mxu0 %v270
        %v710 = vpop.f32.mrb[0].mxu0
        %v711 = vadd.f32 0.0, %v710
        %v712 = vpop.f32.mrb[0].mxu0
        %v713 = vadd.f32 0.0, %v712
        %714 = vmatprep.mubr.f32.mxu0 0.0
        %715 = vmatmul.mubr.f32.gmra.mrb[0].mxu0 %v273
        %v716 = vpop.f32.mrb[0].mxu0
        %v717 = vadd.f32 0.0, %v716
        %v718 = vpop.f32.mrb[0].mxu0
        %v719 = vadd.f32 0.0, %v718
        %720 = vmatprep.mubr.f32.mxu0 0.0
        %721 = vmatmul.mubr.f32.gmra.mrb[0].mxu0 %v276
        %v722 = vpop.f32.mrb[0].mxu0
        %v723 = vadd.f32 0.0, %v722
        %v724 = vpop.f32.mrb[0].mxu0
        %v725 = vadd.f32 0.0, %v724
        %726 = vmatprep.mubr.f32.mxu0 0.0
        %727 = vmatmul.mubr.f32.gmra.mrb[0].mxu0 %v279
        %v728 = vpop.f32.mrb[0].mxu0
        %v729 = vadd.f32 0.0, %v728
        %v730 = vpop.f32.mrb[0].mxu0
        %v731 = vadd.f32 0.0, %v730
        %732 = vmatprep.mubr.f32.mxu0 0.0
        %733 = vmatmul.mubr.f32.gmra.mrb[0].mxu0 %v282
        %v734 = vpop.f32.mrb[0].mxu0
        %v735 = vadd.f32 0.0, %v734
        %v736 = vpop.f32.mrb[0].mxu0
        %v737 = vadd.f32 0.0, %v736
        %738 = vmatprep.mubr.f32.mxu0 0.0
        %739 = vmatmul.mubr.f32.gmra.mrb[0].mxu0 %v285
        %v740 = vpop.f32.mrb[0].mxu0
        %v741 = vadd.f32 0.0, %v740
        %v742 = vpop.f32.mrb[0].mxu0
        %v743 = vadd.f32 0.0, %v742
        %744 = vmatprep.mubr.f32.mxu0 0.0
        %745 = vmatmul.mubr.f32.gmra.mrb[0].mxu0 %v288
        %v746 = vpop.f32.mrb[0].mxu0
        %v747 = vadd.f32 0.0, %v746
        %v748 = vpop.f32.mrb[0].mxu0
        %v749 = vadd.f32 0.0, %v748
        %750 = vmatprep.mubr.f32.mxu0 0.0
        %751 = vmatmul.mubr.f32.gmra.mrb[0].mxu0 %v291
        %v752 = vpop.f32.mrb[0].mxu0
        %v753 = vadd.f32 0.0, %v752
        %v754 = vpop.f32.mrb[0].mxu0
        %v755 = vadd.f32 0.0, %v754
        %756 = vmatprep.mubr.f32.mxu0 0.0
        %757 = vmatmul.mubr.f32.gmra.mrb[0].mxu0 %v294
        %v758 = vpop.f32.mrb[0].mxu0
        %v759 = vadd.f32 0.0, %v758
        %v760 = vpop.f32.mrb[0].mxu0
        %v761 = vadd.f32 0.0, %v760
        %762 = vmatprep.mubr.f32.mxu0 0.0
        %763 = vmatmul.mubr.f32.gmra.mrb[0].mxu0 %v297
        %v764 = vpop.f32.mrb[0].mxu0
        %v765 = vadd.f32 0.0, %v764
        %v766 = vpop.f32.mrb[0].mxu0
        %v767 = vadd.f32 0.0, %v766
        %768 = vmatprep.mubr.f32.mxu0 0.0
        %769 = vmatmul.mubr.f32.gmra.mrb[0].mxu0 %v300
        %v770 = vpop.f32.mrb[0].mxu0
        %v771 = vadd.f32 0.0, %v770
        %v772 = vpop.f32.mrb[0].mxu0
        %v773 = vadd.f32 0.0, %v772
        %774 = vmatprep.mubr.f32.mxu0 0.0
        %775 = vmatmul.mubr.f32.gmra.mrb[0].mxu0 %v303
        %v776 = vpop.f32.mrb[0].mxu0
        %v777 = vadd.f32 0.0, %v776
        %v778 = vpop.f32.mrb[0].mxu0
        %v779 = vadd.f32 0.0, %v778
        %780 = vmatprep.mubr.f32.mxu0 0.0
        %781 = vmatmul.mubr.f32.gmra.mrb[0].mxu0 %v306
        %v782 = vpop.f32.mrb[0].mxu0
        %v783 = vadd.f32 0.0, %v782
        %v784 = vpop.f32.mrb[0].mxu0
        %v785 = vadd.f32 0.0, %v784
        %786 = vmatprep.mubr.f32.mxu0 0.0
        %787 = vmatmul.mubr.f32.gmra.mrb[0].mxu0 %v309
        %v788 = vpop.f32.mrb[0].mxu0
        %v789 = vadd.f32 0.0, %v788
        %v790 = vpop.f32.mrb[0].mxu0
        %v791 = vadd.f32 0.0, %v790
        %792 = vmatprep.mubr.f32.mxu0 0.0
        %793 = vmatmul.mubr.f32.gmra.mrb[0].mxu0 %v312
        %v794 = vpop.f32.mrb[0].mxu0
        %v795 = vadd.f32 0.0, %v794
        %v796 = vpop.f32.mrb[0].mxu0
        %v797 = vadd.f32 0.0, %v796
        %798 = vmatprep.mubr.f32.mxu0 0.0
        %799 = vmatmul.mubr.f32.gmra.mrb[0].mxu0 %v315
        %v800 = vpop.f32.mrb[0].mxu0
        %v801 = vadd.f32 0.0, %v800
        %v802 = vpop.f32.mrb[0].mxu0
        %v803 = vadd.f32 0.0, %v802
        %804 = vmatprep.mubr.f32.mxu0 0.0
        %805 = vmatmul.mubr.f32.gmra.mrb[0].mxu0 %v318
        %v806 = vpop.f32.mrb[0].mxu0
        %v807 = vadd.f32 0.0, %v806
        %v808 = vpop.f32.mrb[0].mxu0
        %v809 = vadd.f32 0.0, %v808
        %810 = vmatprep.mubr.f32.mxu0 0.0
        %811 = vmatmul.mubr.f32.gmra.mrb[0].mxu0 %v321
        %v812 = vpop.f32.mrb[0].mxu0
        %v813 = vadd.f32 0.0, %v812
        %v814 = vpop.f32.mrb[0].mxu0
        %v815 = vadd.f32 0.0, %v814
        %816 = vmatprep.mubr.f32.mxu0 0.0
        %817 = vmatmul.mubr.f32.gmra.mrb[0].mxu0 %v324
        %v818 = vpop.f32.mrb[0].mxu0
        %v819 = vadd.f32 0.0, %v818
        %v820 = vpop.f32.mrb[0].mxu0
        %v821 = vadd.f32 0.0, %v820
        %822 = vmatprep.mubr.f32.mxu0 0.0
        %823 = vmatmul.mubr.f32.gmra.mrb[0].mxu0 %v327
        %v824 = vpop.f32.mrb[0].mxu0
        %v825 = vadd.f32 0.0, %v824
        %v826 = vpop.f32.mrb[0].mxu0
        %v827 = vadd.f32 0.0, %v826
        %828 = vmatprep.mubr.f32.mxu0 0.0
        %829 = vmatmul.mubr.f32.gmra.mrb[0].mxu0 %v330
        %v830 = vpop.f32.mrb[0].mxu0
        %v831 = vadd.f32 0.0, %v830
        %v832 = vpop.f32.mrb[0].mxu0
        %v833 = vadd.f32 0.0, %v832
        %834 = vmatprep.mubr.f32.mxu0 0.0
        %835 = vmatmul.mubr.f32.gmra.mrb[0].mxu0 %v333
        %v836 = vpop.f32.mrb[0].mxu0
        %v837 = vadd.f32 0.0, %v836
        %v838 = vpop.f32.mrb[0].mxu0
        %v839 = vadd.f32 0.0, %v838
        %840 = vmatprep.mubr.f32.mxu0 0.0
        %841 = vmatmul.mubr.f32.gmra.mrb[0].mxu0 %v336
        %v842 = vpop.f32.mrb[0].mxu0
        %v843 = vadd.f32 0.0, %v842
        %v844 = vpop.f32.mrb[0].mxu0
        %v845 = vadd.f32 0.0, %v844
        %846 = vmatprep.mubr.f32.mxu0 0.0
        %847 = vmatmul.mubr.f32.gmra.mrb[0].mxu0 %v339
        %v848 = vpop.f32.mrb[0].mxu0
        %v849 = vadd.f32 0.0, %v848
        %v850 = vpop.f32.mrb[0].mxu0
        %v851 = vadd.f32 0.0, %v850
        %852 = vmatprep.mubr.f32.mxu0 0.0
        %853 = vmatmul.mubr.f32.gmra.mrb[0].mxu0 %v342
        %v854 = vpop.f32.mrb[0].mxu0
        %v855 = vadd.f32 0.0, %v854
        %v856 = vpop.f32.mrb[0].mxu0
        %v857 = vadd.f32 0.0, %v856
        %858 = vmatprep.mubr.f32.mxu0 0.0
        %859 = vmatmul.mubr.f32.gmra.mrb[0].mxu0 %v345
        %v860 = vpop.f32.mrb[0].mxu0
        %v861 = vadd.f32 0.0, %v860
        %v862 = vpop.f32.mrb[0].mxu0
        %v863 = vadd.f32 0.0, %v862
        %864 = vmatprep.mubr.f32.mxu0 0.0
        %865 = vmatmul.mubr.f32.gmra.mrb[0].mxu0 %v348
        %v866 = vpop.f32.mrb[0].mxu0
        %v867 = vadd.f32 0.0, %v866
        %v868 = vpop.f32.mrb[0].mxu0
        %v869 = vadd.f32 0.0, %v868
        %870 = vmatprep.mubr.f32.mxu0 0.0
        %871 = vmatmul.mubr.f32.gmra.mrb[0].mxu0 %v351
        %v872 = vpop.f32.mrb[0].mxu0
        %v873 = vadd.f32 0.0, %v872
        %v874 = vpop.f32.mrb[0].mxu0
        %v875 = vadd.f32 0.0, %v874
        %876 = vmatprep.mubr.f32.mxu0 0.0
        %877 = vmatmul.mubr.f32.gmra.mrb[0].mxu0 %v354
        %v878 = vpop.f32.mrb[0].mxu0
        %v879 = vadd.f32 0.0, %v878
        %v880 = vpop.f32.mrb[0].mxu0
        %v881 = vadd.f32 0.0, %v880
        %882 = vmatprep.mubr.f32.mxu0 0.0
        %883 = vmatmul.mubr.f32.gmra.mrb[0].mxu0 %v357
        %v884 = vpop.f32.mrb[0].mxu0
        %v885 = vadd.f32 0.0, %v884
        %v886 = vpop.f32.mrb[0].mxu0
        %v887 = vadd.f32 0.0, %v886
        %888 = vdwg.mxu0
        %s889 = scalar_lea.vmem %s219, 32
        %v890 = vld [vmem:[%s889] sm:$0x3f]
        %v891 = vld [vmem:[%s889 + $0x8] sm:$0x3f]
        %v893 = vsel %vm359, %v890, 0
        %v896 = vsel %vm359, %v891, 0
        %898 = vmatprep.subr.mxu0 %v896
        %899 = vmatpush1.msra.mxu0 %v893
        %900 = vmatprep.subr.mxu0 0.0
        %901 = vmatpush1.msra.mxu0 0.0
        %902 = vmatprep.subr.mxu0 0.0
        %903 = vmatpush1.msra.mxu0 0.0
        %904 = vmatprep.subr.mxu0 0.0
        %905 = vmatpush1.msra.mxu0 0.0
        %906 = vmatprep.subr.mxu0 0.0
        %907 = vmatpush1.msra.mxu0 0.0
        %908 = vmatprep.subr.mxu0 0.0
        %909 = vmatpush1.msra.mxu0 0.0
        %910 = vmatprep.subr.mxu0 0.0
        %911 = vmatpush1.msra.mxu0 0.0
        %912 = vmatprep.subr.mxu0 0.0
        %913 = vmatpush1.msra.mxu0 0.0
        %914 = vmatprep.subr.mxu0 0.0
        %915 = vmatpush1.msra.mxu0 0.0
        %916 = vmatprep.subr.mxu0 0.0
        %917 = vmatpush1.msra.mxu0 0.0
        %918 = vmatprep.subr.mxu0 0.0
        %919 = vmatpush1.msra.mxu0 0.0
        %920 = vmatprep.subr.mxu0 0.0
        %921 = vmatpush1.msra.mxu0 0.0
        %922 = vmatprep.subr.mxu0 0.0
        %923 = vmatpush1.msra.mxu0 0.0
        %924 = vmatprep.subr.mxu0 0.0
        %925 = vmatpush1.msra.mxu0 0.0
        %926 = vmatprep.subr.mxu0 0.0
        %927 = vmatpush1.msra.mxu0 0.0
        %928 = vmatprep.subr.mxu0 0.0
        %929 = vmatpush1.msra.mxu0 0.0
        %930 = vmatprep.subr.mxu0 0.0
        %931 = vmatpush1.msra.mxu0 0.0
        %932 = vmatprep.subr.mxu0 0.0
        %933 = vmatpush1.msra.mxu0 0.0
        %934 = vmatprep.subr.mxu0 0.0
        %935 = vmatpush1.msra.mxu0 0.0
        %936 = vmatprep.subr.mxu0 0.0
        %937 = vmatpush1.msra.mxu0 0.0
        %938 = vmatprep.subr.mxu0 0.0
        %939 = vmatpush1.msra.mxu0 0.0
        %940 = vmatprep.subr.mxu0 0.0
        %941 = vmatpush1.msra.mxu0 0.0
        %942 = vmatprep.subr.mxu0 0.0
        %943 = vmatpush1.msra.mxu0 0.0
        %944 = vmatprep.subr.mxu0 0.0
        %945 = vmatpush1.msra.mxu0 0.0
        %946 = vmatprep.subr.mxu0 0.0
        %947 = vmatpush1.msra.mxu0 0.0
        %948 = vmatprep.subr.mxu0 0.0
        %949 = vmatpush1.msra.mxu0 0.0
        %950 = vmatprep.subr.mxu0 0.0
        %951 = vmatpush1.msra.mxu0 0.0
        %952 = vmatprep.subr.mxu0 0.0
        %953 = vmatpush1.msra.mxu0 0.0
        %954 = vmatprep.subr.mxu0 0.0
        %955 = vmatpush1.msra.mxu0 0.0
        %956 = vmatprep.subr.mxu0 0.0
        %957 = vmatpush1.msra.mxu0 0.0
        %958 = vmatprep.subr.mxu0 0.0
        %959 = vmatpush1.msra.mxu0 0.0
        %960 = vmatprep.subr.mxu0 0.0
        %961 = vmatpush1.msra.mxu0 0.0
        %962 = vmatprep.mubr.f32.mxu0 0.0
        %963 = vmatmul.mubr.f32.gmra.mrb[0].mxu0 %v264
        %v964 = vpop.f32.mrb[0].mxu0
        %v965 = vadd.f32 0.0, %v964
        %v966 = vpop.f32.mrb[0].mxu0
        %v967 = vadd.f32 0.0, %v966
        %968 = vmatprep.mubr.f32.mxu0 0.0
        %969 = vmatmul.mubr.f32.gmra.mrb[0].mxu0 %v267
        %v970 = vpop.f32.mrb[0].mxu0
        %v971 = vadd.f32 0.0, %v970
        %v972 = vpop.f32.mrb[0].mxu0
        %v973 = vadd.f32 0.0, %v972
        %974 = vmatprep.mubr.f32.mxu0 0.0
        %975 = vmatmul.mubr.f32.gmra.mrb[0].mxu0 %v270
        %v976 = vpop.f32.mrb[0].mxu0
        %v977 = vadd.f32 0.0, %v976
        %v978 = vpop.f32.mrb[0].mxu0
        %v979 = vadd.f32 0.0, %v978
        %980 = vmatprep.mubr.f32.mxu0 0.0
        %981 = vmatmul.mubr.f32.gmra.mrb[0].mxu0 %v273
        %v982 = vpop.f32.mrb[0].mxu0
        %v983 = vadd.f32 0.0, %v982
        %v984 = vpop.f32.mrb[0].mxu0
        %v985 = vadd.f32 0.0, %v984
        %986 = vmatprep.mubr.f32.mxu0 0.0
        %987 = vmatmul.mubr.f32.gmra.mrb[0].mxu0 %v276
        %v988 = vpop.f32.mrb[0].mxu0
        %v989 = vadd.f32 0.0, %v988
        %v990 = vpop.f32.mrb[0].mxu0
        %v991 = vadd.f32 0.0, %v990
        %992 = vmatprep.mubr.f32.mxu0 0.0
        %993 = vmatmul.mubr.f32.gmra.mrb[0].mxu0 %v279
        %v994 = vpop.f32.mrb[0].mxu0
        %v995 = vadd.f32 0.0, %v994
        %v996 = vpop.f32.mrb[0].mxu0
        %v997 = vadd.f32 0.0, %v996
        %998 = vmatprep.mubr.f32.mxu0 0.0
        %999 = vmatmul.mubr.f32.gmra.mrb[0].mxu0 %v282
        %v1000 = vpop.f32.mrb[0].mxu0
        %v1001 = vadd.f32 0.0, %v1000
        %v1002 = vpop.f32.mrb[0].mxu0
        %v1003 = vadd.f32 0.0, %v1002
        %1004 = vmatprep.mubr.f32.mxu0 0.0
        %1005 = vmatmul.mubr.f32.gmra.mrb[0].mxu0 %v285
        %v1006 = vpop.f32.mrb[0].mxu0
        %v1007 = vadd.f32 0.0, %v1006
        %v1008 = vpop.f32.mrb[0].mxu0
        %v1009 = vadd.f32 0.0, %v1008
        %1010 = vmatprep.mubr.f32.mxu0 0.0
        %1011 = vmatmul.mubr.f32.gmra.mrb[0].mxu0 %v288
        %v1012 = vpop.f32.mrb[0].mxu0
        %v1013 = vadd.f32 0.0, %v1012
        %v1014 = vpop.f32.mrb[0].mxu0
        %v1015 = vadd.f32 0.0, %v1014
        %1016 = vmatprep.mubr.f32.mxu0 0.0
        %1017 = vmatmul.mubr.f32.gmra.mrb[0].mxu0 %v291
        %v1018 = vpop.f32.mrb[0].mxu0
        %v1019 = vadd.f32 0.0, %v1018
        %v1020 = vpop.f32.mrb[0].mxu0
        %v1021 = vadd.f32 0.0, %v1020
        %1022 = vmatprep.mubr.f32.mxu0 0.0
        %1023 = vmatmul.mubr.f32.gmra.mrb[0].mxu0 %v294
        %v1024 = vpop.f32.mrb[0].mxu0
        %v1025 = vadd.f32 0.0, %v1024
        %v1026 = vpop.f32.mrb[0].mxu0
        %v1027 = vadd.f32 0.0, %v1026
        %1028 = vmatprep.mubr.f32.mxu0 0.0
        %1029 = vmatmul.mubr.f32.gmra.mrb[0].mxu0 %v297
        %v1030 = vpop.f32.mrb[0].mxu0
        %v1031 = vadd.f32 0.0, %v1030
        %v1032 = vpop.f32.mrb[0].mxu0
        %v1033 = vadd.f32 0.0, %v1032
        %1034 = vmatprep.mubr.f32.mxu0 0.0
        %1035 = vmatmul.mubr.f32.gmra.mrb[0].mxu0 %v300
        %v1036 = vpop.f32.mrb[0].mxu0
        %v1037 = vadd.f32 0.0, %v1036
        %v1038 = vpop.f32.mrb[0].mxu0
        %v1039 = vadd.f32 0.0, %v1038
        %1040 = vmatprep.mubr.f32.mxu0 0.0
        %1041 = vmatmul.mubr.f32.gmra.mrb[0].mxu0 %v303
        %v1042 = vpop.f32.mrb[0].mxu0
        %v1043 = vadd.f32 0.0, %v1042
        %v1044 = vpop.f32.mrb[0].mxu0
        %v1045 = vadd.f32 0.0, %v1044
        %1046 = vmatprep.mubr.f32.mxu0 0.0
        %1047 = vmatmul.mubr.f32.gmra.mrb[0].mxu0 %v306
        %v1048 = vpop.f32.mrb[0].mxu0
        %v1049 = vadd.f32 0.0, %v1048
        %v1050 = vpop.f32.mrb[0].mxu0
        %v1051 = vadd.f32 0.0, %v1050
        %1052 = vmatprep.mubr.f32.mxu0 0.0
        %1053 = vmatmul.mubr.f32.gmra.mrb[0].mxu0 %v309
        %v1054 = vpop.f32.mrb[0].mxu0
        %v1055 = vadd.f32 0.0, %v1054
        %v1056 = vpop.f32.mrb[0].mxu0
        %v1057 = vadd.f32 0.0, %v1056
        %1058 = vmatprep.mubr.f32.mxu0 0.0
        %1059 = vmatmul.mubr.f32.gmra.mrb[0].mxu0 %v312
        %v1060 = vpop.f32.mrb[0].mxu0
        %v1061 = vadd.f32 0.0, %v1060
        %v1062 = vpop.f32.mrb[0].mxu0
        %v1063 = vadd.f32 0.0, %v1062
        %1064 = vmatprep.mubr.f32.mxu0 0.0
        %1065 = vmatmul.mubr.f32.gmra.mrb[0].mxu0 %v315
        %v1066 = vpop.f32.mrb[0].mxu0
        %v1067 = vadd.f32 0.0, %v1066
        %v1068 = vpop.f32.mrb[0].mxu0
        %v1069 = vadd.f32 0.0, %v1068
        %1070 = vmatprep.mubr.f32.mxu0 0.0
        %1071 = vmatmul.mubr.f32.gmra.mrb[0].mxu0 %v318
        %v1072 = vpop.f32.mrb[0].mxu0
        %v1073 = vadd.f32 0.0, %v1072
        %v1074 = vpop.f32.mrb[0].mxu0
        %v1075 = vadd.f32 0.0, %v1074
        %1076 = vmatprep.mubr.f32.mxu0 0.0
        %1077 = vmatmul.mubr.f32.gmra.mrb[0].mxu0 %v321
        %v1078 = vpop.f32.mrb[0].mxu0
        %v1079 = vadd.f32 0.0, %v1078
        %v1080 = vpop.f32.mrb[0].mxu0
        %v1081 = vadd.f32 0.0, %v1080
        %1082 = vmatprep.mubr.f32.mxu0 0.0
        %1083 = vmatmul.mubr.f32.gmra.mrb[0].mxu0 %v324
        %v1084 = vpop.f32.mrb[0].mxu0
        %v1085 = vadd.f32 0.0, %v1084
        %v1086 = vpop.f32.mrb[0].mxu0
        %v1087 = vadd.f32 0.0, %v1086
        %1088 = vmatprep.mubr.f32.mxu0 0.0
        %1089 = vmatmul.mubr.f32.gmra.mrb[0].mxu0 %v327
        %v1090 = vpop.f32.mrb[0].mxu0
        %v1091 = vadd.f32 0.0, %v1090
        %v1092 = vpop.f32.mrb[0].mxu0
        %v1093 = vadd.f32 0.0, %v1092
        %1094 = vmatprep.mubr.f32.mxu0 0.0
        %1095 = vmatmul.mubr.f32.gmra.mrb[0].mxu0 %v330
        %v1096 = vpop.f32.mrb[0].mxu0
        %v1097 = vadd.f32 0.0, %v1096
        %v1098 = vpop.f32.mrb[0].mxu0
        %v1099 = vadd.f32 0.0, %v1098
        %1100 = vmatprep.mubr.f32.mxu0 0.0
        %1101 = vmatmul.mubr.f32.gmra.mrb[0].mxu0 %v333
        %v1102 = vpop.f32.mrb[0].mxu0
        %v1103 = vadd.f32 0.0, %v1102
        %v1104 = vpop.f32.mrb[0].mxu0
        %v1105 = vadd.f32 0.0, %v1104
        %1106 = vmatprep.mubr.f32.mxu0 0.0
        %1107 = vmatmul.mubr.f32.gmra.mrb[0].mxu0 %v336
        %v1108 = vpop.f32.mrb[0].mxu0
        %v1109 = vadd.f32 0.0, %v1108
        %v1110 = vpop.f32.mrb[0].mxu0
        %v1111 = vadd.f32 0.0, %v1110
        %1112 = vmatprep.mubr.f32.mxu0 0.0
        %1113 = vmatmul.mubr.f32.gmra.mrb[0].mxu0 %v339
        %v1114 = vpop.f32.mrb[0].mxu0
        %v1115 = vadd.f32 0.0, %v1114
        %v1116 = vpop.f32.mrb[0].mxu0
        %v1117 = vadd.f32 0.0, %v1116
        %1118 = vmatprep.mubr.f32.mxu0 0.0
        %1119 = vmatmul.mubr.f32.gmra.mrb[0].mxu0 %v342
        %v1120 = vpop.f32.mrb[0].mxu0
        %v1121 = vadd.f32 0.0, %v1120
        %v1122 = vpop.f32.mrb[0].mxu0
        %v1123 = vadd.f32 0.0, %v1122
        %1124 = vmatprep.mubr.f32.mxu0 0.0
        %1125 = vmatmul.mubr.f32.gmra.mrb[0].mxu0 %v345
        %v1126 = vpop.f32.mrb[0].mxu0
        %v1127 = vadd.f32 0.0, %v1126
        %v1128 = vpop.f32.mrb[0].mxu0
        %v1129 = vadd.f32 0.0, %v1128
        %1130 = vmatprep.mubr.f32.mxu0 0.0
        %1131 = vmatmul.mubr.f32.gmra.mrb[0].mxu0 %v348
        %v1132 = vpop.f32.mrb[0].mxu0
        %v1133 = vadd.f32 0.0, %v1132
        %v1134 = vpop.f32.mrb[0].mxu0
        %v1135 = vadd.f32 0.0, %v1134
        %1136 = vmatprep.mubr.f32.mxu0 0.0
        %1137 = vmatmul.mubr.f32.gmra.mrb[0].mxu0 %v351
        %v1138 = vpop.f32.mrb[0].mxu0
        %v1139 = vadd.f32 0.0, %v1138
        %v1140 = vpop.f32.mrb[0].mxu0
        %v1141 = vadd.f32 0.0, %v1140
        %1142 = vmatprep.mubr.f32.mxu0 0.0
        %1143 = vmatmul.mubr.f32.gmra.mrb[0].mxu0 %v354
        %v1144 = vpop.f32.mrb[0].mxu0
        %v1145 = vadd.f32 0.0, %v1144
        %v1146 = vpop.f32.mrb[0].mxu0
        %v1147 = vadd.f32 0.0, %v1146
        %1148 = vmatprep.mubr.f32.mxu0 0.0
        %1149 = vmatmul.mubr.f32.gmra.mrb[0].mxu0 %v357
        %v1150 = vpop.f32.mrb[0].mxu0
        %v1151 = vadd.f32 0.0, %v1150
        %v1152 = vpop.f32.mrb[0].mxu0
        %v1153 = vadd.f32 0.0, %v1152
        %1154 = vdwg.mxu0
        %v1155 = vld [vmem:[%s224] sm:$0x3]
        %v1156 = vadd.f32 %v699, 1.000001
        %v1157 = vadd.f32 %v701, 1.000001
        %v1158 = vadd.f32 %v705, 1.000001
        %v1159 = vadd.f32 %v707, 1.000001
        %v1160 = vadd.f32 %v711, 1.000001
        %v1161 = vadd.f32 %v713, 1.000001
        %v1162 = vadd.f32 %v717, 1.000001
        %v1163 = vadd.f32 %v719, 1.000001
        %v1164 = vadd.f32 %v723, 1.000001
        %v1165 = vadd.f32 %v725, 1.000001
        %v1166 = vadd.f32 %v729, 1.000001
        %v1167 = vadd.f32 %v731, 1.000001
        %v1168 = vadd.f32 %v735, 1.000001
        %v1169 = vadd.f32 %v737, 1.000001
        %v1170 = vadd.f32 %v741, 1.000001
        %v1171 = vadd.f32 %v743, 1.000001
        %v1172 = vadd.f32 %v747, 1.000001
        %v1173 = vadd.f32 %v749, 1.000001
        %v1174 = vadd.f32 %v753, 1.000001
        %v1175 = vadd.f32 %v755, 1.000001
        %v1176 = vadd.f32 %v759, 1.000001
        %v1177 = vadd.f32 %v761, 1.000001
        %v1178 = vadd.f32 %v765, 1.000001
        %v1179 = vadd.f32 %v767, 1.000001
        %v1180 = vadd.f32 %v771, 1.000001
        %v1181 = vadd.f32 %v773, 1.000001
        %v1182 = vadd.f32 %v777, 1.000001
        %v1183 = vadd.f32 %v779, 1.000001
        %v1184 = vadd.f32 %v783, 1.000001
        %v1185 = vadd.f32 %v785, 1.000001
        %v1186 = vadd.f32 %v789, 1.000001
        %v1187 = vadd.f32 %v791, 1.000001
        %v1188 = vadd.f32 %v795, 1.000001
        %v1189 = vadd.f32 %v797, 1.000001
        %v1190 = vadd.f32 %v801, 1.000001
        %v1191 = vadd.f32 %v803, 1.000001
        %v1192 = vadd.f32 %v807, 1.000001
        %v1193 = vadd.f32 %v809, 1.000001
        %v1194 = vadd.f32 %v813, 1.000001
        %v1195 = vadd.f32 %v815, 1.000001
        %v1196 = vadd.f32 %v819, 1.000001
        %v1197 = vadd.f32 %v821, 1.000001
        %v1198 = vadd.f32 %v825, 1.000001
        %v1199 = vadd.f32 %v827, 1.000001
        %v1200 = vadd.f32 %v831, 1.000001
        %v1201 = vadd.f32 %v833, 1.000001
        %v1202 = vadd.f32 %v837, 1.000001
        %v1203 = vadd.f32 %v839, 1.000001
        %v1204 = vadd.f32 %v843, 1.000001
        %v1205 = vadd.f32 %v845, 1.000001
        %v1206 = vadd.f32 %v849, 1.000001
        %v1207 = vadd.f32 %v851, 1.000001
        %v1208 = vadd.f32 %v855, 1.000001
        %v1209 = vadd.f32 %v857, 1.000001
        %v1210 = vadd.f32 %v861, 1.000001
        %v1211 = vadd.f32 %v863, 1.000001
        %v1212 = vadd.f32 %v867, 1.000001
        %v1213 = vadd.f32 %v869, 1.000001
        %v1214 = vadd.f32 %v873, 1.000001
        %v1215 = vadd.f32 %v875, 1.000001
        %v1216 = vadd.f32 %v879, 1.000001
        %v1217 = vadd.f32 %v881, 1.000001
        %v1218 = vadd.f32 %v885, 1.000001
        %v1219 = vadd.f32 %v887, 1.000001
        %v1220 = vrcp.pop %v1156
        %v1221 = vrcp.pop %v1157
        %v1222 = vrcp.pop %v1158
        %v1223 = vrcp.pop %v1159
        %v1224 = vrcp.pop %v1160
        %v1225 = vrcp.pop %v1161
        %v1226 = vrcp.pop %v1162
        %v1227 = vrcp.pop %v1163
        %v1228 = vrcp.pop %v1164
        %v1229 = vrcp.pop %v1165
        %v1230 = vrcp.pop %v1166
        %v1231 = vrcp.pop %v1167
        %v1232 = vrcp.pop %v1168
        %v1233 = vrcp.pop %v1169
        %v1234 = vrcp.pop %v1170
        %v1235 = vrcp.pop %v1171
        %v1236 = vrcp.pop %v1172
        %v1237 = vrcp.pop %v1173
        %v1238 = vrcp.pop %v1174
        %v1239 = vrcp.pop %v1175
        %v1240 = vrcp.pop %v1176
        %v1241 = vrcp.pop %v1177
        %v1242 = vrcp.pop %v1178
        %v1243 = vrcp.pop %v1179
        %v1244 = vrcp.pop %v1180
        %v1245 = vrcp.pop %v1181
        %v1246 = vrcp.pop %v1182
        %v1247 = vrcp.pop %v1183
        %v1248 = vrcp.pop %v1184
        %v1249 = vrcp.pop %v1185
        %v1250 = vrcp.pop %v1186
        %v1251 = vrcp.pop %v1187
        %v1252 = vrcp.pop %v1188
        %v1253 = vrcp.pop %v1189
        %v1254 = vrcp.pop %v1190
        %v1255 = vrcp.pop %v1191
        %v1256 = vrcp.pop %v1192
        %v1257 = vrcp.pop %v1193
        %v1258 = vrcp.pop %v1194
        %v1259 = vrcp.pop %v1195
        %v1260 = vrcp.pop %v1196
        %v1261 = vrcp.pop %v1197
        %v1262 = vrcp.pop %v1198
        %v1263 = vrcp.pop %v1199
        %v1264 = vrcp.pop %v1200
        %v1265 = vrcp.pop %v1201
        %v1266 = vrcp.pop %v1202
        %v1267 = vrcp.pop %v1203
        %v1268 = vrcp.pop %v1204
        %v1269 = vrcp.pop %v1205
        %v1270 = vrcp.pop %v1206
        %v1271 = vrcp.pop %v1207
        %v1272 = vrcp.pop %v1208
        %v1273 = vrcp.pop %v1209
        %v1274 = vrcp.pop %v1210
        %v1275 = vrcp.pop %v1211
        %v1276 = vrcp.pop %v1212
        %v1277 = vrcp.pop %v1213
        %v1278 = vrcp.pop %v1214
        %v1279 = vrcp.pop %v1215
        %v1280 = vrcp.pop %v1216
        %v1281 = vrcp.pop %v1217
        %v1282 = vrcp.pop %v1218
        %v1283 = vrcp.pop %v1219
        %v1284 = vmul.f32 %v1156, %v1220
        %v1285 = vmul.f32 %v1157, %v1221
        %v1286 = vmul.f32 %v1158, %v1222
        %v1287 = vmul.f32 %v1159, %v1223
        %v1288 = vmul.f32 %v1160, %v1224
        %v1289 = vmul.f32 %v1161, %v1225
        %v1290 = vmul.f32 %v1162, %v1226
        %v1291 = vmul.f32 %v1163, %v1227
        %v1292 = vmul.f32 %v1164, %v1228
        %v1293 = vmul.f32 %v1165, %v1229
        %v1294 = vmul.f32 %v1166, %v1230
        %v1295 = vmul.f32 %v1167, %v1231
        %v1296 = vmul.f32 %v1168, %v1232
        %v1297 = vmul.f32 %v1169, %v1233
        %v1298 = vmul.f32 %v1170, %v1234
        %v1299 = vmul.f32 %v1171, %v1235
        %v1300 = vmul.f32 %v1172, %v1236
        %v1301 = vmul.f32 %v1173, %v1237
        %v1302 = vmul.f32 %v1174, %v1238
        %v1303 = vmul.f32 %v1175, %v1239
        %v1304 = vmul.f32 %v1176, %v1240
        %v1305 = vmul.f32 %v1177, %v1241
        %v1306 = vmul.f32 %v1178, %v1242
        %v1307 = vmul.f32 %v1179, %v1243
        %v1308 = vmul.f32 %v1180, %v1244
        %v1309 = vmul.f32 %v1181, %v1245
        %v1310 = vmul.f32 %v1182, %v1246
        %v1311 = vmul.f32 %v1183, %v1247
        %v1312 = vmul.f32 %v1184, %v1248
        %v1313 = vmul.f32 %v1185, %v1249
        %v1314 = vmul.f32 %v1186, %v1250
        %v1315 = vmul.f32 %v1187, %v1251
        %v1316 = vmul.f32 %v1188, %v1252
        %v1317 = vmul.f32 %v1189, %v1253
        %v1318 = vmul.f32 %v1190, %v1254
        %v1319 = vmul.f32 %v1191, %v1255
        %v1320 = vmul.f32 %v1192, %v1256
        %v1321 = vmul.f32 %v1193, %v1257
        %v1322 = vmul.f32 %v1194, %v1258
        %v1323 = vmul.f32 %v1195, %v1259
        %v1324 = vmul.f32 %v1196, %v1260
        %v1325 = vmul.f32 %v1197, %v1261
        %v1326 = vmul.f32 %v1198, %v1262
        %v1327 = vmul.f32 %v1199, %v1263
        %v1328 = vmul.f32 %v1200, %v1264
        %v1329 = vmul.f32 %v1201, %v1265
        %v1330 = vmul.f32 %v1202, %v1266
        %v1331 = vmul.f32 %v1203, %v1267
        %v1332 = vmul.f32 %v1204, %v1268
        %v1333 = vmul.f32 %v1205, %v1269
        %v1334 = vmul.f32 %v1206, %v1270
        %v1335 = vmul.f32 %v1207, %v1271
        %v1336 = vmul.f32 %v1208, %v1272
        %v1337 = vmul.f32 %v1209, %v1273
        %v1338 = vmul.f32 %v1210, %v1274
        %v1339 = vmul.f32 %v1211, %v1275
        %v1340 = vmul.f32 %v1212, %v1276
        %v1341 = vmul.f32 %v1213, %v1277
        %v1342 = vmul.f32 %v1214, %v1278
        %v1343 = vmul.f32 %v1215, %v1279
        %v1344 = vmul.f32 %v1216, %v1280
        %v1345 = vmul.f32 %v1217, %v1281
        %v1346 = vmul.f32 %v1218, %v1282
        %v1347 = vmul.f32 %v1219, %v1283
        %v1348 = vsub.f32 2.0, %v1284
        %v1349 = vsub.f32 2.0, %v1285
        %v1350 = vsub.f32 2.0, %v1286
        %v1351 = vsub.f32 2.0, %v1287
        %v1352 = vsub.f32 2.0, %v1288
        %v1353 = vsub.f32 2.0, %v1289
        %v1354 = vsub.f32 2.0, %v1290
        %v1355 = vsub.f32 2.0, %v1291
        %v1356 = vsub.f32 2.0, %v1292
        %v1357 = vsub.f32 2.0, %v1293
        %v1358 = vsub.f32 2.0, %v1294
        %v1359 = vsub.f32 2.0, %v1295
        %v1360 = vsub.f32 2.0, %v1296
        %v1361 = vsub.f32 2.0, %v1297
        %v1362 = vsub.f32 2.0, %v1298
        %v1363 = vsub.f32 2.0, %v1299
        %v1364 = vsub.f32 2.0, %v1300
        %v1365 = vsub.f32 2.0, %v1301
        %v1366 = vsub.f32 2.0, %v1302
        %v1367 = vsub.f32 2.0, %v1303
        %v1368 = vsub.f32 2.0, %v1304
        %v1369 = vsub.f32 2.0, %v1305
        %v1370 = vsub.f32 2.0, %v1306
        %v1371 = vsub.f32 2.0, %v1307
        %v1372 = vsub.f32 2.0, %v1308
        %v1373 = vsub.f32 2.0, %v1309
        %v1374 = vsub.f32 2.0, %v1310
        %v1375 = vsub.f32 2.0, %v1311
        %v1376 = vsub.f32 2.0, %v1312
        %v1377 = vsub.f32 2.0, %v1313
        %v1378 = vsub.f32 2.0, %v1314
        %v1379 = vsub.f32 2.0, %v1315
        %v1380 = vsub.f32 2.0, %v1316
        %v1381 = vsub.f32 2.0, %v1317
        %v1382 = vsub.f32 2.0, %v1318
        %v1383 = vsub.f32 2.0, %v1319
        %v1384 = vsub.f32 2.0, %v1320
        %v1385 = vsub.f32 2.0, %v1321
        %v1386 = vsub.f32 2.0, %v1322
        %v1387 = vsub.f32 2.0, %v1323
        %v1388 = vsub.f32 2.0, %v1324
        %v1389 = vsub.f32 2.0, %v1325
        %v1390 = vsub.f32 2.0, %v1326
        %v1391 = vsub.f32 2.0, %v1327
        %v1392 = vsub.f32 2.0, %v1328
        %v1393 = vsub.f32 2.0, %v1329
        %v1394 = vsub.f32 2.0, %v1330
        %v1395 = vsub.f32 2.0, %v1331
        %v1396 = vsub.f32 2.0, %v1332
        %v1397 = vsub.f32 2.0, %v1333
        %v1398 = vsub.f32 2.0, %v1334
        %v1399 = vsub.f32 2.0, %v1335
        %v1400 = vsub.f32 2.0, %v1336
        %v1401 = vsub.f32 2.0, %v1337
        %v1402 = vsub.f32 2.0, %v1338
        %v1403 = vsub.f32 2.0, %v1339
        %v1404 = vsub.f32 2.0, %v1340
        %v1405 = vsub.f32 2.0, %v1341
        %v1406 = vsub.f32 2.0, %v1342
        %v1407 = vsub.f32 2.0, %v1343
        %v1408 = vsub.f32 2.0, %v1344
        %v1409 = vsub.f32 2.0, %v1345
        %v1410 = vsub.f32 2.0, %v1346
        %v1411 = vsub.f32 2.0, %v1347
        %v1412 = vmul.f32 %v1220, %v1348
        %v1413 = vmul.f32 %v1221, %v1349
        %v1414 = vmul.f32 %v1222, %v1350
        %v1415 = vmul.f32 %v1223, %v1351
        %v1416 = vmul.f32 %v1224, %v1352
        %v1417 = vmul.f32 %v1225, %v1353
        %v1418 = vmul.f32 %v1226, %v1354
        %v1419 = vmul.f32 %v1227, %v1355
        %v1420 = vmul.f32 %v1228, %v1356
        %v1421 = vmul.f32 %v1229, %v1357
        %v1422 = vmul.f32 %v1230, %v1358
        %v1423 = vmul.f32 %v1231, %v1359
        %v1424 = vmul.f32 %v1232, %v1360
        %v1425 = vmul.f32 %v1233, %v1361
        %v1426 = vmul.f32 %v1234, %v1362
        %v1427 = vmul.f32 %v1235, %v1363
        %v1428 = vmul.f32 %v1236, %v1364
        %v1429 = vmul.f32 %v1237, %v1365
        %v1430 = vmul.f32 %v1238, %v1366
        %v1431 = vmul.f32 %v1239, %v1367
        %v1432 = vmul.f32 %v1240, %v1368
        %v1433 = vmul.f32 %v1241, %v1369
        %v1434 = vmul.f32 %v1242, %v1370
        %v1435 = vmul.f32 %v1243, %v1371
        %v1436 = vmul.f32 %v1244, %v1372
        %v1437 = vmul.f32 %v1245, %v1373
        %v1438 = vmul.f32 %v1246, %v1374
        %v1439 = vmul.f32 %v1247, %v1375
        %v1440 = vmul.f32 %v1248, %v1376
        %v1441 = vmul.f32 %v1249, %v1377
        %v1442 = vmul.f32 %v1250, %v1378
        %v1443 = vmul.f32 %v1251, %v1379
        %v1444 = vmul.f32 %v1252, %v1380
        %v1445 = vmul.f32 %v1253, %v1381
        %v1446 = vmul.f32 %v1254, %v1382
        %v1447 = vmul.f32 %v1255, %v1383
        %v1448 = vmul.f32 %v1256, %v1384
        %v1449 = vmul.f32 %v1257, %v1385
        %v1450 = vmul.f32 %v1258, %v1386
        %v1451 = vmul.f32 %v1259, %v1387
        %v1452 = vmul.f32 %v1260, %v1388
        %v1453 = vmul.f32 %v1261, %v1389
        %v1454 = vmul.f32 %v1262, %v1390
        %v1455 = vmul.f32 %v1263, %v1391
        %v1456 = vmul.f32 %v1264, %v1392
        %v1457 = vmul.f32 %v1265, %v1393
        %v1458 = vmul.f32 %v1266, %v1394
        %v1459 = vmul.f32 %v1267, %v1395
        %v1460 = vmul.f32 %v1268, %v1396
        %v1461 = vmul.f32 %v1269, %v1397
        %v1462 = vmul.f32 %v1270, %v1398
        %v1463 = vmul.f32 %v1271, %v1399
        %v1464 = vmul.f32 %v1272, %v1400
        %v1465 = vmul.f32 %v1273, %v1401
        %v1466 = vmul.f32 %v1274, %v1402
        %v1467 = vmul.f32 %v1275, %v1403
        %v1468 = vmul.f32 %v1276, %v1404
        %v1469 = vmul.f32 %v1277, %v1405
        %v1470 = vmul.f32 %v1278, %v1406
        %v1471 = vmul.f32 %v1279, %v1407
        %v1472 = vmul.f32 %v1280, %v1408
        %v1473 = vmul.f32 %v1281, %v1409
        %v1474 = vmul.f32 %v1282, %v1410
        %v1475 = vmul.f32 %v1283, %v1411
        %v1476 = vmul.f32 %v433, %v1412
        %v1477 = vmul.f32 %v435, %v1413
        %v1478 = vmul.f32 %v439, %v1414
        %v1479 = vmul.f32 %v441, %v1415
        %v1480 = vmul.f32 %v445, %v1416
        %v1481 = vmul.f32 %v447, %v1417
        %v1482 = vmul.f32 %v451, %v1418
        %v1483 = vmul.f32 %v453, %v1419
        %v1484 = vmul.f32 %v457, %v1420
        %v1485 = vmul.f32 %v459, %v1421
        %v1486 = vmul.f32 %v463, %v1422
        %v1487 = vmul.f32 %v465, %v1423
        %v1488 = vmul.f32 %v469, %v1424
        %v1489 = vmul.f32 %v471, %v1425
        %v1490 = vmul.f32 %v475, %v1426
        %v1491 = vmul.f32 %v477, %v1427
        %v1492 = vmul.f32 %v481, %v1428
        %v1493 = vmul.f32 %v483, %v1429
        %v1494 = vmul.f32 %v487, %v1430
        %v1495 = vmul.f32 %v489, %v1431
        %v1496 = vmul.f32 %v493, %v1432
        %v1497 = vmul.f32 %v495, %v1433
        %v1498 = vmul.f32 %v499, %v1434
        %v1499 = vmul.f32 %v501, %v1435
        %v1500 = vmul.f32 %v505, %v1436
        %v1501 = vmul.f32 %v507, %v1437
        %v1502 = vmul.f32 %v511, %v1438
        %v1503 = vmul.f32 %v513, %v1439
        %v1504 = vmul.f32 %v517, %v1440
        %v1505 = vmul.f32 %v519, %v1441
        %v1506 = vmul.f32 %v523, %v1442
        %v1507 = vmul.f32 %v525, %v1443
        %v1508 = vmul.f32 %v529, %v1444
        %v1509 = vmul.f32 %v531, %v1445
        %v1510 = vmul.f32 %v535, %v1446
        %v1511 = vmul.f32 %v537, %v1447
        %v1512 = vmul.f32 %v541, %v1448
        %v1513 = vmul.f32 %v543, %v1449
        %v1514 = vmul.f32 %v547, %v1450
        %v1515 = vmul.f32 %v549, %v1451
        %v1516 = vmul.f32 %v553, %v1452
        %v1517 = vmul.f32 %v555, %v1453
        %v1518 = vmul.f32 %v559, %v1454
        %v1519 = vmul.f32 %v561, %v1455
        %v1520 = vmul.f32 %v565, %v1456
        %v1521 = vmul.f32 %v567, %v1457
        %v1522 = vmul.f32 %v571, %v1458
        %v1523 = vmul.f32 %v573, %v1459
        %v1524 = vmul.f32 %v577, %v1460
        %v1525 = vmul.f32 %v579, %v1461
        %v1526 = vmul.f32 %v583, %v1462
        %v1527 = vmul.f32 %v585, %v1463
        %v1528 = vmul.f32 %v589, %v1464
        %v1529 = vmul.f32 %v591, %v1465
        %v1530 = vmul.f32 %v595, %v1466
        %v1531 = vmul.f32 %v597, %v1467
        %v1532 = vmul.f32 %v601, %v1468
        %v1533 = vmul.f32 %v603, %v1469
        %v1534 = vmul.f32 %v607, %v1470
        %v1535 = vmul.f32 %v609, %v1471
        %v1536 = vmul.f32 %v613, %v1472
        %v1537 = vmul.f32 %v615, %v1473
        %v1538 = vmul.f32 %v619, %v1474
        %v1539 = vmul.f32 %v621, %v1475
        %v1540 = vmul.f32 %v965, 0.1
        %v1541 = vmul.f32 %v967, 0.1
        %v1542 = vmul.f32 %v971, 0.1
        %v1543 = vmul.f32 %v973, 0.1
        %v1544 = vmul.f32 %v977, 0.1
        %v1545 = vmul.f32 %v979, 0.1
        %v1546 = vmul.f32 %v983, 0.1
        %v1547 = vmul.f32 %v985, 0.1
        %v1548 = vmul.f32 %v989, 0.1
        %v1549 = vmul.f32 %v991, 0.1
        %v1550 = vmul.f32 %v995, 0.1
        %v1551 = vmul.f32 %v997, 0.1
        %v1552 = vmul.f32 %v1001, 0.1
        %v1553 = vmul.f32 %v1003, 0.1
        %v1554 = vmul.f32 %v1007, 0.1
        %v1555 = vmul.f32 %v1009, 0.1
        %v1556 = vmul.f32 %v1013, 0.1
        %v1557 = vmul.f32 %v1015, 0.1
        %v1558 = vmul.f32 %v1019, 0.1
        %v1559 = vmul.f32 %v1021, 0.1
        %v1560 = vmul.f32 %v1025, 0.1
        %v1561 = vmul.f32 %v1027, 0.1
        %v1562 = vmul.f32 %v1031, 0.1
        %v1563 = vmul.f32 %v1033, 0.1
        %v1564 = vmul.f32 %v1037, 0.1
        %v1565 = vmul.f32 %v1039, 0.1
        %v1566 = vmul.f32 %v1043, 0.1
        %v1567 = vmul.f32 %v1045, 0.1
        %v1568 = vmul.f32 %v1049, 0.1
        %v1569 = vmul.f32 %v1051, 0.1
        %v1570 = vmul.f32 %v1055, 0.1
        %v1571 = vmul.f32 %v1057, 0.1
        %v1572 = vmul.f32 %v1061, 0.1
        %v1573 = vmul.f32 %v1063, 0.1
        %v1574 = vmul.f32 %v1067, 0.1
        %v1575 = vmul.f32 %v1069, 0.1
        %v1576 = vmul.f32 %v1073, 0.1
        %v1577 = vmul.f32 %v1075, 0.1
        %v1578 = vmul.f32 %v1079, 0.1
        %v1579 = vmul.f32 %v1081, 0.1
        %v1580 = vmul.f32 %v1085, 0.1
        %v1581 = vmul.f32 %v1087, 0.1
        %v1582 = vmul.f32 %v1091, 0.1
        %v1583 = vmul.f32 %v1093, 0.1
        %v1584 = vmul.f32 %v1097, 0.1
        %v1585 = vmul.f32 %v1099, 0.1
        %v1586 = vmul.f32 %v1103, 0.1
        %v1587 = vmul.f32 %v1105, 0.1
        %v1588 = vmul.f32 %v1109, 0.1
        %v1589 = vmul.f32 %v1111, 0.1
        %v1590 = vmul.f32 %v1115, 0.1
        %v1591 = vmul.f32 %v1117, 0.1
        %v1592 = vmul.f32 %v1121, 0.1
        %v1593 = vmul.f32 %v1123, 0.1
        %v1594 = vmul.f32 %v1127, 0.1
        %v1595 = vmul.f32 %v1129, 0.1
        %v1596 = vmul.f32 %v1133, 0.1
        %v1597 = vmul.f32 %v1135, 0.1
        %v1598 = vmul.f32 %v1139, 0.1
        %v1599 = vmul.f32 %v1141, 0.1
        %v1600 = vmul.f32 %v1145, 0.1
        %v1601 = vmul.f32 %v1147, 0.1
        %v1602 = vmul.f32 %v1151, 0.1
        %v1603 = vmul.f32 %v1153, 0.1
        %v1604 = vadd.f32 %v1476, %v1540
        %v1605 = vadd.f32 %v1477, %v1541
        %v1606 = vadd.f32 %v1478, %v1542
        %v1607 = vadd.f32 %v1479, %v1543
        %v1608 = vadd.f32 %v1480, %v1544
        %v1609 = vadd.f32 %v1481, %v1545
        %v1610 = vadd.f32 %v1482, %v1546
        %v1611 = vadd.f32 %v1483, %v1547
        %v1612 = vadd.f32 %v1484, %v1548
        %v1613 = vadd.f32 %v1485, %v1549
        %v1614 = vadd.f32 %v1486, %v1550
        %v1615 = vadd.f32 %v1487, %v1551
        %v1616 = vadd.f32 %v1488, %v1552
        %v1617 = vadd.f32 %v1489, %v1553
        %v1618 = vadd.f32 %v1490, %v1554
        %v1619 = vadd.f32 %v1491, %v1555
        %v1620 = vadd.f32 %v1492, %v1556
        %v1621 = vadd.f32 %v1493, %v1557
        %v1622 = vadd.f32 %v1494, %v1558
        %v1623 = vadd.f32 %v1495, %v1559
        %v1624 = vadd.f32 %v1496, %v1560
        %v1625 = vadd.f32 %v1497, %v1561
        %v1626 = vadd.f32 %v1498, %v1562
        %v1627 = vadd.f32 %v1499, %v1563
        %v1628 = vadd.f32 %v1500, %v1564
        %v1629 = vadd.f32 %v1501, %v1565
        %v1630 = vadd.f32 %v1502, %v1566
        %v1631 = vadd.f32 %v1503, %v1567
        %v1632 = vadd.f32 %v1504, %v1568
        %v1633 = vadd.f32 %v1505, %v1569
        %v1634 = vadd.f32 %v1506, %v1570
        %v1635 = vadd.f32 %v1507, %v1571
        %v1636 = vadd.f32 %v1508, %v1572
        %v1637 = vadd.f32 %v1509, %v1573
        %v1638 = vadd.f32 %v1510, %v1574
        %v1639 = vadd.f32 %v1511, %v1575
        %v1640 = vadd.f32 %v1512, %v1576
        %v1641 = vadd.f32 %v1513, %v1577
        %v1642 = vadd.f32 %v1514, %v1578
        %v1643 = vadd.f32 %v1515, %v1579
        %v1644 = vadd.f32 %v1516, %v1580
        %v1645 = vadd.f32 %v1517, %v1581
        %v1646 = vadd.f32 %v1518, %v1582
        %v1647 = vadd.f32 %v1519, %v1583
        %v1648 = vadd.f32 %v1520, %v1584
        %v1649 = vadd.f32 %v1521, %v1585
        %v1650 = vadd.f32 %v1522, %v1586
        %v1651 = vadd.f32 %v1523, %v1587
        %v1652 = vadd.f32 %v1524, %v1588
        %v1653 = vadd.f32 %v1525, %v1589
        %v1654 = vadd.f32 %v1526, %v1590
        %v1655 = vadd.f32 %v1527, %v1591
        %v1656 = vadd.f32 %v1528, %v1592
        %v1657 = vadd.f32 %v1529, %v1593
        %v1658 = vadd.f32 %v1530, %v1594
        %v1659 = vadd.f32 %v1531, %v1595
        %v1660 = vadd.f32 %v1532, %v1596
        %v1661 = vadd.f32 %v1533, %v1597
        %v1662 = vadd.f32 %v1534, %v1598
        %v1663 = vadd.f32 %v1535, %v1599
        %v1664 = vadd.f32 %v1536, %v1600
        %v1665 = vadd.f32 %v1537, %v1601
        %v1666 = vadd.f32 %v1538, %v1602
        %v1667 = vadd.f32 %v1539, %v1603
        %v1668 = vsub.f32 1.0, %v699
        %v1669 = vsub.f32 1.0, %v701
        %v1670 = vsub.f32 1.0, %v705
        %v1671 = vsub.f32 1.0, %v707
        %v1672 = vsub.f32 1.0, %v711
        %v1673 = vsub.f32 1.0, %v713
        %v1674 = vsub.f32 1.0, %v717
        %v1675 = vsub.f32 1.0, %v719
        %v1676 = vsub.f32 1.0, %v723
        %v1677 = vsub.f32 1.0, %v725
        %v1678 = vsub.f32 1.0, %v729
        %v1679 = vsub.f32 1.0, %v731
        %v1680 = vsub.f32 1.0, %v735
        %v1681 = vsub.f32 1.0, %v737
        %v1682 = vsub.f32 1.0, %v741
        %v1683 = vsub.f32 1.0, %v743
        %v1684 = vsub.f32 1.0, %v747
        %v1685 = vsub.f32 1.0, %v749
        %v1686 = vsub.f32 1.0, %v753
        %v1687 = vsub.f32 1.0, %v755
        %v1688 = vsub.f32 1.0, %v759
        %v1689 = vsub.f32 1.0, %v761
        %v1690 = vsub.f32 1.0, %v765
        %v1691 = vsub.f32 1.0, %v767
        %v1692 = vsub.f32 1.0, %v771
        %v1693 = vsub.f32 1.0, %v773
        %v1694 = vsub.f32 1.0, %v777
        %v1695 = vsub.f32 1.0, %v779
        %v1696 = vsub.f32 1.0, %v783
        %v1697 = vsub.f32 1.0, %v785
        %v1698 = vsub.f32 1.0, %v789
        %v1699 = vsub.f32 1.0, %v791
        %v1700 = vsub.f32 1.0, %v795
        %v1701 = vsub.f32 1.0, %v797
        %v1702 = vsub.f32 1.0, %v801
        %v1703 = vsub.f32 1.0, %v803
        %v1704 = vsub.f32 1.0, %v807
        %v1705 = vsub.f32 1.0, %v809
        %v1706 = vsub.f32 1.0, %v813
        %v1707 = vsub.f32 1.0, %v815
        %v1708 = vsub.f32 1.0, %v819
        %v1709 = vsub.f32 1.0, %v821
        %v1710 = vsub.f32 1.0, %v825
        %v1711 = vsub.f32 1.0, %v827
        %v1712 = vsub.f32 1.0, %v831
        %v1713 = vsub.f32 1.0, %v833
        %v1714 = vsub.f32 1.0, %v837
        %v1715 = vsub.f32 1.0, %v839
        %v1716 = vsub.f32 1.0, %v843
        %v1717 = vsub.f32 1.0, %v845
        %v1718 = vsub.f32 1.0, %v849
        %v1719 = vsub.f32 1.0, %v851
        %v1720 = vsub.f32 1.0, %v855
        %v1721 = vsub.f32 1.0, %v857
        %v1722 = vsub.f32 1.0, %v861
        %v1723 = vsub.f32 1.0, %v863
        %v1724 = vsub.f32 1.0, %v867
        %v1725 = vsub.f32 1.0, %v869
        %v1726 = vsub.f32 1.0, %v873
        %v1727 = vsub.f32 1.0, %v875
        %v1728 = vsub.f32 1.0, %v879
        %v1729 = vsub.f32 1.0, %v881
        %v1730 = vsub.f32 1.0, %v885
        %v1731 = vsub.f32 1.0, %v887
        %v1732 = vmul.f32 %v1668, %v1412
        %v1733 = vmul.f32 %v1669, %v1413
        %v1734 = vmul.f32 %v1670, %v1414
        %v1735 = vmul.f32 %v1671, %v1415
        %v1736 = vmul.f32 %v1672, %v1416
        %v1737 = vmul.f32 %v1673, %v1417
        %v1738 = vmul.f32 %v1674, %v1418
        %v1739 = vmul.f32 %v1675, %v1419
        %v1740 = vmul.f32 %v1676, %v1420
        %v1741 = vmul.f32 %v1677, %v1421
        %v1742 = vmul.f32 %v1678, %v1422
        %v1743 = vmul.f32 %v1679, %v1423
        %v1744 = vmul.f32 %v1680, %v1424
        %v1745 = vmul.f32 %v1681, %v1425
        %v1746 = vmul.f32 %v1682, %v1426
        %v1747 = vmul.f32 %v1683, %v1427
        %v1748 = vmul.f32 %v1684, %v1428
        %v1749 = vmul.f32 %v1685, %v1429
        %v1750 = vmul.f32 %v1686, %v1430
        %v1751 = vmul.f32 %v1687, %v1431
        %v1752 = vmul.f32 %v1688, %v1432
        %v1753 = vmul.f32 %v1689, %v1433
        %v1754 = vmul.f32 %v1690, %v1434
        %v1755 = vmul.f32 %v1691, %v1435
        %v1756 = vmul.f32 %v1692, %v1436
        %v1757 = vmul.f32 %v1693, %v1437
        %v1758 = vmul.f32 %v1694, %v1438
        %v1759 = vmul.f32 %v1695, %v1439
        %v1760 = vmul.f32 %v1696, %v1440
        %v1761 = vmul.f32 %v1697, %v1441
        %v1762 = vmul.f32 %v1698, %v1442
        %v1763 = vmul.f32 %v1699, %v1443
        %v1764 = vmul.f32 %v1700, %v1444
        %v1765 = vmul.f32 %v1701, %v1445
        %v1766 = vmul.f32 %v1702, %v1446
        %v1767 = vmul.f32 %v1703, %v1447
        %v1768 = vmul.f32 %v1704, %v1448
        %v1769 = vmul.f32 %v1705, %v1449
        %v1770 = vmul.f32 %v1706, %v1450
        %v1771 = vmul.f32 %v1707, %v1451
        %v1772 = vmul.f32 %v1708, %v1452
        %v1773 = vmul.f32 %v1709, %v1453
        %v1774 = vmul.f32 %v1710, %v1454
        %v1775 = vmul.f32 %v1711, %v1455
        %v1776 = vmul.f32 %v1712, %v1456
        %v1777 = vmul.f32 %v1713, %v1457
        %v1778 = vmul.f32 %v1714, %v1458
        %v1779 = vmul.f32 %v1715, %v1459
        %v1780 = vmul.f32 %v1716, %v1460
        %v1781 = vmul.f32 %v1717, %v1461
        %v1782 = vmul.f32 %v1718, %v1462
        %v1783 = vmul.f32 %v1719, %v1463
        %v1784 = vmul.f32 %v1720, %v1464
        %v1785 = vmul.f32 %v1721, %v1465
        %v1786 = vmul.f32 %v1722, %v1466
        %v1787 = vmul.f32 %v1723, %v1467
        %v1788 = vmul.f32 %v1724, %v1468
        %v1789 = vmul.f32 %v1725, %v1469
        %v1790 = vmul.f32 %v1726, %v1470
        %v1791 = vmul.f32 %v1727, %v1471
        %v1792 = vmul.f32 %v1728, %v1472
        %v1793 = vmul.f32 %v1729, %v1473
        %v1794 = vmul.f32 %v1730, %v1474
        %v1795 = vmul.f32 %v1731, %v1475
        %v1797 = vlaneseq
        %v1798 = vshrl.u32 %v1797, 7
        %v1799 = vsub.s32 0, %v1798
        %v1800 = vrot.slane %v1155, %v1799
        %v1801 = vlaneseq
        %v1802 = vshrl.u32 %v1801, 7
        %v1803 = vsub.s32 1, %v1802
        %v1804 = vrot.slane %v1155, %v1803
        %v1807 = vmul.f32 %v1800, %v1732
        %v1808 = vmul.f32 %v1804, %v1733
        %v1809 = vmul.f32 %v1800, %v1734
        %v1810 = vmul.f32 %v1804, %v1735
        %v1811 = vmul.f32 %v1800, %v1736
        %v1812 = vmul.f32 %v1804, %v1737
        %v1813 = vmul.f32 %v1800, %v1738
        %v1814 = vmul.f32 %v1804, %v1739
        %v1815 = vmul.f32 %v1800, %v1740
        %v1816 = vmul.f32 %v1804, %v1741
        %v1817 = vmul.f32 %v1800, %v1742
        %v1818 = vmul.f32 %v1804, %v1743
        %v1819 = vmul.f32 %v1800, %v1744
        %v1820 = vmul.f32 %v1804, %v1745
        %v1821 = vmul.f32 %v1800, %v1746
        %v1822 = vmul.f32 %v1804, %v1747
        %v1823 = vmul.f32 %v1800, %v1748
        %v1824 = vmul.f32 %v1804, %v1749
        %v1825 = vmul.f32 %v1800, %v1750
        %v1826 = vmul.f32 %v1804, %v1751
        %v1827 = vmul.f32 %v1800, %v1752
        %v1828 = vmul.f32 %v1804, %v1753
        %v1829 = vmul.f32 %v1800, %v1754
        %v1830 = vmul.f32 %v1804, %v1755
        %v1831 = vmul.f32 %v1800, %v1756
        %v1832 = vmul.f32 %v1804, %v1757
        %v1833 = vmul.f32 %v1800, %v1758
        %v1834 = vmul.f32 %v1804, %v1759
        %v1835 = vmul.f32 %v1800, %v1760
        %v1836 = vmul.f32 %v1804, %v1761
        %v1837 = vmul.f32 %v1800, %v1762
        %v1838 = vmul.f32 %v1804, %v1763
        %v1839 = vmul.f32 %v1800, %v1764
        %v1840 = vmul.f32 %v1804, %v1765
        %v1841 = vmul.f32 %v1800, %v1766
        %v1842 = vmul.f32 %v1804, %v1767
        %v1843 = vmul.f32 %v1800, %v1768
        %v1844 = vmul.f32 %v1804, %v1769
        %v1845 = vmul.f32 %v1800, %v1770
        %v1846 = vmul.f32 %v1804, %v1771
        %v1847 = vmul.f32 %v1800, %v1772
        %v1848 = vmul.f32 %v1804, %v1773
        %v1849 = vmul.f32 %v1800, %v1774
        %v1850 = vmul.f32 %v1804, %v1775
        %v1851 = vmul.f32 %v1800, %v1776
        %v1852 = vmul.f32 %v1804, %v1777
        %v1853 = vmul.f32 %v1800, %v1778
        %v1854 = vmul.f32 %v1804, %v1779
        %v1855 = vmul.f32 %v1800, %v1780
        %v1856 = vmul.f32 %v1804, %v1781
        %v1857 = vmul.f32 %v1800, %v1782
        %v1858 = vmul.f32 %v1804, %v1783
        %v1859 = vmul.f32 %v1800, %v1784
        %v1860 = vmul.f32 %v1804, %v1785
        %v1861 = vmul.f32 %v1800, %v1786
        %v1862 = vmul.f32 %v1804, %v1787
        %v1863 = vmul.f32 %v1800, %v1788
        %v1864 = vmul.f32 %v1804, %v1789
        %v1865 = vmul.f32 %v1800, %v1790
        %v1866 = vmul.f32 %v1804, %v1791
        %v1867 = vmul.f32 %v1800, %v1792
        %v1868 = vmul.f32 %v1804, %v1793
        %v1869 = vmul.f32 %v1800, %v1794
        %v1870 = vmul.f32 %v1804, %v1795
        %v1871 = vmul.f32 %v965, %v965
        %v1872 = vmul.f32 %v967, %v967
        %v1873 = vmul.f32 %v971, %v971
        %v1874 = vmul.f32 %v973, %v973
        %v1875 = vmul.f32 %v977, %v977
        %v1876 = vmul.f32 %v979, %v979
        %v1877 = vmul.f32 %v983, %v983
        %v1878 = vmul.f32 %v985, %v985
        %v1879 = vmul.f32 %v989, %v989
        %v1880 = vmul.f32 %v991, %v991
        %v1881 = vmul.f32 %v995, %v995
        %v1882 = vmul.f32 %v997, %v997
        %v1883 = vmul.f32 %v1001, %v1001
        %v1884 = vmul.f32 %v1003, %v1003
        %v1885 = vmul.f32 %v1007, %v1007
        %v1886 = vmul.f32 %v1009, %v1009
        %v1887 = vmul.f32 %v1013, %v1013
        %v1888 = vmul.f32 %v1015, %v1015
        %v1889 = vmul.f32 %v1019, %v1019
        %v1890 = vmul.f32 %v1021, %v1021
        %v1891 = vmul.f32 %v1025, %v1025
        %v1892 = vmul.f32 %v1027, %v1027
        %v1893 = vmul.f32 %v1031, %v1031
        %v1894 = vmul.f32 %v1033, %v1033
        %v1895 = vmul.f32 %v1037, %v1037
        %v1896 = vmul.f32 %v1039, %v1039
        %v1897 = vmul.f32 %v1043, %v1043
        %v1898 = vmul.f32 %v1045, %v1045
        %v1899 = vmul.f32 %v1049, %v1049
        %v1900 = vmul.f32 %v1051, %v1051
        %v1901 = vmul.f32 %v1055, %v1055
        %v1902 = vmul.f32 %v1057, %v1057
        %v1903 = vmul.f32 %v1061, %v1061
        %v1904 = vmul.f32 %v1063, %v1063
        %v1905 = vmul.f32 %v1067, %v1067
        %v1906 = vmul.f32 %v1069, %v1069
        %v1907 = vmul.f32 %v1073, %v1073
        %v1908 = vmul.f32 %v1075, %v1075
        %v1909 = vmul.f32 %v1079, %v1079
        %v1910 = vmul.f32 %v1081, %v1081
        %v1911 = vmul.f32 %v1085, %v1085
        %v1912 = vmul.f32 %v1087, %v1087
        %v1913 = vmul.f32 %v1091, %v1091
        %v1914 = vmul.f32 %v1093, %v1093
        %v1915 = vmul.f32 %v1097, %v1097
        %v1916 = vmul.f32 %v1099, %v1099
        %v1917 = vmul.f32 %v1103, %v1103
        %v1918 = vmul.f32 %v1105, %v1105
        %v1919 = vmul.f32 %v1109, %v1109
        %v1920 = vmul.f32 %v1111, %v1111
        %v1921 = vmul.f32 %v1115, %v1115
        %v1922 = vmul.f32 %v1117, %v1117
        %v1923 = vmul.f32 %v1121, %v1121
        %v1924 = vmul.f32 %v1123, %v1123
        %v1925 = vmul.f32 %v1127, %v1127
        %v1926 = vmul.f32 %v1129, %v1129
        %v1927 = vmul.f32 %v1133, %v1133
        %v1928 = vmul.f32 %v1135, %v1135
        %v1929 = vmul.f32 %v1139, %v1139
        %v1930 = vmul.f32 %v1141, %v1141
        %v1931 = vmul.f32 %v1145, %v1145
        %v1932 = vmul.f32 %v1147, %v1147
        %v1933 = vmul.f32 %v1151, %v1151
        %v1934 = vmul.f32 %v1153, %v1153
        %v1935 = vsub.f32 %v1807, %v1871
        %v1936 = vsub.f32 %v1808, %v1872
        %v1937 = vsub.f32 %v1809, %v1873
        %v1938 = vsub.f32 %v1810, %v1874
        %v1939 = vsub.f32 %v1811, %v1875
        %v1940 = vsub.f32 %v1812, %v1876
        %v1941 = vsub.f32 %v1813, %v1877
        %v1942 = vsub.f32 %v1814, %v1878
        %v1943 = vsub.f32 %v1815, %v1879
        %v1944 = vsub.f32 %v1816, %v1880
        %v1945 = vsub.f32 %v1817, %v1881
        %v1946 = vsub.f32 %v1818, %v1882
        %v1947 = vsub.f32 %v1819, %v1883
        %v1948 = vsub.f32 %v1820, %v1884
        %v1949 = vsub.f32 %v1821, %v1885
        %v1950 = vsub.f32 %v1822, %v1886
        %v1951 = vsub.f32 %v1823, %v1887
        %v1952 = vsub.f32 %v1824, %v1888
        %v1953 = vsub.f32 %v1825, %v1889
        %v1954 = vsub.f32 %v1826, %v1890
        %v1955 = vsub.f32 %v1827, %v1891
        %v1956 = vsub.f32 %v1828, %v1892
        %v1957 = vsub.f32 %v1829, %v1893
        %v1958 = vsub.f32 %v1830, %v1894
        %v1959 = vsub.f32 %v1831, %v1895
        %v1960 = vsub.f32 %v1832, %v1896
        %v1961 = vsub.f32 %v1833, %v1897
        %v1962 = vsub.f32 %v1834, %v1898
        %v1963 = vsub.f32 %v1835, %v1899
        %v1964 = vsub.f32 %v1836, %v1900
        %v1965 = vsub.f32 %v1837, %v1901
        %v1966 = vsub.f32 %v1838, %v1902
        %v1967 = vsub.f32 %v1839, %v1903
        %v1968 = vsub.f32 %v1840, %v1904
        %v1969 = vsub.f32 %v1841, %v1905
        %v1970 = vsub.f32 %v1842, %v1906
        %v1971 = vsub.f32 %v1843, %v1907
        %v1972 = vsub.f32 %v1844, %v1908
        %v1973 = vsub.f32 %v1845, %v1909
        %v1974 = vsub.f32 %v1846, %v1910
        %v1975 = vsub.f32 %v1847, %v1911
        %v1976 = vsub.f32 %v1848, %v1912
        %v1977 = vsub.f32 %v1849, %v1913
        %v1978 = vsub.f32 %v1850, %v1914
        %v1979 = vsub.f32 %v1851, %v1915
        %v1980 = vsub.f32 %v1852, %v1916
        %v1981 = vsub.f32 %v1853, %v1917
        %v1982 = vsub.f32 %v1854, %v1918
        %v1983 = vsub.f32 %v1855, %v1919
        %v1984 = vsub.f32 %v1856, %v1920
        %v1985 = vsub.f32 %v1857, %v1921
        %v1986 = vsub.f32 %v1858, %v1922
        %v1987 = vsub.f32 %v1859, %v1923
        %v1988 = vsub.f32 %v1860, %v1924
        %v1989 = vsub.f32 %v1861, %v1925
        %v1990 = vsub.f32 %v1862, %v1926
        %v1991 = vsub.f32 %v1863, %v1927
        %v1992 = vsub.f32 %v1864, %v1928
        %v1993 = vsub.f32 %v1865, %v1929
        %v1994 = vsub.f32 %v1866, %v1930
        %v1995 = vsub.f32 %v1867, %v1931
        %v1996 = vsub.f32 %v1868, %v1932
        %v1997 = vsub.f32 %v1869, %v1933
        %v1998 = vsub.f32 %v1870, %v1934
        %v1999 = vand.u32 2147483647, %v1604
        %vm2000 = vcmp.le.f32.partialorder %v1999, 0.7853982
        %vm2001 = vcmp.lt.s32.totalorder %v1604, 0
        %v2002 = vand.u32 %v1604, 2139095040
        %v2003 = vshrl.u32 %v2002, 23
        %v2004 = vsub.s32 %v2003, 127
        %v2005 = vand.u32 2147483647, %v1604
        %v2006 = vand.u32 %v2005, 8388607
        %v2007 = vor.u32 %v2006, 8388608
        %v2008 = vsub.s32 0, %v2007
        %v2009 = vadd.s32 %v2004, 1
        %vm2010 = vcmp.gt.s32.totalorder %v2009, 0
        %v2011 = vsel %vm2010, %v2009, 0
        %v2012 = vshrl.u32 %v2011, 5
        %v2013 = vand.u32 %v2011, 31
        %v2014 = vsub.s32 32, %v2013
        %v2015 = vshrl.u32 683565275, %v2014
        %v2016 = vshll.u32 683565275, %v2013
        %v2017 = vshrl.u32 2475754826, %v2014
        %v2018 = vor.u32 %v2016, %v2017
        %v2019 = vshll.u32 2475754826, %v2013
        %v2020 = vshrl.u32 2131351028, %v2014
        %v2021 = vor.u32 %v2019, %v2020
        %v2022 = vshll.u32 2131351028, %v2013
        %v2023 = vshrl.u32 2102212464, %v2014
        %v2024 = vor.u32 %v2022, %v2023
        %v2025 = vshll.u32 2102212464, %v2013
        %v2026 = vshrl.u32 920167782, %v2014
        %v2027 = vor.u32 %v2025, %v2026
        %v2028 = vshll.u32 920167782, %v2013
        %v2029 = vshrl.u32 1326507024, %v2014
        %v2030 = vor.u32 %v2028, %v2029
        %vm2031 = vcmp.lt.s32.totalorder %v2012, 1
        %vm2032 = vcmp.lt.s32.totalorder %v2012, 2
        %vm2033 = vcmp.lt.s32.totalorder %v2012, 3
        %vm2034 = vcmp.lt.s32.totalorder %v2012, 4
        %v2035 = vsel %vm2031, %v2015, %v2018
        %v2036 = vsel %vm2034, %v2024, 2102212464
        %v2037 = vsel %vm2033, %v2021, %v2036
        %v2038 = vsel %vm2032, %v2035, %v2037
        %v2039 = vsel %vm2031, %v2018, %v2021
        %v2040 = vsel %vm2034, %v2027, 920167782
        %v2041 = vsel %vm2033, %v2024, %v2040
        %v2042 = vsel %vm2032, %v2039, %v2041
        %v2043 = vsel %vm2031, %v2021, %v2024
        %v2044 = vsel %vm2034, %v2030, 1326507024
        %v2045 = vsel %vm2033, %v2027, %v2044
        %v2046 = vsel %vm2032, %v2043, %v2045
        %v2047 = vshll.u32 %v2007, 8
        %v2048 = vmul.u32.u64.compose %v2047, %v2046
        %v2049 = vextract.low.u32 %v2048
        %v2050 = vextract.high.u32 %v2048
        %v2051 = vmul.u32.u64.compose %v2047, %v2042
        %v2052 = vextract.low.u32 %v2051
        %v2053 = vextract.high.u32 %v2051
        %v2054 = vmul.u32 %v2047, %v2038
        %v2055 = vadd.s32 %v2050, %v2052
        %vm2056 = vc.u32 %v2050, %v2052
        %v2057 = vadd.s32 %v2053, 1
        %v2058 = vsel %vm2056, %v2057, %v2053
        %v2059 = vadd.s32 %v2054, %v2058
        %v2060 = vadd.s32 %v2059, 536870912
        %v2061 = vshrl.u32 %v2060, 30
        %v2062 = vshll.u32 %v2061, 30
        %v2063 = vsub.s32 %v2059, %v2062
        %vm2064 = vcmp.lt.s32.totalorder %v2063, 0
        %v2065 = vsub.s32 0, %v2063
        %v2066 = vsel %vm2064, %v2065, %v2063
        %v2067 = vclz %v2066
        %v2068 = vsub.s32 %v2067, 2
        %vm2069 = vcmp.gt.s32.totalorder 0, %v2068
        %v2070 = vsel %vm2069, 0, %v2068
        %v2071 = vsub.s32 32, %v2070
        %v2072 = vshll.u32 %v2063, %v2070
        %v2073 = vshrl.u32 %v2055, %v2071
        %v2074 = vor.u32 %v2072, %v2073
        %v2075 = vsub.s32 4294967266, %v2070
        %v2076 = vadd.s32 %v2075, 127
        %v2077 = vshll.u32 %v2076, 23
        %v2078 = vor.u32 4788187, %v2077
        %v2079 = vand.u32 2147483647, %v2078
        %v2081 = vcvt.s32.f32 %v2074
        %v2082 = vmul.f32 %v2081, %v2079
        %v2083 = vxor.u32 %v2082, 2147483648
        %v2084 = vsel %vm2001, %v2083, %v2082
        %v2085 = vsub.s32 4, %v2061
        %v2086 = vsel %vm2001, %v2085, %v2061
        %v2087 = vsel %vm2000, %v1604, %v2084
        %v2088 = vsel %vm2000, 0, %v2086
        %v2089 = vcosq.f32.pop %v2087
        %v2090 = vsinq.f32.pop %v2087
        %vm2091 = vweird.f32 %v1604
        %v2092 = vand.u32 %v2088, 3
        %vm2093 = vcmp.lt.s32.totalorder %v2092, 2
        %vm2094 = vcmp.eq.s32.totalorder %v2092, 0
        %v2095 = vxor.u32 %v2090, 2147483648
        %v2096 = vsel %vm2094, %v2089, %v2095
        %vm2097 = vcmp.eq.s32.totalorder %v2092, 2
        %v2098 = vxor.u32 %v2089, 2147483648
        %v2099 = vsel %vm2097, %v2098, %v2090
        %v2100 = vsel %vm2093, %v2096, %v2099
        %v2101 = vsel %vm2091, nan, %v2100
        %v2102 = vand.u32 2147483647, %v1605
        %vm2103 = vcmp.le.f32.partialorder %v2102, 0.7853982
        %vm2104 = vcmp.lt.s32.totalorder %v1605, 0
        %v2105 = vand.u32 %v1605, 2139095040
        %v2106 = vshrl.u32 %v2105, 23
        %v2107 = vsub.s32 %v2106, 127
        %v2108 = vand.u32 2147483647, %v1605
        %v2109 = vand.u32 %v2108, 8388607
        %v2110 = vor.u32 %v2109, 8388608
        %v2111 = vsub.s32 0, %v2110
        %v2112 = vadd.s32 %v2107, 1
        %vm2113 = vcmp.gt.s32.totalorder %v2112, 0
        %v2114 = vsel %vm2113, %v2112, 0
        %v2115 = vshrl.u32 %v2114, 5
        %v2116 = vand.u32 %v2114, 31
        %v2117 = vsub.s32 32, %v2116
        %v2118 = vshrl.u32 683565275, %v2117
        %v2119 = vshll.u32 683565275, %v2116
        %v2120 = vshrl.u32 2475754826, %v2117
        %v2121 = vor.u32 %v2119, %v2120
        %v2122 = vshll.u32 2475754826, %v2116
        %v2123 = vshrl.u32 2131351028, %v2117
        %v2124 = vor.u32 %v2122, %v2123
        %v2125 = vshll.u32 2131351028, %v2116
        %v2126 = vshrl.u32 2102212464, %v2117
        %v2127 = vor.u32 %v2125, %v2126
        %v2128 = vshll.u32 2102212464, %v2116
        %v2129 = vshrl.u32 920167782, %v2117
        %v2130 = vor.u32 %v2128, %v2129
        %v2131 = vshll.u32 920167782, %v2116
        %v2132 = vshrl.u32 1326507024, %v2117
        %v2133 = vor.u32 %v2131, %v2132
        %vm2134 = vcmp.lt.s32.totalorder %v2115, 1
        %vm2135 = vcmp.lt.s32.totalorder %v2115, 2
        %vm2136 = vcmp.lt.s32.totalorder %v2115, 3
        %vm2137 = vcmp.lt.s32.totalorder %v2115, 4
        %v2138 = vsel %vm2134, %v2118, %v2121
        %v2139 = vsel %vm2137, %v2127, 2102212464
        %v2140 = vsel %vm2136, %v2124, %v2139
        %v2141 = vsel %vm2135, %v2138, %v2140
        %v2142 = vsel %vm2134, %v2121, %v2124
        %v2143 = vsel %vm2137, %v2130, 920167782
        %v2144 = vsel %vm2136, %v2127, %v2143
        %v2145 = vsel %vm2135, %v2142, %v2144
        %v2146 = vsel %vm2134, %v2124, %v2127
        %v2147 = vsel %vm2137, %v2133, 1326507024
        %v2148 = vsel %vm2136, %v2130, %v2147
        %v2149 = vsel %vm2135, %v2146, %v2148
        %v2150 = vshll.u32 %v2110, 8
        %v2151 = vmul.u32.u64.compose %v2150, %v2149
        %v2152 = vextract.low.u32 %v2151
        %v2153 = vextract.high.u32 %v2151
        %v2154 = vmul.u32.u64.compose %v2150, %v2145
        %v2155 = vextract.low.u32 %v2154
        %v2156 = vextract.high.u32 %v2154
        %v2157 = vmul.u32 %v2150, %v2141
        %v2158 = vadd.s32 %v2153, %v2155
        %vm2159 = vc.u32 %v2153, %v2155
        %v2160 = vadd.s32 %v2156, 1
        %v2161 = vsel %vm2159, %v2160, %v2156
        %v2162 = vadd.s32 %v2157, %v2161
        %v2163 = vadd.s32 %v2162, 536870912
        %v2164 = vshrl.u32 %v2163, 30
        %v2165 = vshll.u32 %v2164, 30
        %v2166 = vsub.s32 %v2162, %v2165
        %vm2167 = vcmp.lt.s32.totalorder %v2166, 0
        %v2168 = vsub.s32 0, %v2166
        %v2169 = vsel %vm2167, %v2168, %v2166
        %v2170 = vclz %v2169
        %v2171 = vsub.s32 %v2170, 2
        %vm2172 = vcmp.gt.s32.totalorder 0, %v2171
        %v2173 = vsel %vm2172, 0, %v2171
        %v2174 = vsub.s32 32, %v2173
        %v2175 = vshll.u32 %v2166, %v2173
        %v2176 = vshrl.u32 %v2158, %v2174
        %v2177 = vor.u32 %v2175, %v2176
        %v2178 = vsub.s32 4294967266, %v2173
        %v2179 = vadd.s32 %v2178, 127
        %v2180 = vshll.u32 %v2179, 23
        %v2181 = vor.u32 4788187, %v2180
        %v2182 = vand.u32 2147483647, %v2181
        %v2184 = vcvt.s32.f32 %v2177
        %v2185 = vmul.f32 %v2184, %v2182
        %v2186 = vxor.u32 %v2185, 2147483648
        %v2187 = vsel %vm2104, %v2186, %v2185
        %v2188 = vsub.s32 4, %v2164
        %v2189 = vsel %vm2104, %v2188, %v2164
        %v2190 = vsel %vm2103, %v1605, %v2187
        %v2191 = vsel %vm2103, 0, %v2189
        %v2192 = vcosq.f32.pop %v2190
        %v2193 = vsinq.f32.pop %v2190
        %vm2194 = vweird.f32 %v1605
        %v2195 = vand.u32 %v2191, 3
        %vm2196 = vcmp.lt.s32.totalorder %v2195, 2
        %vm2197 = vcmp.eq.s32.totalorder %v2195, 0
        %v2198 = vxor.u32 %v2193, 2147483648
        %v2199 = vsel %vm2197, %v2192, %v2198
        %vm2200 = vcmp.eq.s32.totalorder %v2195, 2
        %v2201 = vxor.u32 %v2192, 2147483648
        %v2202 = vsel %vm2200, %v2201, %v2193
        %v2203 = vsel %vm2196, %v2199, %v2202
        %v2204 = vsel %vm2194, nan, %v2203
        %v2205 = vand.u32 2147483647, %v1606
        %vm2206 = vcmp.le.f32.partialorder %v2205, 0.7853982
        %vm2207 = vcmp.lt.s32.totalorder %v1606, 0
        %v2208 = vand.u32 %v1606, 2139095040
        %v2209 = vshrl.u32 %v2208, 23
        %v2210 = vsub.s32 %v2209, 127
        %v2211 = vand.u32 2147483647, %v1606
        %v2212 = vand.u32 %v2211, 8388607
        %v2213 = vor.u32 %v2212, 8388608
        %v2214 = vsub.s32 0, %v2213
        %v2215 = vadd.s32 %v2210, 1
        %vm2216 = vcmp.gt.s32.totalorder %v2215, 0
        %v2217 = vsel %vm2216, %v2215, 0
        %v2218 = vshrl.u32 %v2217, 5
        %v2219 = vand.u32 %v2217, 31
        %v2220 = vsub.s32 32, %v2219
        %v2221 = vshrl.u32 683565275, %v2220
        %v2222 = vshll.u32 683565275, %v2219
        %v2223 = vshrl.u32 2475754826, %v2220
        %v2224 = vor.u32 %v2222, %v2223
        %v2225 = vshll.u32 2475754826, %v2219
        %v2226 = vshrl.u32 2131351028, %v2220
        %v2227 = vor.u32 %v2225, %v2226
        %v2228 = vshll.u32 2131351028, %v2219
        %v2229 = vshrl.u32 2102212464, %v2220
        %v2230 = vor.u32 %v2228, %v2229
        %v2231 = vshll.u32 2102212464, %v2219
        %v2232 = vshrl.u32 920167782, %v2220
        %v2233 = vor.u32 %v2231, %v2232
        %v2234 = vshll.u32 920167782, %v2219
        %v2235 = vshrl.u32 1326507024, %v2220
        %v2236 = vor.u32 %v2234, %v2235
        %vm2237 = vcmp.lt.s32.totalorder %v2218, 1
        %vm2238 = vcmp.lt.s32.totalorder %v2218, 2
        %vm2239 = vcmp.lt.s32.totalorder %v2218, 3
        %vm2240 = vcmp.lt.s32.totalorder %v2218, 4
        %v2241 = vsel %vm2237, %v2221, %v2224
        %v2242 = vsel %vm2240, %v2230, 2102212464
        %v2243 = vsel %vm2239, %v2227, %v2242
        %v2244 = vsel %vm2238, %v2241, %v2243
        %v2245 = vsel %vm2237, %v2224, %v2227
        %v2246 = vsel %vm2240, %v2233, 920167782
        %v2247 = vsel %vm2239, %v2230, %v2246
        %v2248 = vsel %vm2238, %v2245, %v2247
        %v2249 = vsel %vm2237, %v2227, %v2230
        %v2250 = vsel %vm2240, %v2236, 1326507024
        %v2251 = vsel %vm2239, %v2233, %v2250
        %v2252 = vsel %vm2238, %v2249, %v2251
        %v2253 = vshll.u32 %v2213, 8
        %v2254 = vmul.u32.u64.compose %v2253, %v2252
        %v2255 = vextract.low.u32 %v2254
        %v2256 = vextract.high.u32 %v2254
        %v2257 = vmul.u32.u64.compose %v2253, %v2248
        %v2258 = vextract.low.u32 %v2257
        %v2259 = vextract.high.u32 %v2257
        %v2260 = vmul.u32 %v2253, %v2244
        %v2261 = vadd.s32 %v2256, %v2258
        %vm2262 = vc.u32 %v2256, %v2258
        %v2263 = vadd.s32 %v2259, 1
        %v2264 = vsel %vm2262, %v2263, %v2259
        %v2265 = vadd.s32 %v2260, %v2264
        %v2266 = vadd.s32 %v2265, 536870912
        %v2267 = vshrl.u32 %v2266, 30
        %v2268 = vshll.u32 %v2267, 30
        %v2269 = vsub.s32 %v2265, %v2268
        %vm2270 = vcmp.lt.s32.totalorder %v2269, 0
        %v2271 = vsub.s32 0, %v2269
        %v2272 = vsel %vm2270, %v2271, %v2269
        %v2273 = vclz %v2272
        %v2274 = vsub.s32 %v2273, 2
        %vm2275 = vcmp.gt.s32.totalorder 0, %v2274
        %v2276 = vsel %vm2275, 0, %v2274
        %v2277 = vsub.s32 32, %v2276
        %v2278 = vshll.u32 %v2269, %v2276
        %v2279 = vshrl.u32 %v2261, %v2277
        %v2280 = vor.u32 %v2278, %v2279
        %v2281 = vsub.s32 4294967266, %v2276
        %v2282 = vadd.s32 %v2281, 127
        %v2283 = vshll.u32 %v2282, 23
        %v2284 = vor.u32 4788187, %v2283
        %v2285 = vand.u32 2147483647, %v2284
        %v2287 = vcvt.s32.f32 %v2280
        %v2288 = vmul.f32 %v2287, %v2285
        %v2289 = vxor.u32 %v2288, 2147483648
        %v2290 = vsel %vm2207, %v2289, %v2288
        %v2291 = vsub.s32 4, %v2267
        %v2292 = vsel %vm2207, %v2291, %v2267
        %v2293 = vsel %vm2206, %v1606, %v2290
        %v2294 = vsel %vm2206, 0, %v2292
        %v2295 = vcosq.f32.pop %v2293
        %v2296 = vsinq.f32.pop %v2293
        %vm2297 = vweird.f32 %v1606
        %v2298 = vand.u32 %v2294, 3
        %vm2299 = vcmp.lt.s32.totalorder %v2298, 2
        %vm2300 = vcmp.eq.s32.totalorder %v2298, 0
        %v2301 = vxor.u32 %v2296, 2147483648
        %v2302 = vsel %vm2300, %v2295, %v2301
        %vm2303 = vcmp.eq.s32.totalorder %v2298, 2
        %v2304 = vxor.u32 %v2295, 2147483648
        %v2305 = vsel %vm2303, %v2304, %v2296
        %v2306 = vsel %vm2299, %v2302, %v2305
        %v2307 = vsel %vm2297, nan, %v2306
        %v2308 = vand.u32 2147483647, %v1607
        %vm2309 = vcmp.le.f32.partialorder %v2308, 0.7853982
        %vm2310 = vcmp.lt.s32.totalorder %v1607, 0
        %v2311 = vand.u32 %v1607, 2139095040
        %v2312 = vshrl.u32 %v2311, 23
        %v2313 = vsub.s32 %v2312, 127
        %v2314 = vand.u32 2147483647, %v1607
        %v2315 = vand.u32 %v2314, 8388607
        %v2316 = vor.u32 %v2315, 8388608
        %v2317 = vsub.s32 0, %v2316
        %v2318 = vadd.s32 %v2313, 1
        %vm2319 = vcmp.gt.s32.totalorder %v2318, 0
        %v2320 = vsel %vm2319, %v2318, 0
        %v2321 = vshrl.u32 %v2320, 5
        %v2322 = vand.u32 %v2320, 31
        %v2323 = vsub.s32 32, %v2322
        %v2324 = vshrl.u32 683565275, %v2323
        %v2325 = vshll.u32 683565275, %v2322
        %v2326 = vshrl.u32 2475754826, %v2323
        %v2327 = vor.u32 %v2325, %v2326
        %v2328 = vshll.u32 2475754826, %v2322
        %v2329 = vshrl.u32 2131351028, %v2323
        %v2330 = vor.u32 %v2328, %v2329
        %v2331 = vshll.u32 2131351028, %v2322
        %v2332 = vshrl.u32 2102212464, %v2323
        %v2333 = vor.u32 %v2331, %v2332
        %v2334 = vshll.u32 2102212464, %v2322
        %v2335 = vshrl.u32 920167782, %v2323
        %v2336 = vor.u32 %v2334, %v2335
        %v2337 = vshll.u32 920167782, %v2322
        %v2338 = vshrl.u32 1326507024, %v2323
        %v2339 = vor.u32 %v2337, %v2338
        %vm2340 = vcmp.lt.s32.totalorder %v2321, 1
        %vm2341 = vcmp.lt.s32.totalorder %v2321, 2
        %vm2342 = vcmp.lt.s32.totalorder %v2321, 3
        %vm2343 = vcmp.lt.s32.totalorder %v2321, 4
        %v2344 = vsel %vm2340, %v2324, %v2327
        %v2345 = vsel %vm2343, %v2333, 2102212464
        %v2346 = vsel %vm2342, %v2330, %v2345
        %v2347 = vsel %vm2341, %v2344, %v2346
        %v2348 = vsel %vm2340, %v2327, %v2330
        %v2349 = vsel %vm2343, %v2336, 920167782
        %v2350 = vsel %vm2342, %v2333, %v2349
        %v2351 = vsel %vm2341, %v2348, %v2350
        %v2352 = vsel %vm2340, %v2330, %v2333
        %v2353 = vsel %vm2343, %v2339, 1326507024
        %v2354 = vsel %vm2342, %v2336, %v2353
        %v2355 = vsel %vm2341, %v2352, %v2354
        %v2356 = vshll.u32 %v2316, 8
        %v2357 = vmul.u32.u64.compose %v2356, %v2355
        %v2358 = vextract.low.u32 %v2357
        %v2359 = vextract.high.u32 %v2357
        %v2360 = vmul.u32.u64.compose %v2356, %v2351
        %v2361 = vextract.low.u32 %v2360
        %v2362 = vextract.high.u32 %v2360
        %v2363 = vmul.u32 %v2356, %v2347
        %v2364 = vadd.s32 %v2359, %v2361
        %vm2365 = vc.u32 %v2359, %v2361
        %v2366 = vadd.s32 %v2362, 1
        %v2367 = vsel %vm2365, %v2366, %v2362
        %v2368 = vadd.s32 %v2363, %v2367
        %v2369 = vadd.s32 %v2368, 536870912
        %v2370 = vshrl.u32 %v2369, 30
        %v2371 = vshll.u32 %v2370, 30
        %v2372 = vsub.s32 %v2368, %v2371
        %vm2373 = vcmp.lt.s32.totalorder %v2372, 0
        %v2374 = vsub.s32 0, %v2372
        %v2375 = vsel %vm2373, %v2374, %v2372
        %v2376 = vclz %v2375
        %v2377 = vsub.s32 %v2376, 2
        %vm2378 = vcmp.gt.s32.totalorder 0, %v2377
        %v2379 = vsel %vm2378, 0, %v2377
        %v2380 = vsub.s32 32, %v2379
        %v2381 = vshll.u32 %v2372, %v2379
        %v2382 = vshrl.u32 %v2364, %v2380
        %v2383 = vor.u32 %v2381, %v2382
        %v2384 = vsub.s32 4294967266, %v2379
        %v2385 = vadd.s32 %v2384, 127
        %v2386 = vshll.u32 %v2385, 23
        %v2387 = vor.u32 4788187, %v2386
        %v2388 = vand.u32 2147483647, %v2387
        %v2390 = vcvt.s32.f32 %v2383
        %v2391 = vmul.f32 %v2390, %v2388
        %v2392 = vxor.u32 %v2391, 2147483648
        %v2393 = vsel %vm2310, %v2392, %v2391
        %v2394 = vsub.s32 4, %v2370
        %v2395 = vsel %vm2310, %v2394, %v2370
        %v2396 = vsel %vm2309, %v1607, %v2393
        %v2397 = vsel %vm2309, 0, %v2395
        %v2398 = vcosq.f32.pop %v2396
        %v2399 = vsinq.f32.pop %v2396
        %vm2400 = vweird.f32 %v1607
        %v2401 = vand.u32 %v2397, 3
        %vm2402 = vcmp.lt.s32.totalorder %v2401, 2
        %vm2403 = vcmp.eq.s32.totalorder %v2401, 0
        %v2404 = vxor.u32 %v2399, 2147483648
        %v2405 = vsel %vm2403, %v2398, %v2404
        %vm2406 = vcmp.eq.s32.totalorder %v2401, 2
        %v2407 = vxor.u32 %v2398, 2147483648
        %v2408 = vsel %vm2406, %v2407, %v2399
        %v2409 = vsel %vm2402, %v2405, %v2408
        %v2410 = vsel %vm2400, nan, %v2409
        %v2411 = vand.u32 2147483647, %v1608
        %vm2412 = vcmp.le.f32.partialorder %v2411, 0.7853982
        %vm2413 = vcmp.lt.s32.totalorder %v1608, 0
        %v2414 = vand.u32 %v1608, 2139095040
        %v2415 = vshrl.u32 %v2414, 23
        %v2416 = vsub.s32 %v2415, 127
        %v2417 = vand.u32 2147483647, %v1608
        %v2418 = vand.u32 %v2417, 8388607
        %v2419 = vor.u32 %v2418, 8388608
        %v2420 = vsub.s32 0, %v2419
        %v2421 = vadd.s32 %v2416, 1
        %vm2422 = vcmp.gt.s32.totalorder %v2421, 0
        %v2423 = vsel %vm2422, %v2421, 0
        %v2424 = vshrl.u32 %v2423, 5
        %v2425 = vand.u32 %v2423, 31
        %v2426 = vsub.s32 32, %v2425
        %v2427 = vshrl.u32 683565275, %v2426
        %v2428 = vshll.u32 683565275, %v2425
        %v2429 = vshrl.u32 2475754826, %v2426
        %v2430 = vor.u32 %v2428, %v2429
        %v2431 = vshll.u32 2475754826, %v2425
        %v2432 = vshrl.u32 2131351028, %v2426
        %v2433 = vor.u32 %v2431, %v2432
        %v2434 = vshll.u32 2131351028, %v2425
        %v2435 = vshrl.u32 2102212464, %v2426
        %v2436 = vor.u32 %v2434, %v2435
        %v2437 = vshll.u32 2102212464, %v2425
        %v2438 = vshrl.u32 920167782, %v2426
        %v2439 = vor.u32 %v2437, %v2438
        %v2440 = vshll.u32 920167782, %v2425
        %v2441 = vshrl.u32 1326507024, %v2426
        %v2442 = vor.u32 %v2440, %v2441
        %vm2443 = vcmp.lt.s32.totalorder %v2424, 1
        %vm2444 = vcmp.lt.s32.totalorder %v2424, 2
        %vm2445 = vcmp.lt.s32.totalorder %v2424, 3
        %vm2446 = vcmp.lt.s32.totalorder %v2424, 4
        %v2447 = vsel %vm2443, %v2427, %v2430
        %v2448 = vsel %vm2446, %v2436, 2102212464
        %v2449 = vsel %vm2445, %v2433, %v2448
        %v2450 = vsel %vm2444, %v2447, %v2449
        %v2451 = vsel %vm2443, %v2430, %v2433
        %v2452 = vsel %vm2446, %v2439, 920167782
        %v2453 = vsel %vm2445, %v2436, %v2452
        %v2454 = vsel %vm2444, %v2451, %v2453
        %v2455 = vsel %vm2443, %v2433, %v2436
        %v2456 = vsel %vm2446, %v2442, 1326507024
        %v2457 = vsel %vm2445, %v2439, %v2456
        %v2458 = vsel %vm2444, %v2455, %v2457
        %v2459 = vshll.u32 %v2419, 8
        %v2460 = vmul.u32.u64.compose %v2459, %v2458
        %v2461 = vextract.low.u32 %v2460
        %v2462 = vextract.high.u32 %v2460
        %v2463 = vmul.u32.u64.compose %v2459, %v2454
        %v2464 = vextract.low.u32 %v2463
        %v2465 = vextract.high.u32 %v2463
        %v2466 = vmul.u32 %v2459, %v2450
        %v2467 = vadd.s32 %v2462, %v2464
        %vm2468 = vc.u32 %v2462, %v2464
        %v2469 = vadd.s32 %v2465, 1
        %v2470 = vsel %vm2468, %v2469, %v2465
        %v2471 = vadd.s32 %v2466, %v2470
        %v2472 = vadd.s32 %v2471, 536870912
        %v2473 = vshrl.u32 %v2472, 30
        %v2474 = vshll.u32 %v2473, 30
        %v2475 = vsub.s32 %v2471, %v2474
        %vm2476 = vcmp.lt.s32.totalorder %v2475, 0
        %v2477 = vsub.s32 0, %v2475
        %v2478 = vsel %vm2476, %v2477, %v2475
        %v2479 = vclz %v2478
        %v2480 = vsub.s32 %v2479, 2
        %vm2481 = vcmp.gt.s32.totalorder 0, %v2480
        %v2482 = vsel %vm2481, 0, %v2480
        %v2483 = vsub.s32 32, %v2482
        %v2484 = vshll.u32 %v2475, %v2482
        %v2485 = vshrl.u32 %v2467, %v2483
        %v2486 = vor.u32 %v2484, %v2485
        %v2487 = vsub.s32 4294967266, %v2482
        %v2488 = vadd.s32 %v2487, 127
        %v2489 = vshll.u32 %v2488, 23
        %v2490 = vor.u32 4788187, %v2489
        %v2491 = vand.u32 2147483647, %v2490
        %v2493 = vcvt.s32.f32 %v2486
        %v2494 = vmul.f32 %v2493, %v2491
        %v2495 = vxor.u32 %v2494, 2147483648
        %v2496 = vsel %vm2413, %v2495, %v2494
        %v2497 = vsub.s32 4, %v2473
        %v2498 = vsel %vm2413, %v2497, %v2473
        %v2499 = vsel %vm2412, %v1608, %v2496
        %v2500 = vsel %vm2412, 0, %v2498
        %v2501 = vcosq.f32.pop %v2499
        %v2502 = vsinq.f32.pop %v2499
        %vm2503 = vweird.f32 %v1608
        %v2504 = vand.u32 %v2500, 3
        %vm2505 = vcmp.lt.s32.totalorder %v2504, 2
        %vm2506 = vcmp.eq.s32.totalorder %v2504, 0
        %v2507 = vxor.u32 %v2502, 2147483648
        %v2508 = vsel %vm2506, %v2501, %v2507
        %vm2509 = vcmp.eq.s32.totalorder %v2504, 2
        %v2510 = vxor.u32 %v2501, 2147483648
        %v2511 = vsel %vm2509, %v2510, %v2502
        %v2512 = vsel %vm2505, %v2508, %v2511
        %v2513 = vsel %vm2503, nan, %v2512
        %v2514 = vand.u32 2147483647, %v1609
        %vm2515 = vcmp.le.f32.partialorder %v2514, 0.7853982
        %vm2516 = vcmp.lt.s32.totalorder %v1609, 0
        %v2517 = vand.u32 %v1609, 2139095040
        %v2518 = vshrl.u32 %v2517, 23
        %v2519 = vsub.s32 %v2518, 127
        %v2520 = vand.u32 2147483647, %v1609
        %v2521 = vand.u32 %v2520, 8388607
        %v2522 = vor.u32 %v2521, 8388608
        %v2523 = vsub.s32 0, %v2522
        %v2524 = vadd.s32 %v2519, 1
        %vm2525 = vcmp.gt.s32.totalorder %v2524, 0
        %v2526 = vsel %vm2525, %v2524, 0
        %v2527 = vshrl.u32 %v2526, 5
        %v2528 = vand.u32 %v2526, 31
        %v2529 = vsub.s32 32, %v2528
        %v2530 = vshrl.u32 683565275, %v2529
        %v2531 = vshll.u32 683565275, %v2528
        %v2532 = vshrl.u32 2475754826, %v2529
        %v2533 = vor.u32 %v2531, %v2532
        %v2534 = vshll.u32 2475754826, %v2528
        %v2535 = vshrl.u32 2131351028, %v2529
        %v2536 = vor.u32 %v2534, %v2535
        %v2537 = vshll.u32 2131351028, %v2528
        %v2538 = vshrl.u32 2102212464, %v2529
        %v2539 = vor.u32 %v2537, %v2538
        %v2540 = vshll.u32 2102212464, %v2528
        %v2541 = vshrl.u32 920167782, %v2529
        %v2542 = vor.u32 %v2540, %v2541
        %v2543 = vshll.u32 920167782, %v2528
        %v2544 = vshrl.u32 1326507024, %v2529
        %v2545 = vor.u32 %v2543, %v2544
        %vm2546 = vcmp.lt.s32.totalorder %v2527, 1
        %vm2547 = vcmp.lt.s32.totalorder %v2527, 2
        %vm2548 = vcmp.lt.s32.totalorder %v2527, 3
        %vm2549 = vcmp.lt.s32.totalorder %v2527, 4
        %v2550 = vsel %vm2546, %v2530, %v2533
        %v2551 = vsel %vm2549, %v2539, 2102212464
        %v2552 = vsel %vm2548, %v2536, %v2551
        %v2553 = vsel %vm2547, %v2550, %v2552
        %v2554 = vsel %vm2546, %v2533, %v2536
        %v2555 = vsel %vm2549, %v2542, 920167782
        %v2556 = vsel %vm2548, %v2539, %v2555
        %v2557 = vsel %vm2547, %v2554, %v2556
        %v2558 = vsel %vm2546, %v2536, %v2539
        %v2559 = vsel %vm2549, %v2545, 1326507024
        %v2560 = vsel %vm2548, %v2542, %v2559
        %v2561 = vsel %vm2547, %v2558, %v2560
        %v2562 = vshll.u32 %v2522, 8
        %v2563 = vmul.u32.u64.compose %v2562, %v2561
        %v2564 = vextract.low.u32 %v2563
        %v2565 = vextract.high.u32 %v2563
        %v2566 = vmul.u32.u64.compose %v2562, %v2557
        %v2567 = vextract.low.u32 %v2566
        %v2568 = vextract.high.u32 %v2566
        %v2569 = vmul.u32 %v2562, %v2553
        %v2570 = vadd.s32 %v2565, %v2567
        %vm2571 = vc.u32 %v2565, %v2567
        %v2572 = vadd.s32 %v2568, 1
        %v2573 = vsel %vm2571, %v2572, %v2568
        %v2574 = vadd.s32 %v2569, %v2573
        %v2575 = vadd.s32 %v2574, 536870912
        %v2576 = vshrl.u32 %v2575, 30
        %v2577 = vshll.u32 %v2576, 30
        %v2578 = vsub.s32 %v2574, %v2577
        %vm2579 = vcmp.lt.s32.totalorder %v2578, 0
        %v2580 = vsub.s32 0, %v2578
        %v2581 = vsel %vm2579, %v2580, %v2578
        %v2582 = vclz %v2581
        %v2583 = vsub.s32 %v2582, 2
        %vm2584 = vcmp.gt.s32.totalorder 0, %v2583
        %v2585 = vsel %vm2584, 0, %v2583
        %v2586 = vsub.s32 32, %v2585
        %v2587 = vshll.u32 %v2578, %v2585
        %v2588 = vshrl.u32 %v2570, %v2586
        %v2589 = vor.u32 %v2587, %v2588
        %v2590 = vsub.s32 4294967266, %v2585
        %v2591 = vadd.s32 %v2590, 127
        %v2592 = vshll.u32 %v2591, 23
        %v2593 = vor.u32 4788187, %v2592
        %v2594 = vand.u32 2147483647, %v2593
        %v2596 = vcvt.s32.f32 %v2589
        %v2597 = vmul.f32 %v2596, %v2594
        %v2598 = vxor.u32 %v2597, 2147483648
        %v2599 = vsel %vm2516, %v2598, %v2597
        %v2600 = vsub.s32 4, %v2576
        %v2601 = vsel %vm2516, %v2600, %v2576
        %v2602 = vsel %vm2515, %v1609, %v2599
        %v2603 = vsel %vm2515, 0, %v2601
        %v2604 = vcosq.f32.pop %v2602
        %v2605 = vsinq.f32.pop %v2602
        %vm2606 = vweird.f32 %v1609
        %v2607 = vand.u32 %v2603, 3
        %vm2608 = vcmp.lt.s32.totalorder %v2607, 2
        %vm2609 = vcmp.eq.s32.totalorder %v2607, 0
        %v2610 = vxor.u32 %v2605, 2147483648
        %v2611 = vsel %vm2609, %v2604, %v2610
        %vm2612 = vcmp.eq.s32.totalorder %v2607, 2
        %v2613 = vxor.u32 %v2604, 2147483648
        %v2614 = vsel %vm2612, %v2613, %v2605
        %v2615 = vsel %vm2608, %v2611, %v2614
        %v2616 = vsel %vm2606, nan, %v2615
        %v2617 = vand.u32 2147483647, %v1610
        %vm2618 = vcmp.le.f32.partialorder %v2617, 0.7853982
        %vm2619 = vcmp.lt.s32.totalorder %v1610, 0
        %v2620 = vand.u32 %v1610, 2139095040
        %v2621 = vshrl.u32 %v2620, 23
        %v2622 = vsub.s32 %v2621, 127
        %v2623 = vand.u32 2147483647, %v1610
        %v2624 = vand.u32 %v2623, 8388607
        %v2625 = vor.u32 %v2624, 8388608
        %v2626 = vsub.s32 0, %v2625
        %v2627 = vadd.s32 %v2622, 1
        %vm2628 = vcmp.gt.s32.totalorder %v2627, 0
        %v2629 = vsel %vm2628, %v2627, 0
        %v2630 = vshrl.u32 %v2629, 5
        %v2631 = vand.u32 %v2629, 31
        %v2632 = vsub.s32 32, %v2631
        %v2633 = vshrl.u32 683565275, %v2632
        %v2634 = vshll.u32 683565275, %v2631
        %v2635 = vshrl.u32 2475754826, %v2632
        %v2636 = vor.u32 %v2634, %v2635
        %v2637 = vshll.u32 2475754826, %v2631
        %v2638 = vshrl.u32 2131351028, %v2632
        %v2639 = vor.u32 %v2637, %v2638
        %v2640 = vshll.u32 2131351028, %v2631
        %v2641 = vshrl.u32 2102212464, %v2632
        %v2642 = vor.u32 %v2640, %v2641
        %v2643 = vshll.u32 2102212464, %v2631
        %v2644 = vshrl.u32 920167782, %v2632
        %v2645 = vor.u32 %v2643, %v2644
        %v2646 = vshll.u32 920167782, %v2631
        %v2647 = vshrl.u32 1326507024, %v2632
        %v2648 = vor.u32 %v2646, %v2647
        %vm2649 = vcmp.lt.s32.totalorder %v2630, 1
        %vm2650 = vcmp.lt.s32.totalorder %v2630, 2
        %vm2651 = vcmp.lt.s32.totalorder %v2630, 3
        %vm2652 = vcmp.lt.s32.totalorder %v2630, 4
        %v2653 = vsel %vm2649, %v2633, %v2636
        %v2654 = vsel %vm2652, %v2642, 2102212464
        %v2655 = vsel %vm2651, %v2639, %v2654
        %v2656 = vsel %vm2650, %v2653, %v2655
        %v2657 = vsel %vm2649, %v2636, %v2639
        %v2658 = vsel %vm2652, %v2645, 920167782
        %v2659 = vsel %vm2651, %v2642, %v2658
        %v2660 = vsel %vm2650, %v2657, %v2659
        %v2661 = vsel %vm2649, %v2639, %v2642
        %v2662 = vsel %vm2652, %v2648, 1326507024
        %v2663 = vsel %vm2651, %v2645, %v2662
        %v2664 = vsel %vm2650, %v2661, %v2663
        %v2665 = vshll.u32 %v2625, 8
        %v2666 = vmul.u32.u64.compose %v2665, %v2664
        %v2667 = vextract.low.u32 %v2666
        %v2668 = vextract.high.u32 %v2666
        %v2669 = vmul.u32.u64.compose %v2665, %v2660
        %v2670 = vextract.low.u32 %v2669
        %v2671 = vextract.high.u32 %v2669
        %v2672 = vmul.u32 %v2665, %v2656
        %v2673 = vadd.s32 %v2668, %v2670
        %vm2674 = vc.u32 %v2668, %v2670
        %v2675 = vadd.s32 %v2671, 1
        %v2676 = vsel %vm2674, %v2675, %v2671
        %v2677 = vadd.s32 %v2672, %v2676
        %v2678 = vadd.s32 %v2677, 536870912
        %v2679 = vshrl.u32 %v2678, 30
        %v2680 = vshll.u32 %v2679, 30
        %v2681 = vsub.s32 %v2677, %v2680
        %vm2682 = vcmp.lt.s32.totalorder %v2681, 0
        %v2683 = vsub.s32 0, %v2681
        %v2684 = vsel %vm2682, %v2683, %v2681
        %v2685 = vclz %v2684
        %v2686 = vsub.s32 %v2685, 2
        %vm2687 = vcmp.gt.s32.totalorder 0, %v2686
        %v2688 = vsel %vm2687, 0, %v2686
        %v2689 = vsub.s32 32, %v2688
        %v2690 = vshll.u32 %v2681, %v2688
        %v2691 = vshrl.u32 %v2673, %v2689
        %v2692 = vor.u32 %v2690, %v2691
        %v2693 = vsub.s32 4294967266, %v2688
        %v2694 = vadd.s32 %v2693, 127
        %v2695 = vshll.u32 %v2694, 23
        %v2696 = vor.u32 4788187, %v2695
        %v2697 = vand.u32 2147483647, %v2696
        %v2699 = vcvt.s32.f32 %v2692
        %v2700 = vmul.f32 %v2699, %v2697
        %v2701 = vxor.u32 %v2700, 2147483648
        %v2702 = vsel %vm2619, %v2701, %v2700
        %v2703 = vsub.s32 4, %v2679
        %v2704 = vsel %vm2619, %v2703, %v2679
        %v2705 = vsel %vm2618, %v1610, %v2702
        %v2706 = vsel %vm2618, 0, %v2704
        %v2707 = vcosq.f32.pop %v2705
        %v2708 = vsinq.f32.pop %v2705
        %vm2709 = vweird.f32 %v1610
        %v2710 = vand.u32 %v2706, 3
        %vm2711 = vcmp.lt.s32.totalorder %v2710, 2
        %vm2712 = vcmp.eq.s32.totalorder %v2710, 0
        %v2713 = vxor.u32 %v2708, 2147483648
        %v2714 = vsel %vm2712, %v2707, %v2713
        %vm2715 = vcmp.eq.s32.totalorder %v2710, 2
        %v2716 = vxor.u32 %v2707, 2147483648
        %v2717 = vsel %vm2715, %v2716, %v2708
        %v2718 = vsel %vm2711, %v2714, %v2717
        %v2719 = vsel %vm2709, nan, %v2718
        %v2720 = vand.u32 2147483647, %v1611
        %vm2721 = vcmp.le.f32.partialorder %v2720, 0.7853982
        %vm2722 = vcmp.lt.s32.totalorder %v1611, 0
        %v2723 = vand.u32 %v1611, 2139095040
        %v2724 = vshrl.u32 %v2723, 23
        %v2725 = vsub.s32 %v2724, 127
        %v2726 = vand.u32 2147483647, %v1611
        %v2727 = vand.u32 %v2726, 8388607
        %v2728 = vor.u32 %v2727, 8388608
        %v2729 = vsub.s32 0, %v2728
        %v2730 = vadd.s32 %v2725, 1
        %vm2731 = vcmp.gt.s32.totalorder %v2730, 0
        %v2732 = vsel %vm2731, %v2730, 0
        %v2733 = vshrl.u32 %v2732, 5
        %v2734 = vand.u32 %v2732, 31
        %v2735 = vsub.s32 32, %v2734
        %v2736 = vshrl.u32 683565275, %v2735
        %v2737 = vshll.u32 683565275, %v2734
        %v2738 = vshrl.u32 2475754826, %v2735
        %v2739 = vor.u32 %v2737, %v2738
        %v2740 = vshll.u32 2475754826, %v2734
        %v2741 = vshrl.u32 2131351028, %v2735
        %v2742 = vor.u32 %v2740, %v2741
        %v2743 = vshll.u32 2131351028, %v2734
        %v2744 = vshrl.u32 2102212464, %v2735
        %v2745 = vor.u32 %v2743, %v2744
        %v2746 = vshll.u32 2102212464, %v2734
        %v2747 = vshrl.u32 920167782, %v2735
        %v2748 = vor.u32 %v2746, %v2747
        %v2749 = vshll.u32 920167782, %v2734
        %v2750 = vshrl.u32 1326507024, %v2735
        %v2751 = vor.u32 %v2749, %v2750
        %vm2752 = vcmp.lt.s32.totalorder %v2733, 1
        %vm2753 = vcmp.lt.s32.totalorder %v2733, 2
        %vm2754 = vcmp.lt.s32.totalorder %v2733, 3
        %vm2755 = vcmp.lt.s32.totalorder %v2733, 4
        %v2756 = vsel %vm2752, %v2736, %v2739
        %v2757 = vsel %vm2755, %v2745, 2102212464
        %v2758 = vsel %vm2754, %v2742, %v2757
        %v2759 = vsel %vm2753, %v2756, %v2758
        %v2760 = vsel %vm2752, %v2739, %v2742
        %v2761 = vsel %vm2755, %v2748, 920167782
        %v2762 = vsel %vm2754, %v2745, %v2761
        %v2763 = vsel %vm2753, %v2760, %v2762
        %v2764 = vsel %vm2752, %v2742, %v2745
        %v2765 = vsel %vm2755, %v2751, 1326507024
        %v2766 = vsel %vm2754, %v2748, %v2765
        %v2767 = vsel %vm2753, %v2764, %v2766
        %v2768 = vshll.u32 %v2728, 8
        %v2769 = vmul.u32.u64.compose %v2768, %v2767
        %v2770 = vextract.low.u32 %v2769
        %v2771 = vextract.high.u32 %v2769
        %v2772 = vmul.u32.u64.compose %v2768, %v2763
        %v2773 = vextract.low.u32 %v2772
        %v2774 = vextract.high.u32 %v2772
        %v2775 = vmul.u32 %v2768, %v2759
        %v2776 = vadd.s32 %v2771, %v2773
        %vm2777 = vc.u32 %v2771, %v2773
        %v2778 = vadd.s32 %v2774, 1
        %v2779 = vsel %vm2777, %v2778, %v2774
        %v2780 = vadd.s32 %v2775, %v2779
        %v2781 = vadd.s32 %v2780, 536870912
        %v2782 = vshrl.u32 %v2781, 30
        %v2783 = vshll.u32 %v2782, 30
        %v2784 = vsub.s32 %v2780, %v2783
        %vm2785 = vcmp.lt.s32.totalorder %v2784, 0
        %v2786 = vsub.s32 0, %v2784
        %v2787 = vsel %vm2785, %v2786, %v2784
        %v2788 = vclz %v2787
        %v2789 = vsub.s32 %v2788, 2
        %vm2790 = vcmp.gt.s32.totalorder 0, %v2789
        %v2791 = vsel %vm2790, 0, %v2789
        %v2792 = vsub.s32 32, %v2791
        %v2793 = vshll.u32 %v2784, %v2791
        %v2794 = vshrl.u32 %v2776, %v2792
        %v2795 = vor.u32 %v2793, %v2794
        %v2796 = vsub.s32 4294967266, %v2791
        %v2797 = vadd.s32 %v2796, 127
        %v2798 = vshll.u32 %v2797, 23
        %v2799 = vor.u32 4788187, %v2798
        %v2800 = vand.u32 2147483647, %v2799
        %v2802 = vcvt.s32.f32 %v2795
        %v2803 = vmul.f32 %v2802, %v2800
        %v2804 = vxor.u32 %v2803, 2147483648
        %v2805 = vsel %vm2722, %v2804, %v2803
        %v2806 = vsub.s32 4, %v2782
        %v2807 = vsel %vm2722, %v2806, %v2782
        %v2808 = vsel %vm2721, %v1611, %v2805
        %v2809 = vsel %vm2721, 0, %v2807
        %v2810 = vcosq.f32.pop %v2808
        %v2811 = vsinq.f32.pop %v2808
        %vm2812 = vweird.f32 %v1611
        %v2813 = vand.u32 %v2809, 3
        %vm2814 = vcmp.lt.s32.totalorder %v2813, 2
        %vm2815 = vcmp.eq.s32.totalorder %v2813, 0
        %v2816 = vxor.u32 %v2811, 2147483648
        %v2817 = vsel %vm2815, %v2810, %v2816
        %vm2818 = vcmp.eq.s32.totalorder %v2813, 2
        %v2819 = vxor.u32 %v2810, 2147483648
        %v2820 = vsel %vm2818, %v2819, %v2811
        %v2821 = vsel %vm2814, %v2817, %v2820
        %v2822 = vsel %vm2812, nan, %v2821
        %v2823 = vand.u32 2147483647, %v1612
        %vm2824 = vcmp.le.f32.partialorder %v2823, 0.7853982
        %vm2825 = vcmp.lt.s32.totalorder %v1612, 0
        %v2826 = vand.u32 %v1612, 2139095040
        %v2827 = vshrl.u32 %v2826, 23
        %v2828 = vsub.s32 %v2827, 127
        %v2829 = vand.u32 2147483647, %v1612
        %v2830 = vand.u32 %v2829, 8388607
        %v2831 = vor.u32 %v2830, 8388608
        %v2832 = vsub.s32 0, %v2831
        %v2833 = vadd.s32 %v2828, 1
        %vm2834 = vcmp.gt.s32.totalorder %v2833, 0
        %v2835 = vsel %vm2834, %v2833, 0
        %v2836 = vshrl.u32 %v2835, 5
        %v2837 = vand.u32 %v2835, 31
        %v2838 = vsub.s32 32, %v2837
        %v2839 = vshrl.u32 683565275, %v2838
        %v2840 = vshll.u32 683565275, %v2837
        %v2841 = vshrl.u32 2475754826, %v2838
        %v2842 = vor.u32 %v2840, %v2841
        %v2843 = vshll.u32 2475754826, %v2837
        %v2844 = vshrl.u32 2131351028, %v2838
        %v2845 = vor.u32 %v2843, %v2844
        %v2846 = vshll.u32 2131351028, %v2837
        %v2847 = vshrl.u32 2102212464, %v2838
        %v2848 = vor.u32 %v2846, %v2847
        %v2849 = vshll.u32 2102212464, %v2837
        %v2850 = vshrl.u32 920167782, %v2838
        %v2851 = vor.u32 %v2849, %v2850
        %v2852 = vshll.u32 920167782, %v2837
        %v2853 = vshrl.u32 1326507024, %v2838
        %v2854 = vor.u32 %v2852, %v2853
        %vm2855 = vcmp.lt.s32.totalorder %v2836, 1
        %vm2856 = vcmp.lt.s32.totalorder %v2836, 2
        %vm2857 = vcmp.lt.s32.totalorder %v2836, 3
        %vm2858 = vcmp.lt.s32.totalorder %v2836, 4
        %v2859 = vsel %vm2855, %v2839, %v2842
        %v2860 = vsel %vm2858, %v2848, 2102212464
        %v2861 = vsel %vm2857, %v2845, %v2860
        %v2862 = vsel %vm2856, %v2859, %v2861
        %v2863 = vsel %vm2855, %v2842, %v2845
        %v2864 = vsel %vm2858, %v2851, 920167782
        %v2865 = vsel %vm2857, %v2848, %v2864
        %v2866 = vsel %vm2856, %v2863, %v2865
        %v2867 = vsel %vm2855, %v2845, %v2848
        %v2868 = vsel %vm2858, %v2854, 1326507024
        %v2869 = vsel %vm2857, %v2851, %v2868
        %v2870 = vsel %vm2856, %v2867, %v2869
        %v2871 = vshll.u32 %v2831, 8
        %v2872 = vmul.u32.u64.compose %v2871, %v2870
        %v2873 = vextract.low.u32 %v2872
        %v2874 = vextract.high.u32 %v2872
        %v2875 = vmul.u32.u64.compose %v2871, %v2866
        %v2876 = vextract.low.u32 %v2875
        %v2877 = vextract.high.u32 %v2875
        %v2878 = vmul.u32 %v2871, %v2862
        %v2879 = vadd.s32 %v2874, %v2876
        %vm2880 = vc.u32 %v2874, %v2876
        %v2881 = vadd.s32 %v2877, 1
        %v2882 = vsel %vm2880, %v2881, %v2877
        %v2883 = vadd.s32 %v2878, %v2882
        %v2884 = vadd.s32 %v2883, 536870912
        %v2885 = vshrl.u32 %v2884, 30
        %v2886 = vshll.u32 %v2885, 30
        %v2887 = vsub.s32 %v2883, %v2886
        %vm2888 = vcmp.lt.s32.totalorder %v2887, 0
        %v2889 = vsub.s32 0, %v2887
        %v2890 = vsel %vm2888, %v2889, %v2887
        %v2891 = vclz %v2890
        %v2892 = vsub.s32 %v2891, 2
        %vm2893 = vcmp.gt.s32.totalorder 0, %v2892
        %v2894 = vsel %vm2893, 0, %v2892
        %v2895 = vsub.s32 32, %v2894
        %v2896 = vshll.u32 %v2887, %v2894
        %v2897 = vshrl.u32 %v2879, %v2895
        %v2898 = vor.u32 %v2896, %v2897
        %v2899 = vsub.s32 4294967266, %v2894
        %v2900 = vadd.s32 %v2899, 127
        %v2901 = vshll.u32 %v2900, 23
        %v2902 = vor.u32 4788187, %v2901
        %v2903 = vand.u32 2147483647, %v2902
        %v2905 = vcvt.s32.f32 %v2898
        %v2906 = vmul.f32 %v2905, %v2903
        %v2907 = vxor.u32 %v2906, 2147483648
        %v2908 = vsel %vm2825, %v2907, %v2906
        %v2909 = vsub.s32 4, %v2885
        %v2910 = vsel %vm2825, %v2909, %v2885
        %v2911 = vsel %vm2824, %v1612, %v2908
        %v2912 = vsel %vm2824, 0, %v2910
        %v2913 = vcosq.f32.pop %v2911
        %v2914 = vsinq.f32.pop %v2911
        %vm2915 = vweird.f32 %v1612
        %v2916 = vand.u32 %v2912, 3
        %vm2917 = vcmp.lt.s32.totalorder %v2916, 2
        %vm2918 = vcmp.eq.s32.totalorder %v2916, 0
        %v2919 = vxor.u32 %v2914, 2147483648
        %v2920 = vsel %vm2918, %v2913, %v2919
        %vm2921 = vcmp.eq.s32.totalorder %v2916, 2
        %v2922 = vxor.u32 %v2913, 2147483648
        %v2923 = vsel %vm2921, %v2922, %v2914
        %v2924 = vsel %vm2917, %v2920, %v2923
        %v2925 = vsel %vm2915, nan, %v2924
        %v2926 = vand.u32 2147483647, %v1613
        %vm2927 = vcmp.le.f32.partialorder %v2926, 0.7853982
        %vm2928 = vcmp.lt.s32.totalorder %v1613, 0
        %v2929 = vand.u32 %v1613, 2139095040
        %v2930 = vshrl.u32 %v2929, 23
        %v2931 = vsub.s32 %v2930, 127
        %v2932 = vand.u32 2147483647, %v1613
        %v2933 = vand.u32 %v2932, 8388607
        %v2934 = vor.u32 %v2933, 8388608
        %v2935 = vsub.s32 0, %v2934
        %v2936 = vadd.s32 %v2931, 1
        %vm2937 = vcmp.gt.s32.totalorder %v2936, 0
        %v2938 = vsel %vm2937, %v2936, 0
        %v2939 = vshrl.u32 %v2938, 5
        %v2940 = vand.u32 %v2938, 31
        %v2941 = vsub.s32 32, %v2940
        %v2942 = vshrl.u32 683565275, %v2941
        %v2943 = vshll.u32 683565275, %v2940
        %v2944 = vshrl.u32 2475754826, %v2941
        %v2945 = vor.u32 %v2943, %v2944
        %v2946 = vshll.u32 2475754826, %v2940
        %v2947 = vshrl.u32 2131351028, %v2941
        %v2948 = vor.u32 %v2946, %v2947
        %v2949 = vshll.u32 2131351028, %v2940
        %v2950 = vshrl.u32 2102212464, %v2941
        %v2951 = vor.u32 %v2949, %v2950
        %v2952 = vshll.u32 2102212464, %v2940
        %v2953 = vshrl.u32 920167782, %v2941
        %v2954 = vor.u32 %v2952, %v2953
        %v2955 = vshll.u32 920167782, %v2940
        %v2956 = vshrl.u32 1326507024, %v2941
        %v2957 = vor.u32 %v2955, %v2956
        %vm2958 = vcmp.lt.s32.totalorder %v2939, 1
        %vm2959 = vcmp.lt.s32.totalorder %v2939, 2
        %vm2960 = vcmp.lt.s32.totalorder %v2939, 3
        %vm2961 = vcmp.lt.s32.totalorder %v2939, 4
        %v2962 = vsel %vm2958, %v2942, %v2945
        %v2963 = vsel %vm2961, %v2951, 2102212464
        %v2964 = vsel %vm2960, %v2948, %v2963
        %v2965 = vsel %vm2959, %v2962, %v2964
        %v2966 = vsel %vm2958, %v2945, %v2948
        %v2967 = vsel %vm2961, %v2954, 920167782
        %v2968 = vsel %vm2960, %v2951, %v2967
        %v2969 = vsel %vm2959, %v2966, %v2968
        %v2970 = vsel %vm2958, %v2948, %v2951
        %v2971 = vsel %vm2961, %v2957, 1326507024
        %v2972 = vsel %vm2960, %v2954, %v2971
        %v2973 = vsel %vm2959, %v2970, %v2972
        %v2974 = vshll.u32 %v2934, 8
        %v2975 = vmul.u32.u64.compose %v2974, %v2973
        %v2976 = vextract.low.u32 %v2975
        %v2977 = vextract.high.u32 %v2975
        %v2978 = vmul.u32.u64.compose %v2974, %v2969
        %v2979 = vextract.low.u32 %v2978
        %v2980 = vextract.high.u32 %v2978
        %v2981 = vmul.u32 %v2974, %v2965
        %v2982 = vadd.s32 %v2977, %v2979
        %vm2983 = vc.u32 %v2977, %v2979
        %v2984 = vadd.s32 %v2980, 1
        %v2985 = vsel %vm2983, %v2984, %v2980
        %v2986 = vadd.s32 %v2981, %v2985
        %v2987 = vadd.s32 %v2986, 536870912
        %v2988 = vshrl.u32 %v2987, 30
        %v2989 = vshll.u32 %v2988, 30
        %v2990 = vsub.s32 %v2986, %v2989
        %vm2991 = vcmp.lt.s32.totalorder %v2990, 0
        %v2992 = vsub.s32 0, %v2990
        %v2993 = vsel %vm2991, %v2992, %v2990
        %v2994 = vclz %v2993
        %v2995 = vsub.s32 %v2994, 2
        %vm2996 = vcmp.gt.s32.totalorder 0, %v2995
        %v2997 = vsel %vm2996, 0, %v2995
        %v2998 = vsub.s32 32, %v2997
        %v2999 = vshll.u32 %v2990, %v2997
        %v3000 = vshrl.u32 %v2982, %v2998
        %v3001 = vor.u32 %v2999, %v3000
        %v3002 = vsub.s32 4294967266, %v2997
        %v3003 = vadd.s32 %v3002, 127
        %v3004 = vshll.u32 %v3003, 23
        %v3005 = vor.u32 4788187, %v3004
        %v3006 = vand.u32 2147483647, %v3005
        %v3008 = vcvt.s32.f32 %v3001
        %v3009 = vmul.f32 %v3008, %v3006
        %v3010 = vxor.u32 %v3009, 2147483648
        %v3011 = vsel %vm2928, %v3010, %v3009
        %v3012 = vsub.s32 4, %v2988
        %v3013 = vsel %vm2928, %v3012, %v2988
        %v3014 = vsel %vm2927, %v1613, %v3011
        %v3015 = vsel %vm2927, 0, %v3013
        %v3016 = vcosq.f32.pop %v3014
        %v3017 = vsinq.f32.pop %v3014
        %vm3018 = vweird.f32 %v1613
        %v3019 = vand.u32 %v3015, 3
        %vm3020 = vcmp.lt.s32.totalorder %v3019, 2
        %vm3021 = vcmp.eq.s32.totalorder %v3019, 0
        %v3022 = vxor.u32 %v3017, 2147483648
        %v3023 = vsel %vm3021, %v3016, %v3022
        %vm3024 = vcmp.eq.s32.totalorder %v3019, 2
        %v3025 = vxor.u32 %v3016, 2147483648
        %v3026 = vsel %vm3024, %v3025, %v3017
        %v3027 = vsel %vm3020, %v3023, %v3026
        %v3028 = vsel %vm3018, nan, %v3027
        %v3029 = vand.u32 2147483647, %v1614
        %vm3030 = vcmp.le.f32.partialorder %v3029, 0.7853982
        %vm3031 = vcmp.lt.s32.totalorder %v1614, 0
        %v3032 = vand.u32 %v1614, 2139095040
        %v3033 = vshrl.u32 %v3032, 23
        %v3034 = vsub.s32 %v3033, 127
        %v3035 = vand.u32 2147483647, %v1614
        %v3036 = vand.u32 %v3035, 8388607
        %v3037 = vor.u32 %v3036, 8388608
        %v3038 = vsub.s32 0, %v3037
        %v3039 = vadd.s32 %v3034, 1
        %vm3040 = vcmp.gt.s32.totalorder %v3039, 0
        %v3041 = vsel %vm3040, %v3039, 0
        %v3042 = vshrl.u32 %v3041, 5
        %v3043 = vand.u32 %v3041, 31
        %v3044 = vsub.s32 32, %v3043
        %v3045 = vshrl.u32 683565275, %v3044
        %v3046 = vshll.u32 683565275, %v3043
        %v3047 = vshrl.u32 2475754826, %v3044
        %v3048 = vor.u32 %v3046, %v3047
        %v3049 = vshll.u32 2475754826, %v3043
        %v3050 = vshrl.u32 2131351028, %v3044
        %v3051 = vor.u32 %v3049, %v3050
        %v3052 = vshll.u32 2131351028, %v3043
        %v3053 = vshrl.u32 2102212464, %v3044
        %v3054 = vor.u32 %v3052, %v3053
        %v3055 = vshll.u32 2102212464, %v3043
        %v3056 = vshrl.u32 920167782, %v3044
        %v3057 = vor.u32 %v3055, %v3056
        %v3058 = vshll.u32 920167782, %v3043
        %v3059 = vshrl.u32 1326507024, %v3044
        %v3060 = vor.u32 %v3058, %v3059
        %vm3061 = vcmp.lt.s32.totalorder %v3042, 1
        %vm3062 = vcmp.lt.s32.totalorder %v3042, 2
        %vm3063 = vcmp.lt.s32.totalorder %v3042, 3
        %vm3064 = vcmp.lt.s32.totalorder %v3042, 4
        %v3065 = vsel %vm3061, %v3045, %v3048
        %v3066 = vsel %vm3064, %v3054, 2102212464
        %v3067 = vsel %vm3063, %v3051, %v3066
        %v3068 = vsel %vm3062, %v3065, %v3067
        %v3069 = vsel %vm3061, %v3048, %v3051
        %v3070 = vsel %vm3064, %v3057, 920167782
        %v3071 = vsel %vm3063, %v3054, %v3070
        %v3072 = vsel %vm3062, %v3069, %v3071
        %v3073 = vsel %vm3061, %v3051, %v3054
        %v3074 = vsel %vm3064, %v3060, 1326507024
        %v3075 = vsel %vm3063, %v3057, %v3074
        %v3076 = vsel %vm3062, %v3073, %v3075
        %v3077 = vshll.u32 %v3037, 8
        %v3078 = vmul.u32.u64.compose %v3077, %v3076
        %v3079 = vextract.low.u32 %v3078
        %v3080 = vextract.high.u32 %v3078
        %v3081 = vmul.u32.u64.compose %v3077, %v3072
        %v3082 = vextract.low.u32 %v3081
        %v3083 = vextract.high.u32 %v3081
        %v3084 = vmul.u32 %v3077, %v3068
        %v3085 = vadd.s32 %v3080, %v3082
        %vm3086 = vc.u32 %v3080, %v3082
        %v3087 = vadd.s32 %v3083, 1
        %v3088 = vsel %vm3086, %v3087, %v3083
        %v3089 = vadd.s32 %v3084, %v3088
        %v3090 = vadd.s32 %v3089, 536870912
        %v3091 = vshrl.u32 %v3090, 30
        %v3092 = vshll.u32 %v3091, 30
        %v3093 = vsub.s32 %v3089, %v3092
        %vm3094 = vcmp.lt.s32.totalorder %v3093, 0
        %v3095 = vsub.s32 0, %v3093
        %v3096 = vsel %vm3094, %v3095, %v3093
        %v3097 = vclz %v3096
        %v3098 = vsub.s32 %v3097, 2
        %vm3099 = vcmp.gt.s32.totalorder 0, %v3098
        %v3100 = vsel %vm3099, 0, %v3098
        %v3101 = vsub.s32 32, %v3100
        %v3102 = vshll.u32 %v3093, %v3100
        %v3103 = vshrl.u32 %v3085, %v3101
        %v3104 = vor.u32 %v3102, %v3103
        %v3105 = vsub.s32 4294967266, %v3100
        %v3106 = vadd.s32 %v3105, 127
        %v3107 = vshll.u32 %v3106, 23
        %v3108 = vor.u32 4788187, %v3107
        %v3109 = vand.u32 2147483647, %v3108
        %v3111 = vcvt.s32.f32 %v3104
        %v3112 = vmul.f32 %v3111, %v3109
        %v3113 = vxor.u32 %v3112, 2147483648
        %v3114 = vsel %vm3031, %v3113, %v3112
        %v3115 = vsub.s32 4, %v3091
        %v3116 = vsel %vm3031, %v3115, %v3091
        %v3117 = vsel %vm3030, %v1614, %v3114
        %v3118 = vsel %vm3030, 0, %v3116
        %v3119 = vcosq.f32.pop %v3117
        %v3120 = vsinq.f32.pop %v3117
        %vm3121 = vweird.f32 %v1614
        %v3122 = vand.u32 %v3118, 3
        %vm3123 = vcmp.lt.s32.totalorder %v3122, 2
        %vm3124 = vcmp.eq.s32.totalorder %v3122, 0
        %v3125 = vxor.u32 %v3120, 2147483648
        %v3126 = vsel %vm3124, %v3119, %v3125
        %vm3127 = vcmp.eq.s32.totalorder %v3122, 2
        %v3128 = vxor.u32 %v3119, 2147483648
        %v3129 = vsel %vm3127, %v3128, %v3120
        %v3130 = vsel %vm3123, %v3126, %v3129
        %v3131 = vsel %vm3121, nan, %v3130
        %v3132 = vand.u32 2147483647, %v1615
        %vm3133 = vcmp.le.f32.partialorder %v3132, 0.7853982
        %vm3134 = vcmp.lt.s32.totalorder %v1615, 0
        %v3135 = vand.u32 %v1615, 2139095040
        %v3136 = vshrl.u32 %v3135, 23
        %v3137 = vsub.s32 %v3136, 127
        %v3138 = vand.u32 2147483647, %v1615
        %v3139 = vand.u32 %v3138, 8388607
        %v3140 = vor.u32 %v3139, 8388608
        %v3141 = vsub.s32 0, %v3140
        %v3142 = vadd.s32 %v3137, 1
        %vm3143 = vcmp.gt.s32.totalorder %v3142, 0
        %v3144 = vsel %vm3143, %v3142, 0
        %v3145 = vshrl.u32 %v3144, 5
        %v3146 = vand.u32 %v3144, 31
        %v3147 = vsub.s32 32, %v3146
        %v3148 = vshrl.u32 683565275, %v3147
        %v3149 = vshll.u32 683565275, %v3146
        %v3150 = vshrl.u32 2475754826, %v3147
        %v3151 = vor.u32 %v3149, %v3150
        %v3152 = vshll.u32 2475754826, %v3146
        %v3153 = vshrl.u32 2131351028, %v3147
        %v3154 = vor.u32 %v3152, %v3153
        %v3155 = vshll.u32 2131351028, %v3146
        %v3156 = vshrl.u32 2102212464, %v3147
        %v3157 = vor.u32 %v3155, %v3156
        %v3158 = vshll.u32 2102212464, %v3146
        %v3159 = vshrl.u32 920167782, %v3147
        %v3160 = vor.u32 %v3158, %v3159
        %v3161 = vshll.u32 920167782, %v3146
        %v3162 = vshrl.u32 1326507024, %v3147
        %v3163 = vor.u32 %v3161, %v3162
        %vm3164 = vcmp.lt.s32.totalorder %v3145, 1
        %vm3165 = vcmp.lt.s32.totalorder %v3145, 2
        %vm3166 = vcmp.lt.s32.totalorder %v3145, 3
        %vm3167 = vcmp.lt.s32.totalorder %v3145, 4
        %v3168 = vsel %vm3164, %v3148, %v3151
        %v3169 = vsel %vm3167, %v3157, 2102212464
        %v3170 = vsel %vm3166, %v3154, %v3169
        %v3171 = vsel %vm3165, %v3168, %v3170
        %v3172 = vsel %vm3164, %v3151, %v3154
        %v3173 = vsel %vm3167, %v3160, 920167782
        %v3174 = vsel %vm3166, %v3157, %v3173
        %v3175 = vsel %vm3165, %v3172, %v3174
        %v3176 = vsel %vm3164, %v3154, %v3157
        %v3177 = vsel %vm3167, %v3163, 1326507024
        %v3178 = vsel %vm3166, %v3160, %v3177
        %v3179 = vsel %vm3165, %v3176, %v3178
        %v3180 = vshll.u32 %v3140, 8
        %v3181 = vmul.u32.u64.compose %v3180, %v3179
        %v3182 = vextract.low.u32 %v3181
        %v3183 = vextract.high.u32 %v3181
        %v3184 = vmul.u32.u64.compose %v3180, %v3175
        %v3185 = vextract.low.u32 %v3184
        %v3186 = vextract.high.u32 %v3184
        %v3187 = vmul.u32 %v3180, %v3171
        %v3188 = vadd.s32 %v3183, %v3185
        %vm3189 = vc.u32 %v3183, %v3185
        %v3190 = vadd.s32 %v3186, 1
        %v3191 = vsel %vm3189, %v3190, %v3186
        %v3192 = vadd.s32 %v3187, %v3191
        %v3193 = vadd.s32 %v3192, 536870912
        %v3194 = vshrl.u32 %v3193, 30
        %v3195 = vshll.u32 %v3194, 30
        %v3196 = vsub.s32 %v3192, %v3195
        %vm3197 = vcmp.lt.s32.totalorder %v3196, 0
        %v3198 = vsub.s32 0, %v3196
        %v3199 = vsel %vm3197, %v3198, %v3196
        %v3200 = vclz %v3199
        %v3201 = vsub.s32 %v3200, 2
        %vm3202 = vcmp.gt.s32.totalorder 0, %v3201
        %v3203 = vsel %vm3202, 0, %v3201
        %v3204 = vsub.s32 32, %v3203
        %v3205 = vshll.u32 %v3196, %v3203
        %v3206 = vshrl.u32 %v3188, %v3204
        %v3207 = vor.u32 %v3205, %v3206
        %v3208 = vsub.s32 4294967266, %v3203
        %v3209 = vadd.s32 %v3208, 127
        %v3210 = vshll.u32 %v3209, 23
        %v3211 = vor.u32 4788187, %v3210
        %v3212 = vand.u32 2147483647, %v3211
        %v3214 = vcvt.s32.f32 %v3207
        %v3215 = vmul.f32 %v3214, %v3212
        %v3216 = vxor.u32 %v3215, 2147483648
        %v3217 = vsel %vm3134, %v3216, %v3215
        %v3218 = vsub.s32 4, %v3194
        %v3219 = vsel %vm3134, %v3218, %v3194
        %v3220 = vsel %vm3133, %v1615, %v3217
        %v3221 = vsel %vm3133, 0, %v3219
        %v3222 = vcosq.f32.pop %v3220
        %v3223 = vsinq.f32.pop %v3220
        %vm3224 = vweird.f32 %v1615
        %v3225 = vand.u32 %v3221, 3
        %vm3226 = vcmp.lt.s32.totalorder %v3225, 2
        %vm3227 = vcmp.eq.s32.totalorder %v3225, 0
        %v3228 = vxor.u32 %v3223, 2147483648
        %v3229 = vsel %vm3227, %v3222, %v3228
        %vm3230 = vcmp.eq.s32.totalorder %v3225, 2
        %v3231 = vxor.u32 %v3222, 2147483648
        %v3232 = vsel %vm3230, %v3231, %v3223
        %v3233 = vsel %vm3226, %v3229, %v3232
        %v3234 = vsel %vm3224, nan, %v3233
        %v3235 = vand.u32 2147483647, %v1616
        %vm3236 = vcmp.le.f32.partialorder %v3235, 0.7853982
        %vm3237 = vcmp.lt.s32.totalorder %v1616, 0
        %v3238 = vand.u32 %v1616, 2139095040
        %v3239 = vshrl.u32 %v3238, 23
        %v3240 = vsub.s32 %v3239, 127
        %v3241 = vand.u32 2147483647, %v1616
        %v3242 = vand.u32 %v3241, 8388607
        %v3243 = vor.u32 %v3242, 8388608
        %v3244 = vsub.s32 0, %v3243
        %v3245 = vadd.s32 %v3240, 1
        %vm3246 = vcmp.gt.s32.totalorder %v3245, 0
        %v3247 = vsel %vm3246, %v3245, 0
        %v3248 = vshrl.u32 %v3247, 5
        %v3249 = vand.u32 %v3247, 31
        %v3250 = vsub.s32 32, %v3249
        %v3251 = vshrl.u32 683565275, %v3250
        %v3252 = vshll.u32 683565275, %v3249
        %v3253 = vshrl.u32 2475754826, %v3250
        %v3254 = vor.u32 %v3252, %v3253
        %v3255 = vshll.u32 2475754826, %v3249
        %v3256 = vshrl.u32 2131351028, %v3250
        %v3257 = vor.u32 %v3255, %v3256
        %v3258 = vshll.u32 2131351028, %v3249
        %v3259 = vshrl.u32 2102212464, %v3250
        %v3260 = vor.u32 %v3258, %v3259
        %v3261 = vshll.u32 2102212464, %v3249
        %v3262 = vshrl.u32 920167782, %v3250
        %v3263 = vor.u32 %v3261, %v3262
        %v3264 = vshll.u32 920167782, %v3249
        %v3265 = vshrl.u32 1326507024, %v3250
        %v3266 = vor.u32 %v3264, %v3265
        %vm3267 = vcmp.lt.s32.totalorder %v3248, 1
        %vm3268 = vcmp.lt.s32.totalorder %v3248, 2
        %vm3269 = vcmp.lt.s32.totalorder %v3248, 3
        %vm3270 = vcmp.lt.s32.totalorder %v3248, 4
        %v3271 = vsel %vm3267, %v3251, %v3254
        %v3272 = vsel %vm3270, %v3260, 2102212464
        %v3273 = vsel %vm3269, %v3257, %v3272
        %v3274 = vsel %vm3268, %v3271, %v3273
        %v3275 = vsel %vm3267, %v3254, %v3257
        %v3276 = vsel %vm3270, %v3263, 920167782
        %v3277 = vsel %vm3269, %v3260, %v3276
        %v3278 = vsel %vm3268, %v3275, %v3277
        %v3279 = vsel %vm3267, %v3257, %v3260
        %v3280 = vsel %vm3270, %v3266, 1326507024
        %v3281 = vsel %vm3269, %v3263, %v3280
        %v3282 = vsel %vm3268, %v3279, %v3281
        %v3283 = vshll.u32 %v3243, 8
        %v3284 = vmul.u32.u64.compose %v3283, %v3282
        %v3285 = vextract.low.u32 %v3284
        %v3286 = vextract.high.u32 %v3284
        %v3287 = vmul.u32.u64.compose %v3283, %v3278
        %v3288 = vextract.low.u32 %v3287
        %v3289 = vextract.high.u32 %v3287
        %v3290 = vmul.u32 %v3283, %v3274
        %v3291 = vadd.s32 %v3286, %v3288
        %vm3292 = vc.u32 %v3286, %v3288
        %v3293 = vadd.s32 %v3289, 1
        %v3294 = vsel %vm3292, %v3293, %v3289
        %v3295 = vadd.s32 %v3290, %v3294
        %v3296 = vadd.s32 %v3295, 536870912
        %v3297 = vshrl.u32 %v3296, 30
        %v3298 = vshll.u32 %v3297, 30
        %v3299 = vsub.s32 %v3295, %v3298
        %vm3300 = vcmp.lt.s32.totalorder %v3299, 0
        %v3301 = vsub.s32 0, %v3299
        %v3302 = vsel %vm3300, %v3301, %v3299
        %v3303 = vclz %v3302
        %v3304 = vsub.s32 %v3303, 2
        %vm3305 = vcmp.gt.s32.totalorder 0, %v3304
        %v3306 = vsel %vm3305, 0, %v3304
        %v3307 = vsub.s32 32, %v3306
        %v3308 = vshll.u32 %v3299, %v3306
        %v3309 = vshrl.u32 %v3291, %v3307
        %v3310 = vor.u32 %v3308, %v3309
        %v3311 = vsub.s32 4294967266, %v3306
        %v3312 = vadd.s32 %v3311, 127
        %v3313 = vshll.u32 %v3312, 23
        %v3314 = vor.u32 4788187, %v3313
        %v3315 = vand.u32 2147483647, %v3314
        %v3317 = vcvt.s32.f32 %v3310
        %v3318 = vmul.f32 %v3317, %v3315
        %v3319 = vxor.u32 %v3318, 2147483648
        %v3320 = vsel %vm3237, %v3319, %v3318
        %v3321 = vsub.s32 4, %v3297
        %v3322 = vsel %vm3237, %v3321, %v3297
        %v3323 = vsel %vm3236, %v1616, %v3320
        %v3324 = vsel %vm3236, 0, %v3322
        %v3325 = vcosq.f32.pop %v3323
        %v3326 = vsinq.f32.pop %v3323
        %vm3327 = vweird.f32 %v1616
        %v3328 = vand.u32 %v3324, 3
        %vm3329 = vcmp.lt.s32.totalorder %v3328, 2
        %vm3330 = vcmp.eq.s32.totalorder %v3328, 0
        %v3331 = vxor.u32 %v3326, 2147483648
        %v3332 = vsel %vm3330, %v3325, %v3331
        %vm3333 = vcmp.eq.s32.totalorder %v3328, 2
        %v3334 = vxor.u32 %v3325, 2147483648
        %v3335 = vsel %vm3333, %v3334, %v3326
        %v3336 = vsel %vm3329, %v3332, %v3335
        %v3337 = vsel %vm3327, nan, %v3336
        %v3338 = vand.u32 2147483647, %v1617
        %vm3339 = vcmp.le.f32.partialorder %v3338, 0.7853982
        %vm3340 = vcmp.lt.s32.totalorder %v1617, 0
        %v3341 = vand.u32 %v1617, 2139095040
        %v3342 = vshrl.u32 %v3341, 23
        %v3343 = vsub.s32 %v3342, 127
        %v3344 = vand.u32 2147483647, %v1617
        %v3345 = vand.u32 %v3344, 8388607
        %v3346 = vor.u32 %v3345, 8388608
        %v3347 = vsub.s32 0, %v3346
        %v3348 = vadd.s32 %v3343, 1
        %vm3349 = vcmp.gt.s32.totalorder %v3348, 0
        %v3350 = vsel %vm3349, %v3348, 0
        %v3351 = vshrl.u32 %v3350, 5
        %v3352 = vand.u32 %v3350, 31
        %v3353 = vsub.s32 32, %v3352
        %v3354 = vshrl.u32 683565275, %v3353
        %v3355 = vshll.u32 683565275, %v3352
        %v3356 = vshrl.u32 2475754826, %v3353
        %v3357 = vor.u32 %v3355, %v3356
        %v3358 = vshll.u32 2475754826, %v3352
        %v3359 = vshrl.u32 2131351028, %v3353
        %v3360 = vor.u32 %v3358, %v3359
        %v3361 = vshll.u32 2131351028, %v3352
        %v3362 = vshrl.u32 2102212464, %v3353
        %v3363 = vor.u32 %v3361, %v3362
        %v3364 = vshll.u32 2102212464, %v3352
        %v3365 = vshrl.u32 920167782, %v3353
        %v3366 = vor.u32 %v3364, %v3365
        %v3367 = vshll.u32 920167782, %v3352
        %v3368 = vshrl.u32 1326507024, %v3353
        %v3369 = vor.u32 %v3367, %v3368
        %vm3370 = vcmp.lt.s32.totalorder %v3351, 1
        %vm3371 = vcmp.lt.s32.totalorder %v3351, 2
        %vm3372 = vcmp.lt.s32.totalorder %v3351, 3
        %vm3373 = vcmp.lt.s32.totalorder %v3351, 4
        %v3374 = vsel %vm3370, %v3354, %v3357
        %v3375 = vsel %vm3373, %v3363, 2102212464
        %v3376 = vsel %vm3372, %v3360, %v3375
        %v3377 = vsel %vm3371, %v3374, %v3376
        %v3378 = vsel %vm3370, %v3357, %v3360
        %v3379 = vsel %vm3373, %v3366, 920167782
        %v3380 = vsel %vm3372, %v3363, %v3379
        %v3381 = vsel %vm3371, %v3378, %v3380
        %v3382 = vsel %vm3370, %v3360, %v3363
        %v3383 = vsel %vm3373, %v3369, 1326507024
        %v3384 = vsel %vm3372, %v3366, %v3383
        %v3385 = vsel %vm3371, %v3382, %v3384
        %v3386 = vshll.u32 %v3346, 8
        %v3387 = vmul.u32.u64.compose %v3386, %v3385
        %v3388 = vextract.low.u32 %v3387
        %v3389 = vextract.high.u32 %v3387
        %v3390 = vmul.u32.u64.compose %v3386, %v3381
        %v3391 = vextract.low.u32 %v3390
        %v3392 = vextract.high.u32 %v3390
        %v3393 = vmul.u32 %v3386, %v3377
        %v3394 = vadd.s32 %v3389, %v3391
        %vm3395 = vc.u32 %v3389, %v3391
        %v3396 = vadd.s32 %v3392, 1
        %v3397 = vsel %vm3395, %v3396, %v3392
        %v3398 = vadd.s32 %v3393, %v3397
        %v3399 = vadd.s32 %v3398, 536870912
        %v3400 = vshrl.u32 %v3399, 30
        %v3401 = vshll.u32 %v3400, 30
        %v3402 = vsub.s32 %v3398, %v3401
        %vm3403 = vcmp.lt.s32.totalorder %v3402, 0
        %v3404 = vsub.s32 0, %v3402
        %v3405 = vsel %vm3403, %v3404, %v3402
        %v3406 = vclz %v3405
        %v3407 = vsub.s32 %v3406, 2
        %vm3408 = vcmp.gt.s32.totalorder 0, %v3407
        %v3409 = vsel %vm3408, 0, %v3407
        %v3410 = vsub.s32 32, %v3409
        %v3411 = vshll.u32 %v3402, %v3409
        %v3412 = vshrl.u32 %v3394, %v3410
        %v3413 = vor.u32 %v3411, %v3412
        %v3414 = vsub.s32 4294967266, %v3409
        %v3415 = vadd.s32 %v3414, 127
        %v3416 = vshll.u32 %v3415, 23
        %v3417 = vor.u32 4788187, %v3416
        %v3418 = vand.u32 2147483647, %v3417
        %v3420 = vcvt.s32.f32 %v3413
        %v3421 = vmul.f32 %v3420, %v3418
        %v3422 = vxor.u32 %v3421, 2147483648
        %v3423 = vsel %vm3340, %v3422, %v3421
        %v3424 = vsub.s32 4, %v3400
        %v3425 = vsel %vm3340, %v3424, %v3400
        %v3426 = vsel %vm3339, %v1617, %v3423
        %v3427 = vsel %vm3339, 0, %v3425
        %v3428 = vcosq.f32.pop %v3426
        %v3429 = vsinq.f32.pop %v3426
        %vm3430 = vweird.f32 %v1617
        %v3431 = vand.u32 %v3427, 3
        %vm3432 = vcmp.lt.s32.totalorder %v3431, 2
        %vm3433 = vcmp.eq.s32.totalorder %v3431, 0
        %v3434 = vxor.u32 %v3429, 2147483648
        %v3435 = vsel %vm3433, %v3428, %v3434
        %vm3436 = vcmp.eq.s32.totalorder %v3431, 2
        %v3437 = vxor.u32 %v3428, 2147483648
        %v3438 = vsel %vm3436, %v3437, %v3429
        %v3439 = vsel %vm3432, %v3435, %v3438
        %v3440 = vsel %vm3430, nan, %v3439
        %v3441 = vand.u32 2147483647, %v1618
        %vm3442 = vcmp.le.f32.partialorder %v3441, 0.7853982
        %vm3443 = vcmp.lt.s32.totalorder %v1618, 0
        %v3444 = vand.u32 %v1618, 2139095040
        %v3445 = vshrl.u32 %v3444, 23
        %v3446 = vsub.s32 %v3445, 127
        %v3447 = vand.u32 2147483647, %v1618
        %v3448 = vand.u32 %v3447, 8388607
        %v3449 = vor.u32 %v3448, 8388608
        %v3450 = vsub.s32 0, %v3449
        %v3451 = vadd.s32 %v3446, 1
        %vm3452 = vcmp.gt.s32.totalorder %v3451, 0
        %v3453 = vsel %vm3452, %v3451, 0
        %v3454 = vshrl.u32 %v3453, 5
        %v3455 = vand.u32 %v3453, 31
        %v3456 = vsub.s32 32, %v3455
        %v3457 = vshrl.u32 683565275, %v3456
        %v3458 = vshll.u32 683565275, %v3455
        %v3459 = vshrl.u32 2475754826, %v3456
        %v3460 = vor.u32 %v3458, %v3459
        %v3461 = vshll.u32 2475754826, %v3455
        %v3462 = vshrl.u32 2131351028, %v3456
        %v3463 = vor.u32 %v3461, %v3462
        %v3464 = vshll.u32 2131351028, %v3455
        %v3465 = vshrl.u32 2102212464, %v3456
        %v3466 = vor.u32 %v3464, %v3465
        %v3467 = vshll.u32 2102212464, %v3455
        %v3468 = vshrl.u32 920167782, %v3456
        %v3469 = vor.u32 %v3467, %v3468
        %v3470 = vshll.u32 920167782, %v3455
        %v3471 = vshrl.u32 1326507024, %v3456
        %v3472 = vor.u32 %v3470, %v3471
        %vm3473 = vcmp.lt.s32.totalorder %v3454, 1
        %vm3474 = vcmp.lt.s32.totalorder %v3454, 2
        %vm3475 = vcmp.lt.s32.totalorder %v3454, 3
        %vm3476 = vcmp.lt.s32.totalorder %v3454, 4
        %v3477 = vsel %vm3473, %v3457, %v3460
        %v3478 = vsel %vm3476, %v3466, 2102212464
        %v3479 = vsel %vm3475, %v3463, %v3478
        %v3480 = vsel %vm3474, %v3477, %v3479
        %v3481 = vsel %vm3473, %v3460, %v3463
        %v3482 = vsel %vm3476, %v3469, 920167782
        %v3483 = vsel %vm3475, %v3466, %v3482
        %v3484 = vsel %vm3474, %v3481, %v3483
        %v3485 = vsel %vm3473, %v3463, %v3466
        %v3486 = vsel %vm3476, %v3472, 1326507024
        %v3487 = vsel %vm3475, %v3469, %v3486
        %v3488 = vsel %vm3474, %v3485, %v3487
        %v3489 = vshll.u32 %v3449, 8
        %v3490 = vmul.u32.u64.compose %v3489, %v3488
        %v3491 = vextract.low.u32 %v3490
        %v3492 = vextract.high.u32 %v3490
        %v3493 = vmul.u32.u64.compose %v3489, %v3484
        %v3494 = vextract.low.u32 %v3493
        %v3495 = vextract.high.u32 %v3493
        %v3496 = vmul.u32 %v3489, %v3480
        %v3497 = vadd.s32 %v3492, %v3494
        %vm3498 = vc.u32 %v3492, %v3494
        %v3499 = vadd.s32 %v3495, 1
        %v3500 = vsel %vm3498, %v3499, %v3495
        %v3501 = vadd.s32 %v3496, %v3500
        %v3502 = vadd.s32 %v3501, 536870912
        %v3503 = vshrl.u32 %v3502, 30
        %v3504 = vshll.u32 %v3503, 30
        %v3505 = vsub.s32 %v3501, %v3504
        %vm3506 = vcmp.lt.s32.totalorder %v3505, 0
        %v3507 = vsub.s32 0, %v3505
        %v3508 = vsel %vm3506, %v3507, %v3505
        %v3509 = vclz %v3508
        %v3510 = vsub.s32 %v3509, 2
        %vm3511 = vcmp.gt.s32.totalorder 0, %v3510
        %v3512 = vsel %vm3511, 0, %v3510
        %v3513 = vsub.s32 32, %v3512
        %v3514 = vshll.u32 %v3505, %v3512
        %v3515 = vshrl.u32 %v3497, %v3513
        %v3516 = vor.u32 %v3514, %v3515
        %v3517 = vsub.s32 4294967266, %v3512
        %v3518 = vadd.s32 %v3517, 127
        %v3519 = vshll.u32 %v3518, 23
        %v3520 = vor.u32 4788187, %v3519
        %v3521 = vand.u32 2147483647, %v3520
        %v3523 = vcvt.s32.f32 %v3516
        %v3524 = vmul.f32 %v3523, %v3521
        %v3525 = vxor.u32 %v3524, 2147483648
        %v3526 = vsel %vm3443, %v3525, %v3524
        %v3527 = vsub.s32 4, %v3503
        %v3528 = vsel %vm3443, %v3527, %v3503
        %v3529 = vsel %vm3442, %v1618, %v3526
        %v3530 = vsel %vm3442, 0, %v3528
        %v3531 = vcosq.f32.pop %v3529
        %v3532 = vsinq.f32.pop %v3529
        %vm3533 = vweird.f32 %v1618
        %v3534 = vand.u32 %v3530, 3
        %vm3535 = vcmp.lt.s32.totalorder %v3534, 2
        %vm3536 = vcmp.eq.s32.totalorder %v3534, 0
        %v3537 = vxor.u32 %v3532, 2147483648
        %v3538 = vsel %vm3536, %v3531, %v3537
        %vm3539 = vcmp.eq.s32.totalorder %v3534, 2
        %v3540 = vxor.u32 %v3531, 2147483648
        %v3541 = vsel %vm3539, %v3540, %v3532
        %v3542 = vsel %vm3535, %v3538, %v3541
        %v3543 = vsel %vm3533, nan, %v3542
        %v3544 = vand.u32 2147483647, %v1619
        %vm3545 = vcmp.le.f32.partialorder %v3544, 0.7853982
        %vm3546 = vcmp.lt.s32.totalorder %v1619, 0
        %v3547 = vand.u32 %v1619, 2139095040
        %v3548 = vshrl.u32 %v3547, 23
        %v3549 = vsub.s32 %v3548, 127
        %v3550 = vand.u32 2147483647, %v1619
        %v3551 = vand.u32 %v3550, 8388607
        %v3552 = vor.u32 %v3551, 8388608
        %v3553 = vsub.s32 0, %v3552
        %v3554 = vadd.s32 %v3549, 1
        %vm3555 = vcmp.gt.s32.totalorder %v3554, 0
        %v3556 = vsel %vm3555, %v3554, 0
        %v3557 = vshrl.u32 %v3556, 5
        %v3558 = vand.u32 %v3556, 31
        %v3559 = vsub.s32 32, %v3558
        %v3560 = vshrl.u32 683565275, %v3559
        %v3561 = vshll.u32 683565275, %v3558
        %v3562 = vshrl.u32 2475754826, %v3559
        %v3563 = vor.u32 %v3561, %v3562
        %v3564 = vshll.u32 2475754826, %v3558
        %v3565 = vshrl.u32 2131351028, %v3559
        %v3566 = vor.u32 %v3564, %v3565
        %v3567 = vshll.u32 2131351028, %v3558
        %v3568 = vshrl.u32 2102212464, %v3559
        %v3569 = vor.u32 %v3567, %v3568
        %v3570 = vshll.u32 2102212464, %v3558
        %v3571 = vshrl.u32 920167782, %v3559
        %v3572 = vor.u32 %v3570, %v3571
        %v3573 = vshll.u32 920167782, %v3558
        %v3574 = vshrl.u32 1326507024, %v3559
        %v3575 = vor.u32 %v3573, %v3574
        %vm3576 = vcmp.lt.s32.totalorder %v3557, 1
        %vm3577 = vcmp.lt.s32.totalorder %v3557, 2
        %vm3578 = vcmp.lt.s32.totalorder %v3557, 3
        %vm3579 = vcmp.lt.s32.totalorder %v3557, 4
        %v3580 = vsel %vm3576, %v3560, %v3563
        %v3581 = vsel %vm3579, %v3569, 2102212464
        %v3582 = vsel %vm3578, %v3566, %v3581
        %v3583 = vsel %vm3577, %v3580, %v3582
        %v3584 = vsel %vm3576, %v3563, %v3566
        %v3585 = vsel %vm3579, %v3572, 920167782
        %v3586 = vsel %vm3578, %v3569, %v3585
        %v3587 = vsel %vm3577, %v3584, %v3586
        %v3588 = vsel %vm3576, %v3566, %v3569
        %v3589 = vsel %vm3579, %v3575, 1326507024
        %v3590 = vsel %vm3578, %v3572, %v3589
        %v3591 = vsel %vm3577, %v3588, %v3590
        %v3592 = vshll.u32 %v3552, 8
        %v3593 = vmul.u32.u64.compose %v3592, %v3591
        %v3594 = vextract.low.u32 %v3593
        %v3595 = vextract.high.u32 %v3593
        %v3596 = vmul.u32.u64.compose %v3592, %v3587
        %v3597 = vextract.low.u32 %v3596
        %v3598 = vextract.high.u32 %v3596
        %v3599 = vmul.u32 %v3592, %v3583
        %v3600 = vadd.s32 %v3595, %v3597
        %vm3601 = vc.u32 %v3595, %v3597
        %v3602 = vadd.s32 %v3598, 1
        %v3603 = vsel %vm3601, %v3602, %v3598
        %v3604 = vadd.s32 %v3599, %v3603
        %v3605 = vadd.s32 %v3604, 536870912
        %v3606 = vshrl.u32 %v3605, 30
        %v3607 = vshll.u32 %v3606, 30
        %v3608 = vsub.s32 %v3604, %v3607
        %vm3609 = vcmp.lt.s32.totalorder %v3608, 0
        %v3610 = vsub.s32 0, %v3608
        %v3611 = vsel %vm3609, %v3610, %v3608
        %v3612 = vclz %v3611
        %v3613 = vsub.s32 %v3612, 2
        %vm3614 = vcmp.gt.s32.totalorder 0, %v3613
        %v3615 = vsel %vm3614, 0, %v3613
        %v3616 = vsub.s32 32, %v3615
        %v3617 = vshll.u32 %v3608, %v3615
        %v3618 = vshrl.u32 %v3600, %v3616
        %v3619 = vor.u32 %v3617, %v3618
        %v3620 = vsub.s32 4294967266, %v3615
        %v3621 = vadd.s32 %v3620, 127
        %v3622 = vshll.u32 %v3621, 23
        %v3623 = vor.u32 4788187, %v3622
        %v3624 = vand.u32 2147483647, %v3623
        %v3626 = vcvt.s32.f32 %v3619
        %v3627 = vmul.f32 %v3626, %v3624
        %v3628 = vxor.u32 %v3627, 2147483648
        %v3629 = vsel %vm3546, %v3628, %v3627
        %v3630 = vsub.s32 4, %v3606
        %v3631 = vsel %vm3546, %v3630, %v3606
        %v3632 = vsel %vm3545, %v1619, %v3629
        %v3633 = vsel %vm3545, 0, %v3631
        %v3634 = vcosq.f32.pop %v3632
        %v3635 = vsinq.f32.pop %v3632
        %vm3636 = vweird.f32 %v1619
        %v3637 = vand.u32 %v3633, 3
        %vm3638 = vcmp.lt.s32.totalorder %v3637, 2
        %vm3639 = vcmp.eq.s32.totalorder %v3637, 0
        %v3640 = vxor.u32 %v3635, 2147483648
        %v3641 = vsel %vm3639, %v3634, %v3640
        %vm3642 = vcmp.eq.s32.totalorder %v3637, 2
        %v3643 = vxor.u32 %v3634, 2147483648
        %v3644 = vsel %vm3642, %v3643, %v3635
        %v3645 = vsel %vm3638, %v3641, %v3644
        %v3646 = vsel %vm3636, nan, %v3645
        %v3647 = vand.u32 2147483647, %v1620
        %vm3648 = vcmp.le.f32.partialorder %v3647, 0.7853982
        %vm3649 = vcmp.lt.s32.totalorder %v1620, 0
        %v3650 = vand.u32 %v1620, 2139095040
        %v3651 = vshrl.u32 %v3650, 23
        %v3652 = vsub.s32 %v3651, 127
        %v3653 = vand.u32 2147483647, %v1620
        %v3654 = vand.u32 %v3653, 8388607
        %v3655 = vor.u32 %v3654, 8388608
        %v3656 = vsub.s32 0, %v3655
        %v3657 = vadd.s32 %v3652, 1
        %vm3658 = vcmp.gt.s32.totalorder %v3657, 0
        %v3659 = vsel %vm3658, %v3657, 0
        %v3660 = vshrl.u32 %v3659, 5
        %v3661 = vand.u32 %v3659, 31
        %v3662 = vsub.s32 32, %v3661
        %v3663 = vshrl.u32 683565275, %v3662
        %v3664 = vshll.u32 683565275, %v3661
        %v3665 = vshrl.u32 2475754826, %v3662
        %v3666 = vor.u32 %v3664, %v3665
        %v3667 = vshll.u32 2475754826, %v3661
        %v3668 = vshrl.u32 2131351028, %v3662
        %v3669 = vor.u32 %v3667, %v3668
        %v3670 = vshll.u32 2131351028, %v3661
        %v3671 = vshrl.u32 2102212464, %v3662
        %v3672 = vor.u32 %v3670, %v3671
        %v3673 = vshll.u32 2102212464, %v3661
        %v3674 = vshrl.u32 920167782, %v3662
        %v3675 = vor.u32 %v3673, %v3674
        %v3676 = vshll.u32 920167782, %v3661
        %v3677 = vshrl.u32 1326507024, %v3662
        %v3678 = vor.u32 %v3676, %v3677
        %vm3679 = vcmp.lt.s32.totalorder %v3660, 1
        %vm3680 = vcmp.lt.s32.totalorder %v3660, 2
        %vm3681 = vcmp.lt.s32.totalorder %v3660, 3
        %vm3682 = vcmp.lt.s32.totalorder %v3660, 4
        %v3683 = vsel %vm3679, %v3663, %v3666
        %v3684 = vsel %vm3682, %v3672, 2102212464
        %v3685 = vsel %vm3681, %v3669, %v3684
        %v3686 = vsel %vm3680, %v3683, %v3685
        %v3687 = vsel %vm3679, %v3666, %v3669
        %v3688 = vsel %vm3682, %v3675, 920167782
        %v3689 = vsel %vm3681, %v3672, %v3688
        %v3690 = vsel %vm3680, %v3687, %v3689
        %v3691 = vsel %vm3679, %v3669, %v3672
        %v3692 = vsel %vm3682, %v3678, 1326507024
        %v3693 = vsel %vm3681, %v3675, %v3692
        %v3694 = vsel %vm3680, %v3691, %v3693
        %v3695 = vshll.u32 %v3655, 8
        %v3696 = vmul.u32.u64.compose %v3695, %v3694
        %v3697 = vextract.low.u32 %v3696
        %v3698 = vextract.high.u32 %v3696
        %v3699 = vmul.u32.u64.compose %v3695, %v3690
        %v3700 = vextract.low.u32 %v3699
        %v3701 = vextract.high.u32 %v3699
        %v3702 = vmul.u32 %v3695, %v3686
        %v3703 = vadd.s32 %v3698, %v3700
        %vm3704 = vc.u32 %v3698, %v3700
        %v3705 = vadd.s32 %v3701, 1
        %v3706 = vsel %vm3704, %v3705, %v3701
        %v3707 = vadd.s32 %v3702, %v3706
        %v3708 = vadd.s32 %v3707, 536870912
        %v3709 = vshrl.u32 %v3708, 30
        %v3710 = vshll.u32 %v3709, 30
        %v3711 = vsub.s32 %v3707, %v3710
        %vm3712 = vcmp.lt.s32.totalorder %v3711, 0
        %v3713 = vsub.s32 0, %v3711
        %v3714 = vsel %vm3712, %v3713, %v3711
        %v3715 = vclz %v3714
        %v3716 = vsub.s32 %v3715, 2
        %vm3717 = vcmp.gt.s32.totalorder 0, %v3716
        %v3718 = vsel %vm3717, 0, %v3716
        %v3719 = vsub.s32 32, %v3718
        %v3720 = vshll.u32 %v3711, %v3718
        %v3721 = vshrl.u32 %v3703, %v3719
        %v3722 = vor.u32 %v3720, %v3721
        %v3723 = vsub.s32 4294967266, %v3718
        %v3724 = vadd.s32 %v3723, 127
        %v3725 = vshll.u32 %v3724, 23
        %v3726 = vor.u32 4788187, %v3725
        %v3727 = vand.u32 2147483647, %v3726
        %v3729 = vcvt.s32.f32 %v3722
        %v3730 = vmul.f32 %v3729, %v3727
        %v3731 = vxor.u32 %v3730, 2147483648
        %v3732 = vsel %vm3649, %v3731, %v3730
        %v3733 = vsub.s32 4, %v3709
        %v3734 = vsel %vm3649, %v3733, %v3709
        %v3735 = vsel %vm3648, %v1620, %v3732
        %v3736 = vsel %vm3648, 0, %v3734
        %v3737 = vcosq.f32.pop %v3735
        %v3738 = vsinq.f32.pop %v3735
        %vm3739 = vweird.f32 %v1620
        %v3740 = vand.u32 %v3736, 3
        %vm3741 = vcmp.lt.s32.totalorder %v3740, 2
        %vm3742 = vcmp.eq.s32.totalorder %v3740, 0
        %v3743 = vxor.u32 %v3738, 2147483648
        %v3744 = vsel %vm3742, %v3737, %v3743
        %vm3745 = vcmp.eq.s32.totalorder %v3740, 2
        %v3746 = vxor.u32 %v3737, 2147483648
        %v3747 = vsel %vm3745, %v3746, %v3738
        %v3748 = vsel %vm3741, %v3744, %v3747
        %v3749 = vsel %vm3739, nan, %v3748
        %v3750 = vand.u32 2147483647, %v1621
        %vm3751 = vcmp.le.f32.partialorder %v3750, 0.7853982
        %vm3752 = vcmp.lt.s32.totalorder %v1621, 0
        %v3753 = vand.u32 %v1621, 2139095040
        %v3754 = vshrl.u32 %v3753, 23
        %v3755 = vsub.s32 %v3754, 127
        %v3756 = vand.u32 2147483647, %v1621
        %v3757 = vand.u32 %v3756, 8388607
        %v3758 = vor.u32 %v3757, 8388608
        %v3759 = vsub.s32 0, %v3758
        %v3760 = vadd.s32 %v3755, 1
        %vm3761 = vcmp.gt.s32.totalorder %v3760, 0
        %v3762 = vsel %vm3761, %v3760, 0
        %v3763 = vshrl.u32 %v3762, 5
        %v3764 = vand.u32 %v3762, 31
        %v3765 = vsub.s32 32, %v3764
        %v3766 = vshrl.u32 683565275, %v3765
        %v3767 = vshll.u32 683565275, %v3764
        %v3768 = vshrl.u32 2475754826, %v3765
        %v3769 = vor.u32 %v3767, %v3768
        %v3770 = vshll.u32 2475754826, %v3764
        %v3771 = vshrl.u32 2131351028, %v3765
        %v3772 = vor.u32 %v3770, %v3771
        %v3773 = vshll.u32 2131351028, %v3764
        %v3774 = vshrl.u32 2102212464, %v3765
        %v3775 = vor.u32 %v3773, %v3774
        %v3776 = vshll.u32 2102212464, %v3764
        %v3777 = vshrl.u32 920167782, %v3765
        %v3778 = vor.u32 %v3776, %v3777
        %v3779 = vshll.u32 920167782, %v3764
        %v3780 = vshrl.u32 1326507024, %v3765
        %v3781 = vor.u32 %v3779, %v3780
        %vm3782 = vcmp.lt.s32.totalorder %v3763, 1
        %vm3783 = vcmp.lt.s32.totalorder %v3763, 2
        %vm3784 = vcmp.lt.s32.totalorder %v3763, 3
        %vm3785 = vcmp.lt.s32.totalorder %v3763, 4
        %v3786 = vsel %vm3782, %v3766, %v3769
        %v3787 = vsel %vm3785, %v3775, 2102212464
        %v3788 = vsel %vm3784, %v3772, %v3787
        %v3789 = vsel %vm3783, %v3786, %v3788
        %v3790 = vsel %vm3782, %v3769, %v3772
        %v3791 = vsel %vm3785, %v3778, 920167782
        %v3792 = vsel %vm3784, %v3775, %v3791
        %v3793 = vsel %vm3783, %v3790, %v3792
        %v3794 = vsel %vm3782, %v3772, %v3775
        %v3795 = vsel %vm3785, %v3781, 1326507024
        %v3796 = vsel %vm3784, %v3778, %v3795
        %v3797 = vsel %vm3783, %v3794, %v3796
        %v3798 = vshll.u32 %v3758, 8
        %v3799 = vmul.u32.u64.compose %v3798, %v3797
        %v3800 = vextract.low.u32 %v3799
        %v3801 = vextract.high.u32 %v3799
        %v3802 = vmul.u32.u64.compose %v3798, %v3793
        %v3803 = vextract.low.u32 %v3802
        %v3804 = vextract.high.u32 %v3802
        %v3805 = vmul.u32 %v3798, %v3789
        %v3806 = vadd.s32 %v3801, %v3803
        %vm3807 = vc.u32 %v3801, %v3803
        %v3808 = vadd.s32 %v3804, 1
        %v3809 = vsel %vm3807, %v3808, %v3804
        %v3810 = vadd.s32 %v3805, %v3809
        %v3811 = vadd.s32 %v3810, 536870912
        %v3812 = vshrl.u32 %v3811, 30
        %v3813 = vshll.u32 %v3812, 30
        %v3814 = vsub.s32 %v3810, %v3813
        %vm3815 = vcmp.lt.s32.totalorder %v3814, 0
        %v3816 = vsub.s32 0, %v3814
        %v3817 = vsel %vm3815, %v3816, %v3814
        %v3818 = vclz %v3817
        %v3819 = vsub.s32 %v3818, 2
        %vm3820 = vcmp.gt.s32.totalorder 0, %v3819
        %v3821 = vsel %vm3820, 0, %v3819
        %v3822 = vsub.s32 32, %v3821
        %v3823 = vshll.u32 %v3814, %v3821
        %v3824 = vshrl.u32 %v3806, %v3822
        %v3825 = vor.u32 %v3823, %v3824
        %v3826 = vsub.s32 4294967266, %v3821
        %v3827 = vadd.s32 %v3826, 127
        %v3828 = vshll.u32 %v3827, 23
        %v3829 = vor.u32 4788187, %v3828
        %v3830 = vand.u32 2147483647, %v3829
        %v3832 = vcvt.s32.f32 %v3825
        %v3833 = vmul.f32 %v3832, %v3830
        %v3834 = vxor.u32 %v3833, 2147483648
        %v3835 = vsel %vm3752, %v3834, %v3833
        %v3836 = vsub.s32 4, %v3812
        %v3837 = vsel %vm3752, %v3836, %v3812
        %v3838 = vsel %vm3751, %v1621, %v3835
        %v3839 = vsel %vm3751, 0, %v3837
        %v3840 = vcosq.f32.pop %v3838
        %v3841 = vsinq.f32.pop %v3838
        %vm3842 = vweird.f32 %v1621
        %v3843 = vand.u32 %v3839, 3
        %vm3844 = vcmp.lt.s32.totalorder %v3843, 2
        %vm3845 = vcmp.eq.s32.totalorder %v3843, 0
        %v3846 = vxor.u32 %v3841, 2147483648
        %v3847 = vsel %vm3845, %v3840, %v3846
        %vm3848 = vcmp.eq.s32.totalorder %v3843, 2
        %v3849 = vxor.u32 %v3840, 2147483648
        %v3850 = vsel %vm3848, %v3849, %v3841
        %v3851 = vsel %vm3844, %v3847, %v3850
        %v3852 = vsel %vm3842, nan, %v3851
        %v3853 = vand.u32 2147483647, %v1622
        %vm3854 = vcmp.le.f32.partialorder %v3853, 0.7853982
        %vm3855 = vcmp.lt.s32.totalorder %v1622, 0
        %v3856 = vand.u32 %v1622, 2139095040
        %v3857 = vshrl.u32 %v3856, 23
        %v3858 = vsub.s32 %v3857, 127
        %v3859 = vand.u32 2147483647, %v1622
        %v3860 = vand.u32 %v3859, 8388607
        %v3861 = vor.u32 %v3860, 8388608
        %v3862 = vsub.s32 0, %v3861
        %v3863 = vadd.s32 %v3858, 1
        %vm3864 = vcmp.gt.s32.totalorder %v3863, 0
        %v3865 = vsel %vm3864, %v3863, 0
        %v3866 = vshrl.u32 %v3865, 5
        %v3867 = vand.u32 %v3865, 31
        %v3868 = vsub.s32 32, %v3867
        %v3869 = vshrl.u32 683565275, %v3868
        %v3870 = vshll.u32 683565275, %v3867
        %v3871 = vshrl.u32 2475754826, %v3868
        %v3872 = vor.u32 %v3870, %v3871
        %v3873 = vshll.u32 2475754826, %v3867
        %v3874 = vshrl.u32 2131351028, %v3868
        %v3875 = vor.u32 %v3873, %v3874
        %v3876 = vshll.u32 2131351028, %v3867
        %v3877 = vshrl.u32 2102212464, %v3868
        %v3878 = vor.u32 %v3876, %v3877
        %v3879 = vshll.u32 2102212464, %v3867
        %v3880 = vshrl.u32 920167782, %v3868
        %v3881 = vor.u32 %v3879, %v3880
        %v3882 = vshll.u32 920167782, %v3867
        %v3883 = vshrl.u32 1326507024, %v3868
        %v3884 = vor.u32 %v3882, %v3883
        %vm3885 = vcmp.lt.s32.totalorder %v3866, 1
        %vm3886 = vcmp.lt.s32.totalorder %v3866, 2
        %vm3887 = vcmp.lt.s32.totalorder %v3866, 3
        %vm3888 = vcmp.lt.s32.totalorder %v3866, 4
        %v3889 = vsel %vm3885, %v3869, %v3872
        %v3890 = vsel %vm3888, %v3878, 2102212464
        %v3891 = vsel %vm3887, %v3875, %v3890
        %v3892 = vsel %vm3886, %v3889, %v3891
        %v3893 = vsel %vm3885, %v3872, %v3875
        %v3894 = vsel %vm3888, %v3881, 920167782
        %v3895 = vsel %vm3887, %v3878, %v3894
        %v3896 = vsel %vm3886, %v3893, %v3895
        %v3897 = vsel %vm3885, %v3875, %v3878
        %v3898 = vsel %vm3888, %v3884, 1326507024
        %v3899 = vsel %vm3887, %v3881, %v3898
        %v3900 = vsel %vm3886, %v3897, %v3899
        %v3901 = vshll.u32 %v3861, 8
        %v3902 = vmul.u32.u64.compose %v3901, %v3900
        %v3903 = vextract.low.u32 %v3902
        %v3904 = vextract.high.u32 %v3902
        %v3905 = vmul.u32.u64.compose %v3901, %v3896
        %v3906 = vextract.low.u32 %v3905
        %v3907 = vextract.high.u32 %v3905
        %v3908 = vmul.u32 %v3901, %v3892
        %v3909 = vadd.s32 %v3904, %v3906
        %vm3910 = vc.u32 %v3904, %v3906
        %v3911 = vadd.s32 %v3907, 1
        %v3912 = vsel %vm3910, %v3911, %v3907
        %v3913 = vadd.s32 %v3908, %v3912
        %v3914 = vadd.s32 %v3913, 536870912
        %v3915 = vshrl.u32 %v3914, 30
        %v3916 = vshll.u32 %v3915, 30
        %v3917 = vsub.s32 %v3913, %v3916
        %vm3918 = vcmp.lt.s32.totalorder %v3917, 0
        %v3919 = vsub.s32 0, %v3917
        %v3920 = vsel %vm3918, %v3919, %v3917
        %v3921 = vclz %v3920
        %v3922 = vsub.s32 %v3921, 2
        %vm3923 = vcmp.gt.s32.totalorder 0, %v3922
        %v3924 = vsel %vm3923, 0, %v3922
        %v3925 = vsub.s32 32, %v3924
        %v3926 = vshll.u32 %v3917, %v3924
        %v3927 = vshrl.u32 %v3909, %v3925
        %v3928 = vor.u32 %v3926, %v3927
        %v3929 = vsub.s32 4294967266, %v3924
        %v3930 = vadd.s32 %v3929, 127
        %v3931 = vshll.u32 %v3930, 23
        %v3932 = vor.u32 4788187, %v3931
        %v3933 = vand.u32 2147483647, %v3932
        %v3935 = vcvt.s32.f32 %v3928
        %v3936 = vmul.f32 %v3935, %v3933
        %v3937 = vxor.u32 %v3936, 2147483648
        %v3938 = vsel %vm3855, %v3937, %v3936
        %v3939 = vsub.s32 4, %v3915
        %v3940 = vsel %vm3855, %v3939, %v3915
        %v3941 = vsel %vm3854, %v1622, %v3938
        %v3942 = vsel %vm3854, 0, %v3940
        %v3943 = vcosq.f32.pop %v3941
        %v3944 = vsinq.f32.pop %v3941
        %vm3945 = vweird.f32 %v1622
        %v3946 = vand.u32 %v3942, 3
        %vm3947 = vcmp.lt.s32.totalorder %v3946, 2
        %vm3948 = vcmp.eq.s32.totalorder %v3946, 0
        %v3949 = vxor.u32 %v3944, 2147483648
        %v3950 = vsel %vm3948, %v3943, %v3949
        %vm3951 = vcmp.eq.s32.totalorder %v3946, 2
        %v3952 = vxor.u32 %v3943, 2147483648
        %v3953 = vsel %vm3951, %v3952, %v3944
        %v3954 = vsel %vm3947, %v3950, %v3953
        %v3955 = vsel %vm3945, nan, %v3954
        %v3956 = vand.u32 2147483647, %v1623
        %vm3957 = vcmp.le.f32.partialorder %v3956, 0.7853982
        %vm3958 = vcmp.lt.s32.totalorder %v1623, 0
        %v3959 = vand.u32 %v1623, 2139095040
        %v3960 = vshrl.u32 %v3959, 23
        %v3961 = vsub.s32 %v3960, 127
        %v3962 = vand.u32 2147483647, %v1623
        %v3963 = vand.u32 %v3962, 8388607
        %v3964 = vor.u32 %v3963, 8388608
        %v3965 = vsub.s32 0, %v3964
        %v3966 = vadd.s32 %v3961, 1
        %vm3967 = vcmp.gt.s32.totalorder %v3966, 0
        %v3968 = vsel %vm3967, %v3966, 0
        %v3969 = vshrl.u32 %v3968, 5
        %v3970 = vand.u32 %v3968, 31
        %v3971 = vsub.s32 32, %v3970
        %v3972 = vshrl.u32 683565275, %v3971
        %v3973 = vshll.u32 683565275, %v3970
        %v3974 = vshrl.u32 2475754826, %v3971
        %v3975 = vor.u32 %v3973, %v3974
        %v3976 = vshll.u32 2475754826, %v3970
        %v3977 = vshrl.u32 2131351028, %v3971
        %v3978 = vor.u32 %v3976, %v3977
        %v3979 = vshll.u32 2131351028, %v3970
        %v3980 = vshrl.u32 2102212464, %v3971
        %v3981 = vor.u32 %v3979, %v3980
        %v3982 = vshll.u32 2102212464, %v3970
        %v3983 = vshrl.u32 920167782, %v3971
        %v3984 = vor.u32 %v3982, %v3983
        %v3985 = vshll.u32 920167782, %v3970
        %v3986 = vshrl.u32 1326507024, %v3971
        %v3987 = vor.u32 %v3985, %v3986
        %vm3988 = vcmp.lt.s32.totalorder %v3969, 1
        %vm3989 = vcmp.lt.s32.totalorder %v3969, 2
        %vm3990 = vcmp.lt.s32.totalorder %v3969, 3
        %vm3991 = vcmp.lt.s32.totalorder %v3969, 4
        %v3992 = vsel %vm3988, %v3972, %v3975
        %v3993 = vsel %vm3991, %v3981, 2102212464
        %v3994 = vsel %vm3990, %v3978, %v3993
        %v3995 = vsel %vm3989, %v3992, %v3994
        %v3996 = vsel %vm3988, %v3975, %v3978
        %v3997 = vsel %vm3991, %v3984, 920167782
        %v3998 = vsel %vm3990, %v3981, %v3997
        %v3999 = vsel %vm3989, %v3996, %v3998
        %v4000 = vsel %vm3988, %v3978, %v3981
        %v4001 = vsel %vm3991, %v3987, 1326507024
        %v4002 = vsel %vm3990, %v3984, %v4001
        %v4003 = vsel %vm3989, %v4000, %v4002
        %v4004 = vshll.u32 %v3964, 8
        %v4005 = vmul.u32.u64.compose %v4004, %v4003
        %v4006 = vextract.low.u32 %v4005
        %v4007 = vextract.high.u32 %v4005
        %v4008 = vmul.u32.u64.compose %v4004, %v3999
        %v4009 = vextract.low.u32 %v4008
        %v4010 = vextract.high.u32 %v4008
        %v4011 = vmul.u32 %v4004, %v3995
        %v4012 = vadd.s32 %v4007, %v4009
        %vm4013 = vc.u32 %v4007, %v4009
        %v4014 = vadd.s32 %v4010, 1
        %v4015 = vsel %vm4013, %v4014, %v4010
        %v4016 = vadd.s32 %v4011, %v4015
        %v4017 = vadd.s32 %v4016, 536870912
        %v4018 = vshrl.u32 %v4017, 30
        %v4019 = vshll.u32 %v4018, 30
        %v4020 = vsub.s32 %v4016, %v4019
        %vm4021 = vcmp.lt.s32.totalorder %v4020, 0
        %v4022 = vsub.s32 0, %v4020
        %v4023 = vsel %vm4021, %v4022, %v4020
        %v4024 = vclz %v4023
        %v4025 = vsub.s32 %v4024, 2
        %vm4026 = vcmp.gt.s32.totalorder 0, %v4025
        %v4027 = vsel %vm4026, 0, %v4025
        %v4028 = vsub.s32 32, %v4027
        %v4029 = vshll.u32 %v4020, %v4027
        %v4030 = vshrl.u32 %v4012, %v4028
        %v4031 = vor.u32 %v4029, %v4030
        %v4032 = vsub.s32 4294967266, %v4027
        %v4033 = vadd.s32 %v4032, 127
        %v4034 = vshll.u32 %v4033, 23
        %v4035 = vor.u32 4788187, %v4034
        %v4036 = vand.u32 2147483647, %v4035
        %v4038 = vcvt.s32.f32 %v4031
        %v4039 = vmul.f32 %v4038, %v4036
        %v4040 = vxor.u32 %v4039, 2147483648
        %v4041 = vsel %vm3958, %v4040, %v4039
        %v4042 = vsub.s32 4, %v4018
        %v4043 = vsel %vm3958, %v4042, %v4018
        %v4044 = vsel %vm3957, %v1623, %v4041
        %v4045 = vsel %vm3957, 0, %v4043
        %v4046 = vcosq.f32.pop %v4044
        %v4047 = vsinq.f32.pop %v4044
        %vm4048 = vweird.f32 %v1623
        %v4049 = vand.u32 %v4045, 3
        %vm4050 = vcmp.lt.s32.totalorder %v4049, 2
        %vm4051 = vcmp.eq.s32.totalorder %v4049, 0
        %v4052 = vxor.u32 %v4047, 2147483648
        %v4053 = vsel %vm4051, %v4046, %v4052
        %vm4054 = vcmp.eq.s32.totalorder %v4049, 2
        %v4055 = vxor.u32 %v4046, 2147483648
        %v4056 = vsel %vm4054, %v4055, %v4047
        %v4057 = vsel %vm4050, %v4053, %v4056
        %v4058 = vsel %vm4048, nan, %v4057
        %v4059 = vand.u32 2147483647, %v1624
        %vm4060 = vcmp.le.f32.partialorder %v4059, 0.7853982
        %vm4061 = vcmp.lt.s32.totalorder %v1624, 0
        %v4062 = vand.u32 %v1624, 2139095040
        %v4063 = vshrl.u32 %v4062, 23
        %v4064 = vsub.s32 %v4063, 127
        %v4065 = vand.u32 2147483647, %v1624
        %v4066 = vand.u32 %v4065, 8388607
        %v4067 = vor.u32 %v4066, 8388608
        %v4068 = vsub.s32 0, %v4067
        %v4069 = vadd.s32 %v4064, 1
        %vm4070 = vcmp.gt.s32.totalorder %v4069, 0
        %v4071 = vsel %vm4070, %v4069, 0
        %v4072 = vshrl.u32 %v4071, 5
        %v4073 = vand.u32 %v4071, 31
        %v4074 = vsub.s32 32, %v4073
        %v4075 = vshrl.u32 683565275, %v4074
        %v4076 = vshll.u32 683565275, %v4073
        %v4077 = vshrl.u32 2475754826, %v4074
        %v4078 = vor.u32 %v4076, %v4077
        %v4079 = vshll.u32 2475754826, %v4073
        %v4080 = vshrl.u32 2131351028, %v4074
        %v4081 = vor.u32 %v4079, %v4080
        %v4082 = vshll.u32 2131351028, %v4073
        %v4083 = vshrl.u32 2102212464, %v4074
        %v4084 = vor.u32 %v4082, %v4083
        %v4085 = vshll.u32 2102212464, %v4073
        %v4086 = vshrl.u32 920167782, %v4074
        %v4087 = vor.u32 %v4085, %v4086
        %v4088 = vshll.u32 920167782, %v4073
        %v4089 = vshrl.u32 1326507024, %v4074
        %v4090 = vor.u32 %v4088, %v4089
        %vm4091 = vcmp.lt.s32.totalorder %v4072, 1
        %vm4092 = vcmp.lt.s32.totalorder %v4072, 2
        %vm4093 = vcmp.lt.s32.totalorder %v4072, 3
        %vm4094 = vcmp.lt.s32.totalorder %v4072, 4
        %v4095 = vsel %vm4091, %v4075, %v4078
        %v4096 = vsel %vm4094, %v4084, 2102212464
        %v4097 = vsel %vm4093, %v4081, %v4096
        %v4098 = vsel %vm4092, %v4095, %v4097
        %v4099 = vsel %vm4091, %v4078, %v4081
        %v4100 = vsel %vm4094, %v4087, 920167782
        %v4101 = vsel %vm4093, %v4084, %v4100
        %v4102 = vsel %vm4092, %v4099, %v4101
        %v4103 = vsel %vm4091, %v4081, %v4084
        %v4104 = vsel %vm4094, %v4090, 1326507024
        %v4105 = vsel %vm4093, %v4087, %v4104
        %v4106 = vsel %vm4092, %v4103, %v4105
        %v4107 = vshll.u32 %v4067, 8
        %v4108 = vmul.u32.u64.compose %v4107, %v4106
        %v4109 = vextract.low.u32 %v4108
        %v4110 = vextract.high.u32 %v4108
        %v4111 = vmul.u32.u64.compose %v4107, %v4102
        %v4112 = vextract.low.u32 %v4111
        %v4113 = vextract.high.u32 %v4111
        %v4114 = vmul.u32 %v4107, %v4098
        %v4115 = vadd.s32 %v4110, %v4112
        %vm4116 = vc.u32 %v4110, %v4112
        %v4117 = vadd.s32 %v4113, 1
        %v4118 = vsel %vm4116, %v4117, %v4113
        %v4119 = vadd.s32 %v4114, %v4118
        %v4120 = vadd.s32 %v4119, 536870912
        %v4121 = vshrl.u32 %v4120, 30
        %v4122 = vshll.u32 %v4121, 30
        %v4123 = vsub.s32 %v4119, %v4122
        %vm4124 = vcmp.lt.s32.totalorder %v4123, 0
        %v4125 = vsub.s32 0, %v4123
        %v4126 = vsel %vm4124, %v4125, %v4123
        %v4127 = vclz %v4126
        %v4128 = vsub.s32 %v4127, 2
        %vm4129 = vcmp.gt.s32.totalorder 0, %v4128
        %v4130 = vsel %vm4129, 0, %v4128
        %v4131 = vsub.s32 32, %v4130
        %v4132 = vshll.u32 %v4123, %v4130
        %v4133 = vshrl.u32 %v4115, %v4131
        %v4134 = vor.u32 %v4132, %v4133
        %v4135 = vsub.s32 4294967266, %v4130
        %v4136 = vadd.s32 %v4135, 127
        %v4137 = vshll.u32 %v4136, 23
        %v4138 = vor.u32 4788187, %v4137
        %v4139 = vand.u32 2147483647, %v4138
        %v4141 = vcvt.s32.f32 %v4134
        %v4142 = vmul.f32 %v4141, %v4139
        %v4143 = vxor.u32 %v4142, 2147483648
        %v4144 = vsel %vm4061, %v4143, %v4142
        %v4145 = vsub.s32 4, %v4121
        %v4146 = vsel %vm4061, %v4145, %v4121
        %v4147 = vsel %vm4060, %v1624, %v4144
        %v4148 = vsel %vm4060, 0, %v4146
        %v4149 = vcosq.f32.pop %v4147
        %v4150 = vsinq.f32.pop %v4147
        %vm4151 = vweird.f32 %v1624
        %v4152 = vand.u32 %v4148, 3
        %vm4153 = vcmp.lt.s32.totalorder %v4152, 2
        %vm4154 = vcmp.eq.s32.totalorder %v4152, 0
        %v4155 = vxor.u32 %v4150, 2147483648
        %v4156 = vsel %vm4154, %v4149, %v4155
        %vm4157 = vcmp.eq.s32.totalorder %v4152, 2
        %v4158 = vxor.u32 %v4149, 2147483648
        %v4159 = vsel %vm4157, %v4158, %v4150
        %v4160 = vsel %vm4153, %v4156, %v4159
        %v4161 = vsel %vm4151, nan, %v4160
        %v4162 = vand.u32 2147483647, %v1625
        %vm4163 = vcmp.le.f32.partialorder %v4162, 0.7853982
        %vm4164 = vcmp.lt.s32.totalorder %v1625, 0
        %v4165 = vand.u32 %v1625, 2139095040
        %v4166 = vshrl.u32 %v4165, 23
        %v4167 = vsub.s32 %v4166, 127
        %v4168 = vand.u32 2147483647, %v1625
        %v4169 = vand.u32 %v4168, 8388607
        %v4170 = vor.u32 %v4169, 8388608
        %v4171 = vsub.s32 0, %v4170
        %v4172 = vadd.s32 %v4167, 1
        %vm4173 = vcmp.gt.s32.totalorder %v4172, 0
        %v4174 = vsel %vm4173, %v4172, 0
        %v4175 = vshrl.u32 %v4174, 5
        %v4176 = vand.u32 %v4174, 31
        %v4177 = vsub.s32 32, %v4176
        %v4178 = vshrl.u32 683565275, %v4177
        %v4179 = vshll.u32 683565275, %v4176
        %v4180 = vshrl.u32 2475754826, %v4177
        %v4181 = vor.u32 %v4179, %v4180
        %v4182 = vshll.u32 2475754826, %v4176
        %v4183 = vshrl.u32 2131351028, %v4177
        %v4184 = vor.u32 %v4182, %v4183
        %v4185 = vshll.u32 2131351028, %v4176
        %v4186 = vshrl.u32 2102212464, %v4177
        %v4187 = vor.u32 %v4185, %v4186
        %v4188 = vshll.u32 2102212464, %v4176
        %v4189 = vshrl.u32 920167782, %v4177
        %v4190 = vor.u32 %v4188, %v4189
        %v4191 = vshll.u32 920167782, %v4176
        %v4192 = vshrl.u32 1326507024, %v4177
        %v4193 = vor.u32 %v4191, %v4192
        %vm4194 = vcmp.lt.s32.totalorder %v4175, 1
        %vm4195 = vcmp.lt.s32.totalorder %v4175, 2
        %vm4196 = vcmp.lt.s32.totalorder %v4175, 3
        %vm4197 = vcmp.lt.s32.totalorder %v4175, 4
        %v4198 = vsel %vm4194, %v4178, %v4181
        %v4199 = vsel %vm4197, %v4187, 2102212464
        %v4200 = vsel %vm4196, %v4184, %v4199
        %v4201 = vsel %vm4195, %v4198, %v4200
        %v4202 = vsel %vm4194, %v4181, %v4184
        %v4203 = vsel %vm4197, %v4190, 920167782
        %v4204 = vsel %vm4196, %v4187, %v4203
        %v4205 = vsel %vm4195, %v4202, %v4204
        %v4206 = vsel %vm4194, %v4184, %v4187
        %v4207 = vsel %vm4197, %v4193, 1326507024
        %v4208 = vsel %vm4196, %v4190, %v4207
        %v4209 = vsel %vm4195, %v4206, %v4208
        %v4210 = vshll.u32 %v4170, 8
        %v4211 = vmul.u32.u64.compose %v4210, %v4209
        %v4212 = vextract.low.u32 %v4211
        %v4213 = vextract.high.u32 %v4211
        %v4214 = vmul.u32.u64.compose %v4210, %v4205
        %v4215 = vextract.low.u32 %v4214
        %v4216 = vextract.high.u32 %v4214
        %v4217 = vmul.u32 %v4210, %v4201
        %v4218 = vadd.s32 %v4213, %v4215
        %vm4219 = vc.u32 %v4213, %v4215
        %v4220 = vadd.s32 %v4216, 1
        %v4221 = vsel %vm4219, %v4220, %v4216
        %v4222 = vadd.s32 %v4217, %v4221
        %v4223 = vadd.s32 %v4222, 536870912
        %v4224 = vshrl.u32 %v4223, 30
        %v4225 = vshll.u32 %v4224, 30
        %v4226 = vsub.s32 %v4222, %v4225
        %vm4227 = vcmp.lt.s32.totalorder %v4226, 0
        %v4228 = vsub.s32 0, %v4226
        %v4229 = vsel %vm4227, %v4228, %v4226
        %v4230 = vclz %v4229
        %v4231 = vsub.s32 %v4230, 2
        %vm4232 = vcmp.gt.s32.totalorder 0, %v4231
        %v4233 = vsel %vm4232, 0, %v4231
        %v4234 = vsub.s32 32, %v4233
        %v4235 = vshll.u32 %v4226, %v4233
        %v4236 = vshrl.u32 %v4218, %v4234
        %v4237 = vor.u32 %v4235, %v4236
        %v4238 = vsub.s32 4294967266, %v4233
        %v4239 = vadd.s32 %v4238, 127
        %v4240 = vshll.u32 %v4239, 23
        %v4241 = vor.u32 4788187, %v4240
        %v4242 = vand.u32 2147483647, %v4241
        %v4244 = vcvt.s32.f32 %v4237
        %v4245 = vmul.f32 %v4244, %v4242
        %v4246 = vxor.u32 %v4245, 2147483648
        %v4247 = vsel %vm4164, %v4246, %v4245
        %v4248 = vsub.s32 4, %v4224
        %v4249 = vsel %vm4164, %v4248, %v4224
        %v4250 = vsel %vm4163, %v1625, %v4247
        %v4251 = vsel %vm4163, 0, %v4249
        %v4252 = vcosq.f32.pop %v4250
        %v4253 = vsinq.f32.pop %v4250
        %vm4254 = vweird.f32 %v1625
        %v4255 = vand.u32 %v4251, 3
        %vm4256 = vcmp.lt.s32.totalorder %v4255, 2
        %vm4257 = vcmp.eq.s32.totalorder %v4255, 0
        %v4258 = vxor.u32 %v4253, 2147483648
        %v4259 = vsel %vm4257, %v4252, %v4258
        %vm4260 = vcmp.eq.s32.totalorder %v4255, 2
        %v4261 = vxor.u32 %v4252, 2147483648
        %v4262 = vsel %vm4260, %v4261, %v4253
        %v4263 = vsel %vm4256, %v4259, %v4262
        %v4264 = vsel %vm4254, nan, %v4263
        %v4265 = vand.u32 2147483647, %v1626
        %vm4266 = vcmp.le.f32.partialorder %v4265, 0.7853982
        %vm4267 = vcmp.lt.s32.totalorder %v1626, 0
        %v4268 = vand.u32 %v1626, 2139095040
        %v4269 = vshrl.u32 %v4268, 23
        %v4270 = vsub.s32 %v4269, 127
        %v4271 = vand.u32 2147483647, %v1626
        %v4272 = vand.u32 %v4271, 8388607
        %v4273 = vor.u32 %v4272, 8388608
        %v4274 = vsub.s32 0, %v4273
        %v4275 = vadd.s32 %v4270, 1
        %vm4276 = vcmp.gt.s32.totalorder %v4275, 0
        %v4277 = vsel %vm4276, %v4275, 0
        %v4278 = vshrl.u32 %v4277, 5
        %v4279 = vand.u32 %v4277, 31
        %v4280 = vsub.s32 32, %v4279
        %v4281 = vshrl.u32 683565275, %v4280
        %v4282 = vshll.u32 683565275, %v4279
        %v4283 = vshrl.u32 2475754826, %v4280
        %v4284 = vor.u32 %v4282, %v4283
        %v4285 = vshll.u32 2475754826, %v4279
        %v4286 = vshrl.u32 2131351028, %v4280
        %v4287 = vor.u32 %v4285, %v4286
        %v4288 = vshll.u32 2131351028, %v4279
        %v4289 = vshrl.u32 2102212464, %v4280
        %v4290 = vor.u32 %v4288, %v4289
        %v4291 = vshll.u32 2102212464, %v4279
        %v4292 = vshrl.u32 920167782, %v4280
        %v4293 = vor.u32 %v4291, %v4292
        %v4294 = vshll.u32 920167782, %v4279
        %v4295 = vshrl.u32 1326507024, %v4280
        %v4296 = vor.u32 %v4294, %v4295
        %vm4297 = vcmp.lt.s32.totalorder %v4278, 1
        %vm4298 = vcmp.lt.s32.totalorder %v4278, 2
        %vm4299 = vcmp.lt.s32.totalorder %v4278, 3
        %vm4300 = vcmp.lt.s32.totalorder %v4278, 4
        %v4301 = vsel %vm4297, %v4281, %v4284
        %v4302 = vsel %vm4300, %v4290, 2102212464
        %v4303 = vsel %vm4299, %v4287, %v4302
        %v4304 = vsel %vm4298, %v4301, %v4303
        %v4305 = vsel %vm4297, %v4284, %v4287
        %v4306 = vsel %vm4300, %v4293, 920167782
        %v4307 = vsel %vm4299, %v4290, %v4306
        %v4308 = vsel %vm4298, %v4305, %v4307
        %v4309 = vsel %vm4297, %v4287, %v4290
        %v4310 = vsel %vm4300, %v4296, 1326507024
        %v4311 = vsel %vm4299, %v4293, %v4310
        %v4312 = vsel %vm4298, %v4309, %v4311
        %v4313 = vshll.u32 %v4273, 8
        %v4314 = vmul.u32.u64.compose %v4313, %v4312
        %v4315 = vextract.low.u32 %v4314
        %v4316 = vextract.high.u32 %v4314
        %v4317 = vmul.u32.u64.compose %v4313, %v4308
        %v4318 = vextract.low.u32 %v4317
        %v4319 = vextract.high.u32 %v4317
        %v4320 = vmul.u32 %v4313, %v4304
        %v4321 = vadd.s32 %v4316, %v4318
        %vm4322 = vc.u32 %v4316, %v4318
        %v4323 = vadd.s32 %v4319, 1
        %v4324 = vsel %vm4322, %v4323, %v4319
        %v4325 = vadd.s32 %v4320, %v4324
        %v4326 = vadd.s32 %v4325, 536870912
        %v4327 = vshrl.u32 %v4326, 30
        %v4328 = vshll.u32 %v4327, 30
        %v4329 = vsub.s32 %v4325, %v4328
        %vm4330 = vcmp.lt.s32.totalorder %v4329, 0
        %v4331 = vsub.s32 0, %v4329
        %v4332 = vsel %vm4330, %v4331, %v4329
        %v4333 = vclz %v4332
        %v4334 = vsub.s32 %v4333, 2
        %vm4335 = vcmp.gt.s32.totalorder 0, %v4334
        %v4336 = vsel %vm4335, 0, %v4334
        %v4337 = vsub.s32 32, %v4336
        %v4338 = vshll.u32 %v4329, %v4336
        %v4339 = vshrl.u32 %v4321, %v4337
        %v4340 = vor.u32 %v4338, %v4339
        %v4341 = vsub.s32 4294967266, %v4336
        %v4342 = vadd.s32 %v4341, 127
        %v4343 = vshll.u32 %v4342, 23
        %v4344 = vor.u32 4788187, %v4343
        %v4345 = vand.u32 2147483647, %v4344
        %v4347 = vcvt.s32.f32 %v4340
        %v4348 = vmul.f32 %v4347, %v4345
        %v4349 = vxor.u32 %v4348, 2147483648
        %v4350 = vsel %vm4267, %v4349, %v4348
        %v4351 = vsub.s32 4, %v4327
        %v4352 = vsel %vm4267, %v4351, %v4327
        %v4353 = vsel %vm4266, %v1626, %v4350
        %v4354 = vsel %vm4266, 0, %v4352
        %v4355 = vcosq.f32.pop %v4353
        %v4356 = vsinq.f32.pop %v4353
        %vm4357 = vweird.f32 %v1626
        %v4358 = vand.u32 %v4354, 3
        %vm4359 = vcmp.lt.s32.totalorder %v4358, 2
        %vm4360 = vcmp.eq.s32.totalorder %v4358, 0
        %v4361 = vxor.u32 %v4356, 2147483648
        %v4362 = vsel %vm4360, %v4355, %v4361
        %vm4363 = vcmp.eq.s32.totalorder %v4358, 2
        %v4364 = vxor.u32 %v4355, 2147483648
        %v4365 = vsel %vm4363, %v4364, %v4356
        %v4366 = vsel %vm4359, %v4362, %v4365
        %v4367 = vsel %vm4357, nan, %v4366
        %v4368 = vand.u32 2147483647, %v1627
        %vm4369 = vcmp.le.f32.partialorder %v4368, 0.7853982
        %vm4370 = vcmp.lt.s32.totalorder %v1627, 0
        %v4371 = vand.u32 %v1627, 2139095040
        %v4372 = vshrl.u32 %v4371, 23
        %v4373 = vsub.s32 %v4372, 127
        %v4374 = vand.u32 2147483647, %v1627
        %v4375 = vand.u32 %v4374, 8388607
        %v4376 = vor.u32 %v4375, 8388608
        %v4377 = vsub.s32 0, %v4376
        %v4378 = vadd.s32 %v4373, 1
        %vm4379 = vcmp.gt.s32.totalorder %v4378, 0
        %v4380 = vsel %vm4379, %v4378, 0
        %v4381 = vshrl.u32 %v4380, 5
        %v4382 = vand.u32 %v4380, 31
        %v4383 = vsub.s32 32, %v4382
        %v4384 = vshrl.u32 683565275, %v4383
        %v4385 = vshll.u32 683565275, %v4382
        %v4386 = vshrl.u32 2475754826, %v4383
        %v4387 = vor.u32 %v4385, %v4386
        %v4388 = vshll.u32 2475754826, %v4382
        %v4389 = vshrl.u32 2131351028, %v4383
        %v4390 = vor.u32 %v4388, %v4389
        %v4391 = vshll.u32 2131351028, %v4382
        %v4392 = vshrl.u32 2102212464, %v4383
        %v4393 = vor.u32 %v4391, %v4392
        %v4394 = vshll.u32 2102212464, %v4382
        %v4395 = vshrl.u32 920167782, %v4383
        %v4396 = vor.u32 %v4394, %v4395
        %v4397 = vshll.u32 920167782, %v4382
        %v4398 = vshrl.u32 1326507024, %v4383
        %v4399 = vor.u32 %v4397, %v4398
        %vm4400 = vcmp.lt.s32.totalorder %v4381, 1
        %vm4401 = vcmp.lt.s32.totalorder %v4381, 2
        %vm4402 = vcmp.lt.s32.totalorder %v4381, 3
        %vm4403 = vcmp.lt.s32.totalorder %v4381, 4
        %v4404 = vsel %vm4400, %v4384, %v4387
        %v4405 = vsel %vm4403, %v4393, 2102212464
        %v4406 = vsel %vm4402, %v4390, %v4405
        %v4407 = vsel %vm4401, %v4404, %v4406
        %v4408 = vsel %vm4400, %v4387, %v4390
        %v4409 = vsel %vm4403, %v4396, 920167782
        %v4410 = vsel %vm4402, %v4393, %v4409
        %v4411 = vsel %vm4401, %v4408, %v4410
        %v4412 = vsel %vm4400, %v4390, %v4393
        %v4413 = vsel %vm4403, %v4399, 1326507024
        %v4414 = vsel %vm4402, %v4396, %v4413
        %v4415 = vsel %vm4401, %v4412, %v4414
        %v4416 = vshll.u32 %v4376, 8
        %v4417 = vmul.u32.u64.compose %v4416, %v4415
        %v4418 = vextract.low.u32 %v4417
        %v4419 = vextract.high.u32 %v4417
        %v4420 = vmul.u32.u64.compose %v4416, %v4411
        %v4421 = vextract.low.u32 %v4420
        %v4422 = vextract.high.u32 %v4420
        %v4423 = vmul.u32 %v4416, %v4407
        %v4424 = vadd.s32 %v4419, %v4421
        %vm4425 = vc.u32 %v4419, %v4421
        %v4426 = vadd.s32 %v4422, 1
        %v4427 = vsel %vm4425, %v4426, %v4422
        %v4428 = vadd.s32 %v4423, %v4427
        %v4429 = vadd.s32 %v4428, 536870912
        %v4430 = vshrl.u32 %v4429, 30
        %v4431 = vshll.u32 %v4430, 30
        %v4432 = vsub.s32 %v4428, %v4431
        %vm4433 = vcmp.lt.s32.totalorder %v4432, 0
        %v4434 = vsub.s32 0, %v4432
        %v4435 = vsel %vm4433, %v4434, %v4432
        %v4436 = vclz %v4435
        %v4437 = vsub.s32 %v4436, 2
        %vm4438 = vcmp.gt.s32.totalorder 0, %v4437
        %v4439 = vsel %vm4438, 0, %v4437
        %v4440 = vsub.s32 32, %v4439
        %v4441 = vshll.u32 %v4432, %v4439
        %v4442 = vshrl.u32 %v4424, %v4440
        %v4443 = vor.u32 %v4441, %v4442
        %v4444 = vsub.s32 4294967266, %v4439
        %v4445 = vadd.s32 %v4444, 127
        %v4446 = vshll.u32 %v4445, 23
        %v4447 = vor.u32 4788187, %v4446
        %v4448 = vand.u32 2147483647, %v4447
        %v4450 = vcvt.s32.f32 %v4443
        %v4451 = vmul.f32 %v4450, %v4448
        %v4452 = vxor.u32 %v4451, 2147483648
        %v4453 = vsel %vm4370, %v4452, %v4451
        %v4454 = vsub.s32 4, %v4430
        %v4455 = vsel %vm4370, %v4454, %v4430
        %v4456 = vsel %vm4369, %v1627, %v4453
        %v4457 = vsel %vm4369, 0, %v4455
        %v4458 = vcosq.f32.pop %v4456
        %v4459 = vsinq.f32.pop %v4456
        %vm4460 = vweird.f32 %v1627
        %v4461 = vand.u32 %v4457, 3
        %vm4462 = vcmp.lt.s32.totalorder %v4461, 2
        %vm4463 = vcmp.eq.s32.totalorder %v4461, 0
        %v4464 = vxor.u32 %v4459, 2147483648
        %v4465 = vsel %vm4463, %v4458, %v4464
        %vm4466 = vcmp.eq.s32.totalorder %v4461, 2
        %v4467 = vxor.u32 %v4458, 2147483648
        %v4468 = vsel %vm4466, %v4467, %v4459
        %v4469 = vsel %vm4462, %v4465, %v4468
        %v4470 = vsel %vm4460, nan, %v4469
        %v4471 = vand.u32 2147483647, %v1628
        %vm4472 = vcmp.le.f32.partialorder %v4471, 0.7853982
        %vm4473 = vcmp.lt.s32.totalorder %v1628, 0
        %v4474 = vand.u32 %v1628, 2139095040
        %v4475 = vshrl.u32 %v4474, 23
        %v4476 = vsub.s32 %v4475, 127
        %v4477 = vand.u32 2147483647, %v1628
        %v4478 = vand.u32 %v4477, 8388607
        %v4479 = vor.u32 %v4478, 8388608
        %v4480 = vsub.s32 0, %v4479
        %v4481 = vadd.s32 %v4476, 1
        %vm4482 = vcmp.gt.s32.totalorder %v4481, 0
        %v4483 = vsel %vm4482, %v4481, 0
        %v4484 = vshrl.u32 %v4483, 5
        %v4485 = vand.u32 %v4483, 31
        %v4486 = vsub.s32 32, %v4485
        %v4487 = vshrl.u32 683565275, %v4486
        %v4488 = vshll.u32 683565275, %v4485
        %v4489 = vshrl.u32 2475754826, %v4486
        %v4490 = vor.u32 %v4488, %v4489
        %v4491 = vshll.u32 2475754826, %v4485
        %v4492 = vshrl.u32 2131351028, %v4486
        %v4493 = vor.u32 %v4491, %v4492
        %v4494 = vshll.u32 2131351028, %v4485
        %v4495 = vshrl.u32 2102212464, %v4486
        %v4496 = vor.u32 %v4494, %v4495
        %v4497 = vshll.u32 2102212464, %v4485
        %v4498 = vshrl.u32 920167782, %v4486
        %v4499 = vor.u32 %v4497, %v4498
        %v4500 = vshll.u32 920167782, %v4485
        %v4501 = vshrl.u32 1326507024, %v4486
        %v4502 = vor.u32 %v4500, %v4501
        %vm4503 = vcmp.lt.s32.totalorder %v4484, 1
        %vm4504 = vcmp.lt.s32.totalorder %v4484, 2
        %vm4505 = vcmp.lt.s32.totalorder %v4484, 3
        %vm4506 = vcmp.lt.s32.totalorder %v4484, 4
        %v4507 = vsel %vm4503, %v4487, %v4490
        %v4508 = vsel %vm4506, %v4496, 2102212464
        %v4509 = vsel %vm4505, %v4493, %v4508
        %v4510 = vsel %vm4504, %v4507, %v4509
        %v4511 = vsel %vm4503, %v4490, %v4493
        %v4512 = vsel %vm4506, %v4499, 920167782
        %v4513 = vsel %vm4505, %v4496, %v4512
        %v4514 = vsel %vm4504, %v4511, %v4513
        %v4515 = vsel %vm4503, %v4493, %v4496
        %v4516 = vsel %vm4506, %v4502, 1326507024
        %v4517 = vsel %vm4505, %v4499, %v4516
        %v4518 = vsel %vm4504, %v4515, %v4517
        %v4519 = vshll.u32 %v4479, 8
        %v4520 = vmul.u32.u64.compose %v4519, %v4518
        %v4521 = vextract.low.u32 %v4520
        %v4522 = vextract.high.u32 %v4520
        %v4523 = vmul.u32.u64.compose %v4519, %v4514
        %v4524 = vextract.low.u32 %v4523
        %v4525 = vextract.high.u32 %v4523
        %v4526 = vmul.u32 %v4519, %v4510
        %v4527 = vadd.s32 %v4522, %v4524
        %vm4528 = vc.u32 %v4522, %v4524
        %v4529 = vadd.s32 %v4525, 1
        %v4530 = vsel %vm4528, %v4529, %v4525
        %v4531 = vadd.s32 %v4526, %v4530
        %v4532 = vadd.s32 %v4531, 536870912
        %v4533 = vshrl.u32 %v4532, 30
        %v4534 = vshll.u32 %v4533, 30
        %v4535 = vsub.s32 %v4531, %v4534
        %vm4536 = vcmp.lt.s32.totalorder %v4535, 0
        %v4537 = vsub.s32 0, %v4535
        %v4538 = vsel %vm4536, %v4537, %v4535
        %v4539 = vclz %v4538
        %v4540 = vsub.s32 %v4539, 2
        %vm4541 = vcmp.gt.s32.totalorder 0, %v4540
        %v4542 = vsel %vm4541, 0, %v4540
        %v4543 = vsub.s32 32, %v4542
        %v4544 = vshll.u32 %v4535, %v4542
        %v4545 = vshrl.u32 %v4527, %v4543
        %v4546 = vor.u32 %v4544, %v4545
        %v4547 = vsub.s32 4294967266, %v4542
        %v4548 = vadd.s32 %v4547, 127
        %v4549 = vshll.u32 %v4548, 23
        %v4550 = vor.u32 4788187, %v4549
        %v4551 = vand.u32 2147483647, %v4550
        %v4553 = vcvt.s32.f32 %v4546
        %v4554 = vmul.f32 %v4553, %v4551
        %v4555 = vxor.u32 %v4554, 2147483648
        %v4556 = vsel %vm4473, %v4555, %v4554
        %v4557 = vsub.s32 4, %v4533
        %v4558 = vsel %vm4473, %v4557, %v4533
        %v4559 = vsel %vm4472, %v1628, %v4556
        %v4560 = vsel %vm4472, 0, %v4558
        %v4561 = vcosq.f32.pop %v4559
        %v4562 = vsinq.f32.pop %v4559
        %vm4563 = vweird.f32 %v1628
        %v4564 = vand.u32 %v4560, 3
        %vm4565 = vcmp.lt.s32.totalorder %v4564, 2
        %vm4566 = vcmp.eq.s32.totalorder %v4564, 0
        %v4567 = vxor.u32 %v4562, 2147483648
        %v4568 = vsel %vm4566, %v4561, %v4567
        %vm4569 = vcmp.eq.s32.totalorder %v4564, 2
        %v4570 = vxor.u32 %v4561, 2147483648
        %v4571 = vsel %vm4569, %v4570, %v4562
        %v4572 = vsel %vm4565, %v4568, %v4571
        %v4573 = vsel %vm4563, nan, %v4572
        %v4574 = vand.u32 2147483647, %v1629
        %vm4575 = vcmp.le.f32.partialorder %v4574, 0.7853982
        %vm4576 = vcmp.lt.s32.totalorder %v1629, 0
        %v4577 = vand.u32 %v1629, 2139095040
        %v4578 = vshrl.u32 %v4577, 23
        %v4579 = vsub.s32 %v4578, 127
        %v4580 = vand.u32 2147483647, %v1629
        %v4581 = vand.u32 %v4580, 8388607
        %v4582 = vor.u32 %v4581, 8388608
        %v4583 = vsub.s32 0, %v4582
        %v4584 = vadd.s32 %v4579, 1
        %vm4585 = vcmp.gt.s32.totalorder %v4584, 0
        %v4586 = vsel %vm4585, %v4584, 0
        %v4587 = vshrl.u32 %v4586, 5
        %v4588 = vand.u32 %v4586, 31
        %v4589 = vsub.s32 32, %v4588
        %v4590 = vshrl.u32 683565275, %v4589
        %v4591 = vshll.u32 683565275, %v4588
        %v4592 = vshrl.u32 2475754826, %v4589
        %v4593 = vor.u32 %v4591, %v4592
        %v4594 = vshll.u32 2475754826, %v4588
        %v4595 = vshrl.u32 2131351028, %v4589
        %v4596 = vor.u32 %v4594, %v4595
        %v4597 = vshll.u32 2131351028, %v4588
        %v4598 = vshrl.u32 2102212464, %v4589
        %v4599 = vor.u32 %v4597, %v4598
        %v4600 = vshll.u32 2102212464, %v4588
        %v4601 = vshrl.u32 920167782, %v4589
        %v4602 = vor.u32 %v4600, %v4601
        %v4603 = vshll.u32 920167782, %v4588
        %v4604 = vshrl.u32 1326507024, %v4589
        %v4605 = vor.u32 %v4603, %v4604
        %vm4606 = vcmp.lt.s32.totalorder %v4587, 1
        %vm4607 = vcmp.lt.s32.totalorder %v4587, 2
        %vm4608 = vcmp.lt.s32.totalorder %v4587, 3
        %vm4609 = vcmp.lt.s32.totalorder %v4587, 4
        %v4610 = vsel %vm4606, %v4590, %v4593
        %v4611 = vsel %vm4609, %v4599, 2102212464
        %v4612 = vsel %vm4608, %v4596, %v4611
        %v4613 = vsel %vm4607, %v4610, %v4612
        %v4614 = vsel %vm4606, %v4593, %v4596
        %v4615 = vsel %vm4609, %v4602, 920167782
        %v4616 = vsel %vm4608, %v4599, %v4615
        %v4617 = vsel %vm4607, %v4614, %v4616
        %v4618 = vsel %vm4606, %v4596, %v4599
        %v4619 = vsel %vm4609, %v4605, 1326507024
        %v4620 = vsel %vm4608, %v4602, %v4619
        %v4621 = vsel %vm4607, %v4618, %v4620
        %v4622 = vshll.u32 %v4582, 8
        %v4623 = vmul.u32.u64.compose %v4622, %v4621
        %v4624 = vextract.low.u32 %v4623
        %v4625 = vextract.high.u32 %v4623
        %v4626 = vmul.u32.u64.compose %v4622, %v4617
        %v4627 = vextract.low.u32 %v4626
        %v4628 = vextract.high.u32 %v4626
        %v4629 = vmul.u32 %v4622, %v4613
        %v4630 = vadd.s32 %v4625, %v4627
        %vm4631 = vc.u32 %v4625, %v4627
        %v4632 = vadd.s32 %v4628, 1
        %v4633 = vsel %vm4631, %v4632, %v4628
        %v4634 = vadd.s32 %v4629, %v4633
        %v4635 = vadd.s32 %v4634, 536870912
        %v4636 = vshrl.u32 %v4635, 30
        %v4637 = vshll.u32 %v4636, 30
        %v4638 = vsub.s32 %v4634, %v4637
        %vm4639 = vcmp.lt.s32.totalorder %v4638, 0
        %v4640 = vsub.s32 0, %v4638
        %v4641 = vsel %vm4639, %v4640, %v4638
        %v4642 = vclz %v4641
        %v4643 = vsub.s32 %v4642, 2
        %vm4644 = vcmp.gt.s32.totalorder 0, %v4643
        %v4645 = vsel %vm4644, 0, %v4643
        %v4646 = vsub.s32 32, %v4645
        %v4647 = vshll.u32 %v4638, %v4645
        %v4648 = vshrl.u32 %v4630, %v4646
        %v4649 = vor.u32 %v4647, %v4648
        %v4650 = vsub.s32 4294967266, %v4645
        %v4651 = vadd.s32 %v4650, 127
        %v4652 = vshll.u32 %v4651, 23
        %v4653 = vor.u32 4788187, %v4652
        %v4654 = vand.u32 2147483647, %v4653
        %v4656 = vcvt.s32.f32 %v4649
        %v4657 = vmul.f32 %v4656, %v4654
        %v4658 = vxor.u32 %v4657, 2147483648
        %v4659 = vsel %vm4576, %v4658, %v4657
        %v4660 = vsub.s32 4, %v4636
        %v4661 = vsel %vm4576, %v4660, %v4636
        %v4662 = vsel %vm4575, %v1629, %v4659
        %v4663 = vsel %vm4575, 0, %v4661
        %v4664 = vcosq.f32.pop %v4662
        %v4665 = vsinq.f32.pop %v4662
        %vm4666 = vweird.f32 %v1629
        %v4667 = vand.u32 %v4663, 3
        %vm4668 = vcmp.lt.s32.totalorder %v4667, 2
        %vm4669 = vcmp.eq.s32.totalorder %v4667, 0
        %v4670 = vxor.u32 %v4665, 2147483648
        %v4671 = vsel %vm4669, %v4664, %v4670
        %vm4672 = vcmp.eq.s32.totalorder %v4667, 2
        %v4673 = vxor.u32 %v4664, 2147483648
        %v4674 = vsel %vm4672, %v4673, %v4665
        %v4675 = vsel %vm4668, %v4671, %v4674
        %v4676 = vsel %vm4666, nan, %v4675
        %v4677 = vand.u32 2147483647, %v1630
        %vm4678 = vcmp.le.f32.partialorder %v4677, 0.7853982
        %vm4679 = vcmp.lt.s32.totalorder %v1630, 0
        %v4680 = vand.u32 %v1630, 2139095040
        %v4681 = vshrl.u32 %v4680, 23
        %v4682 = vsub.s32 %v4681, 127
        %v4683 = vand.u32 2147483647, %v1630
        %v4684 = vand.u32 %v4683, 8388607
        %v4685 = vor.u32 %v4684, 8388608
        %v4686 = vsub.s32 0, %v4685
        %v4687 = vadd.s32 %v4682, 1
        %vm4688 = vcmp.gt.s32.totalorder %v4687, 0
        %v4689 = vsel %vm4688, %v4687, 0
        %v4690 = vshrl.u32 %v4689, 5
        %v4691 = vand.u32 %v4689, 31
        %v4692 = vsub.s32 32, %v4691
        %v4693 = vshrl.u32 683565275, %v4692
        %v4694 = vshll.u32 683565275, %v4691
        %v4695 = vshrl.u32 2475754826, %v4692
        %v4696 = vor.u32 %v4694, %v4695
        %v4697 = vshll.u32 2475754826, %v4691
        %v4698 = vshrl.u32 2131351028, %v4692
        %v4699 = vor.u32 %v4697, %v4698
        %v4700 = vshll.u32 2131351028, %v4691
        %v4701 = vshrl.u32 2102212464, %v4692
        %v4702 = vor.u32 %v4700, %v4701
        %v4703 = vshll.u32 2102212464, %v4691
        %v4704 = vshrl.u32 920167782, %v4692
        %v4705 = vor.u32 %v4703, %v4704
        %v4706 = vshll.u32 920167782, %v4691
        %v4707 = vshrl.u32 1326507024, %v4692
        %v4708 = vor.u32 %v4706, %v4707
        %vm4709 = vcmp.lt.s32.totalorder %v4690, 1
        %vm4710 = vcmp.lt.s32.totalorder %v4690, 2
        %vm4711 = vcmp.lt.s32.totalorder %v4690, 3
        %vm4712 = vcmp.lt.s32.totalorder %v4690, 4
        %v4713 = vsel %vm4709, %v4693, %v4696
        %v4714 = vsel %vm4712, %v4702, 2102212464
        %v4715 = vsel %vm4711, %v4699, %v4714
        %v4716 = vsel %vm4710, %v4713, %v4715
        %v4717 = vsel %vm4709, %v4696, %v4699
        %v4718 = vsel %vm4712, %v4705, 920167782
        %v4719 = vsel %vm4711, %v4702, %v4718
        %v4720 = vsel %vm4710, %v4717, %v4719
        %v4721 = vsel %vm4709, %v4699, %v4702
        %v4722 = vsel %vm4712, %v4708, 1326507024
        %v4723 = vsel %vm4711, %v4705, %v4722
        %v4724 = vsel %vm4710, %v4721, %v4723
        %v4725 = vshll.u32 %v4685, 8
        %v4726 = vmul.u32.u64.compose %v4725, %v4724
        %v4727 = vextract.low.u32 %v4726
        %v4728 = vextract.high.u32 %v4726
        %v4729 = vmul.u32.u64.compose %v4725, %v4720
        %v4730 = vextract.low.u32 %v4729
        %v4731 = vextract.high.u32 %v4729
        %v4732 = vmul.u32 %v4725, %v4716
        %v4733 = vadd.s32 %v4728, %v4730
        %vm4734 = vc.u32 %v4728, %v4730
        %v4735 = vadd.s32 %v4731, 1
        %v4736 = vsel %vm4734, %v4735, %v4731
        %v4737 = vadd.s32 %v4732, %v4736
        %v4738 = vadd.s32 %v4737, 536870912
        %v4739 = vshrl.u32 %v4738, 30
        %v4740 = vshll.u32 %v4739, 30
        %v4741 = vsub.s32 %v4737, %v4740
        %vm4742 = vcmp.lt.s32.totalorder %v4741, 0
        %v4743 = vsub.s32 0, %v4741
        %v4744 = vsel %vm4742, %v4743, %v4741
        %v4745 = vclz %v4744
        %v4746 = vsub.s32 %v4745, 2
        %vm4747 = vcmp.gt.s32.totalorder 0, %v4746
        %v4748 = vsel %vm4747, 0, %v4746
        %v4749 = vsub.s32 32, %v4748
        %v4750 = vshll.u32 %v4741, %v4748
        %v4751 = vshrl.u32 %v4733, %v4749
        %v4752 = vor.u32 %v4750, %v4751
        %v4753 = vsub.s32 4294967266, %v4748
        %v4754 = vadd.s32 %v4753, 127
        %v4755 = vshll.u32 %v4754, 23
        %v4756 = vor.u32 4788187, %v4755
        %v4757 = vand.u32 2147483647, %v4756
        %v4759 = vcvt.s32.f32 %v4752
        %v4760 = vmul.f32 %v4759, %v4757
        %v4761 = vxor.u32 %v4760, 2147483648
        %v4762 = vsel %vm4679, %v4761, %v4760
        %v4763 = vsub.s32 4, %v4739
        %v4764 = vsel %vm4679, %v4763, %v4739
        %v4765 = vsel %vm4678, %v1630, %v4762
        %v4766 = vsel %vm4678, 0, %v4764
        %v4767 = vcosq.f32.pop %v4765
        %v4768 = vsinq.f32.pop %v4765
        %vm4769 = vweird.f32 %v1630
        %v4770 = vand.u32 %v4766, 3
        %vm4771 = vcmp.lt.s32.totalorder %v4770, 2
        %vm4772 = vcmp.eq.s32.totalorder %v4770, 0
        %v4773 = vxor.u32 %v4768, 2147483648
        %v4774 = vsel %vm4772, %v4767, %v4773
        %vm4775 = vcmp.eq.s32.totalorder %v4770, 2
        %v4776 = vxor.u32 %v4767, 2147483648
        %v4777 = vsel %vm4775, %v4776, %v4768
        %v4778 = vsel %vm4771, %v4774, %v4777
        %v4779 = vsel %vm4769, nan, %v4778
        %v4780 = vand.u32 2147483647, %v1631
        %vm4781 = vcmp.le.f32.partialorder %v4780, 0.7853982
        %vm4782 = vcmp.lt.s32.totalorder %v1631, 0
        %v4783 = vand.u32 %v1631, 2139095040
        %v4784 = vshrl.u32 %v4783, 23
        %v4785 = vsub.s32 %v4784, 127
        %v4786 = vand.u32 2147483647, %v1631
        %v4787 = vand.u32 %v4786, 8388607
        %v4788 = vor.u32 %v4787, 8388608
        %v4789 = vsub.s32 0, %v4788
        %v4790 = vadd.s32 %v4785, 1
        %vm4791 = vcmp.gt.s32.totalorder %v4790, 0
        %v4792 = vsel %vm4791, %v4790, 0
        %v4793 = vshrl.u32 %v4792, 5
        %v4794 = vand.u32 %v4792, 31
        %v4795 = vsub.s32 32, %v4794
        %v4796 = vshrl.u32 683565275, %v4795
        %v4797 = vshll.u32 683565275, %v4794
        %v4798 = vshrl.u32 2475754826, %v4795
        %v4799 = vor.u32 %v4797, %v4798
        %v4800 = vshll.u32 2475754826, %v4794
        %v4801 = vshrl.u32 2131351028, %v4795
        %v4802 = vor.u32 %v4800, %v4801
        %v4803 = vshll.u32 2131351028, %v4794
        %v4804 = vshrl.u32 2102212464, %v4795
        %v4805 = vor.u32 %v4803, %v4804
        %v4806 = vshll.u32 2102212464, %v4794
        %v4807 = vshrl.u32 920167782, %v4795
        %v4808 = vor.u32 %v4806, %v4807
        %v4809 = vshll.u32 920167782, %v4794
        %v4810 = vshrl.u32 1326507024, %v4795
        %v4811 = vor.u32 %v4809, %v4810
        %vm4812 = vcmp.lt.s32.totalorder %v4793, 1
        %vm4813 = vcmp.lt.s32.totalorder %v4793, 2
        %vm4814 = vcmp.lt.s32.totalorder %v4793, 3
        %vm4815 = vcmp.lt.s32.totalorder %v4793, 4
        %v4816 = vsel %vm4812, %v4796, %v4799
        %v4817 = vsel %vm4815, %v4805, 2102212464
        %v4818 = vsel %vm4814, %v4802, %v4817
        %v4819 = vsel %vm4813, %v4816, %v4818
        %v4820 = vsel %vm4812, %v4799, %v4802
        %v4821 = vsel %vm4815, %v4808, 920167782
        %v4822 = vsel %vm4814, %v4805, %v4821
        %v4823 = vsel %vm4813, %v4820, %v4822
        %v4824 = vsel %vm4812, %v4802, %v4805
        %v4825 = vsel %vm4815, %v4811, 1326507024
        %v4826 = vsel %vm4814, %v4808, %v4825
        %v4827 = vsel %vm4813, %v4824, %v4826
        %v4828 = vshll.u32 %v4788, 8
        %v4829 = vmul.u32.u64.compose %v4828, %v4827
        %v4830 = vextract.low.u32 %v4829
        %v4831 = vextract.high.u32 %v4829
        %v4832 = vmul.u32.u64.compose %v4828, %v4823
        %v4833 = vextract.low.u32 %v4832
        %v4834 = vextract.high.u32 %v4832
        %v4835 = vmul.u32 %v4828, %v4819
        %v4836 = vadd.s32 %v4831, %v4833
        %vm4837 = vc.u32 %v4831, %v4833
        %v4838 = vadd.s32 %v4834, 1
        %v4839 = vsel %vm4837, %v4838, %v4834
        %v4840 = vadd.s32 %v4835, %v4839
        %v4841 = vadd.s32 %v4840, 536870912
        %v4842 = vshrl.u32 %v4841, 30
        %v4843 = vshll.u32 %v4842, 30
        %v4844 = vsub.s32 %v4840, %v4843
        %vm4845 = vcmp.lt.s32.totalorder %v4844, 0
        %v4846 = vsub.s32 0, %v4844
        %v4847 = vsel %vm4845, %v4846, %v4844
        %v4848 = vclz %v4847
        %v4849 = vsub.s32 %v4848, 2
        %vm4850 = vcmp.gt.s32.totalorder 0, %v4849
        %v4851 = vsel %vm4850, 0, %v4849
        %v4852 = vsub.s32 32, %v4851
        %v4853 = vshll.u32 %v4844, %v4851
        %v4854 = vshrl.u32 %v4836, %v4852
        %v4855 = vor.u32 %v4853, %v4854
        %v4856 = vsub.s32 4294967266, %v4851
        %v4857 = vadd.s32 %v4856, 127
        %v4858 = vshll.u32 %v4857, 23
        %v4859 = vor.u32 4788187, %v4858
        %v4860 = vand.u32 2147483647, %v4859
        %v4862 = vcvt.s32.f32 %v4855
        %v4863 = vmul.f32 %v4862, %v4860
        %v4864 = vxor.u32 %v4863, 2147483648
        %v4865 = vsel %vm4782, %v4864, %v4863
        %v4866 = vsub.s32 4, %v4842
        %v4867 = vsel %vm4782, %v4866, %v4842
        %v4868 = vsel %vm4781, %v1631, %v4865
        %v4869 = vsel %vm4781, 0, %v4867
        %v4870 = vcosq.f32.pop %v4868
        %v4871 = vsinq.f32.pop %v4868
        %vm4872 = vweird.f32 %v1631
        %v4873 = vand.u32 %v4869, 3
        %vm4874 = vcmp.lt.s32.totalorder %v4873, 2
        %vm4875 = vcmp.eq.s32.totalorder %v4873, 0
        %v4876 = vxor.u32 %v4871, 2147483648
        %v4877 = vsel %vm4875, %v4870, %v4876
        %vm4878 = vcmp.eq.s32.totalorder %v4873, 2
        %v4879 = vxor.u32 %v4870, 2147483648
        %v4880 = vsel %vm4878, %v4879, %v4871
        %v4881 = vsel %vm4874, %v4877, %v4880
        %v4882 = vsel %vm4872, nan, %v4881
        %v4883 = vand.u32 2147483647, %v1632
        %vm4884 = vcmp.le.f32.partialorder %v4883, 0.7853982
        %vm4885 = vcmp.lt.s32.totalorder %v1632, 0
        %v4886 = vand.u32 %v1632, 2139095040
        %v4887 = vshrl.u32 %v4886, 23
        %v4888 = vsub.s32 %v4887, 127
        %v4889 = vand.u32 2147483647, %v1632
        %v4890 = vand.u32 %v4889, 8388607
        %v4891 = vor.u32 %v4890, 8388608
        %v4892 = vsub.s32 0, %v4891
        %v4893 = vadd.s32 %v4888, 1
        %vm4894 = vcmp.gt.s32.totalorder %v4893, 0
        %v4895 = vsel %vm4894, %v4893, 0
        %v4896 = vshrl.u32 %v4895, 5
        %v4897 = vand.u32 %v4895, 31
        %v4898 = vsub.s32 32, %v4897
        %v4899 = vshrl.u32 683565275, %v4898
        %v4900 = vshll.u32 683565275, %v4897
        %v4901 = vshrl.u32 2475754826, %v4898
        %v4902 = vor.u32 %v4900, %v4901
        %v4903 = vshll.u32 2475754826, %v4897
        %v4904 = vshrl.u32 2131351028, %v4898
        %v4905 = vor.u32 %v4903, %v4904
        %v4906 = vshll.u32 2131351028, %v4897
        %v4907 = vshrl.u32 2102212464, %v4898
        %v4908 = vor.u32 %v4906, %v4907
        %v4909 = vshll.u32 2102212464, %v4897
        %v4910 = vshrl.u32 920167782, %v4898
        %v4911 = vor.u32 %v4909, %v4910
        %v4912 = vshll.u32 920167782, %v4897
        %v4913 = vshrl.u32 1326507024, %v4898
        %v4914 = vor.u32 %v4912, %v4913
        %vm4915 = vcmp.lt.s32.totalorder %v4896, 1
        %vm4916 = vcmp.lt.s32.totalorder %v4896, 2
        %vm4917 = vcmp.lt.s32.totalorder %v4896, 3
        %vm4918 = vcmp.lt.s32.totalorder %v4896, 4
        %v4919 = vsel %vm4915, %v4899, %v4902
        %v4920 = vsel %vm4918, %v4908, 2102212464
        %v4921 = vsel %vm4917, %v4905, %v4920
        %v4922 = vsel %vm4916, %v4919, %v4921
        %v4923 = vsel %vm4915, %v4902, %v4905
        %v4924 = vsel %vm4918, %v4911, 920167782
        %v4925 = vsel %vm4917, %v4908, %v4924
        %v4926 = vsel %vm4916, %v4923, %v4925
        %v4927 = vsel %vm4915, %v4905, %v4908
        %v4928 = vsel %vm4918, %v4914, 1326507024
        %v4929 = vsel %vm4917, %v4911, %v4928
        %v4930 = vsel %vm4916, %v4927, %v4929
        %v4931 = vshll.u32 %v4891, 8
        %v4932 = vmul.u32.u64.compose %v4931, %v4930
        %v4933 = vextract.low.u32 %v4932
        %v4934 = vextract.high.u32 %v4932
        %v4935 = vmul.u32.u64.compose %v4931, %v4926
        %v4936 = vextract.low.u32 %v4935
        %v4937 = vextract.high.u32 %v4935
        %v4938 = vmul.u32 %v4931, %v4922
        %v4939 = vadd.s32 %v4934, %v4936
        %vm4940 = vc.u32 %v4934, %v4936
        %v4941 = vadd.s32 %v4937, 1
        %v4942 = vsel %vm4940, %v4941, %v4937
        %v4943 = vadd.s32 %v4938, %v4942
        %v4944 = vadd.s32 %v4943, 536870912
        %v4945 = vshrl.u32 %v4944, 30
        %v4946 = vshll.u32 %v4945, 30
        %v4947 = vsub.s32 %v4943, %v4946
        %vm4948 = vcmp.lt.s32.totalorder %v4947, 0
        %v4949 = vsub.s32 0, %v4947
        %v4950 = vsel %vm4948, %v4949, %v4947
        %v4951 = vclz %v4950
        %v4952 = vsub.s32 %v4951, 2
        %vm4953 = vcmp.gt.s32.totalorder 0, %v4952
        %v4954 = vsel %vm4953, 0, %v4952
        %v4955 = vsub.s32 32, %v4954
        %v4956 = vshll.u32 %v4947, %v4954
        %v4957 = vshrl.u32 %v4939, %v4955
        %v4958 = vor.u32 %v4956, %v4957
        %v4959 = vsub.s32 4294967266, %v4954
        %v4960 = vadd.s32 %v4959, 127
        %v4961 = vshll.u32 %v4960, 23
        %v4962 = vor.u32 4788187, %v4961
        %v4963 = vand.u32 2147483647, %v4962
        %v4965 = vcvt.s32.f32 %v4958
        %v4966 = vmul.f32 %v4965, %v4963
        %v4967 = vxor.u32 %v4966, 2147483648
        %v4968 = vsel %vm4885, %v4967, %v4966
        %v4969 = vsub.s32 4, %v4945
        %v4970 = vsel %vm4885, %v4969, %v4945
        %v4971 = vsel %vm4884, %v1632, %v4968
        %v4972 = vsel %vm4884, 0, %v4970
        %v4973 = vcosq.f32.pop %v4971
        %v4974 = vsinq.f32.pop %v4971
        %vm4975 = vweird.f32 %v1632
        %v4976 = vand.u32 %v4972, 3
        %vm4977 = vcmp.lt.s32.totalorder %v4976, 2
        %vm4978 = vcmp.eq.s32.totalorder %v4976, 0
        %v4979 = vxor.u32 %v4974, 2147483648
        %v4980 = vsel %vm4978, %v4973, %v4979
        %vm4981 = vcmp.eq.s32.totalorder %v4976, 2
        %v4982 = vxor.u32 %v4973, 2147483648
        %v4983 = vsel %vm4981, %v4982, %v4974
        %v4984 = vsel %vm4977, %v4980, %v4983
        %v4985 = vsel %vm4975, nan, %v4984
        %v4986 = vand.u32 2147483647, %v1633
        %vm4987 = vcmp.le.f32.partialorder %v4986, 0.7853982
        %vm4988 = vcmp.lt.s32.totalorder %v1633, 0
        %v4989 = vand.u32 %v1633, 2139095040
        %v4990 = vshrl.u32 %v4989, 23
        %v4991 = vsub.s32 %v4990, 127
        %v4992 = vand.u32 2147483647, %v1633
        %v4993 = vand.u32 %v4992, 8388607
        %v4994 = vor.u32 %v4993, 8388608
        %v4995 = vsub.s32 0, %v4994
        %v4996 = vadd.s32 %v4991, 1
        %vm4997 = vcmp.gt.s32.totalorder %v4996, 0
        %v4998 = vsel %vm4997, %v4996, 0
        %v4999 = vshrl.u32 %v4998, 5
        %v5000 = vand.u32 %v4998, 31
        %v5001 = vsub.s32 32, %v5000
        %v5002 = vshrl.u32 683565275, %v5001
        %v5003 = vshll.u32 683565275, %v5000
        %v5004 = vshrl.u32 2475754826, %v5001
        %v5005 = vor.u32 %v5003, %v5004
        %v5006 = vshll.u32 2475754826, %v5000
        %v5007 = vshrl.u32 2131351028, %v5001
        %v5008 = vor.u32 %v5006, %v5007
        %v5009 = vshll.u32 2131351028, %v5000
        %v5010 = vshrl.u32 2102212464, %v5001
        %v5011 = vor.u32 %v5009, %v5010
        %v5012 = vshll.u32 2102212464, %v5000
        %v5013 = vshrl.u32 920167782, %v5001
        %v5014 = vor.u32 %v5012, %v5013
        %v5015 = vshll.u32 920167782, %v5000
        %v5016 = vshrl.u32 1326507024, %v5001
        %v5017 = vor.u32 %v5015, %v5016
        %vm5018 = vcmp.lt.s32.totalorder %v4999, 1
        %vm5019 = vcmp.lt.s32.totalorder %v4999, 2
        %vm5020 = vcmp.lt.s32.totalorder %v4999, 3
        %vm5021 = vcmp.lt.s32.totalorder %v4999, 4
        %v5022 = vsel %vm5018, %v5002, %v5005
        %v5023 = vsel %vm5021, %v5011, 2102212464
        %v5024 = vsel %vm5020, %v5008, %v5023
        %v5025 = vsel %vm5019, %v5022, %v5024
        %v5026 = vsel %vm5018, %v5005, %v5008
        %v5027 = vsel %vm5021, %v5014, 920167782
        %v5028 = vsel %vm5020, %v5011, %v5027
        %v5029 = vsel %vm5019, %v5026, %v5028
        %v5030 = vsel %vm5018, %v5008, %v5011
        %v5031 = vsel %vm5021, %v5017, 1326507024
        %v5032 = vsel %vm5020, %v5014, %v5031
        %v5033 = vsel %vm5019, %v5030, %v5032
        %v5034 = vshll.u32 %v4994, 8
        %v5035 = vmul.u32.u64.compose %v5034, %v5033
        %v5036 = vextract.low.u32 %v5035
        %v5037 = vextract.high.u32 %v5035
        %v5038 = vmul.u32.u64.compose %v5034, %v5029
        %v5039 = vextract.low.u32 %v5038
        %v5040 = vextract.high.u32 %v5038
        %v5041 = vmul.u32 %v5034, %v5025
        %v5042 = vadd.s32 %v5037, %v5039
        %vm5043 = vc.u32 %v5037, %v5039
        %v5044 = vadd.s32 %v5040, 1
        %v5045 = vsel %vm5043, %v5044, %v5040
        %v5046 = vadd.s32 %v5041, %v5045
        %v5047 = vadd.s32 %v5046, 536870912
        %v5048 = vshrl.u32 %v5047, 30
        %v5049 = vshll.u32 %v5048, 30
        %v5050 = vsub.s32 %v5046, %v5049
        %vm5051 = vcmp.lt.s32.totalorder %v5050, 0
        %v5052 = vsub.s32 0, %v5050
        %v5053 = vsel %vm5051, %v5052, %v5050
        %v5054 = vclz %v5053
        %v5055 = vsub.s32 %v5054, 2
        %vm5056 = vcmp.gt.s32.totalorder 0, %v5055
        %v5057 = vsel %vm5056, 0, %v5055
        %v5058 = vsub.s32 32, %v5057
        %v5059 = vshll.u32 %v5050, %v5057
        %v5060 = vshrl.u32 %v5042, %v5058
        %v5061 = vor.u32 %v5059, %v5060
        %v5062 = vsub.s32 4294967266, %v5057
        %v5063 = vadd.s32 %v5062, 127
        %v5064 = vshll.u32 %v5063, 23
        %v5065 = vor.u32 4788187, %v5064
        %v5066 = vand.u32 2147483647, %v5065
        %v5068 = vcvt.s32.f32 %v5061
        %v5069 = vmul.f32 %v5068, %v5066
        %v5070 = vxor.u32 %v5069, 2147483648
        %v5071 = vsel %vm4988, %v5070, %v5069
        %v5072 = vsub.s32 4, %v5048
        %v5073 = vsel %vm4988, %v5072, %v5048
        %v5074 = vsel %vm4987, %v1633, %v5071
        %v5075 = vsel %vm4987, 0, %v5073
        %v5076 = vcosq.f32.pop %v5074
        %v5077 = vsinq.f32.pop %v5074
        %vm5078 = vweird.f32 %v1633
        %v5079 = vand.u32 %v5075, 3
        %vm5080 = vcmp.lt.s32.totalorder %v5079, 2
        %vm5081 = vcmp.eq.s32.totalorder %v5079, 0
        %v5082 = vxor.u32 %v5077, 2147483648
        %v5083 = vsel %vm5081, %v5076, %v5082
        %vm5084 = vcmp.eq.s32.totalorder %v5079, 2
        %v5085 = vxor.u32 %v5076, 2147483648
        %v5086 = vsel %vm5084, %v5085, %v5077
        %v5087 = vsel %vm5080, %v5083, %v5086
        %v5088 = vsel %vm5078, nan, %v5087
        %v5089 = vand.u32 2147483647, %v1634
        %vm5090 = vcmp.le.f32.partialorder %v5089, 0.7853982
        %vm5091 = vcmp.lt.s32.totalorder %v1634, 0
        %v5092 = vand.u32 %v1634, 2139095040
        %v5093 = vshrl.u32 %v5092, 23
        %v5094 = vsub.s32 %v5093, 127
        %v5095 = vand.u32 2147483647, %v1634
        %v5096 = vand.u32 %v5095, 8388607
        %v5097 = vor.u32 %v5096, 8388608
        %v5098 = vsub.s32 0, %v5097
        %v5099 = vadd.s32 %v5094, 1
        %vm5100 = vcmp.gt.s32.totalorder %v5099, 0
        %v5101 = vsel %vm5100, %v5099, 0
        %v5102 = vshrl.u32 %v5101, 5
        %v5103 = vand.u32 %v5101, 31
        %v5104 = vsub.s32 32, %v5103
        %v5105 = vshrl.u32 683565275, %v5104
        %v5106 = vshll.u32 683565275, %v5103
        %v5107 = vshrl.u32 2475754826, %v5104
        %v5108 = vor.u32 %v5106, %v5107
        %v5109 = vshll.u32 2475754826, %v5103
        %v5110 = vshrl.u32 2131351028, %v5104
        %v5111 = vor.u32 %v5109, %v5110
        %v5112 = vshll.u32 2131351028, %v5103
        %v5113 = vshrl.u32 2102212464, %v5104
        %v5114 = vor.u32 %v5112, %v5113
        %v5115 = vshll.u32 2102212464, %v5103
        %v5116 = vshrl.u32 920167782, %v5104
        %v5117 = vor.u32 %v5115, %v5116
        %v5118 = vshll.u32 920167782, %v5103
        %v5119 = vshrl.u32 1326507024, %v5104
        %v5120 = vor.u32 %v5118, %v5119
        %vm5121 = vcmp.lt.s32.totalorder %v5102, 1
        %vm5122 = vcmp.lt.s32.totalorder %v5102, 2
        %vm5123 = vcmp.lt.s32.totalorder %v5102, 3
        %vm5124 = vcmp.lt.s32.totalorder %v5102, 4
        %v5125 = vsel %vm5121, %v5105, %v5108
        %v5126 = vsel %vm5124, %v5114, 2102212464
        %v5127 = vsel %vm5123, %v5111, %v5126
        %v5128 = vsel %vm5122, %v5125, %v5127
        %v5129 = vsel %vm5121, %v5108, %v5111
        %v5130 = vsel %vm5124, %v5117, 920167782
        %v5131 = vsel %vm5123, %v5114, %v5130
        %v5132 = vsel %vm5122, %v5129, %v5131
        %v5133 = vsel %vm5121, %v5111, %v5114
        %v5134 = vsel %vm5124, %v5120, 1326507024
        %v5135 = vsel %vm5123, %v5117, %v5134
        %v5136 = vsel %vm5122, %v5133, %v5135
        %v5137 = vshll.u32 %v5097, 8
        %v5138 = vmul.u32.u64.compose %v5137, %v5136
        %v5139 = vextract.low.u32 %v5138
        %v5140 = vextract.high.u32 %v5138
        %v5141 = vmul.u32.u64.compose %v5137, %v5132
        %v5142 = vextract.low.u32 %v5141
        %v5143 = vextract.high.u32 %v5141
        %v5144 = vmul.u32 %v5137, %v5128
        %v5145 = vadd.s32 %v5140, %v5142
        %vm5146 = vc.u32 %v5140, %v5142
        %v5147 = vadd.s32 %v5143, 1
        %v5148 = vsel %vm5146, %v5147, %v5143
        %v5149 = vadd.s32 %v5144, %v5148
        %v5150 = vadd.s32 %v5149, 536870912
        %v5151 = vshrl.u32 %v5150, 30
        %v5152 = vshll.u32 %v5151, 30
        %v5153 = vsub.s32 %v5149, %v5152
        %vm5154 = vcmp.lt.s32.totalorder %v5153, 0
        %v5155 = vsub.s32 0, %v5153
        %v5156 = vsel %vm5154, %v5155, %v5153
        %v5157 = vclz %v5156
        %v5158 = vsub.s32 %v5157, 2
        %vm5159 = vcmp.gt.s32.totalorder 0, %v5158
        %v5160 = vsel %vm5159, 0, %v5158
        %v5161 = vsub.s32 32, %v5160
        %v5162 = vshll.u32 %v5153, %v5160
        %v5163 = vshrl.u32 %v5145, %v5161
        %v5164 = vor.u32 %v5162, %v5163
        %v5165 = vsub.s32 4294967266, %v5160
        %v5166 = vadd.s32 %v5165, 127
        %v5167 = vshll.u32 %v5166, 23
        %v5168 = vor.u32 4788187, %v5167
        %v5169 = vand.u32 2147483647, %v5168
        %v5171 = vcvt.s32.f32 %v5164
        %v5172 = vmul.f32 %v5171, %v5169
        %v5173 = vxor.u32 %v5172, 2147483648
        %v5174 = vsel %vm5091, %v5173, %v5172
        %v5175 = vsub.s32 4, %v5151
        %v5176 = vsel %vm5091, %v5175, %v5151
        %v5177 = vsel %vm5090, %v1634, %v5174
        %v5178 = vsel %vm5090, 0, %v5176
        %v5179 = vcosq.f32.pop %v5177
        %v5180 = vsinq.f32.pop %v5177
        %vm5181 = vweird.f32 %v1634
        %v5182 = vand.u32 %v5178, 3
        %vm5183 = vcmp.lt.s32.totalorder %v5182, 2
        %vm5184 = vcmp.eq.s32.totalorder %v5182, 0
        %v5185 = vxor.u32 %v5180, 2147483648
        %v5186 = vsel %vm5184, %v5179, %v5185
        %vm5187 = vcmp.eq.s32.totalorder %v5182, 2
        %v5188 = vxor.u32 %v5179, 2147483648
        %v5189 = vsel %vm5187, %v5188, %v5180
        %v5190 = vsel %vm5183, %v5186, %v5189
        %v5191 = vsel %vm5181, nan, %v5190
        %v5192 = vand.u32 2147483647, %v1635
        %vm5193 = vcmp.le.f32.partialorder %v5192, 0.7853982
        %vm5194 = vcmp.lt.s32.totalorder %v1635, 0
        %v5195 = vand.u32 %v1635, 2139095040
        %v5196 = vshrl.u32 %v5195, 23
        %v5197 = vsub.s32 %v5196, 127
        %v5198 = vand.u32 2147483647, %v1635
        %v5199 = vand.u32 %v5198, 8388607
        %v5200 = vor.u32 %v5199, 8388608
        %v5201 = vsub.s32 0, %v5200
        %v5202 = vadd.s32 %v5197, 1
        %vm5203 = vcmp.gt.s32.totalorder %v5202, 0
        %v5204 = vsel %vm5203, %v5202, 0
        %v5205 = vshrl.u32 %v5204, 5
        %v5206 = vand.u32 %v5204, 31
        %v5207 = vsub.s32 32, %v5206
        %v5208 = vshrl.u32 683565275, %v5207
        %v5209 = vshll.u32 683565275, %v5206
        %v5210 = vshrl.u32 2475754826, %v5207
        %v5211 = vor.u32 %v5209, %v5210
        %v5212 = vshll.u32 2475754826, %v5206
        %v5213 = vshrl.u32 2131351028, %v5207
        %v5214 = vor.u32 %v5212, %v5213
        %v5215 = vshll.u32 2131351028, %v5206
        %v5216 = vshrl.u32 2102212464, %v5207
        %v5217 = vor.u32 %v5215, %v5216
        %v5218 = vshll.u32 2102212464, %v5206
        %v5219 = vshrl.u32 920167782, %v5207
        %v5220 = vor.u32 %v5218, %v5219
        %v5221 = vshll.u32 920167782, %v5206
        %v5222 = vshrl.u32 1326507024, %v5207
        %v5223 = vor.u32 %v5221, %v5222
        %vm5224 = vcmp.lt.s32.totalorder %v5205, 1
        %vm5225 = vcmp.lt.s32.totalorder %v5205, 2
        %vm5226 = vcmp.lt.s32.totalorder %v5205, 3
        %vm5227 = vcmp.lt.s32.totalorder %v5205, 4
        %v5228 = vsel %vm5224, %v5208, %v5211
        %v5229 = vsel %vm5227, %v5217, 2102212464
        %v5230 = vsel %vm5226, %v5214, %v5229
        %v5231 = vsel %vm5225, %v5228, %v5230
        %v5232 = vsel %vm5224, %v5211, %v5214
        %v5233 = vsel %vm5227, %v5220, 920167782
        %v5234 = vsel %vm5226, %v5217, %v5233
        %v5235 = vsel %vm5225, %v5232, %v5234
        %v5236 = vsel %vm5224, %v5214, %v5217
        %v5237 = vsel %vm5227, %v5223, 1326507024
        %v5238 = vsel %vm5226, %v5220, %v5237
        %v5239 = vsel %vm5225, %v5236, %v5238
        %v5240 = vshll.u32 %v5200, 8
        %v5241 = vmul.u32.u64.compose %v5240, %v5239
        %v5242 = vextract.low.u32 %v5241
        %v5243 = vextract.high.u32 %v5241
        %v5244 = vmul.u32.u64.compose %v5240, %v5235
        %v5245 = vextract.low.u32 %v5244
        %v5246 = vextract.high.u32 %v5244
        %v5247 = vmul.u32 %v5240, %v5231
        %v5248 = vadd.s32 %v5243, %v5245
        %vm5249 = vc.u32 %v5243, %v5245
        %v5250 = vadd.s32 %v5246, 1
        %v5251 = vsel %vm5249, %v5250, %v5246
        %v5252 = vadd.s32 %v5247, %v5251
        %v5253 = vadd.s32 %v5252, 536870912
        %v5254 = vshrl.u32 %v5253, 30
        %v5255 = vshll.u32 %v5254, 30
        %v5256 = vsub.s32 %v5252, %v5255
        %vm5257 = vcmp.lt.s32.totalorder %v5256, 0
        %v5258 = vsub.s32 0, %v5256
        %v5259 = vsel %vm5257, %v5258, %v5256
        %v5260 = vclz %v5259
        %v5261 = vsub.s32 %v5260, 2
        %vm5262 = vcmp.gt.s32.totalorder 0, %v5261
        %v5263 = vsel %vm5262, 0, %v5261
        %v5264 = vsub.s32 32, %v5263
        %v5265 = vshll.u32 %v5256, %v5263
        %v5266 = vshrl.u32 %v5248, %v5264
        %v5267 = vor.u32 %v5265, %v5266
        %v5268 = vsub.s32 4294967266, %v5263
        %v5269 = vadd.s32 %v5268, 127
        %v5270 = vshll.u32 %v5269, 23
        %v5271 = vor.u32 4788187, %v5270
        %v5272 = vand.u32 2147483647, %v5271
        %v5274 = vcvt.s32.f32 %v5267
        %v5275 = vmul.f32 %v5274, %v5272
        %v5276 = vxor.u32 %v5275, 2147483648
        %v5277 = vsel %vm5194, %v5276, %v5275
        %v5278 = vsub.s32 4, %v5254
        %v5279 = vsel %vm5194, %v5278, %v5254
        %v5280 = vsel %vm5193, %v1635, %v5277
        %v5281 = vsel %vm5193, 0, %v5279
        %v5282 = vcosq.f32.pop %v5280
        %v5283 = vsinq.f32.pop %v5280
        %vm5284 = vweird.f32 %v1635
        %v5285 = vand.u32 %v5281, 3
        %vm5286 = vcmp.lt.s32.totalorder %v5285, 2
        %vm5287 = vcmp.eq.s32.totalorder %v5285, 0
        %v5288 = vxor.u32 %v5283, 2147483648
        %v5289 = vsel %vm5287, %v5282, %v5288
        %vm5290 = vcmp.eq.s32.totalorder %v5285, 2
        %v5291 = vxor.u32 %v5282, 2147483648
        %v5292 = vsel %vm5290, %v5291, %v5283
        %v5293 = vsel %vm5286, %v5289, %v5292
        %v5294 = vsel %vm5284, nan, %v5293
        %v5295 = vand.u32 2147483647, %v1636
        %vm5296 = vcmp.le.f32.partialorder %v5295, 0.7853982
        %vm5297 = vcmp.lt.s32.totalorder %v1636, 0
        %v5298 = vand.u32 %v1636, 2139095040
        %v5299 = vshrl.u32 %v5298, 23
        %v5300 = vsub.s32 %v5299, 127
        %v5301 = vand.u32 2147483647, %v1636
        %v5302 = vand.u32 %v5301, 8388607
        %v5303 = vor.u32 %v5302, 8388608
        %v5304 = vsub.s32 0, %v5303
        %v5305 = vadd.s32 %v5300, 1
        %vm5306 = vcmp.gt.s32.totalorder %v5305, 0
        %v5307 = vsel %vm5306, %v5305, 0
        %v5308 = vshrl.u32 %v5307, 5
        %v5309 = vand.u32 %v5307, 31
        %v5310 = vsub.s32 32, %v5309
        %v5311 = vshrl.u32 683565275, %v5310
        %v5312 = vshll.u32 683565275, %v5309
        %v5313 = vshrl.u32 2475754826, %v5310
        %v5314 = vor.u32 %v5312, %v5313
        %v5315 = vshll.u32 2475754826, %v5309
        %v5316 = vshrl.u32 2131351028, %v5310
        %v5317 = vor.u32 %v5315, %v5316
        %v5318 = vshll.u32 2131351028, %v5309
        %v5319 = vshrl.u32 2102212464, %v5310
        %v5320 = vor.u32 %v5318, %v5319
        %v5321 = vshll.u32 2102212464, %v5309
        %v5322 = vshrl.u32 920167782, %v5310
        %v5323 = vor.u32 %v5321, %v5322
        %v5324 = vshll.u32 920167782, %v5309
        %v5325 = vshrl.u32 1326507024, %v5310
        %v5326 = vor.u32 %v5324, %v5325
        %vm5327 = vcmp.lt.s32.totalorder %v5308, 1
        %vm5328 = vcmp.lt.s32.totalorder %v5308, 2
        %vm5329 = vcmp.lt.s32.totalorder %v5308, 3
        %vm5330 = vcmp.lt.s32.totalorder %v5308, 4
        %v5331 = vsel %vm5327, %v5311, %v5314
        %v5332 = vsel %vm5330, %v5320, 2102212464
        %v5333 = vsel %vm5329, %v5317, %v5332
        %v5334 = vsel %vm5328, %v5331, %v5333
        %v5335 = vsel %vm5327, %v5314, %v5317
        %v5336 = vsel %vm5330, %v5323, 920167782
        %v5337 = vsel %vm5329, %v5320, %v5336
        %v5338 = vsel %vm5328, %v5335, %v5337
        %v5339 = vsel %vm5327, %v5317, %v5320
        %v5340 = vsel %vm5330, %v5326, 1326507024
        %v5341 = vsel %vm5329, %v5323, %v5340
        %v5342 = vsel %vm5328, %v5339, %v5341
        %v5343 = vshll.u32 %v5303, 8
        %v5344 = vmul.u32.u64.compose %v5343, %v5342
        %v5345 = vextract.low.u32 %v5344
        %v5346 = vextract.high.u32 %v5344
        %v5347 = vmul.u32.u64.compose %v5343, %v5338
        %v5348 = vextract.low.u32 %v5347
        %v5349 = vextract.high.u32 %v5347
        %v5350 = vmul.u32 %v5343, %v5334
        %v5351 = vadd.s32 %v5346, %v5348
        %vm5352 = vc.u32 %v5346, %v5348
        %v5353 = vadd.s32 %v5349, 1
        %v5354 = vsel %vm5352, %v5353, %v5349
        %v5355 = vadd.s32 %v5350, %v5354
        %v5356 = vadd.s32 %v5355, 536870912
        %v5357 = vshrl.u32 %v5356, 30
        %v5358 = vshll.u32 %v5357, 30
        %v5359 = vsub.s32 %v5355, %v5358
        %vm5360 = vcmp.lt.s32.totalorder %v5359, 0
        %v5361 = vsub.s32 0, %v5359
        %v5362 = vsel %vm5360, %v5361, %v5359
        %v5363 = vclz %v5362
        %v5364 = vsub.s32 %v5363, 2
        %vm5365 = vcmp.gt.s32.totalorder 0, %v5364
        %v5366 = vsel %vm5365, 0, %v5364
        %v5367 = vsub.s32 32, %v5366
        %v5368 = vshll.u32 %v5359, %v5366
        %v5369 = vshrl.u32 %v5351, %v5367
        %v5370 = vor.u32 %v5368, %v5369
        %v5371 = vsub.s32 4294967266, %v5366
        %v5372 = vadd.s32 %v5371, 127
        %v5373 = vshll.u32 %v5372, 23
        %v5374 = vor.u32 4788187, %v5373
        %v5375 = vand.u32 2147483647, %v5374
        %v5377 = vcvt.s32.f32 %v5370
        %v5378 = vmul.f32 %v5377, %v5375
        %v5379 = vxor.u32 %v5378, 2147483648
        %v5380 = vsel %vm5297, %v5379, %v5378
        %v5381 = vsub.s32 4, %v5357
        %v5382 = vsel %vm5297, %v5381, %v5357
        %v5383 = vsel %vm5296, %v1636, %v5380
        %v5384 = vsel %vm5296, 0, %v5382
        %v5385 = vcosq.f32.pop %v5383
        %v5386 = vsinq.f32.pop %v5383
        %vm5387 = vweird.f32 %v1636
        %v5388 = vand.u32 %v5384, 3
        %vm5389 = vcmp.lt.s32.totalorder %v5388, 2
        %vm5390 = vcmp.eq.s32.totalorder %v5388, 0
        %v5391 = vxor.u32 %v5386, 2147483648
        %v5392 = vsel %vm5390, %v5385, %v5391
        %vm5393 = vcmp.eq.s32.totalorder %v5388, 2
        %v5394 = vxor.u32 %v5385, 2147483648
        %v5395 = vsel %vm5393, %v5394, %v5386
        %v5396 = vsel %vm5389, %v5392, %v5395
        %v5397 = vsel %vm5387, nan, %v5396
        %v5398 = vand.u32 2147483647, %v1637
        %vm5399 = vcmp.le.f32.partialorder %v5398, 0.7853982
        %vm5400 = vcmp.lt.s32.totalorder %v1637, 0
        %v5401 = vand.u32 %v1637, 2139095040
        %v5402 = vshrl.u32 %v5401, 23
        %v5403 = vsub.s32 %v5402, 127
        %v5404 = vand.u32 2147483647, %v1637
        %v5405 = vand.u32 %v5404, 8388607
        %v5406 = vor.u32 %v5405, 8388608
        %v5407 = vsub.s32 0, %v5406
        %v5408 = vadd.s32 %v5403, 1
        %vm5409 = vcmp.gt.s32.totalorder %v5408, 0
        %v5410 = vsel %vm5409, %v5408, 0
        %v5411 = vshrl.u32 %v5410, 5
        %v5412 = vand.u32 %v5410, 31
        %v5413 = vsub.s32 32, %v5412
        %v5414 = vshrl.u32 683565275, %v5413
        %v5415 = vshll.u32 683565275, %v5412
        %v5416 = vshrl.u32 2475754826, %v5413
        %v5417 = vor.u32 %v5415, %v5416
        %v5418 = vshll.u32 2475754826, %v5412
        %v5419 = vshrl.u32 2131351028, %v5413
        %v5420 = vor.u32 %v5418, %v5419
        %v5421 = vshll.u32 2131351028, %v5412
        %v5422 = vshrl.u32 2102212464, %v5413
        %v5423 = vor.u32 %v5421, %v5422
        %v5424 = vshll.u32 2102212464, %v5412
        %v5425 = vshrl.u32 920167782, %v5413
        %v5426 = vor.u32 %v5424, %v5425
        %v5427 = vshll.u32 920167782, %v5412
        %v5428 = vshrl.u32 1326507024, %v5413
        %v5429 = vor.u32 %v5427, %v5428
        %vm5430 = vcmp.lt.s32.totalorder %v5411, 1
        %vm5431 = vcmp.lt.s32.totalorder %v5411, 2
        %vm5432 = vcmp.lt.s32.totalorder %v5411, 3
        %vm5433 = vcmp.lt.s32.totalorder %v5411, 4
        %v5434 = vsel %vm5430, %v5414, %v5417
        %v5435 = vsel %vm5433, %v5423, 2102212464
        %v5436 = vsel %vm5432, %v5420, %v5435
        %v5437 = vsel %vm5431, %v5434, %v5436
        %v5438 = vsel %vm5430, %v5417, %v5420
        %v5439 = vsel %vm5433, %v5426, 920167782
        %v5440 = vsel %vm5432, %v5423, %v5439
        %v5441 = vsel %vm5431, %v5438, %v5440
        %v5442 = vsel %vm5430, %v5420, %v5423
        %v5443 = vsel %vm5433, %v5429, 1326507024
        %v5444 = vsel %vm5432, %v5426, %v5443
        %v5445 = vsel %vm5431, %v5442, %v5444
        %v5446 = vshll.u32 %v5406, 8
        %v5447 = vmul.u32.u64.compose %v5446, %v5445
        %v5448 = vextract.low.u32 %v5447
        %v5449 = vextract.high.u32 %v5447
        %v5450 = vmul.u32.u64.compose %v5446, %v5441
        %v5451 = vextract.low.u32 %v5450
        %v5452 = vextract.high.u32 %v5450
        %v5453 = vmul.u32 %v5446, %v5437
        %v5454 = vadd.s32 %v5449, %v5451
        %vm5455 = vc.u32 %v5449, %v5451
        %v5456 = vadd.s32 %v5452, 1
        %v5457 = vsel %vm5455, %v5456, %v5452
        %v5458 = vadd.s32 %v5453, %v5457
        %v5459 = vadd.s32 %v5458, 536870912
        %v5460 = vshrl.u32 %v5459, 30
        %v5461 = vshll.u32 %v5460, 30
        %v5462 = vsub.s32 %v5458, %v5461
        %vm5463 = vcmp.lt.s32.totalorder %v5462, 0
        %v5464 = vsub.s32 0, %v5462
        %v5465 = vsel %vm5463, %v5464, %v5462
        %v5466 = vclz %v5465
        %v5467 = vsub.s32 %v5466, 2
        %vm5468 = vcmp.gt.s32.totalorder 0, %v5467
        %v5469 = vsel %vm5468, 0, %v5467
        %v5470 = vsub.s32 32, %v5469
        %v5471 = vshll.u32 %v5462, %v5469
        %v5472 = vshrl.u32 %v5454, %v5470
        %v5473 = vor.u32 %v5471, %v5472
        %v5474 = vsub.s32 4294967266, %v5469
        %v5475 = vadd.s32 %v5474, 127
        %v5476 = vshll.u32 %v5475, 23
        %v5477 = vor.u32 4788187, %v5476
        %v5478 = vand.u32 2147483647, %v5477
        %v5480 = vcvt.s32.f32 %v5473
        %v5481 = vmul.f32 %v5480, %v5478
        %v5482 = vxor.u32 %v5481, 2147483648
        %v5483 = vsel %vm5400, %v5482, %v5481
        %v5484 = vsub.s32 4, %v5460
        %v5485 = vsel %vm5400, %v5484, %v5460
        %v5486 = vsel %vm5399, %v1637, %v5483
        %v5487 = vsel %vm5399, 0, %v5485
        %v5488 = vcosq.f32.pop %v5486
        %v5489 = vsinq.f32.pop %v5486
        %vm5490 = vweird.f32 %v1637
        %v5491 = vand.u32 %v5487, 3
        %vm5492 = vcmp.lt.s32.totalorder %v5491, 2
        %vm5493 = vcmp.eq.s32.totalorder %v5491, 0
        %v5494 = vxor.u32 %v5489, 2147483648
        %v5495 = vsel %vm5493, %v5488, %v5494
        %vm5496 = vcmp.eq.s32.totalorder %v5491, 2
        %v5497 = vxor.u32 %v5488, 2147483648
        %v5498 = vsel %vm5496, %v5497, %v5489
        %v5499 = vsel %vm5492, %v5495, %v5498
        %v5500 = vsel %vm5490, nan, %v5499
        %v5501 = vand.u32 2147483647, %v1638
        %vm5502 = vcmp.le.f32.partialorder %v5501, 0.7853982
        %vm5503 = vcmp.lt.s32.totalorder %v1638, 0
        %v5504 = vand.u32 %v1638, 2139095040
        %v5505 = vshrl.u32 %v5504, 23
        %v5506 = vsub.s32 %v5505, 127
        %v5507 = vand.u32 2147483647, %v1638
        %v5508 = vand.u32 %v5507, 8388607
        %v5509 = vor.u32 %v5508, 8388608
        %v5510 = vsub.s32 0, %v5509
        %v5511 = vadd.s32 %v5506, 1
        %vm5512 = vcmp.gt.s32.totalorder %v5511, 0
        %v5513 = vsel %vm5512, %v5511, 0
        %v5514 = vshrl.u32 %v5513, 5
        %v5515 = vand.u32 %v5513, 31
        %v5516 = vsub.s32 32, %v5515
        %v5517 = vshrl.u32 683565275, %v5516
        %v5518 = vshll.u32 683565275, %v5515
        %v5519 = vshrl.u32 2475754826, %v5516
        %v5520 = vor.u32 %v5518, %v5519
        %v5521 = vshll.u32 2475754826, %v5515
        %v5522 = vshrl.u32 2131351028, %v5516
        %v5523 = vor.u32 %v5521, %v5522
        %v5524 = vshll.u32 2131351028, %v5515
        %v5525 = vshrl.u32 2102212464, %v5516
        %v5526 = vor.u32 %v5524, %v5525
        %v5527 = vshll.u32 2102212464, %v5515
        %v5528 = vshrl.u32 920167782, %v5516
        %v5529 = vor.u32 %v5527, %v5528
        %v5530 = vshll.u32 920167782, %v5515
        %v5531 = vshrl.u32 1326507024, %v5516
        %v5532 = vor.u32 %v5530, %v5531
        %vm5533 = vcmp.lt.s32.totalorder %v5514, 1
        %vm5534 = vcmp.lt.s32.totalorder %v5514, 2
        %vm5535 = vcmp.lt.s32.totalorder %v5514, 3
        %vm5536 = vcmp.lt.s32.totalorder %v5514, 4
        %v5537 = vsel %vm5533, %v5517, %v5520
        %v5538 = vsel %vm5536, %v5526, 2102212464
        %v5539 = vsel %vm5535, %v5523, %v5538
        %v5540 = vsel %vm5534, %v5537, %v5539
        %v5541 = vsel %vm5533, %v5520, %v5523
        %v5542 = vsel %vm5536, %v5529, 920167782
        %v5543 = vsel %vm5535, %v5526, %v5542
        %v5544 = vsel %vm5534, %v5541, %v5543
        %v5545 = vsel %vm5533, %v5523, %v5526
        %v5546 = vsel %vm5536, %v5532, 1326507024
        %v5547 = vsel %vm5535, %v5529, %v5546
        %v5548 = vsel %vm5534, %v5545, %v5547
        %v5549 = vshll.u32 %v5509, 8
        %v5550 = vmul.u32.u64.compose %v5549, %v5548
        %v5551 = vextract.low.u32 %v5550
        %v5552 = vextract.high.u32 %v5550
        %v5553 = vmul.u32.u64.compose %v5549, %v5544
        %v5554 = vextract.low.u32 %v5553
        %v5555 = vextract.high.u32 %v5553
        %v5556 = vmul.u32 %v5549, %v5540
        %v5557 = vadd.s32 %v5552, %v5554
        %vm5558 = vc.u32 %v5552, %v5554
        %v5559 = vadd.s32 %v5555, 1
        %v5560 = vsel %vm5558, %v5559, %v5555
        %v5561 = vadd.s32 %v5556, %v5560
        %v5562 = vadd.s32 %v5561, 536870912
        %v5563 = vshrl.u32 %v5562, 30
        %v5564 = vshll.u32 %v5563, 30
        %v5565 = vsub.s32 %v5561, %v5564
        %vm5566 = vcmp.lt.s32.totalorder %v5565, 0
        %v5567 = vsub.s32 0, %v5565
        %v5568 = vsel %vm5566, %v5567, %v5565
        %v5569 = vclz %v5568
        %v5570 = vsub.s32 %v5569, 2
        %vm5571 = vcmp.gt.s32.totalorder 0, %v5570
        %v5572 = vsel %vm5571, 0, %v5570
        %v5573 = vsub.s32 32, %v5572
        %v5574 = vshll.u32 %v5565, %v5572
        %v5575 = vshrl.u32 %v5557, %v5573
        %v5576 = vor.u32 %v5574, %v5575
        %v5577 = vsub.s32 4294967266, %v5572
        %v5578 = vadd.s32 %v5577, 127
        %v5579 = vshll.u32 %v5578, 23
        %v5580 = vor.u32 4788187, %v5579
        %v5581 = vand.u32 2147483647, %v5580
        %v5583 = vcvt.s32.f32 %v5576
        %v5584 = vmul.f32 %v5583, %v5581
        %v5585 = vxor.u32 %v5584, 2147483648
        %v5586 = vsel %vm5503, %v5585, %v5584
        %v5587 = vsub.s32 4, %v5563
        %v5588 = vsel %vm5503, %v5587, %v5563
        %v5589 = vsel %vm5502, %v1638, %v5586
        %v5590 = vsel %vm5502, 0, %v5588
        %v5591 = vcosq.f32.pop %v5589
        %v5592 = vsinq.f32.pop %v5589
        %vm5593 = vweird.f32 %v1638
        %v5594 = vand.u32 %v5590, 3
        %vm5595 = vcmp.lt.s32.totalorder %v5594, 2
        %vm5596 = vcmp.eq.s32.totalorder %v5594, 0
        %v5597 = vxor.u32 %v5592, 2147483648
        %v5598 = vsel %vm5596, %v5591, %v5597
        %vm5599 = vcmp.eq.s32.totalorder %v5594, 2
        %v5600 = vxor.u32 %v5591, 2147483648
        %v5601 = vsel %vm5599, %v5600, %v5592
        %v5602 = vsel %vm5595, %v5598, %v5601
        %v5603 = vsel %vm5593, nan, %v5602
        %v5604 = vand.u32 2147483647, %v1639
        %vm5605 = vcmp.le.f32.partialorder %v5604, 0.7853982
        %vm5606 = vcmp.lt.s32.totalorder %v1639, 0
        %v5607 = vand.u32 %v1639, 2139095040
        %v5608 = vshrl.u32 %v5607, 23
        %v5609 = vsub.s32 %v5608, 127
        %v5610 = vand.u32 2147483647, %v1639
        %v5611 = vand.u32 %v5610, 8388607
        %v5612 = vor.u32 %v5611, 8388608
        %v5613 = vsub.s32 0, %v5612
        %v5614 = vadd.s32 %v5609, 1
        %vm5615 = vcmp.gt.s32.totalorder %v5614, 0
        %v5616 = vsel %vm5615, %v5614, 0
        %v5617 = vshrl.u32 %v5616, 5
        %v5618 = vand.u32 %v5616, 31
        %v5619 = vsub.s32 32, %v5618
        %v5620 = vshrl.u32 683565275, %v5619
        %v5621 = vshll.u32 683565275, %v5618
        %v5622 = vshrl.u32 2475754826, %v5619
        %v5623 = vor.u32 %v5621, %v5622
        %v5624 = vshll.u32 2475754826, %v5618
        %v5625 = vshrl.u32 2131351028, %v5619
        %v5626 = vor.u32 %v5624, %v5625
        %v5627 = vshll.u32 2131351028, %v5618
        %v5628 = vshrl.u32 2102212464, %v5619
        %v5629 = vor.u32 %v5627, %v5628
        %v5630 = vshll.u32 2102212464, %v5618
        %v5631 = vshrl.u32 920167782, %v5619
        %v5632 = vor.u32 %v5630, %v5631
        %v5633 = vshll.u32 920167782, %v5618
        %v5634 = vshrl.u32 1326507024, %v5619
        %v5635 = vor.u32 %v5633, %v5634
        %vm5636 = vcmp.lt.s32.totalorder %v5617, 1
        %vm5637 = vcmp.lt.s32.totalorder %v5617, 2
        %vm5638 = vcmp.lt.s32.totalorder %v5617, 3
        %vm5639 = vcmp.lt.s32.totalorder %v5617, 4
        %v5640 = vsel %vm5636, %v5620, %v5623
        %v5641 = vsel %vm5639, %v5629, 2102212464
        %v5642 = vsel %vm5638, %v5626, %v5641
        %v5643 = vsel %vm5637, %v5640, %v5642
        %v5644 = vsel %vm5636, %v5623, %v5626
        %v5645 = vsel %vm5639, %v5632, 920167782
        %v5646 = vsel %vm5638, %v5629, %v5645
        %v5647 = vsel %vm5637, %v5644, %v5646
        %v5648 = vsel %vm5636, %v5626, %v5629
        %v5649 = vsel %vm5639, %v5635, 1326507024
        %v5650 = vsel %vm5638, %v5632, %v5649
        %v5651 = vsel %vm5637, %v5648, %v5650
        %v5652 = vshll.u32 %v5612, 8
        %v5653 = vmul.u32.u64.compose %v5652, %v5651
        %v5654 = vextract.low.u32 %v5653
        %v5655 = vextract.high.u32 %v5653
        %v5656 = vmul.u32.u64.compose %v5652, %v5647
        %v5657 = vextract.low.u32 %v5656
        %v5658 = vextract.high.u32 %v5656
        %v5659 = vmul.u32 %v5652, %v5643
        %v5660 = vadd.s32 %v5655, %v5657
        %vm5661 = vc.u32 %v5655, %v5657
        %v5662 = vadd.s32 %v5658, 1
        %v5663 = vsel %vm5661, %v5662, %v5658
        %v5664 = vadd.s32 %v5659, %v5663
        %v5665 = vadd.s32 %v5664, 536870912
        %v5666 = vshrl.u32 %v5665, 30
        %v5667 = vshll.u32 %v5666, 30
        %v5668 = vsub.s32 %v5664, %v5667
        %vm5669 = vcmp.lt.s32.totalorder %v5668, 0
        %v5670 = vsub.s32 0, %v5668
        %v5671 = vsel %vm5669, %v5670, %v5668
        %v5672 = vclz %v5671
        %v5673 = vsub.s32 %v5672, 2
        %vm5674 = vcmp.gt.s32.totalorder 0, %v5673
        %v5675 = vsel %vm5674, 0, %v5673
        %v5676 = vsub.s32 32, %v5675
        %v5677 = vshll.u32 %v5668, %v5675
        %v5678 = vshrl.u32 %v5660, %v5676
        %v5679 = vor.u32 %v5677, %v5678
        %v5680 = vsub.s32 4294967266, %v5675
        %v5681 = vadd.s32 %v5680, 127
        %v5682 = vshll.u32 %v5681, 23
        %v5683 = vor.u32 4788187, %v5682
        %v5684 = vand.u32 2147483647, %v5683
        %v5686 = vcvt.s32.f32 %v5679
        %v5687 = vmul.f32 %v5686, %v5684
        %v5688 = vxor.u32 %v5687, 2147483648
        %v5689 = vsel %vm5606, %v5688, %v5687
        %v5690 = vsub.s32 4, %v5666
        %v5691 = vsel %vm5606, %v5690, %v5666
        %v5692 = vsel %vm5605, %v1639, %v5689
        %v5693 = vsel %vm5605, 0, %v5691
        %v5694 = vcosq.f32.pop %v5692
        %v5695 = vsinq.f32.pop %v5692
        %vm5696 = vweird.f32 %v1639
        %v5697 = vand.u32 %v5693, 3
        %vm5698 = vcmp.lt.s32.totalorder %v5697, 2
        %vm5699 = vcmp.eq.s32.totalorder %v5697, 0
        %v5700 = vxor.u32 %v5695, 2147483648
        %v5701 = vsel %vm5699, %v5694, %v5700
        %vm5702 = vcmp.eq.s32.totalorder %v5697, 2
        %v5703 = vxor.u32 %v5694, 2147483648
        %v5704 = vsel %vm5702, %v5703, %v5695
        %v5705 = vsel %vm5698, %v5701, %v5704
        %v5706 = vsel %vm5696, nan, %v5705
        %v5707 = vand.u32 2147483647, %v1640
        %vm5708 = vcmp.le.f32.partialorder %v5707, 0.7853982
        %vm5709 = vcmp.lt.s32.totalorder %v1640, 0
        %v5710 = vand.u32 %v1640, 2139095040
        %v5711 = vshrl.u32 %v5710, 23
        %v5712 = vsub.s32 %v5711, 127
        %v5713 = vand.u32 2147483647, %v1640
        %v5714 = vand.u32 %v5713, 8388607
        %v5715 = vor.u32 %v5714, 8388608
        %v5716 = vsub.s32 0, %v5715
        %v5717 = vadd.s32 %v5712, 1
        %vm5718 = vcmp.gt.s32.totalorder %v5717, 0
        %v5719 = vsel %vm5718, %v5717, 0
        %v5720 = vshrl.u32 %v5719, 5
        %v5721 = vand.u32 %v5719, 31
        %v5722 = vsub.s32 32, %v5721
        %v5723 = vshrl.u32 683565275, %v5722
        %v5724 = vshll.u32 683565275, %v5721
        %v5725 = vshrl.u32 2475754826, %v5722
        %v5726 = vor.u32 %v5724, %v5725
        %v5727 = vshll.u32 2475754826, %v5721
        %v5728 = vshrl.u32 2131351028, %v5722
        %v5729 = vor.u32 %v5727, %v5728
        %v5730 = vshll.u32 2131351028, %v5721
        %v5731 = vshrl.u32 2102212464, %v5722
        %v5732 = vor.u32 %v5730, %v5731
        %v5733 = vshll.u32 2102212464, %v5721
        %v5734 = vshrl.u32 920167782, %v5722
        %v5735 = vor.u32 %v5733, %v5734
        %v5736 = vshll.u32 920167782, %v5721
        %v5737 = vshrl.u32 1326507024, %v5722
        %v5738 = vor.u32 %v5736, %v5737
        %vm5739 = vcmp.lt.s32.totalorder %v5720, 1
        %vm5740 = vcmp.lt.s32.totalorder %v5720, 2
        %vm5741 = vcmp.lt.s32.totalorder %v5720, 3
        %vm5742 = vcmp.lt.s32.totalorder %v5720, 4
        %v5743 = vsel %vm5739, %v5723, %v5726
        %v5744 = vsel %vm5742, %v5732, 2102212464
        %v5745 = vsel %vm5741, %v5729, %v5744
        %v5746 = vsel %vm5740, %v5743, %v5745
        %v5747 = vsel %vm5739, %v5726, %v5729
        %v5748 = vsel %vm5742, %v5735, 920167782
        %v5749 = vsel %vm5741, %v5732, %v5748
        %v5750 = vsel %vm5740, %v5747, %v5749
        %v5751 = vsel %vm5739, %v5729, %v5732
        %v5752 = vsel %vm5742, %v5738, 1326507024
        %v5753 = vsel %vm5741, %v5735, %v5752
        %v5754 = vsel %vm5740, %v5751, %v5753
        %v5755 = vshll.u32 %v5715, 8
        %v5756 = vmul.u32.u64.compose %v5755, %v5754
        %v5757 = vextract.low.u32 %v5756
        %v5758 = vextract.high.u32 %v5756
        %v5759 = vmul.u32.u64.compose %v5755, %v5750
        %v5760 = vextract.low.u32 %v5759
        %v5761 = vextract.high.u32 %v5759
        %v5762 = vmul.u32 %v5755, %v5746
        %v5763 = vadd.s32 %v5758, %v5760
        %vm5764 = vc.u32 %v5758, %v5760
        %v5765 = vadd.s32 %v5761, 1
        %v5766 = vsel %vm5764, %v5765, %v5761
        %v5767 = vadd.s32 %v5762, %v5766
        %v5768 = vadd.s32 %v5767, 536870912
        %v5769 = vshrl.u32 %v5768, 30
        %v5770 = vshll.u32 %v5769, 30
        %v5771 = vsub.s32 %v5767, %v5770
        %vm5772 = vcmp.lt.s32.totalorder %v5771, 0
        %v5773 = vsub.s32 0, %v5771
        %v5774 = vsel %vm5772, %v5773, %v5771
        %v5775 = vclz %v5774
        %v5776 = vsub.s32 %v5775, 2
        %vm5777 = vcmp.gt.s32.totalorder 0, %v5776
        %v5778 = vsel %vm5777, 0, %v5776
        %v5779 = vsub.s32 32, %v5778
        %v5780 = vshll.u32 %v5771, %v5778
        %v5781 = vshrl.u32 %v5763, %v5779
        %v5782 = vor.u32 %v5780, %v5781
        %v5783 = vsub.s32 4294967266, %v5778
        %v5784 = vadd.s32 %v5783, 127
        %v5785 = vshll.u32 %v5784, 23
        %v5786 = vor.u32 4788187, %v5785
        %v5787 = vand.u32 2147483647, %v5786
        %v5789 = vcvt.s32.f32 %v5782
        %v5790 = vmul.f32 %v5789, %v5787
        %v5791 = vxor.u32 %v5790, 2147483648
        %v5792 = vsel %vm5709, %v5791, %v5790
        %v5793 = vsub.s32 4, %v5769
        %v5794 = vsel %vm5709, %v5793, %v5769
        %v5795 = vsel %vm5708, %v1640, %v5792
        %v5796 = vsel %vm5708, 0, %v5794
        %v5797 = vcosq.f32.pop %v5795
        %v5798 = vsinq.f32.pop %v5795
        %vm5799 = vweird.f32 %v1640
        %v5800 = vand.u32 %v5796, 3
        %vm5801 = vcmp.lt.s32.totalorder %v5800, 2
        %vm5802 = vcmp.eq.s32.totalorder %v5800, 0
        %v5803 = vxor.u32 %v5798, 2147483648
        %v5804 = vsel %vm5802, %v5797, %v5803
        %vm5805 = vcmp.eq.s32.totalorder %v5800, 2
        %v5806 = vxor.u32 %v5797, 2147483648
        %v5807 = vsel %vm5805, %v5806, %v5798
        %v5808 = vsel %vm5801, %v5804, %v5807
        %v5809 = vsel %vm5799, nan, %v5808
        %v5810 = vand.u32 2147483647, %v1641
        %vm5811 = vcmp.le.f32.partialorder %v5810, 0.7853982
        %vm5812 = vcmp.lt.s32.totalorder %v1641, 0
        %v5813 = vand.u32 %v1641, 2139095040
        %v5814 = vshrl.u32 %v5813, 23
        %v5815 = vsub.s32 %v5814, 127
        %v5816 = vand.u32 2147483647, %v1641
        %v5817 = vand.u32 %v5816, 8388607
        %v5818 = vor.u32 %v5817, 8388608
        %v5819 = vsub.s32 0, %v5818
        %v5820 = vadd.s32 %v5815, 1
        %vm5821 = vcmp.gt.s32.totalorder %v5820, 0
        %v5822 = vsel %vm5821, %v5820, 0
        %v5823 = vshrl.u32 %v5822, 5
        %v5824 = vand.u32 %v5822, 31
        %v5825 = vsub.s32 32, %v5824
        %v5826 = vshrl.u32 683565275, %v5825
        %v5827 = vshll.u32 683565275, %v5824
        %v5828 = vshrl.u32 2475754826, %v5825
        %v5829 = vor.u32 %v5827, %v5828
        %v5830 = vshll.u32 2475754826, %v5824
        %v5831 = vshrl.u32 2131351028, %v5825
        %v5832 = vor.u32 %v5830, %v5831
        %v5833 = vshll.u32 2131351028, %v5824
        %v5834 = vshrl.u32 2102212464, %v5825
        %v5835 = vor.u32 %v5833, %v5834
        %v5836 = vshll.u32 2102212464, %v5824
        %v5837 = vshrl.u32 920167782, %v5825
        %v5838 = vor.u32 %v5836, %v5837
        %v5839 = vshll.u32 920167782, %v5824
        %v5840 = vshrl.u32 1326507024, %v5825
        %v5841 = vor.u32 %v5839, %v5840
        %vm5842 = vcmp.lt.s32.totalorder %v5823, 1
        %vm5843 = vcmp.lt.s32.totalorder %v5823, 2
        %vm5844 = vcmp.lt.s32.totalorder %v5823, 3
        %vm5845 = vcmp.lt.s32.totalorder %v5823, 4
        %v5846 = vsel %vm5842, %v5826, %v5829
        %v5847 = vsel %vm5845, %v5835, 2102212464
        %v5848 = vsel %vm5844, %v5832, %v5847
        %v5849 = vsel %vm5843, %v5846, %v5848
        %v5850 = vsel %vm5842, %v5829, %v5832
        %v5851 = vsel %vm5845, %v5838, 920167782
        %v5852 = vsel %vm5844, %v5835, %v5851
        %v5853 = vsel %vm5843, %v5850, %v5852
        %v5854 = vsel %vm5842, %v5832, %v5835
        %v5855 = vsel %vm5845, %v5841, 1326507024
        %v5856 = vsel %vm5844, %v5838, %v5855
        %v5857 = vsel %vm5843, %v5854, %v5856
        %v5858 = vshll.u32 %v5818, 8
        %v5859 = vmul.u32.u64.compose %v5858, %v5857
        %v5860 = vextract.low.u32 %v5859
        %v5861 = vextract.high.u32 %v5859
        %v5862 = vmul.u32.u64.compose %v5858, %v5853
        %v5863 = vextract.low.u32 %v5862
        %v5864 = vextract.high.u32 %v5862
        %v5865 = vmul.u32 %v5858, %v5849
        %v5866 = vadd.s32 %v5861, %v5863
        %vm5867 = vc.u32 %v5861, %v5863
        %v5868 = vadd.s32 %v5864, 1
        %v5869 = vsel %vm5867, %v5868, %v5864
        %v5870 = vadd.s32 %v5865, %v5869
        %v5871 = vadd.s32 %v5870, 536870912
        %v5872 = vshrl.u32 %v5871, 30
        %v5873 = vshll.u32 %v5872, 30
        %v5874 = vsub.s32 %v5870, %v5873
        %vm5875 = vcmp.lt.s32.totalorder %v5874, 0
        %v5876 = vsub.s32 0, %v5874
        %v5877 = vsel %vm5875, %v5876, %v5874
        %v5878 = vclz %v5877
        %v5879 = vsub.s32 %v5878, 2
        %vm5880 = vcmp.gt.s32.totalorder 0, %v5879
        %v5881 = vsel %vm5880, 0, %v5879
        %v5882 = vsub.s32 32, %v5881
        %v5883 = vshll.u32 %v5874, %v5881
        %v5884 = vshrl.u32 %v5866, %v5882
        %v5885 = vor.u32 %v5883, %v5884
        %v5886 = vsub.s32 4294967266, %v5881
        %v5887 = vadd.s32 %v5886, 127
        %v5888 = vshll.u32 %v5887, 23
        %v5889 = vor.u32 4788187, %v5888
        %v5890 = vand.u32 2147483647, %v5889
        %v5892 = vcvt.s32.f32 %v5885
        %v5893 = vmul.f32 %v5892, %v5890
        %v5894 = vxor.u32 %v5893, 2147483648
        %v5895 = vsel %vm5812, %v5894, %v5893
        %v5896 = vsub.s32 4, %v5872
        %v5897 = vsel %vm5812, %v5896, %v5872
        %v5898 = vsel %vm5811, %v1641, %v5895
        %v5899 = vsel %vm5811, 0, %v5897
        %v5900 = vcosq.f32.pop %v5898
        %v5901 = vsinq.f32.pop %v5898
        %vm5902 = vweird.f32 %v1641
        %v5903 = vand.u32 %v5899, 3
        %vm5904 = vcmp.lt.s32.totalorder %v5903, 2
        %vm5905 = vcmp.eq.s32.totalorder %v5903, 0
        %v5906 = vxor.u32 %v5901, 2147483648
        %v5907 = vsel %vm5905, %v5900, %v5906
        %vm5908 = vcmp.eq.s32.totalorder %v5903, 2
        %v5909 = vxor.u32 %v5900, 2147483648
        %v5910 = vsel %vm5908, %v5909, %v5901
        %v5911 = vsel %vm5904, %v5907, %v5910
        %v5912 = vsel %vm5902, nan, %v5911
        %v5913 = vand.u32 2147483647, %v1642
        %vm5914 = vcmp.le.f32.partialorder %v5913, 0.7853982
        %vm5915 = vcmp.lt.s32.totalorder %v1642, 0
        %v5916 = vand.u32 %v1642, 2139095040
        %v5917 = vshrl.u32 %v5916, 23
        %v5918 = vsub.s32 %v5917, 127
        %v5919 = vand.u32 2147483647, %v1642
        %v5920 = vand.u32 %v5919, 8388607
        %v5921 = vor.u32 %v5920, 8388608
        %v5922 = vsub.s32 0, %v5921
        %v5923 = vadd.s32 %v5918, 1
        %vm5924 = vcmp.gt.s32.totalorder %v5923, 0
        %v5925 = vsel %vm5924, %v5923, 0
        %v5926 = vshrl.u32 %v5925, 5
        %v5927 = vand.u32 %v5925, 31
        %v5928 = vsub.s32 32, %v5927
        %v5929 = vshrl.u32 683565275, %v5928
        %v5930 = vshll.u32 683565275, %v5927
        %v5931 = vshrl.u32 2475754826, %v5928
        %v5932 = vor.u32 %v5930, %v5931
        %v5933 = vshll.u32 2475754826, %v5927
        %v5934 = vshrl.u32 2131351028, %v5928
        %v5935 = vor.u32 %v5933, %v5934
        %v5936 = vshll.u32 2131351028, %v5927
        %v5937 = vshrl.u32 2102212464, %v5928
        %v5938 = vor.u32 %v5936, %v5937
        %v5939 = vshll.u32 2102212464, %v5927
        %v5940 = vshrl.u32 920167782, %v5928
        %v5941 = vor.u32 %v5939, %v5940
        %v5942 = vshll.u32 920167782, %v5927
        %v5943 = vshrl.u32 1326507024, %v5928
        %v5944 = vor.u32 %v5942, %v5943
        %vm5945 = vcmp.lt.s32.totalorder %v5926, 1
        %vm5946 = vcmp.lt.s32.totalorder %v5926, 2
        %vm5947 = vcmp.lt.s32.totalorder %v5926, 3
        %vm5948 = vcmp.lt.s32.totalorder %v5926, 4
        %v5949 = vsel %vm5945, %v5929, %v5932
        %v5950 = vsel %vm5948, %v5938, 2102212464
        %v5951 = vsel %vm5947, %v5935, %v5950
        %v5952 = vsel %vm5946, %v5949, %v5951
        %v5953 = vsel %vm5945, %v5932, %v5935
        %v5954 = vsel %vm5948, %v5941, 920167782
        %v5955 = vsel %vm5947, %v5938, %v5954
        %v5956 = vsel %vm5946, %v5953, %v5955
        %v5957 = vsel %vm5945, %v5935, %v5938
        %v5958 = vsel %vm5948, %v5944, 1326507024
        %v5959 = vsel %vm5947, %v5941, %v5958
        %v5960 = vsel %vm5946, %v5957, %v5959
        %v5961 = vshll.u32 %v5921, 8
        %v5962 = vmul.u32.u64.compose %v5961, %v5960
        %v5963 = vextract.low.u32 %v5962
        %v5964 = vextract.high.u32 %v5962
        %v5965 = vmul.u32.u64.compose %v5961, %v5956
        %v5966 = vextract.low.u32 %v5965
        %v5967 = vextract.high.u32 %v5965
        %v5968 = vmul.u32 %v5961, %v5952
        %v5969 = vadd.s32 %v5964, %v5966
        %vm5970 = vc.u32 %v5964, %v5966
        %v5971 = vadd.s32 %v5967, 1
        %v5972 = vsel %vm5970, %v5971, %v5967
        %v5973 = vadd.s32 %v5968, %v5972
        %v5974 = vadd.s32 %v5973, 536870912
        %v5975 = vshrl.u32 %v5974, 30
        %v5976 = vshll.u32 %v5975, 30
        %v5977 = vsub.s32 %v5973, %v5976
        %vm5978 = vcmp.lt.s32.totalorder %v5977, 0
        %v5979 = vsub.s32 0, %v5977
        %v5980 = vsel %vm5978, %v5979, %v5977
        %v5981 = vclz %v5980
        %v5982 = vsub.s32 %v5981, 2
        %vm5983 = vcmp.gt.s32.totalorder 0, %v5982
        %v5984 = vsel %vm5983, 0, %v5982
        %v5985 = vsub.s32 32, %v5984
        %v5986 = vshll.u32 %v5977, %v5984
        %v5987 = vshrl.u32 %v5969, %v5985
        %v5988 = vor.u32 %v5986, %v5987
        %v5989 = vsub.s32 4294967266, %v5984
        %v5990 = vadd.s32 %v5989, 127
        %v5991 = vshll.u32 %v5990, 23
        %v5992 = vor.u32 4788187, %v5991
        %v5993 = vand.u32 2147483647, %v5992
        %v5995 = vcvt.s32.f32 %v5988
        %v5996 = vmul.f32 %v5995, %v5993
        %v5997 = vxor.u32 %v5996, 2147483648
        %v5998 = vsel %vm5915, %v5997, %v5996
        %v5999 = vsub.s32 4, %v5975
        %v6000 = vsel %vm5915, %v5999, %v5975
        %v6001 = vsel %vm5914, %v1642, %v5998
        %v6002 = vsel %vm5914, 0, %v6000
        %v6003 = vcosq.f32.pop %v6001
        %v6004 = vsinq.f32.pop %v6001
        %vm6005 = vweird.f32 %v1642
        %v6006 = vand.u32 %v6002, 3
        %vm6007 = vcmp.lt.s32.totalorder %v6006, 2
        %vm6008 = vcmp.eq.s32.totalorder %v6006, 0
        %v6009 = vxor.u32 %v6004, 2147483648
        %v6010 = vsel %vm6008, %v6003, %v6009
        %vm6011 = vcmp.eq.s32.totalorder %v6006, 2
        %v6012 = vxor.u32 %v6003, 2147483648
        %v6013 = vsel %vm6011, %v6012, %v6004
        %v6014 = vsel %vm6007, %v6010, %v6013
        %v6015 = vsel %vm6005, nan, %v6014
        %v6016 = vand.u32 2147483647, %v1643
        %vm6017 = vcmp.le.f32.partialorder %v6016, 0.7853982
        %vm6018 = vcmp.lt.s32.totalorder %v1643, 0
        %v6019 = vand.u32 %v1643, 2139095040
        %v6020 = vshrl.u32 %v6019, 23
        %v6021 = vsub.s32 %v6020, 127
        %v6022 = vand.u32 2147483647, %v1643
        %v6023 = vand.u32 %v6022, 8388607
        %v6024 = vor.u32 %v6023, 8388608
        %v6025 = vsub.s32 0, %v6024
        %v6026 = vadd.s32 %v6021, 1
        %vm6027 = vcmp.gt.s32.totalorder %v6026, 0
        %v6028 = vsel %vm6027, %v6026, 0
        %v6029 = vshrl.u32 %v6028, 5
        %v6030 = vand.u32 %v6028, 31
        %v6031 = vsub.s32 32, %v6030
        %v6032 = vshrl.u32 683565275, %v6031
        %v6033 = vshll.u32 683565275, %v6030
        %v6034 = vshrl.u32 2475754826, %v6031
        %v6035 = vor.u32 %v6033, %v6034
        %v6036 = vshll.u32 2475754826, %v6030
        %v6037 = vshrl.u32 2131351028, %v6031
        %v6038 = vor.u32 %v6036, %v6037
        %v6039 = vshll.u32 2131351028, %v6030
        %v6040 = vshrl.u32 2102212464, %v6031
        %v6041 = vor.u32 %v6039, %v6040
        %v6042 = vshll.u32 2102212464, %v6030
        %v6043 = vshrl.u32 920167782, %v6031
        %v6044 = vor.u32 %v6042, %v6043
        %v6045 = vshll.u32 920167782, %v6030
        %v6046 = vshrl.u32 1326507024, %v6031
        %v6047 = vor.u32 %v6045, %v6046
        %vm6048 = vcmp.lt.s32.totalorder %v6029, 1
        %vm6049 = vcmp.lt.s32.totalorder %v6029, 2
        %vm6050 = vcmp.lt.s32.totalorder %v6029, 3
        %vm6051 = vcmp.lt.s32.totalorder %v6029, 4
        %v6052 = vsel %vm6048, %v6032, %v6035
        %v6053 = vsel %vm6051, %v6041, 2102212464
        %v6054 = vsel %vm6050, %v6038, %v6053
        %v6055 = vsel %vm6049, %v6052, %v6054
        %v6056 = vsel %vm6048, %v6035, %v6038
        %v6057 = vsel %vm6051, %v6044, 920167782
        %v6058 = vsel %vm6050, %v6041, %v6057
        %v6059 = vsel %vm6049, %v6056, %v6058
        %v6060 = vsel %vm6048, %v6038, %v6041
        %v6061 = vsel %vm6051, %v6047, 1326507024
        %v6062 = vsel %vm6050, %v6044, %v6061
        %v6063 = vsel %vm6049, %v6060, %v6062
        %v6064 = vshll.u32 %v6024, 8
        %v6065 = vmul.u32.u64.compose %v6064, %v6063
        %v6066 = vextract.low.u32 %v6065
        %v6067 = vextract.high.u32 %v6065
        %v6068 = vmul.u32.u64.compose %v6064, %v6059
        %v6069 = vextract.low.u32 %v6068
        %v6070 = vextract.high.u32 %v6068
        %v6071 = vmul.u32 %v6064, %v6055
        %v6072 = vadd.s32 %v6067, %v6069
        %vm6073 = vc.u32 %v6067, %v6069
        %v6074 = vadd.s32 %v6070, 1
        %v6075 = vsel %vm6073, %v6074, %v6070
        %v6076 = vadd.s32 %v6071, %v6075
        %v6077 = vadd.s32 %v6076, 536870912
        %v6078 = vshrl.u32 %v6077, 30
        %v6079 = vshll.u32 %v6078, 30
        %v6080 = vsub.s32 %v6076, %v6079
        %vm6081 = vcmp.lt.s32.totalorder %v6080, 0
        %v6082 = vsub.s32 0, %v6080
        %v6083 = vsel %vm6081, %v6082, %v6080
        %v6084 = vclz %v6083
        %v6085 = vsub.s32 %v6084, 2
        %vm6086 = vcmp.gt.s32.totalorder 0, %v6085
        %v6087 = vsel %vm6086, 0, %v6085
        %v6088 = vsub.s32 32, %v6087
        %v6089 = vshll.u32 %v6080, %v6087
        %v6090 = vshrl.u32 %v6072, %v6088
        %v6091 = vor.u32 %v6089, %v6090
        %v6092 = vsub.s32 4294967266, %v6087
        %v6093 = vadd.s32 %v6092, 127
        %v6094 = vshll.u32 %v6093, 23
        %v6095 = vor.u32 4788187, %v6094
        %v6096 = vand.u32 2147483647, %v6095
        %v6098 = vcvt.s32.f32 %v6091
        %v6099 = vmul.f32 %v6098, %v6096
        %v6100 = vxor.u32 %v6099, 2147483648
        %v6101 = vsel %vm6018, %v6100, %v6099
        %v6102 = vsub.s32 4, %v6078
        %v6103 = vsel %vm6018, %v6102, %v6078
        %v6104 = vsel %vm6017, %v1643, %v6101
        %v6105 = vsel %vm6017, 0, %v6103
        %v6106 = vcosq.f32.pop %v6104
        %v6107 = vsinq.f32.pop %v6104
        %vm6108 = vweird.f32 %v1643
        %v6109 = vand.u32 %v6105, 3
        %vm6110 = vcmp.lt.s32.totalorder %v6109, 2
        %vm6111 = vcmp.eq.s32.totalorder %v6109, 0
        %v6112 = vxor.u32 %v6107, 2147483648
        %v6113 = vsel %vm6111, %v6106, %v6112
        %vm6114 = vcmp.eq.s32.totalorder %v6109, 2
        %v6115 = vxor.u32 %v6106, 2147483648
        %v6116 = vsel %vm6114, %v6115, %v6107
        %v6117 = vsel %vm6110, %v6113, %v6116
        %v6118 = vsel %vm6108, nan, %v6117
        %v6119 = vand.u32 2147483647, %v1644
        %vm6120 = vcmp.le.f32.partialorder %v6119, 0.7853982
        %vm6121 = vcmp.lt.s32.totalorder %v1644, 0
        %v6122 = vand.u32 %v1644, 2139095040
        %v6123 = vshrl.u32 %v6122, 23
        %v6124 = vsub.s32 %v6123, 127
        %v6125 = vand.u32 2147483647, %v1644
        %v6126 = vand.u32 %v6125, 8388607
        %v6127 = vor.u32 %v6126, 8388608
        %v6128 = vsub.s32 0, %v6127
        %v6129 = vadd.s32 %v6124, 1
        %vm6130 = vcmp.gt.s32.totalorder %v6129, 0
        %v6131 = vsel %vm6130, %v6129, 0
        %v6132 = vshrl.u32 %v6131, 5
        %v6133 = vand.u32 %v6131, 31
        %v6134 = vsub.s32 32, %v6133
        %v6135 = vshrl.u32 683565275, %v6134
        %v6136 = vshll.u32 683565275, %v6133
        %v6137 = vshrl.u32 2475754826, %v6134
        %v6138 = vor.u32 %v6136, %v6137
        %v6139 = vshll.u32 2475754826, %v6133
        %v6140 = vshrl.u32 2131351028, %v6134
        %v6141 = vor.u32 %v6139, %v6140
        %v6142 = vshll.u32 2131351028, %v6133
        %v6143 = vshrl.u32 2102212464, %v6134
        %v6144 = vor.u32 %v6142, %v6143
        %v6145 = vshll.u32 2102212464, %v6133
        %v6146 = vshrl.u32 920167782, %v6134
        %v6147 = vor.u32 %v6145, %v6146
        %v6148 = vshll.u32 920167782, %v6133
        %v6149 = vshrl.u32 1326507024, %v6134
        %v6150 = vor.u32 %v6148, %v6149
        %vm6151 = vcmp.lt.s32.totalorder %v6132, 1
        %vm6152 = vcmp.lt.s32.totalorder %v6132, 2
        %vm6153 = vcmp.lt.s32.totalorder %v6132, 3
        %vm6154 = vcmp.lt.s32.totalorder %v6132, 4
        %v6155 = vsel %vm6151, %v6135, %v6138
        %v6156 = vsel %vm6154, %v6144, 2102212464
        %v6157 = vsel %vm6153, %v6141, %v6156
        %v6158 = vsel %vm6152, %v6155, %v6157
        %v6159 = vsel %vm6151, %v6138, %v6141
        %v6160 = vsel %vm6154, %v6147, 920167782
        %v6161 = vsel %vm6153, %v6144, %v6160
        %v6162 = vsel %vm6152, %v6159, %v6161
        %v6163 = vsel %vm6151, %v6141, %v6144
        %v6164 = vsel %vm6154, %v6150, 1326507024
        %v6165 = vsel %vm6153, %v6147, %v6164
        %v6166 = vsel %vm6152, %v6163, %v6165
        %v6167 = vshll.u32 %v6127, 8
        %v6168 = vmul.u32.u64.compose %v6167, %v6166
        %v6169 = vextract.low.u32 %v6168
        %v6170 = vextract.high.u32 %v6168
        %v6171 = vmul.u32.u64.compose %v6167, %v6162
        %v6172 = vextract.low.u32 %v6171
        %v6173 = vextract.high.u32 %v6171
        %v6174 = vmul.u32 %v6167, %v6158
        %v6175 = vadd.s32 %v6170, %v6172
        %vm6176 = vc.u32 %v6170, %v6172
        %v6177 = vadd.s32 %v6173, 1
        %v6178 = vsel %vm6176, %v6177, %v6173
        %v6179 = vadd.s32 %v6174, %v6178
        %v6180 = vadd.s32 %v6179, 536870912
        %v6181 = vshrl.u32 %v6180, 30
        %v6182 = vshll.u32 %v6181, 30
        %v6183 = vsub.s32 %v6179, %v6182
        %vm6184 = vcmp.lt.s32.totalorder %v6183, 0
        %v6185 = vsub.s32 0, %v6183
        %v6186 = vsel %vm6184, %v6185, %v6183
        %v6187 = vclz %v6186
        %v6188 = vsub.s32 %v6187, 2
        %vm6189 = vcmp.gt.s32.totalorder 0, %v6188
        %v6190 = vsel %vm6189, 0, %v6188
        %v6191 = vsub.s32 32, %v6190
        %v6192 = vshll.u32 %v6183, %v6190
        %v6193 = vshrl.u32 %v6175, %v6191
        %v6194 = vor.u32 %v6192, %v6193
        %v6195 = vsub.s32 4294967266, %v6190
        %v6196 = vadd.s32 %v6195, 127
        %v6197 = vshll.u32 %v6196, 23
        %v6198 = vor.u32 4788187, %v6197
        %v6199 = vand.u32 2147483647, %v6198
        %v6201 = vcvt.s32.f32 %v6194
        %v6202 = vmul.f32 %v6201, %v6199
        %v6203 = vxor.u32 %v6202, 2147483648
        %v6204 = vsel %vm6121, %v6203, %v6202
        %v6205 = vsub.s32 4, %v6181
        %v6206 = vsel %vm6121, %v6205, %v6181
        %v6207 = vsel %vm6120, %v1644, %v6204
        %v6208 = vsel %vm6120, 0, %v6206
        %v6209 = vcosq.f32.pop %v6207
        %v6210 = vsinq.f32.pop %v6207
        %vm6211 = vweird.f32 %v1644
        %v6212 = vand.u32 %v6208, 3
        %vm6213 = vcmp.lt.s32.totalorder %v6212, 2
        %vm6214 = vcmp.eq.s32.totalorder %v6212, 0
        %v6215 = vxor.u32 %v6210, 2147483648
        %v6216 = vsel %vm6214, %v6209, %v6215
        %vm6217 = vcmp.eq.s32.totalorder %v6212, 2
        %v6218 = vxor.u32 %v6209, 2147483648
        %v6219 = vsel %vm6217, %v6218, %v6210
        %v6220 = vsel %vm6213, %v6216, %v6219
        %v6221 = vsel %vm6211, nan, %v6220
        %v6222 = vand.u32 2147483647, %v1645
        %vm6223 = vcmp.le.f32.partialorder %v6222, 0.7853982
        %vm6224 = vcmp.lt.s32.totalorder %v1645, 0
        %v6225 = vand.u32 %v1645, 2139095040
        %v6226 = vshrl.u32 %v6225, 23
        %v6227 = vsub.s32 %v6226, 127
        %v6228 = vand.u32 2147483647, %v1645
        %v6229 = vand.u32 %v6228, 8388607
        %v6230 = vor.u32 %v6229, 8388608
        %v6231 = vsub.s32 0, %v6230
        %v6232 = vadd.s32 %v6227, 1
        %vm6233 = vcmp.gt.s32.totalorder %v6232, 0
        %v6234 = vsel %vm6233, %v6232, 0
        %v6235 = vshrl.u32 %v6234, 5
        %v6236 = vand.u32 %v6234, 31
        %v6237 = vsub.s32 32, %v6236
        %v6238 = vshrl.u32 683565275, %v6237
        %v6239 = vshll.u32 683565275, %v6236
        %v6240 = vshrl.u32 2475754826, %v6237
        %v6241 = vor.u32 %v6239, %v6240
        %v6242 = vshll.u32 2475754826, %v6236
        %v6243 = vshrl.u32 2131351028, %v6237
        %v6244 = vor.u32 %v6242, %v6243
        %v6245 = vshll.u32 2131351028, %v6236
        %v6246 = vshrl.u32 2102212464, %v6237
        %v6247 = vor.u32 %v6245, %v6246
        %v6248 = vshll.u32 2102212464, %v6236
        %v6249 = vshrl.u32 920167782, %v6237
        %v6250 = vor.u32 %v6248, %v6249
        %v6251 = vshll.u32 920167782, %v6236
        %v6252 = vshrl.u32 1326507024, %v6237
        %v6253 = vor.u32 %v6251, %v6252
        %vm6254 = vcmp.lt.s32.totalorder %v6235, 1
        %vm6255 = vcmp.lt.s32.totalorder %v6235, 2
        %vm6256 = vcmp.lt.s32.totalorder %v6235, 3
        %vm6257 = vcmp.lt.s32.totalorder %v6235, 4
        %v6258 = vsel %vm6254, %v6238, %v6241
        %v6259 = vsel %vm6257, %v6247, 2102212464
        %v6260 = vsel %vm6256, %v6244, %v6259
        %v6261 = vsel %vm6255, %v6258, %v6260
        %v6262 = vsel %vm6254, %v6241, %v6244
        %v6263 = vsel %vm6257, %v6250, 920167782
        %v6264 = vsel %vm6256, %v6247, %v6263
        %v6265 = vsel %vm6255, %v6262, %v6264
        %v6266 = vsel %vm6254, %v6244, %v6247
        %v6267 = vsel %vm6257, %v6253, 1326507024
        %v6268 = vsel %vm6256, %v6250, %v6267
        %v6269 = vsel %vm6255, %v6266, %v6268
        %v6270 = vshll.u32 %v6230, 8
        %v6271 = vmul.u32.u64.compose %v6270, %v6269
        %v6272 = vextract.low.u32 %v6271
        %v6273 = vextract.high.u32 %v6271
        %v6274 = vmul.u32.u64.compose %v6270, %v6265
        %v6275 = vextract.low.u32 %v6274
        %v6276 = vextract.high.u32 %v6274
        %v6277 = vmul.u32 %v6270, %v6261
        %v6278 = vadd.s32 %v6273, %v6275
        %vm6279 = vc.u32 %v6273, %v6275
        %v6280 = vadd.s32 %v6276, 1
        %v6281 = vsel %vm6279, %v6280, %v6276
        %v6282 = vadd.s32 %v6277, %v6281
        %v6283 = vadd.s32 %v6282, 536870912
        %v6284 = vshrl.u32 %v6283, 30
        %v6285 = vshll.u32 %v6284, 30
        %v6286 = vsub.s32 %v6282, %v6285
        %vm6287 = vcmp.lt.s32.totalorder %v6286, 0
        %v6288 = vsub.s32 0, %v6286
        %v6289 = vsel %vm6287, %v6288, %v6286
        %v6290 = vclz %v6289
        %v6291 = vsub.s32 %v6290, 2
        %vm6292 = vcmp.gt.s32.totalorder 0, %v6291
        %v6293 = vsel %vm6292, 0, %v6291
        %v6294 = vsub.s32 32, %v6293
        %v6295 = vshll.u32 %v6286, %v6293
        %v6296 = vshrl.u32 %v6278, %v6294
        %v6297 = vor.u32 %v6295, %v6296
        %v6298 = vsub.s32 4294967266, %v6293
        %v6299 = vadd.s32 %v6298, 127
        %v6300 = vshll.u32 %v6299, 23
        %v6301 = vor.u32 4788187, %v6300
        %v6302 = vand.u32 2147483647, %v6301
        %v6304 = vcvt.s32.f32 %v6297
        %v6305 = vmul.f32 %v6304, %v6302
        %v6306 = vxor.u32 %v6305, 2147483648
        %v6307 = vsel %vm6224, %v6306, %v6305
        %v6308 = vsub.s32 4, %v6284
        %v6309 = vsel %vm6224, %v6308, %v6284
        %v6310 = vsel %vm6223, %v1645, %v6307
        %v6311 = vsel %vm6223, 0, %v6309
        %v6312 = vcosq.f32.pop %v6310
        %v6313 = vsinq.f32.pop %v6310
        %vm6314 = vweird.f32 %v1645
        %v6315 = vand.u32 %v6311, 3
        %vm6316 = vcmp.lt.s32.totalorder %v6315, 2
        %vm6317 = vcmp.eq.s32.totalorder %v6315, 0
        %v6318 = vxor.u32 %v6313, 2147483648
        %v6319 = vsel %vm6317, %v6312, %v6318
        %vm6320 = vcmp.eq.s32.totalorder %v6315, 2
        %v6321 = vxor.u32 %v6312, 2147483648
        %v6322 = vsel %vm6320, %v6321, %v6313
        %v6323 = vsel %vm6316, %v6319, %v6322
        %v6324 = vsel %vm6314, nan, %v6323
        %v6325 = vand.u32 2147483647, %v1646
        %vm6326 = vcmp.le.f32.partialorder %v6325, 0.7853982
        %vm6327 = vcmp.lt.s32.totalorder %v1646, 0
        %v6328 = vand.u32 %v1646, 2139095040
        %v6329 = vshrl.u32 %v6328, 23
        %v6330 = vsub.s32 %v6329, 127
        %v6331 = vand.u32 2147483647, %v1646
        %v6332 = vand.u32 %v6331, 8388607
        %v6333 = vor.u32 %v6332, 8388608
        %v6334 = vsub.s32 0, %v6333
        %v6335 = vadd.s32 %v6330, 1
        %vm6336 = vcmp.gt.s32.totalorder %v6335, 0
        %v6337 = vsel %vm6336, %v6335, 0
        %v6338 = vshrl.u32 %v6337, 5
        %v6339 = vand.u32 %v6337, 31
        %v6340 = vsub.s32 32, %v6339
        %v6341 = vshrl.u32 683565275, %v6340
        %v6342 = vshll.u32 683565275, %v6339
        %v6343 = vshrl.u32 2475754826, %v6340
        %v6344 = vor.u32 %v6342, %v6343
        %v6345 = vshll.u32 2475754826, %v6339
        %v6346 = vshrl.u32 2131351028, %v6340
        %v6347 = vor.u32 %v6345, %v6346
        %v6348 = vshll.u32 2131351028, %v6339
        %v6349 = vshrl.u32 2102212464, %v6340
        %v6350 = vor.u32 %v6348, %v6349
        %v6351 = vshll.u32 2102212464, %v6339
        %v6352 = vshrl.u32 920167782, %v6340
        %v6353 = vor.u32 %v6351, %v6352
        %v6354 = vshll.u32 920167782, %v6339
        %v6355 = vshrl.u32 1326507024, %v6340
        %v6356 = vor.u32 %v6354, %v6355
        %vm6357 = vcmp.lt.s32.totalorder %v6338, 1
        %vm6358 = vcmp.lt.s32.totalorder %v6338, 2
        %vm6359 = vcmp.lt.s32.totalorder %v6338, 3
        %vm6360 = vcmp.lt.s32.totalorder %v6338, 4
        %v6361 = vsel %vm6357, %v6341, %v6344
        %v6362 = vsel %vm6360, %v6350, 2102212464
        %v6363 = vsel %vm6359, %v6347, %v6362
        %v6364 = vsel %vm6358, %v6361, %v6363
        %v6365 = vsel %vm6357, %v6344, %v6347
        %v6366 = vsel %vm6360, %v6353, 920167782
        %v6367 = vsel %vm6359, %v6350, %v6366
        %v6368 = vsel %vm6358, %v6365, %v6367
        %v6369 = vsel %vm6357, %v6347, %v6350
        %v6370 = vsel %vm6360, %v6356, 1326507024
        %v6371 = vsel %vm6359, %v6353, %v6370
        %v6372 = vsel %vm6358, %v6369, %v6371
        %v6373 = vshll.u32 %v6333, 8
        %v6374 = vmul.u32.u64.compose %v6373, %v6372
        %v6375 = vextract.low.u32 %v6374
        %v6376 = vextract.high.u32 %v6374
        %v6377 = vmul.u32.u64.compose %v6373, %v6368
        %v6378 = vextract.low.u32 %v6377
        %v6379 = vextract.high.u32 %v6377
        %v6380 = vmul.u32 %v6373, %v6364
        %v6381 = vadd.s32 %v6376, %v6378
        %vm6382 = vc.u32 %v6376, %v6378
        %v6383 = vadd.s32 %v6379, 1
        %v6384 = vsel %vm6382, %v6383, %v6379
        %v6385 = vadd.s32 %v6380, %v6384
        %v6386 = vadd.s32 %v6385, 536870912
        %v6387 = vshrl.u32 %v6386, 30
        %v6388 = vshll.u32 %v6387, 30
        %v6389 = vsub.s32 %v6385, %v6388
        %vm6390 = vcmp.lt.s32.totalorder %v6389, 0
        %v6391 = vsub.s32 0, %v6389
        %v6392 = vsel %vm6390, %v6391, %v6389
        %v6393 = vclz %v6392
        %v6394 = vsub.s32 %v6393, 2
        %vm6395 = vcmp.gt.s32.totalorder 0, %v6394
        %v6396 = vsel %vm6395, 0, %v6394
        %v6397 = vsub.s32 32, %v6396
        %v6398 = vshll.u32 %v6389, %v6396
        %v6399 = vshrl.u32 %v6381, %v6397
        %v6400 = vor.u32 %v6398, %v6399
        %v6401 = vsub.s32 4294967266, %v6396
        %v6402 = vadd.s32 %v6401, 127
        %v6403 = vshll.u32 %v6402, 23
        %v6404 = vor.u32 4788187, %v6403
        %v6405 = vand.u32 2147483647, %v6404
        %v6407 = vcvt.s32.f32 %v6400
        %v6408 = vmul.f32 %v6407, %v6405
        %v6409 = vxor.u32 %v6408, 2147483648
        %v6410 = vsel %vm6327, %v6409, %v6408
        %v6411 = vsub.s32 4, %v6387
        %v6412 = vsel %vm6327, %v6411, %v6387
        %v6413 = vsel %vm6326, %v1646, %v6410
        %v6414 = vsel %vm6326, 0, %v6412
        %v6415 = vcosq.f32.pop %v6413
        %v6416 = vsinq.f32.pop %v6413
        %vm6417 = vweird.f32 %v1646
        %v6418 = vand.u32 %v6414, 3
        %vm6419 = vcmp.lt.s32.totalorder %v6418, 2
        %vm6420 = vcmp.eq.s32.totalorder %v6418, 0
        %v6421 = vxor.u32 %v6416, 2147483648
        %v6422 = vsel %vm6420, %v6415, %v6421
        %vm6423 = vcmp.eq.s32.totalorder %v6418, 2
        %v6424 = vxor.u32 %v6415, 2147483648
        %v6425 = vsel %vm6423, %v6424, %v6416
        %v6426 = vsel %vm6419, %v6422, %v6425
        %v6427 = vsel %vm6417, nan, %v6426
        %v6428 = vand.u32 2147483647, %v1647
        %vm6429 = vcmp.le.f32.partialorder %v6428, 0.7853982
        %vm6430 = vcmp.lt.s32.totalorder %v1647, 0
        %v6431 = vand.u32 %v1647, 2139095040
        %v6432 = vshrl.u32 %v6431, 23
        %v6433 = vsub.s32 %v6432, 127
        %v6434 = vand.u32 2147483647, %v1647
        %v6435 = vand.u32 %v6434, 8388607
        %v6436 = vor.u32 %v6435, 8388608
        %v6437 = vsub.s32 0, %v6436
        %v6438 = vadd.s32 %v6433, 1
        %vm6439 = vcmp.gt.s32.totalorder %v6438, 0
        %v6440 = vsel %vm6439, %v6438, 0
        %v6441 = vshrl.u32 %v6440, 5
        %v6442 = vand.u32 %v6440, 31
        %v6443 = vsub.s32 32, %v6442
        %v6444 = vshrl.u32 683565275, %v6443
        %v6445 = vshll.u32 683565275, %v6442
        %v6446 = vshrl.u32 2475754826, %v6443
        %v6447 = vor.u32 %v6445, %v6446
        %v6448 = vshll.u32 2475754826, %v6442
        %v6449 = vshrl.u32 2131351028, %v6443
        %v6450 = vor.u32 %v6448, %v6449
        %v6451 = vshll.u32 2131351028, %v6442
        %v6452 = vshrl.u32 2102212464, %v6443
        %v6453 = vor.u32 %v6451, %v6452
        %v6454 = vshll.u32 2102212464, %v6442
        %v6455 = vshrl.u32 920167782, %v6443
        %v6456 = vor.u32 %v6454, %v6455
        %v6457 = vshll.u32 920167782, %v6442
        %v6458 = vshrl.u32 1326507024, %v6443
        %v6459 = vor.u32 %v6457, %v6458
        %vm6460 = vcmp.lt.s32.totalorder %v6441, 1
        %vm6461 = vcmp.lt.s32.totalorder %v6441, 2
        %vm6462 = vcmp.lt.s32.totalorder %v6441, 3
        %vm6463 = vcmp.lt.s32.totalorder %v6441, 4
        %v6464 = vsel %vm6460, %v6444, %v6447
        %v6465 = vsel %vm6463, %v6453, 2102212464
        %v6466 = vsel %vm6462, %v6450, %v6465
        %v6467 = vsel %vm6461, %v6464, %v6466
        %v6468 = vsel %vm6460, %v6447, %v6450
        %v6469 = vsel %vm6463, %v6456, 920167782
        %v6470 = vsel %vm6462, %v6453, %v6469
        %v6471 = vsel %vm6461, %v6468, %v6470
        %v6472 = vsel %vm6460, %v6450, %v6453
        %v6473 = vsel %vm6463, %v6459, 1326507024
        %v6474 = vsel %vm6462, %v6456, %v6473
        %v6475 = vsel %vm6461, %v6472, %v6474
        %v6476 = vshll.u32 %v6436, 8
        %v6477 = vmul.u32.u64.compose %v6476, %v6475
        %v6478 = vextract.low.u32 %v6477
        %v6479 = vextract.high.u32 %v6477
        %v6480 = vmul.u32.u64.compose %v6476, %v6471
        %v6481 = vextract.low.u32 %v6480
        %v6482 = vextract.high.u32 %v6480
        %v6483 = vmul.u32 %v6476, %v6467
        %v6484 = vadd.s32 %v6479, %v6481
        %vm6485 = vc.u32 %v6479, %v6481
        %v6486 = vadd.s32 %v6482, 1
        %v6487 = vsel %vm6485, %v6486, %v6482
        %v6488 = vadd.s32 %v6483, %v6487
        %v6489 = vadd.s32 %v6488, 536870912
        %v6490 = vshrl.u32 %v6489, 30
        %v6491 = vshll.u32 %v6490, 30
        %v6492 = vsub.s32 %v6488, %v6491
        %vm6493 = vcmp.lt.s32.totalorder %v6492, 0
        %v6494 = vsub.s32 0, %v6492
        %v6495 = vsel %vm6493, %v6494, %v6492
        %v6496 = vclz %v6495
        %v6497 = vsub.s32 %v6496, 2
        %vm6498 = vcmp.gt.s32.totalorder 0, %v6497
        %v6499 = vsel %vm6498, 0, %v6497
        %v6500 = vsub.s32 32, %v6499
        %v6501 = vshll.u32 %v6492, %v6499
        %v6502 = vshrl.u32 %v6484, %v6500
        %v6503 = vor.u32 %v6501, %v6502
        %v6504 = vsub.s32 4294967266, %v6499
        %v6505 = vadd.s32 %v6504, 127
        %v6506 = vshll.u32 %v6505, 23
        %v6507 = vor.u32 4788187, %v6506
        %v6508 = vand.u32 2147483647, %v6507
        %v6510 = vcvt.s32.f32 %v6503
        %v6511 = vmul.f32 %v6510, %v6508
        %v6512 = vxor.u32 %v6511, 2147483648
        %v6513 = vsel %vm6430, %v6512, %v6511
        %v6514 = vsub.s32 4, %v6490
        %v6515 = vsel %vm6430, %v6514, %v6490
        %v6516 = vsel %vm6429, %v1647, %v6513
        %v6517 = vsel %vm6429, 0, %v6515
        %v6518 = vcosq.f32.pop %v6516
        %v6519 = vsinq.f32.pop %v6516
        %vm6520 = vweird.f32 %v1647
        %v6521 = vand.u32 %v6517, 3
        %vm6522 = vcmp.lt.s32.totalorder %v6521, 2
        %vm6523 = vcmp.eq.s32.totalorder %v6521, 0
        %v6524 = vxor.u32 %v6519, 2147483648
        %v6525 = vsel %vm6523, %v6518, %v6524
        %vm6526 = vcmp.eq.s32.totalorder %v6521, 2
        %v6527 = vxor.u32 %v6518, 2147483648
        %v6528 = vsel %vm6526, %v6527, %v6519
        %v6529 = vsel %vm6522, %v6525, %v6528
        %v6530 = vsel %vm6520, nan, %v6529
        %v6531 = vand.u32 2147483647, %v1648
        %vm6532 = vcmp.le.f32.partialorder %v6531, 0.7853982
        %vm6533 = vcmp.lt.s32.totalorder %v1648, 0
        %v6534 = vand.u32 %v1648, 2139095040
        %v6535 = vshrl.u32 %v6534, 23
        %v6536 = vsub.s32 %v6535, 127
        %v6537 = vand.u32 2147483647, %v1648
        %v6538 = vand.u32 %v6537, 8388607
        %v6539 = vor.u32 %v6538, 8388608
        %v6540 = vsub.s32 0, %v6539
        %v6541 = vadd.s32 %v6536, 1
        %vm6542 = vcmp.gt.s32.totalorder %v6541, 0
        %v6543 = vsel %vm6542, %v6541, 0
        %v6544 = vshrl.u32 %v6543, 5
        %v6545 = vand.u32 %v6543, 31
        %v6546 = vsub.s32 32, %v6545
        %v6547 = vshrl.u32 683565275, %v6546
        %v6548 = vshll.u32 683565275, %v6545
        %v6549 = vshrl.u32 2475754826, %v6546
        %v6550 = vor.u32 %v6548, %v6549
        %v6551 = vshll.u32 2475754826, %v6545
        %v6552 = vshrl.u32 2131351028, %v6546
        %v6553 = vor.u32 %v6551, %v6552
        %v6554 = vshll.u32 2131351028, %v6545
        %v6555 = vshrl.u32 2102212464, %v6546
        %v6556 = vor.u32 %v6554, %v6555
        %v6557 = vshll.u32 2102212464, %v6545
        %v6558 = vshrl.u32 920167782, %v6546
        %v6559 = vor.u32 %v6557, %v6558
        %v6560 = vshll.u32 920167782, %v6545
        %v6561 = vshrl.u32 1326507024, %v6546
        %v6562 = vor.u32 %v6560, %v6561
        %vm6563 = vcmp.lt.s32.totalorder %v6544, 1
        %vm6564 = vcmp.lt.s32.totalorder %v6544, 2
        %vm6565 = vcmp.lt.s32.totalorder %v6544, 3
        %vm6566 = vcmp.lt.s32.totalorder %v6544, 4
        %v6567 = vsel %vm6563, %v6547, %v6550
        %v6568 = vsel %vm6566, %v6556, 2102212464
        %v6569 = vsel %vm6565, %v6553, %v6568
        %v6570 = vsel %vm6564, %v6567, %v6569
        %v6571 = vsel %vm6563, %v6550, %v6553
        %v6572 = vsel %vm6566, %v6559, 920167782
        %v6573 = vsel %vm6565, %v6556, %v6572
        %v6574 = vsel %vm6564, %v6571, %v6573
        %v6575 = vsel %vm6563, %v6553, %v6556
        %v6576 = vsel %vm6566, %v6562, 1326507024
        %v6577 = vsel %vm6565, %v6559, %v6576
        %v6578 = vsel %vm6564, %v6575, %v6577
        %v6579 = vshll.u32 %v6539, 8
        %v6580 = vmul.u32.u64.compose %v6579, %v6578
        %v6581 = vextract.low.u32 %v6580
        %v6582 = vextract.high.u32 %v6580
        %v6583 = vmul.u32.u64.compose %v6579, %v6574
        %v6584 = vextract.low.u32 %v6583
        %v6585 = vextract.high.u32 %v6583
        %v6586 = vmul.u32 %v6579, %v6570
        %v6587 = vadd.s32 %v6582, %v6584
        %vm6588 = vc.u32 %v6582, %v6584
        %v6589 = vadd.s32 %v6585, 1
        %v6590 = vsel %vm6588, %v6589, %v6585
        %v6591 = vadd.s32 %v6586, %v6590
        %v6592 = vadd.s32 %v6591, 536870912
        %v6593 = vshrl.u32 %v6592, 30
        %v6594 = vshll.u32 %v6593, 30
        %v6595 = vsub.s32 %v6591, %v6594
        %vm6596 = vcmp.lt.s32.totalorder %v6595, 0
        %v6597 = vsub.s32 0, %v6595
        %v6598 = vsel %vm6596, %v6597, %v6595
        %v6599 = vclz %v6598
        %v6600 = vsub.s32 %v6599, 2
        %vm6601 = vcmp.gt.s32.totalorder 0, %v6600
        %v6602 = vsel %vm6601, 0, %v6600
        %v6603 = vsub.s32 32, %v6602
        %v6604 = vshll.u32 %v6595, %v6602
        %v6605 = vshrl.u32 %v6587, %v6603
        %v6606 = vor.u32 %v6604, %v6605
        %v6607 = vsub.s32 4294967266, %v6602
        %v6608 = vadd.s32 %v6607, 127
        %v6609 = vshll.u32 %v6608, 23
        %v6610 = vor.u32 4788187, %v6609
        %v6611 = vand.u32 2147483647, %v6610
        %v6613 = vcvt.s32.f32 %v6606
        %v6614 = vmul.f32 %v6613, %v6611
        %v6615 = vxor.u32 %v6614, 2147483648
        %v6616 = vsel %vm6533, %v6615, %v6614
        %v6617 = vsub.s32 4, %v6593
        %v6618 = vsel %vm6533, %v6617, %v6593
        %v6619 = vsel %vm6532, %v1648, %v6616
        %v6620 = vsel %vm6532, 0, %v6618
        %v6621 = vcosq.f32.pop %v6619
        %v6622 = vsinq.f32.pop %v6619
        %vm6623 = vweird.f32 %v1648
        %v6624 = vand.u32 %v6620, 3
        %vm6625 = vcmp.lt.s32.totalorder %v6624, 2
        %vm6626 = vcmp.eq.s32.totalorder %v6624, 0
        %v6627 = vxor.u32 %v6622, 2147483648
        %v6628 = vsel %vm6626, %v6621, %v6627
        %vm6629 = vcmp.eq.s32.totalorder %v6624, 2
        %v6630 = vxor.u32 %v6621, 2147483648
        %v6631 = vsel %vm6629, %v6630, %v6622
        %v6632 = vsel %vm6625, %v6628, %v6631
        %v6633 = vsel %vm6623, nan, %v6632
        %v6634 = vand.u32 2147483647, %v1649
        %vm6635 = vcmp.le.f32.partialorder %v6634, 0.7853982
        %vm6636 = vcmp.lt.s32.totalorder %v1649, 0
        %v6637 = vand.u32 %v1649, 2139095040
        %v6638 = vshrl.u32 %v6637, 23
        %v6639 = vsub.s32 %v6638, 127
        %v6640 = vand.u32 2147483647, %v1649
        %v6641 = vand.u32 %v6640, 8388607
        %v6642 = vor.u32 %v6641, 8388608
        %v6643 = vsub.s32 0, %v6642
        %v6644 = vadd.s32 %v6639, 1
        %vm6645 = vcmp.gt.s32.totalorder %v6644, 0
        %v6646 = vsel %vm6645, %v6644, 0
        %v6647 = vshrl.u32 %v6646, 5
        %v6648 = vand.u32 %v6646, 31
        %v6649 = vsub.s32 32, %v6648
        %v6650 = vshrl.u32 683565275, %v6649
        %v6651 = vshll.u32 683565275, %v6648
        %v6652 = vshrl.u32 2475754826, %v6649
        %v6653 = vor.u32 %v6651, %v6652
        %v6654 = vshll.u32 2475754826, %v6648
        %v6655 = vshrl.u32 2131351028, %v6649
        %v6656 = vor.u32 %v6654, %v6655
        %v6657 = vshll.u32 2131351028, %v6648
        %v6658 = vshrl.u32 2102212464, %v6649
        %v6659 = vor.u32 %v6657, %v6658
        %v6660 = vshll.u32 2102212464, %v6648
        %v6661 = vshrl.u32 920167782, %v6649
        %v6662 = vor.u32 %v6660, %v6661
        %v6663 = vshll.u32 920167782, %v6648
        %v6664 = vshrl.u32 1326507024, %v6649
        %v6665 = vor.u32 %v6663, %v6664
        %vm6666 = vcmp.lt.s32.totalorder %v6647, 1
        %vm6667 = vcmp.lt.s32.totalorder %v6647, 2
        %vm6668 = vcmp.lt.s32.totalorder %v6647, 3
        %vm6669 = vcmp.lt.s32.totalorder %v6647, 4
        %v6670 = vsel %vm6666, %v6650, %v6653
        %v6671 = vsel %vm6669, %v6659, 2102212464
        %v6672 = vsel %vm6668, %v6656, %v6671
        %v6673 = vsel %vm6667, %v6670, %v6672
        %v6674 = vsel %vm6666, %v6653, %v6656
        %v6675 = vsel %vm6669, %v6662, 920167782
        %v6676 = vsel %vm6668, %v6659, %v6675
        %v6677 = vsel %vm6667, %v6674, %v6676
        %v6678 = vsel %vm6666, %v6656, %v6659
        %v6679 = vsel %vm6669, %v6665, 1326507024
        %v6680 = vsel %vm6668, %v6662, %v6679
        %v6681 = vsel %vm6667, %v6678, %v6680
        %v6682 = vshll.u32 %v6642, 8
        %v6683 = vmul.u32.u64.compose %v6682, %v6681
        %v6684 = vextract.low.u32 %v6683
        %v6685 = vextract.high.u32 %v6683
        %v6686 = vmul.u32.u64.compose %v6682, %v6677
        %v6687 = vextract.low.u32 %v6686
        %v6688 = vextract.high.u32 %v6686
        %v6689 = vmul.u32 %v6682, %v6673
        %v6690 = vadd.s32 %v6685, %v6687
        %vm6691 = vc.u32 %v6685, %v6687
        %v6692 = vadd.s32 %v6688, 1
        %v6693 = vsel %vm6691, %v6692, %v6688
        %v6694 = vadd.s32 %v6689, %v6693
        %v6695 = vadd.s32 %v6694, 536870912
        %v6696 = vshrl.u32 %v6695, 30
        %v6697 = vshll.u32 %v6696, 30
        %v6698 = vsub.s32 %v6694, %v6697
        %vm6699 = vcmp.lt.s32.totalorder %v6698, 0
        %v6700 = vsub.s32 0, %v6698
        %v6701 = vsel %vm6699, %v6700, %v6698
        %v6702 = vclz %v6701
        %v6703 = vsub.s32 %v6702, 2
        %vm6704 = vcmp.gt.s32.totalorder 0, %v6703
        %v6705 = vsel %vm6704, 0, %v6703
        %v6706 = vsub.s32 32, %v6705
        %v6707 = vshll.u32 %v6698, %v6705
        %v6708 = vshrl.u32 %v6690, %v6706
        %v6709 = vor.u32 %v6707, %v6708
        %v6710 = vsub.s32 4294967266, %v6705
        %v6711 = vadd.s32 %v6710, 127
        %v6712 = vshll.u32 %v6711, 23
        %v6713 = vor.u32 4788187, %v6712
        %v6714 = vand.u32 2147483647, %v6713
        %v6716 = vcvt.s32.f32 %v6709
        %v6717 = vmul.f32 %v6716, %v6714
        %v6718 = vxor.u32 %v6717, 2147483648
        %v6719 = vsel %vm6636, %v6718, %v6717
        %v6720 = vsub.s32 4, %v6696
        %v6721 = vsel %vm6636, %v6720, %v6696
        %v6722 = vsel %vm6635, %v1649, %v6719
        %v6723 = vsel %vm6635, 0, %v6721
        %v6724 = vcosq.f32.pop %v6722
        %v6725 = vsinq.f32.pop %v6722
        %vm6726 = vweird.f32 %v1649
        %v6727 = vand.u32 %v6723, 3
        %vm6728 = vcmp.lt.s32.totalorder %v6727, 2
        %vm6729 = vcmp.eq.s32.totalorder %v6727, 0
        %v6730 = vxor.u32 %v6725, 2147483648
        %v6731 = vsel %vm6729, %v6724, %v6730
        %vm6732 = vcmp.eq.s32.totalorder %v6727, 2
        %v6733 = vxor.u32 %v6724, 2147483648
        %v6734 = vsel %vm6732, %v6733, %v6725
        %v6735 = vsel %vm6728, %v6731, %v6734
        %v6736 = vsel %vm6726, nan, %v6735
        %v6737 = vand.u32 2147483647, %v1650
        %vm6738 = vcmp.le.f32.partialorder %v6737, 0.7853982
        %vm6739 = vcmp.lt.s32.totalorder %v1650, 0
        %v6740 = vand.u32 %v1650, 2139095040
        %v6741 = vshrl.u32 %v6740, 23
        %v6742 = vsub.s32 %v6741, 127
        %v6743 = vand.u32 2147483647, %v1650
        %v6744 = vand.u32 %v6743, 8388607
        %v6745 = vor.u32 %v6744, 8388608
        %v6746 = vsub.s32 0, %v6745
        %v6747 = vadd.s32 %v6742, 1
        %vm6748 = vcmp.gt.s32.totalorder %v6747, 0
        %v6749 = vsel %vm6748, %v6747, 0
        %v6750 = vshrl.u32 %v6749, 5
        %v6751 = vand.u32 %v6749, 31
        %v6752 = vsub.s32 32, %v6751
        %v6753 = vshrl.u32 683565275, %v6752
        %v6754 = vshll.u32 683565275, %v6751
        %v6755 = vshrl.u32 2475754826, %v6752
        %v6756 = vor.u32 %v6754, %v6755
        %v6757 = vshll.u32 2475754826, %v6751
        %v6758 = vshrl.u32 2131351028, %v6752
        %v6759 = vor.u32 %v6757, %v6758
        %v6760 = vshll.u32 2131351028, %v6751
        %v6761 = vshrl.u32 2102212464, %v6752
        %v6762 = vor.u32 %v6760, %v6761
        %v6763 = vshll.u32 2102212464, %v6751
        %v6764 = vshrl.u32 920167782, %v6752
        %v6765 = vor.u32 %v6763, %v6764
        %v6766 = vshll.u32 920167782, %v6751
        %v6767 = vshrl.u32 1326507024, %v6752
        %v6768 = vor.u32 %v6766, %v6767
        %vm6769 = vcmp.lt.s32.totalorder %v6750, 1
        %vm6770 = vcmp.lt.s32.totalorder %v6750, 2
        %vm6771 = vcmp.lt.s32.totalorder %v6750, 3
        %vm6772 = vcmp.lt.s32.totalorder %v6750, 4
        %v6773 = vsel %vm6769, %v6753, %v6756
        %v6774 = vsel %vm6772, %v6762, 2102212464
        %v6775 = vsel %vm6771, %v6759, %v6774
        %v6776 = vsel %vm6770, %v6773, %v6775
        %v6777 = vsel %vm6769, %v6756, %v6759
        %v6778 = vsel %vm6772, %v6765, 920167782
        %v6779 = vsel %vm6771, %v6762, %v6778
        %v6780 = vsel %vm6770, %v6777, %v6779
        %v6781 = vsel %vm6769, %v6759, %v6762
        %v6782 = vsel %vm6772, %v6768, 1326507024
        %v6783 = vsel %vm6771, %v6765, %v6782
        %v6784 = vsel %vm6770, %v6781, %v6783
        %v6785 = vshll.u32 %v6745, 8
        %v6786 = vmul.u32.u64.compose %v6785, %v6784
        %v6787 = vextract.low.u32 %v6786
        %v6788 = vextract.high.u32 %v6786
        %v6789 = vmul.u32.u64.compose %v6785, %v6780
        %v6790 = vextract.low.u32 %v6789
        %v6791 = vextract.high.u32 %v6789
        %v6792 = vmul.u32 %v6785, %v6776
        %v6793 = vadd.s32 %v6788, %v6790
        %vm6794 = vc.u32 %v6788, %v6790
        %v6795 = vadd.s32 %v6791, 1
        %v6796 = vsel %vm6794, %v6795, %v6791
        %v6797 = vadd.s32 %v6792, %v6796
        %v6798 = vadd.s32 %v6797, 536870912
        %v6799 = vshrl.u32 %v6798, 30
        %v6800 = vshll.u32 %v6799, 30
        %v6801 = vsub.s32 %v6797, %v6800
        %vm6802 = vcmp.lt.s32.totalorder %v6801, 0
        %v6803 = vsub.s32 0, %v6801
        %v6804 = vsel %vm6802, %v6803, %v6801
        %v6805 = vclz %v6804
        %v6806 = vsub.s32 %v6805, 2
        %vm6807 = vcmp.gt.s32.totalorder 0, %v6806
        %v6808 = vsel %vm6807, 0, %v6806
        %v6809 = vsub.s32 32, %v6808
        %v6810 = vshll.u32 %v6801, %v6808
        %v6811 = vshrl.u32 %v6793, %v6809
        %v6812 = vor.u32 %v6810, %v6811
        %v6813 = vsub.s32 4294967266, %v6808
        %v6814 = vadd.s32 %v6813, 127
        %v6815 = vshll.u32 %v6814, 23
        %v6816 = vor.u32 4788187, %v6815
        %v6817 = vand.u32 2147483647, %v6816
        %v6819 = vcvt.s32.f32 %v6812
        %v6820 = vmul.f32 %v6819, %v6817
        %v6821 = vxor.u32 %v6820, 2147483648
        %v6822 = vsel %vm6739, %v6821, %v6820
        %v6823 = vsub.s32 4, %v6799
        %v6824 = vsel %vm6739, %v6823, %v6799
        %v6825 = vsel %vm6738, %v1650, %v6822
        %v6826 = vsel %vm6738, 0, %v6824
        %v6827 = vcosq.f32.pop %v6825
        %v6828 = vsinq.f32.pop %v6825
        %vm6829 = vweird.f32 %v1650
        %v6830 = vand.u32 %v6826, 3
        %vm6831 = vcmp.lt.s32.totalorder %v6830, 2
        %vm6832 = vcmp.eq.s32.totalorder %v6830, 0
        %v6833 = vxor.u32 %v6828, 2147483648
        %v6834 = vsel %vm6832, %v6827, %v6833
        %vm6835 = vcmp.eq.s32.totalorder %v6830, 2
        %v6836 = vxor.u32 %v6827, 2147483648
        %v6837 = vsel %vm6835, %v6836, %v6828
        %v6838 = vsel %vm6831, %v6834, %v6837
        %v6839 = vsel %vm6829, nan, %v6838
        %v6840 = vand.u32 2147483647, %v1651
        %vm6841 = vcmp.le.f32.partialorder %v6840, 0.7853982
        %vm6842 = vcmp.lt.s32.totalorder %v1651, 0
        %v6843 = vand.u32 %v1651, 2139095040
        %v6844 = vshrl.u32 %v6843, 23
        %v6845 = vsub.s32 %v6844, 127
        %v6846 = vand.u32 2147483647, %v1651
        %v6847 = vand.u32 %v6846, 8388607
        %v6848 = vor.u32 %v6847, 8388608
        %v6849 = vsub.s32 0, %v6848
        %v6850 = vadd.s32 %v6845, 1
        %vm6851 = vcmp.gt.s32.totalorder %v6850, 0
        %v6852 = vsel %vm6851, %v6850, 0
        %v6853 = vshrl.u32 %v6852, 5
        %v6854 = vand.u32 %v6852, 31
        %v6855 = vsub.s32 32, %v6854
        %v6856 = vshrl.u32 683565275, %v6855
        %v6857 = vshll.u32 683565275, %v6854
        %v6858 = vshrl.u32 2475754826, %v6855
        %v6859 = vor.u32 %v6857, %v6858
        %v6860 = vshll.u32 2475754826, %v6854
        %v6861 = vshrl.u32 2131351028, %v6855
        %v6862 = vor.u32 %v6860, %v6861
        %v6863 = vshll.u32 2131351028, %v6854
        %v6864 = vshrl.u32 2102212464, %v6855
        %v6865 = vor.u32 %v6863, %v6864
        %v6866 = vshll.u32 2102212464, %v6854
        %v6867 = vshrl.u32 920167782, %v6855
        %v6868 = vor.u32 %v6866, %v6867
        %v6869 = vshll.u32 920167782, %v6854
        %v6870 = vshrl.u32 1326507024, %v6855
        %v6871 = vor.u32 %v6869, %v6870
        %vm6872 = vcmp.lt.s32.totalorder %v6853, 1
        %vm6873 = vcmp.lt.s32.totalorder %v6853, 2
        %vm6874 = vcmp.lt.s32.totalorder %v6853, 3
        %vm6875 = vcmp.lt.s32.totalorder %v6853, 4
        %v6876 = vsel %vm6872, %v6856, %v6859
        %v6877 = vsel %vm6875, %v6865, 2102212464
        %v6878 = vsel %vm6874, %v6862, %v6877
        %v6879 = vsel %vm6873, %v6876, %v6878
        %v6880 = vsel %vm6872, %v6859, %v6862
        %v6881 = vsel %vm6875, %v6868, 920167782
        %v6882 = vsel %vm6874, %v6865, %v6881
        %v6883 = vsel %vm6873, %v6880, %v6882
        %v6884 = vsel %vm6872, %v6862, %v6865
        %v6885 = vsel %vm6875, %v6871, 1326507024
        %v6886 = vsel %vm6874, %v6868, %v6885
        %v6887 = vsel %vm6873, %v6884, %v6886
        %v6888 = vshll.u32 %v6848, 8
        %v6889 = vmul.u32.u64.compose %v6888, %v6887
        %v6890 = vextract.low.u32 %v6889
        %v6891 = vextract.high.u32 %v6889
        %v6892 = vmul.u32.u64.compose %v6888, %v6883
        %v6893 = vextract.low.u32 %v6892
        %v6894 = vextract.high.u32 %v6892
        %v6895 = vmul.u32 %v6888, %v6879
        %v6896 = vadd.s32 %v6891, %v6893
        %vm6897 = vc.u32 %v6891, %v6893
        %v6898 = vadd.s32 %v6894, 1
        %v6899 = vsel %vm6897, %v6898, %v6894
        %v6900 = vadd.s32 %v6895, %v6899
        %v6901 = vadd.s32 %v6900, 536870912
        %v6902 = vshrl.u32 %v6901, 30
        %v6903 = vshll.u32 %v6902, 30
        %v6904 = vsub.s32 %v6900, %v6903
        %vm6905 = vcmp.lt.s32.totalorder %v6904, 0
        %v6906 = vsub.s32 0, %v6904
        %v6907 = vsel %vm6905, %v6906, %v6904
        %v6908 = vclz %v6907
        %v6909 = vsub.s32 %v6908, 2
        %vm6910 = vcmp.gt.s32.totalorder 0, %v6909
        %v6911 = vsel %vm6910, 0, %v6909
        %v6912 = vsub.s32 32, %v6911
        %v6913 = vshll.u32 %v6904, %v6911
        %v6914 = vshrl.u32 %v6896, %v6912
        %v6915 = vor.u32 %v6913, %v6914
        %v6916 = vsub.s32 4294967266, %v6911
        %v6917 = vadd.s32 %v6916, 127
        %v6918 = vshll.u32 %v6917, 23
        %v6919 = vor.u32 4788187, %v6918
        %v6920 = vand.u32 2147483647, %v6919
        %v6922 = vcvt.s32.f32 %v6915
        %v6923 = vmul.f32 %v6922, %v6920
        %v6924 = vxor.u32 %v6923, 2147483648
        %v6925 = vsel %vm6842, %v6924, %v6923
        %v6926 = vsub.s32 4, %v6902
        %v6927 = vsel %vm6842, %v6926, %v6902
        %v6928 = vsel %vm6841, %v1651, %v6925
        %v6929 = vsel %vm6841, 0, %v6927
        %v6930 = vcosq.f32.pop %v6928
        %v6931 = vsinq.f32.pop %v6928
        %vm6932 = vweird.f32 %v1651
        %v6933 = vand.u32 %v6929, 3
        %vm6934 = vcmp.lt.s32.totalorder %v6933, 2
        %vm6935 = vcmp.eq.s32.totalorder %v6933, 0
        %v6936 = vxor.u32 %v6931, 2147483648
        %v6937 = vsel %vm6935, %v6930, %v6936
        %vm6938 = vcmp.eq.s32.totalorder %v6933, 2
        %v6939 = vxor.u32 %v6930, 2147483648
        %v6940 = vsel %vm6938, %v6939, %v6931
        %v6941 = vsel %vm6934, %v6937, %v6940
        %v6942 = vsel %vm6932, nan, %v6941
        %v6943 = vand.u32 2147483647, %v1652
        %vm6944 = vcmp.le.f32.partialorder %v6943, 0.7853982
        %vm6945 = vcmp.lt.s32.totalorder %v1652, 0
        %v6946 = vand.u32 %v1652, 2139095040
        %v6947 = vshrl.u32 %v6946, 23
        %v6948 = vsub.s32 %v6947, 127
        %v6949 = vand.u32 2147483647, %v1652
        %v6950 = vand.u32 %v6949, 8388607
        %v6951 = vor.u32 %v6950, 8388608
        %v6952 = vsub.s32 0, %v6951
        %v6953 = vadd.s32 %v6948, 1
        %vm6954 = vcmp.gt.s32.totalorder %v6953, 0
        %v6955 = vsel %vm6954, %v6953, 0
        %v6956 = vshrl.u32 %v6955, 5
        %v6957 = vand.u32 %v6955, 31
        %v6958 = vsub.s32 32, %v6957
        %v6959 = vshrl.u32 683565275, %v6958
        %v6960 = vshll.u32 683565275, %v6957
        %v6961 = vshrl.u32 2475754826, %v6958
        %v6962 = vor.u32 %v6960, %v6961
        %v6963 = vshll.u32 2475754826, %v6957
        %v6964 = vshrl.u32 2131351028, %v6958
        %v6965 = vor.u32 %v6963, %v6964
        %v6966 = vshll.u32 2131351028, %v6957
        %v6967 = vshrl.u32 2102212464, %v6958
        %v6968 = vor.u32 %v6966, %v6967
        %v6969 = vshll.u32 2102212464, %v6957
        %v6970 = vshrl.u32 920167782, %v6958
        %v6971 = vor.u32 %v6969, %v6970
        %v6972 = vshll.u32 920167782, %v6957
        %v6973 = vshrl.u32 1326507024, %v6958
        %v6974 = vor.u32 %v6972, %v6973
        %vm6975 = vcmp.lt.s32.totalorder %v6956, 1
        %vm6976 = vcmp.lt.s32.totalorder %v6956, 2
        %vm6977 = vcmp.lt.s32.totalorder %v6956, 3
        %vm6978 = vcmp.lt.s32.totalorder %v6956, 4
        %v6979 = vsel %vm6975, %v6959, %v6962
        %v6980 = vsel %vm6978, %v6968, 2102212464
        %v6981 = vsel %vm6977, %v6965, %v6980
        %v6982 = vsel %vm6976, %v6979, %v6981
        %v6983 = vsel %vm6975, %v6962, %v6965
        %v6984 = vsel %vm6978, %v6971, 920167782
        %v6985 = vsel %vm6977, %v6968, %v6984
        %v6986 = vsel %vm6976, %v6983, %v6985
        %v6987 = vsel %vm6975, %v6965, %v6968
        %v6988 = vsel %vm6978, %v6974, 1326507024
        %v6989 = vsel %vm6977, %v6971, %v6988
        %v6990 = vsel %vm6976, %v6987, %v6989
        %v6991 = vshll.u32 %v6951, 8
        %v6992 = vmul.u32.u64.compose %v6991, %v6990
        %v6993 = vextract.low.u32 %v6992
        %v6994 = vextract.high.u32 %v6992
        %v6995 = vmul.u32.u64.compose %v6991, %v6986
        %v6996 = vextract.low.u32 %v6995
        %v6997 = vextract.high.u32 %v6995
        %v6998 = vmul.u32 %v6991, %v6982
        %v6999 = vadd.s32 %v6994, %v6996
        %vm7000 = vc.u32 %v6994, %v6996
        %v7001 = vadd.s32 %v6997, 1
        %v7002 = vsel %vm7000, %v7001, %v6997
        %v7003 = vadd.s32 %v6998, %v7002
        %v7004 = vadd.s32 %v7003, 536870912
        %v7005 = vshrl.u32 %v7004, 30
        %v7006 = vshll.u32 %v7005, 30
        %v7007 = vsub.s32 %v7003, %v7006
        %vm7008 = vcmp.lt.s32.totalorder %v7007, 0
        %v7009 = vsub.s32 0, %v7007
        %v7010 = vsel %vm7008, %v7009, %v7007
        %v7011 = vclz %v7010
        %v7012 = vsub.s32 %v7011, 2
        %vm7013 = vcmp.gt.s32.totalorder 0, %v7012
        %v7014 = vsel %vm7013, 0, %v7012
        %v7015 = vsub.s32 32, %v7014
        %v7016 = vshll.u32 %v7007, %v7014
        %v7017 = vshrl.u32 %v6999, %v7015
        %v7018 = vor.u32 %v7016, %v7017
        %v7019 = vsub.s32 4294967266, %v7014
        %v7020 = vadd.s32 %v7019, 127
        %v7021 = vshll.u32 %v7020, 23
        %v7022 = vor.u32 4788187, %v7021
        %v7023 = vand.u32 2147483647, %v7022
        %v7025 = vcvt.s32.f32 %v7018
        %v7026 = vmul.f32 %v7025, %v7023
        %v7027 = vxor.u32 %v7026, 2147483648
        %v7028 = vsel %vm6945, %v7027, %v7026
        %v7029 = vsub.s32 4, %v7005
        %v7030 = vsel %vm6945, %v7029, %v7005
        %v7031 = vsel %vm6944, %v1652, %v7028
        %v7032 = vsel %vm6944, 0, %v7030
        %v7033 = vcosq.f32.pop %v7031
        %v7034 = vsinq.f32.pop %v7031
        %vm7035 = vweird.f32 %v1652
        %v7036 = vand.u32 %v7032, 3
        %vm7037 = vcmp.lt.s32.totalorder %v7036, 2
        %vm7038 = vcmp.eq.s32.totalorder %v7036, 0
        %v7039 = vxor.u32 %v7034, 2147483648
        %v7040 = vsel %vm7038, %v7033, %v7039
        %vm7041 = vcmp.eq.s32.totalorder %v7036, 2
        %v7042 = vxor.u32 %v7033, 2147483648
        %v7043 = vsel %vm7041, %v7042, %v7034
        %v7044 = vsel %vm7037, %v7040, %v7043
        %v7045 = vsel %vm7035, nan, %v7044
        %v7046 = vand.u32 2147483647, %v1653
        %vm7047 = vcmp.le.f32.partialorder %v7046, 0.7853982
        %vm7048 = vcmp.lt.s32.totalorder %v1653, 0
        %v7049 = vand.u32 %v1653, 2139095040
        %v7050 = vshrl.u32 %v7049, 23
        %v7051 = vsub.s32 %v7050, 127
        %v7052 = vand.u32 2147483647, %v1653
        %v7053 = vand.u32 %v7052, 8388607
        %v7054 = vor.u32 %v7053, 8388608
        %v7055 = vsub.s32 0, %v7054
        %v7056 = vadd.s32 %v7051, 1
        %vm7057 = vcmp.gt.s32.totalorder %v7056, 0
        %v7058 = vsel %vm7057, %v7056, 0
        %v7059 = vshrl.u32 %v7058, 5
        %v7060 = vand.u32 %v7058, 31
        %v7061 = vsub.s32 32, %v7060
        %v7062 = vshrl.u32 683565275, %v7061
        %v7063 = vshll.u32 683565275, %v7060
        %v7064 = vshrl.u32 2475754826, %v7061
        %v7065 = vor.u32 %v7063, %v7064
        %v7066 = vshll.u32 2475754826, %v7060
        %v7067 = vshrl.u32 2131351028, %v7061
        %v7068 = vor.u32 %v7066, %v7067
        %v7069 = vshll.u32 2131351028, %v7060
        %v7070 = vshrl.u32 2102212464, %v7061
        %v7071 = vor.u32 %v7069, %v7070
        %v7072 = vshll.u32 2102212464, %v7060
        %v7073 = vshrl.u32 920167782, %v7061
        %v7074 = vor.u32 %v7072, %v7073
        %v7075 = vshll.u32 920167782, %v7060
        %v7076 = vshrl.u32 1326507024, %v7061
        %v7077 = vor.u32 %v7075, %v7076
        %vm7078 = vcmp.lt.s32.totalorder %v7059, 1
        %vm7079 = vcmp.lt.s32.totalorder %v7059, 2
        %vm7080 = vcmp.lt.s32.totalorder %v7059, 3
        %vm7081 = vcmp.lt.s32.totalorder %v7059, 4
        %v7082 = vsel %vm7078, %v7062, %v7065
        %v7083 = vsel %vm7081, %v7071, 2102212464
        %v7084 = vsel %vm7080, %v7068, %v7083
        %v7085 = vsel %vm7079, %v7082, %v7084
        %v7086 = vsel %vm7078, %v7065, %v7068
        %v7087 = vsel %vm7081, %v7074, 920167782
        %v7088 = vsel %vm7080, %v7071, %v7087
        %v7089 = vsel %vm7079, %v7086, %v7088
        %v7090 = vsel %vm7078, %v7068, %v7071
        %v7091 = vsel %vm7081, %v7077, 1326507024
        %v7092 = vsel %vm7080, %v7074, %v7091
        %v7093 = vsel %vm7079, %v7090, %v7092
        %v7094 = vshll.u32 %v7054, 8
        %v7095 = vmul.u32.u64.compose %v7094, %v7093
        %v7096 = vextract.low.u32 %v7095
        %v7097 = vextract.high.u32 %v7095
        %v7098 = vmul.u32.u64.compose %v7094, %v7089
        %v7099 = vextract.low.u32 %v7098
        %v7100 = vextract.high.u32 %v7098
        %v7101 = vmul.u32 %v7094, %v7085
        %v7102 = vadd.s32 %v7097, %v7099
        %vm7103 = vc.u32 %v7097, %v7099
        %v7104 = vadd.s32 %v7100, 1
        %v7105 = vsel %vm7103, %v7104, %v7100
        %v7106 = vadd.s32 %v7101, %v7105
        %v7107 = vadd.s32 %v7106, 536870912
        %v7108 = vshrl.u32 %v7107, 30
        %v7109 = vshll.u32 %v7108, 30
        %v7110 = vsub.s32 %v7106, %v7109
        %vm7111 = vcmp.lt.s32.totalorder %v7110, 0
        %v7112 = vsub.s32 0, %v7110
        %v7113 = vsel %vm7111, %v7112, %v7110
        %v7114 = vclz %v7113
        %v7115 = vsub.s32 %v7114, 2
        %vm7116 = vcmp.gt.s32.totalorder 0, %v7115
        %v7117 = vsel %vm7116, 0, %v7115
        %v7118 = vsub.s32 32, %v7117
        %v7119 = vshll.u32 %v7110, %v7117
        %v7120 = vshrl.u32 %v7102, %v7118
        %v7121 = vor.u32 %v7119, %v7120
        %v7122 = vsub.s32 4294967266, %v7117
        %v7123 = vadd.s32 %v7122, 127
        %v7124 = vshll.u32 %v7123, 23
        %v7125 = vor.u32 4788187, %v7124
        %v7126 = vand.u32 2147483647, %v7125
        %v7128 = vcvt.s32.f32 %v7121
        %v7129 = vmul.f32 %v7128, %v7126
        %v7130 = vxor.u32 %v7129, 2147483648
        %v7131 = vsel %vm7048, %v7130, %v7129
        %v7132 = vsub.s32 4, %v7108
        %v7133 = vsel %vm7048, %v7132, %v7108
        %v7134 = vsel %vm7047, %v1653, %v7131
        %v7135 = vsel %vm7047, 0, %v7133
        %v7136 = vcosq.f32.pop %v7134
        %v7137 = vsinq.f32.pop %v7134
        %vm7138 = vweird.f32 %v1653
        %v7139 = vand.u32 %v7135, 3
        %vm7140 = vcmp.lt.s32.totalorder %v7139, 2
        %vm7141 = vcmp.eq.s32.totalorder %v7139, 0
        %v7142 = vxor.u32 %v7137, 2147483648
        %v7143 = vsel %vm7141, %v7136, %v7142
        %vm7144 = vcmp.eq.s32.totalorder %v7139, 2
        %v7145 = vxor.u32 %v7136, 2147483648
        %v7146 = vsel %vm7144, %v7145, %v7137
        %v7147 = vsel %vm7140, %v7143, %v7146
        %v7148 = vsel %vm7138, nan, %v7147
        %v7149 = vand.u32 2147483647, %v1654
        %vm7150 = vcmp.le.f32.partialorder %v7149, 0.7853982
        %vm7151 = vcmp.lt.s32.totalorder %v1654, 0
        %v7152 = vand.u32 %v1654, 2139095040
        %v7153 = vshrl.u32 %v7152, 23
        %v7154 = vsub.s32 %v7153, 127
        %v7155 = vand.u32 2147483647, %v1654
        %v7156 = vand.u32 %v7155, 8388607
        %v7157 = vor.u32 %v7156, 8388608
        %v7158 = vsub.s32 0, %v7157
        %v7159 = vadd.s32 %v7154, 1
        %vm7160 = vcmp.gt.s32.totalorder %v7159, 0
        %v7161 = vsel %vm7160, %v7159, 0
        %v7162 = vshrl.u32 %v7161, 5
        %v7163 = vand.u32 %v7161, 31
        %v7164 = vsub.s32 32, %v7163
        %v7165 = vshrl.u32 683565275, %v7164
        %v7166 = vshll.u32 683565275, %v7163
        %v7167 = vshrl.u32 2475754826, %v7164
        %v7168 = vor.u32 %v7166, %v7167
        %v7169 = vshll.u32 2475754826, %v7163
        %v7170 = vshrl.u32 2131351028, %v7164
        %v7171 = vor.u32 %v7169, %v7170
        %v7172 = vshll.u32 2131351028, %v7163
        %v7173 = vshrl.u32 2102212464, %v7164
        %v7174 = vor.u32 %v7172, %v7173
        %v7175 = vshll.u32 2102212464, %v7163
        %v7176 = vshrl.u32 920167782, %v7164
        %v7177 = vor.u32 %v7175, %v7176
        %v7178 = vshll.u32 920167782, %v7163
        %v7179 = vshrl.u32 1326507024, %v7164
        %v7180 = vor.u32 %v7178, %v7179
        %vm7181 = vcmp.lt.s32.totalorder %v7162, 1
        %vm7182 = vcmp.lt.s32.totalorder %v7162, 2
        %vm7183 = vcmp.lt.s32.totalorder %v7162, 3
        %vm7184 = vcmp.lt.s32.totalorder %v7162, 4
        %v7185 = vsel %vm7181, %v7165, %v7168
        %v7186 = vsel %vm7184, %v7174, 2102212464
        %v7187 = vsel %vm7183, %v7171, %v7186
        %v7188 = vsel %vm7182, %v7185, %v7187
        %v7189 = vsel %vm7181, %v7168, %v7171
        %v7190 = vsel %vm7184, %v7177, 920167782
        %v7191 = vsel %vm7183, %v7174, %v7190
        %v7192 = vsel %vm7182, %v7189, %v7191
        %v7193 = vsel %vm7181, %v7171, %v7174
        %v7194 = vsel %vm7184, %v7180, 1326507024
        %v7195 = vsel %vm7183, %v7177, %v7194
        %v7196 = vsel %vm7182, %v7193, %v7195
        %v7197 = vshll.u32 %v7157, 8
        %v7198 = vmul.u32.u64.compose %v7197, %v7196
        %v7199 = vextract.low.u32 %v7198
        %v7200 = vextract.high.u32 %v7198
        %v7201 = vmul.u32.u64.compose %v7197, %v7192
        %v7202 = vextract.low.u32 %v7201
        %v7203 = vextract.high.u32 %v7201
        %v7204 = vmul.u32 %v7197, %v7188
        %v7205 = vadd.s32 %v7200, %v7202
        %vm7206 = vc.u32 %v7200, %v7202
        %v7207 = vadd.s32 %v7203, 1
        %v7208 = vsel %vm7206, %v7207, %v7203
        %v7209 = vadd.s32 %v7204, %v7208
        %v7210 = vadd.s32 %v7209, 536870912
        %v7211 = vshrl.u32 %v7210, 30
        %v7212 = vshll.u32 %v7211, 30
        %v7213 = vsub.s32 %v7209, %v7212
        %vm7214 = vcmp.lt.s32.totalorder %v7213, 0
        %v7215 = vsub.s32 0, %v7213
        %v7216 = vsel %vm7214, %v7215, %v7213
        %v7217 = vclz %v7216
        %v7218 = vsub.s32 %v7217, 2
        %vm7219 = vcmp.gt.s32.totalorder 0, %v7218
        %v7220 = vsel %vm7219, 0, %v7218
        %v7221 = vsub.s32 32, %v7220
        %v7222 = vshll.u32 %v7213, %v7220
        %v7223 = vshrl.u32 %v7205, %v7221
        %v7224 = vor.u32 %v7222, %v7223
        %v7225 = vsub.s32 4294967266, %v7220
        %v7226 = vadd.s32 %v7225, 127
        %v7227 = vshll.u32 %v7226, 23
        %v7228 = vor.u32 4788187, %v7227
        %v7229 = vand.u32 2147483647, %v7228
        %v7231 = vcvt.s32.f32 %v7224
        %v7232 = vmul.f32 %v7231, %v7229
        %v7233 = vxor.u32 %v7232, 2147483648
        %v7234 = vsel %vm7151, %v7233, %v7232
        %v7235 = vsub.s32 4, %v7211
        %v7236 = vsel %vm7151, %v7235, %v7211
        %v7237 = vsel %vm7150, %v1654, %v7234
        %v7238 = vsel %vm7150, 0, %v7236
        %v7239 = vcosq.f32.pop %v7237
        %v7240 = vsinq.f32.pop %v7237
        %vm7241 = vweird.f32 %v1654
        %v7242 = vand.u32 %v7238, 3
        %vm7243 = vcmp.lt.s32.totalorder %v7242, 2
        %vm7244 = vcmp.eq.s32.totalorder %v7242, 0
        %v7245 = vxor.u32 %v7240, 2147483648
        %v7246 = vsel %vm7244, %v7239, %v7245
        %vm7247 = vcmp.eq.s32.totalorder %v7242, 2
        %v7248 = vxor.u32 %v7239, 2147483648
        %v7249 = vsel %vm7247, %v7248, %v7240
        %v7250 = vsel %vm7243, %v7246, %v7249
        %v7251 = vsel %vm7241, nan, %v7250
        %v7252 = vand.u32 2147483647, %v1655
        %vm7253 = vcmp.le.f32.partialorder %v7252, 0.7853982
        %vm7254 = vcmp.lt.s32.totalorder %v1655, 0
        %v7255 = vand.u32 %v1655, 2139095040
        %v7256 = vshrl.u32 %v7255, 23
        %v7257 = vsub.s32 %v7256, 127
        %v7258 = vand.u32 2147483647, %v1655
        %v7259 = vand.u32 %v7258, 8388607
        %v7260 = vor.u32 %v7259, 8388608
        %v7261 = vsub.s32 0, %v7260
        %v7262 = vadd.s32 %v7257, 1
        %vm7263 = vcmp.gt.s32.totalorder %v7262, 0
        %v7264 = vsel %vm7263, %v7262, 0
        %v7265 = vshrl.u32 %v7264, 5
        %v7266 = vand.u32 %v7264, 31
        %v7267 = vsub.s32 32, %v7266
        %v7268 = vshrl.u32 683565275, %v7267
        %v7269 = vshll.u32 683565275, %v7266
        %v7270 = vshrl.u32 2475754826, %v7267
        %v7271 = vor.u32 %v7269, %v7270
        %v7272 = vshll.u32 2475754826, %v7266
        %v7273 = vshrl.u32 2131351028, %v7267
        %v7274 = vor.u32 %v7272, %v7273
        %v7275 = vshll.u32 2131351028, %v7266
        %v7276 = vshrl.u32 2102212464, %v7267
        %v7277 = vor.u32 %v7275, %v7276
        %v7278 = vshll.u32 2102212464, %v7266
        %v7279 = vshrl.u32 920167782, %v7267
        %v7280 = vor.u32 %v7278, %v7279
        %v7281 = vshll.u32 920167782, %v7266
        %v7282 = vshrl.u32 1326507024, %v7267
        %v7283 = vor.u32 %v7281, %v7282
        %vm7284 = vcmp.lt.s32.totalorder %v7265, 1
        %vm7285 = vcmp.lt.s32.totalorder %v7265, 2
        %vm7286 = vcmp.lt.s32.totalorder %v7265, 3
        %vm7287 = vcmp.lt.s32.totalorder %v7265, 4
        %v7288 = vsel %vm7284, %v7268, %v7271
        %v7289 = vsel %vm7287, %v7277, 2102212464
        %v7290 = vsel %vm7286, %v7274, %v7289
        %v7291 = vsel %vm7285, %v7288, %v7290
        %v7292 = vsel %vm7284, %v7271, %v7274
        %v7293 = vsel %vm7287, %v7280, 920167782
        %v7294 = vsel %vm7286, %v7277, %v7293
        %v7295 = vsel %vm7285, %v7292, %v7294
        %v7296 = vsel %vm7284, %v7274, %v7277
        %v7297 = vsel %vm7287, %v7283, 1326507024
        %v7298 = vsel %vm7286, %v7280, %v7297
        %v7299 = vsel %vm7285, %v7296, %v7298
        %v7300 = vshll.u32 %v7260, 8
        %v7301 = vmul.u32.u64.compose %v7300, %v7299
        %v7302 = vextract.low.u32 %v7301
        %v7303 = vextract.high.u32 %v7301
        %v7304 = vmul.u32.u64.compose %v7300, %v7295
        %v7305 = vextract.low.u32 %v7304
        %v7306 = vextract.high.u32 %v7304
        %v7307 = vmul.u32 %v7300, %v7291
        %v7308 = vadd.s32 %v7303, %v7305
        %vm7309 = vc.u32 %v7303, %v7305
        %v7310 = vadd.s32 %v7306, 1
        %v7311 = vsel %vm7309, %v7310, %v7306
        %v7312 = vadd.s32 %v7307, %v7311
        %v7313 = vadd.s32 %v7312, 536870912
        %v7314 = vshrl.u32 %v7313, 30
        %v7315 = vshll.u32 %v7314, 30
        %v7316 = vsub.s32 %v7312, %v7315
        %vm7317 = vcmp.lt.s32.totalorder %v7316, 0
        %v7318 = vsub.s32 0, %v7316
        %v7319 = vsel %vm7317, %v7318, %v7316
        %v7320 = vclz %v7319
        %v7321 = vsub.s32 %v7320, 2
        %vm7322 = vcmp.gt.s32.totalorder 0, %v7321
        %v7323 = vsel %vm7322, 0, %v7321
        %v7324 = vsub.s32 32, %v7323
        %v7325 = vshll.u32 %v7316, %v7323
        %v7326 = vshrl.u32 %v7308, %v7324
        %v7327 = vor.u32 %v7325, %v7326
        %v7328 = vsub.s32 4294967266, %v7323
        %v7329 = vadd.s32 %v7328, 127
        %v7330 = vshll.u32 %v7329, 23
        %v7331 = vor.u32 4788187, %v7330
        %v7332 = vand.u32 2147483647, %v7331
        %v7334 = vcvt.s32.f32 %v7327
        %v7335 = vmul.f32 %v7334, %v7332
        %v7336 = vxor.u32 %v7335, 2147483648
        %v7337 = vsel %vm7254, %v7336, %v7335
        %v7338 = vsub.s32 4, %v7314
        %v7339 = vsel %vm7254, %v7338, %v7314
        %v7340 = vsel %vm7253, %v1655, %v7337
        %v7341 = vsel %vm7253, 0, %v7339
        %v7342 = vcosq.f32.pop %v7340
        %v7343 = vsinq.f32.pop %v7340
        %vm7344 = vweird.f32 %v1655
        %v7345 = vand.u32 %v7341, 3
        %vm7346 = vcmp.lt.s32.totalorder %v7345, 2
        %vm7347 = vcmp.eq.s32.totalorder %v7345, 0
        %v7348 = vxor.u32 %v7343, 2147483648
        %v7349 = vsel %vm7347, %v7342, %v7348
        %vm7350 = vcmp.eq.s32.totalorder %v7345, 2
        %v7351 = vxor.u32 %v7342, 2147483648
        %v7352 = vsel %vm7350, %v7351, %v7343
        %v7353 = vsel %vm7346, %v7349, %v7352
        %v7354 = vsel %vm7344, nan, %v7353
        %v7355 = vand.u32 2147483647, %v1656
        %vm7356 = vcmp.le.f32.partialorder %v7355, 0.7853982
        %vm7357 = vcmp.lt.s32.totalorder %v1656, 0
        %v7358 = vand.u32 %v1656, 2139095040
        %v7359 = vshrl.u32 %v7358, 23
        %v7360 = vsub.s32 %v7359, 127
        %v7361 = vand.u32 2147483647, %v1656
        %v7362 = vand.u32 %v7361, 8388607
        %v7363 = vor.u32 %v7362, 8388608
        %v7364 = vsub.s32 0, %v7363
        %v7365 = vadd.s32 %v7360, 1
        %vm7366 = vcmp.gt.s32.totalorder %v7365, 0
        %v7367 = vsel %vm7366, %v7365, 0
        %v7368 = vshrl.u32 %v7367, 5
        %v7369 = vand.u32 %v7367, 31
        %v7370 = vsub.s32 32, %v7369
        %v7371 = vshrl.u32 683565275, %v7370
        %v7372 = vshll.u32 683565275, %v7369
        %v7373 = vshrl.u32 2475754826, %v7370
        %v7374 = vor.u32 %v7372, %v7373
        %v7375 = vshll.u32 2475754826, %v7369
        %v7376 = vshrl.u32 2131351028, %v7370
        %v7377 = vor.u32 %v7375, %v7376
        %v7378 = vshll.u32 2131351028, %v7369
        %v7379 = vshrl.u32 2102212464, %v7370
        %v7380 = vor.u32 %v7378, %v7379
        %v7381 = vshll.u32 2102212464, %v7369
        %v7382 = vshrl.u32 920167782, %v7370
        %v7383 = vor.u32 %v7381, %v7382
        %v7384 = vshll.u32 920167782, %v7369
        %v7385 = vshrl.u32 1326507024, %v7370
        %v7386 = vor.u32 %v7384, %v7385
        %vm7387 = vcmp.lt.s32.totalorder %v7368, 1
        %vm7388 = vcmp.lt.s32.totalorder %v7368, 2
        %vm7389 = vcmp.lt.s32.totalorder %v7368, 3
        %vm7390 = vcmp.lt.s32.totalorder %v7368, 4
        %v7391 = vsel %vm7387, %v7371, %v7374
        %v7392 = vsel %vm7390, %v7380, 2102212464
        %v7393 = vsel %vm7389, %v7377, %v7392
        %v7394 = vsel %vm7388, %v7391, %v7393
        %v7395 = vsel %vm7387, %v7374, %v7377
        %v7396 = vsel %vm7390, %v7383, 920167782
        %v7397 = vsel %vm7389, %v7380, %v7396
        %v7398 = vsel %vm7388, %v7395, %v7397
        %v7399 = vsel %vm7387, %v7377, %v7380
        %v7400 = vsel %vm7390, %v7386, 1326507024
        %v7401 = vsel %vm7389, %v7383, %v7400
        %v7402 = vsel %vm7388, %v7399, %v7401
        %v7403 = vshll.u32 %v7363, 8
        %v7404 = vmul.u32.u64.compose %v7403, %v7402
        %v7405 = vextract.low.u32 %v7404
        %v7406 = vextract.high.u32 %v7404
        %v7407 = vmul.u32.u64.compose %v7403, %v7398
        %v7408 = vextract.low.u32 %v7407
        %v7409 = vextract.high.u32 %v7407
        %v7410 = vmul.u32 %v7403, %v7394
        %v7411 = vadd.s32 %v7406, %v7408
        %vm7412 = vc.u32 %v7406, %v7408
        %v7413 = vadd.s32 %v7409, 1
        %v7414 = vsel %vm7412, %v7413, %v7409
        %v7415 = vadd.s32 %v7410, %v7414
        %v7416 = vadd.s32 %v7415, 536870912
        %v7417 = vshrl.u32 %v7416, 30
        %v7418 = vshll.u32 %v7417, 30
        %v7419 = vsub.s32 %v7415, %v7418
        %vm7420 = vcmp.lt.s32.totalorder %v7419, 0
        %v7421 = vsub.s32 0, %v7419
        %v7422 = vsel %vm7420, %v7421, %v7419
        %v7423 = vclz %v7422
        %v7424 = vsub.s32 %v7423, 2
        %vm7425 = vcmp.gt.s32.totalorder 0, %v7424
        %v7426 = vsel %vm7425, 0, %v7424
        %v7427 = vsub.s32 32, %v7426
        %v7428 = vshll.u32 %v7419, %v7426
        %v7429 = vshrl.u32 %v7411, %v7427
        %v7430 = vor.u32 %v7428, %v7429
        %v7431 = vsub.s32 4294967266, %v7426
        %v7432 = vadd.s32 %v7431, 127
        %v7433 = vshll.u32 %v7432, 23
        %v7434 = vor.u32 4788187, %v7433
        %v7435 = vand.u32 2147483647, %v7434
        %v7437 = vcvt.s32.f32 %v7430
        %v7438 = vmul.f32 %v7437, %v7435
        %v7439 = vxor.u32 %v7438, 2147483648
        %v7440 = vsel %vm7357, %v7439, %v7438
        %v7441 = vsub.s32 4, %v7417
        %v7442 = vsel %vm7357, %v7441, %v7417
        %v7443 = vsel %vm7356, %v1656, %v7440
        %v7444 = vsel %vm7356, 0, %v7442
        %v7445 = vcosq.f32.pop %v7443
        %v7446 = vsinq.f32.pop %v7443
        %vm7447 = vweird.f32 %v1656
        %v7448 = vand.u32 %v7444, 3
        %vm7449 = vcmp.lt.s32.totalorder %v7448, 2
        %vm7450 = vcmp.eq.s32.totalorder %v7448, 0
        %v7451 = vxor.u32 %v7446, 2147483648
        %v7452 = vsel %vm7450, %v7445, %v7451
        %vm7453 = vcmp.eq.s32.totalorder %v7448, 2
        %v7454 = vxor.u32 %v7445, 2147483648
        %v7455 = vsel %vm7453, %v7454, %v7446
        %v7456 = vsel %vm7449, %v7452, %v7455
        %v7457 = vsel %vm7447, nan, %v7456
        %v7458 = vand.u32 2147483647, %v1657
        %vm7459 = vcmp.le.f32.partialorder %v7458, 0.7853982
        %vm7460 = vcmp.lt.s32.totalorder %v1657, 0
        %v7461 = vand.u32 %v1657, 2139095040
        %v7462 = vshrl.u32 %v7461, 23
        %v7463 = vsub.s32 %v7462, 127
        %v7464 = vand.u32 2147483647, %v1657
        %v7465 = vand.u32 %v7464, 8388607
        %v7466 = vor.u32 %v7465, 8388608
        %v7467 = vsub.s32 0, %v7466
        %v7468 = vadd.s32 %v7463, 1
        %vm7469 = vcmp.gt.s32.totalorder %v7468, 0
        %v7470 = vsel %vm7469, %v7468, 0
        %v7471 = vshrl.u32 %v7470, 5
        %v7472 = vand.u32 %v7470, 31
        %v7473 = vsub.s32 32, %v7472
        %v7474 = vshrl.u32 683565275, %v7473
        %v7475 = vshll.u32 683565275, %v7472
        %v7476 = vshrl.u32 2475754826, %v7473
        %v7477 = vor.u32 %v7475, %v7476
        %v7478 = vshll.u32 2475754826, %v7472
        %v7479 = vshrl.u32 2131351028, %v7473
        %v7480 = vor.u32 %v7478, %v7479
        %v7481 = vshll.u32 2131351028, %v7472
        %v7482 = vshrl.u32 2102212464, %v7473
        %v7483 = vor.u32 %v7481, %v7482
        %v7484 = vshll.u32 2102212464, %v7472
        %v7485 = vshrl.u32 920167782, %v7473
        %v7486 = vor.u32 %v7484, %v7485
        %v7487 = vshll.u32 920167782, %v7472
        %v7488 = vshrl.u32 1326507024, %v7473
        %v7489 = vor.u32 %v7487, %v7488
        %vm7490 = vcmp.lt.s32.totalorder %v7471, 1
        %vm7491 = vcmp.lt.s32.totalorder %v7471, 2
        %vm7492 = vcmp.lt.s32.totalorder %v7471, 3
        %vm7493 = vcmp.lt.s32.totalorder %v7471, 4
        %v7494 = vsel %vm7490, %v7474, %v7477
        %v7495 = vsel %vm7493, %v7483, 2102212464
        %v7496 = vsel %vm7492, %v7480, %v7495
        %v7497 = vsel %vm7491, %v7494, %v7496
        %v7498 = vsel %vm7490, %v7477, %v7480
        %v7499 = vsel %vm7493, %v7486, 920167782
        %v7500 = vsel %vm7492, %v7483, %v7499
        %v7501 = vsel %vm7491, %v7498, %v7500
        %v7502 = vsel %vm7490, %v7480, %v7483
        %v7503 = vsel %vm7493, %v7489, 1326507024
        %v7504 = vsel %vm7492, %v7486, %v7503
        %v7505 = vsel %vm7491, %v7502, %v7504
        %v7506 = vshll.u32 %v7466, 8
        %v7507 = vmul.u32.u64.compose %v7506, %v7505
        %v7508 = vextract.low.u32 %v7507
        %v7509 = vextract.high.u32 %v7507
        %v7510 = vmul.u32.u64.compose %v7506, %v7501
        %v7511 = vextract.low.u32 %v7510
        %v7512 = vextract.high.u32 %v7510
        %v7513 = vmul.u32 %v7506, %v7497
        %v7514 = vadd.s32 %v7509, %v7511
        %vm7515 = vc.u32 %v7509, %v7511
        %v7516 = vadd.s32 %v7512, 1
        %v7517 = vsel %vm7515, %v7516, %v7512
        %v7518 = vadd.s32 %v7513, %v7517
        %v7519 = vadd.s32 %v7518, 536870912
        %v7520 = vshrl.u32 %v7519, 30
        %v7521 = vshll.u32 %v7520, 30
        %v7522 = vsub.s32 %v7518, %v7521
        %vm7523 = vcmp.lt.s32.totalorder %v7522, 0
        %v7524 = vsub.s32 0, %v7522
        %v7525 = vsel %vm7523, %v7524, %v7522
        %v7526 = vclz %v7525
        %v7527 = vsub.s32 %v7526, 2
        %vm7528 = vcmp.gt.s32.totalorder 0, %v7527
        %v7529 = vsel %vm7528, 0, %v7527
        %v7530 = vsub.s32 32, %v7529
        %v7531 = vshll.u32 %v7522, %v7529
        %v7532 = vshrl.u32 %v7514, %v7530
        %v7533 = vor.u32 %v7531, %v7532
        %v7534 = vsub.s32 4294967266, %v7529
        %v7535 = vadd.s32 %v7534, 127
        %v7536 = vshll.u32 %v7535, 23
        %v7537 = vor.u32 4788187, %v7536
        %v7538 = vand.u32 2147483647, %v7537
        %v7540 = vcvt.s32.f32 %v7533
        %v7541 = vmul.f32 %v7540, %v7538
        %v7542 = vxor.u32 %v7541, 2147483648
        %v7543 = vsel %vm7460, %v7542, %v7541
        %v7544 = vsub.s32 4, %v7520
        %v7545 = vsel %vm7460, %v7544, %v7520
        %v7546 = vsel %vm7459, %v1657, %v7543
        %v7547 = vsel %vm7459, 0, %v7545
        %v7548 = vcosq.f32.pop %v7546
        %v7549 = vsinq.f32.pop %v7546
        %vm7550 = vweird.f32 %v1657
        %v7551 = vand.u32 %v7547, 3
        %vm7552 = vcmp.lt.s32.totalorder %v7551, 2
        %vm7553 = vcmp.eq.s32.totalorder %v7551, 0
        %v7554 = vxor.u32 %v7549, 2147483648
        %v7555 = vsel %vm7553, %v7548, %v7554
        %vm7556 = vcmp.eq.s32.totalorder %v7551, 2
        %v7557 = vxor.u32 %v7548, 2147483648
        %v7558 = vsel %vm7556, %v7557, %v7549
        %v7559 = vsel %vm7552, %v7555, %v7558
        %v7560 = vsel %vm7550, nan, %v7559
        %v7561 = vand.u32 2147483647, %v1658
        %vm7562 = vcmp.le.f32.partialorder %v7561, 0.7853982
        %vm7563 = vcmp.lt.s32.totalorder %v1658, 0
        %v7564 = vand.u32 %v1658, 2139095040
        %v7565 = vshrl.u32 %v7564, 23
        %v7566 = vsub.s32 %v7565, 127
        %v7567 = vand.u32 2147483647, %v1658
        %v7568 = vand.u32 %v7567, 8388607
        %v7569 = vor.u32 %v7568, 8388608
        %v7570 = vsub.s32 0, %v7569
        %v7571 = vadd.s32 %v7566, 1
        %vm7572 = vcmp.gt.s32.totalorder %v7571, 0
        %v7573 = vsel %vm7572, %v7571, 0
        %v7574 = vshrl.u32 %v7573, 5
        %v7575 = vand.u32 %v7573, 31
        %v7576 = vsub.s32 32, %v7575
        %v7577 = vshrl.u32 683565275, %v7576
        %v7578 = vshll.u32 683565275, %v7575
        %v7579 = vshrl.u32 2475754826, %v7576
        %v7580 = vor.u32 %v7578, %v7579
        %v7581 = vshll.u32 2475754826, %v7575
        %v7582 = vshrl.u32 2131351028, %v7576
        %v7583 = vor.u32 %v7581, %v7582
        %v7584 = vshll.u32 2131351028, %v7575
        %v7585 = vshrl.u32 2102212464, %v7576
        %v7586 = vor.u32 %v7584, %v7585
        %v7587 = vshll.u32 2102212464, %v7575
        %v7588 = vshrl.u32 920167782, %v7576
        %v7589 = vor.u32 %v7587, %v7588
        %v7590 = vshll.u32 920167782, %v7575
        %v7591 = vshrl.u32 1326507024, %v7576
        %v7592 = vor.u32 %v7590, %v7591
        %vm7593 = vcmp.lt.s32.totalorder %v7574, 1
        %vm7594 = vcmp.lt.s32.totalorder %v7574, 2
        %vm7595 = vcmp.lt.s32.totalorder %v7574, 3
        %vm7596 = vcmp.lt.s32.totalorder %v7574, 4
        %v7597 = vsel %vm7593, %v7577, %v7580
        %v7598 = vsel %vm7596, %v7586, 2102212464
        %v7599 = vsel %vm7595, %v7583, %v7598
        %v7600 = vsel %vm7594, %v7597, %v7599
        %v7601 = vsel %vm7593, %v7580, %v7583
        %v7602 = vsel %vm7596, %v7589, 920167782
        %v7603 = vsel %vm7595, %v7586, %v7602
        %v7604 = vsel %vm7594, %v7601, %v7603
        %v7605 = vsel %vm7593, %v7583, %v7586
        %v7606 = vsel %vm7596, %v7592, 1326507024
        %v7607 = vsel %vm7595, %v7589, %v7606
        %v7608 = vsel %vm7594, %v7605, %v7607
        %v7609 = vshll.u32 %v7569, 8
        %v7610 = vmul.u32.u64.compose %v7609, %v7608
        %v7611 = vextract.low.u32 %v7610
        %v7612 = vextract.high.u32 %v7610
        %v7613 = vmul.u32.u64.compose %v7609, %v7604
        %v7614 = vextract.low.u32 %v7613
        %v7615 = vextract.high.u32 %v7613
        %v7616 = vmul.u32 %v7609, %v7600
        %v7617 = vadd.s32 %v7612, %v7614
        %vm7618 = vc.u32 %v7612, %v7614
        %v7619 = vadd.s32 %v7615, 1
        %v7620 = vsel %vm7618, %v7619, %v7615
        %v7621 = vadd.s32 %v7616, %v7620
        %v7622 = vadd.s32 %v7621, 536870912
        %v7623 = vshrl.u32 %v7622, 30
        %v7624 = vshll.u32 %v7623, 30
        %v7625 = vsub.s32 %v7621, %v7624
        %vm7626 = vcmp.lt.s32.totalorder %v7625, 0
        %v7627 = vsub.s32 0, %v7625
        %v7628 = vsel %vm7626, %v7627, %v7625
        %v7629 = vclz %v7628
        %v7630 = vsub.s32 %v7629, 2
        %vm7631 = vcmp.gt.s32.totalorder 0, %v7630
        %v7632 = vsel %vm7631, 0, %v7630
        %v7633 = vsub.s32 32, %v7632
        %v7634 = vshll.u32 %v7625, %v7632
        %v7635 = vshrl.u32 %v7617, %v7633
        %v7636 = vor.u32 %v7634, %v7635
        %v7637 = vsub.s32 4294967266, %v7632
        %v7638 = vadd.s32 %v7637, 127
        %v7639 = vshll.u32 %v7638, 23
        %v7640 = vor.u32 4788187, %v7639
        %v7641 = vand.u32 2147483647, %v7640
        %v7643 = vcvt.s32.f32 %v7636
        %v7644 = vmul.f32 %v7643, %v7641
        %v7645 = vxor.u32 %v7644, 2147483648
        %v7646 = vsel %vm7563, %v7645, %v7644
        %v7647 = vsub.s32 4, %v7623
        %v7648 = vsel %vm7563, %v7647, %v7623
        %v7649 = vsel %vm7562, %v1658, %v7646
        %v7650 = vsel %vm7562, 0, %v7648
        %v7651 = vcosq.f32.pop %v7649
        %v7652 = vsinq.f32.pop %v7649
        %vm7653 = vweird.f32 %v1658
        %v7654 = vand.u32 %v7650, 3
        %vm7655 = vcmp.lt.s32.totalorder %v7654, 2
        %vm7656 = vcmp.eq.s32.totalorder %v7654, 0
        %v7657 = vxor.u32 %v7652, 2147483648
        %v7658 = vsel %vm7656, %v7651, %v7657
        %vm7659 = vcmp.eq.s32.totalorder %v7654, 2
        %v7660 = vxor.u32 %v7651, 2147483648
        %v7661 = vsel %vm7659, %v7660, %v7652
        %v7662 = vsel %vm7655, %v7658, %v7661
        %v7663 = vsel %vm7653, nan, %v7662
        %v7664 = vand.u32 2147483647, %v1659
        %vm7665 = vcmp.le.f32.partialorder %v7664, 0.7853982
        %vm7666 = vcmp.lt.s32.totalorder %v1659, 0
        %v7667 = vand.u32 %v1659, 2139095040
        %v7668 = vshrl.u32 %v7667, 23
        %v7669 = vsub.s32 %v7668, 127
        %v7670 = vand.u32 2147483647, %v1659
        %v7671 = vand.u32 %v7670, 8388607
        %v7672 = vor.u32 %v7671, 8388608
        %v7673 = vsub.s32 0, %v7672
        %v7674 = vadd.s32 %v7669, 1
        %vm7675 = vcmp.gt.s32.totalorder %v7674, 0
        %v7676 = vsel %vm7675, %v7674, 0
        %v7677 = vshrl.u32 %v7676, 5
        %v7678 = vand.u32 %v7676, 31
        %v7679 = vsub.s32 32, %v7678
        %v7680 = vshrl.u32 683565275, %v7679
        %v7681 = vshll.u32 683565275, %v7678
        %v7682 = vshrl.u32 2475754826, %v7679
        %v7683 = vor.u32 %v7681, %v7682
        %v7684 = vshll.u32 2475754826, %v7678
        %v7685 = vshrl.u32 2131351028, %v7679
        %v7686 = vor.u32 %v7684, %v7685
        %v7687 = vshll.u32 2131351028, %v7678
        %v7688 = vshrl.u32 2102212464, %v7679
        %v7689 = vor.u32 %v7687, %v7688
        %v7690 = vshll.u32 2102212464, %v7678
        %v7691 = vshrl.u32 920167782, %v7679
        %v7692 = vor.u32 %v7690, %v7691
        %v7693 = vshll.u32 920167782, %v7678
        %v7694 = vshrl.u32 1326507024, %v7679
        %v7695 = vor.u32 %v7693, %v7694
        %vm7696 = vcmp.lt.s32.totalorder %v7677, 1
        %vm7697 = vcmp.lt.s32.totalorder %v7677, 2
        %vm7698 = vcmp.lt.s32.totalorder %v7677, 3
        %vm7699 = vcmp.lt.s32.totalorder %v7677, 4
        %v7700 = vsel %vm7696, %v7680, %v7683
        %v7701 = vsel %vm7699, %v7689, 2102212464
        %v7702 = vsel %vm7698, %v7686, %v7701
        %v7703 = vsel %vm7697, %v7700, %v7702
        %v7704 = vsel %vm7696, %v7683, %v7686
        %v7705 = vsel %vm7699, %v7692, 920167782
        %v7706 = vsel %vm7698, %v7689, %v7705
        %v7707 = vsel %vm7697, %v7704, %v7706
        %v7708 = vsel %vm7696, %v7686, %v7689
        %v7709 = vsel %vm7699, %v7695, 1326507024
        %v7710 = vsel %vm7698, %v7692, %v7709
        %v7711 = vsel %vm7697, %v7708, %v7710
        %v7712 = vshll.u32 %v7672, 8
        %v7713 = vmul.u32.u64.compose %v7712, %v7711
        %v7714 = vextract.low.u32 %v7713
        %v7715 = vextract.high.u32 %v7713
        %v7716 = vmul.u32.u64.compose %v7712, %v7707
        %v7717 = vextract.low.u32 %v7716
        %v7718 = vextract.high.u32 %v7716
        %v7719 = vmul.u32 %v7712, %v7703
        %v7720 = vadd.s32 %v7715, %v7717
        %vm7721 = vc.u32 %v7715, %v7717
        %v7722 = vadd.s32 %v7718, 1
        %v7723 = vsel %vm7721, %v7722, %v7718
        %v7724 = vadd.s32 %v7719, %v7723
        %v7725 = vadd.s32 %v7724, 536870912
        %v7726 = vshrl.u32 %v7725, 30
        %v7727 = vshll.u32 %v7726, 30
        %v7728 = vsub.s32 %v7724, %v7727
        %vm7729 = vcmp.lt.s32.totalorder %v7728, 0
        %v7730 = vsub.s32 0, %v7728
        %v7731 = vsel %vm7729, %v7730, %v7728
        %v7732 = vclz %v7731
        %v7733 = vsub.s32 %v7732, 2
        %vm7734 = vcmp.gt.s32.totalorder 0, %v7733
        %v7735 = vsel %vm7734, 0, %v7733
        %v7736 = vsub.s32 32, %v7735
        %v7737 = vshll.u32 %v7728, %v7735
        %v7738 = vshrl.u32 %v7720, %v7736
        %v7739 = vor.u32 %v7737, %v7738
        %v7740 = vsub.s32 4294967266, %v7735
        %v7741 = vadd.s32 %v7740, 127
        %v7742 = vshll.u32 %v7741, 23
        %v7743 = vor.u32 4788187, %v7742
        %v7744 = vand.u32 2147483647, %v7743
        %v7746 = vcvt.s32.f32 %v7739
        %v7747 = vmul.f32 %v7746, %v7744
        %v7748 = vxor.u32 %v7747, 2147483648
        %v7749 = vsel %vm7666, %v7748, %v7747
        %v7750 = vsub.s32 4, %v7726
        %v7751 = vsel %vm7666, %v7750, %v7726
        %v7752 = vsel %vm7665, %v1659, %v7749
        %v7753 = vsel %vm7665, 0, %v7751
        %v7754 = vcosq.f32.pop %v7752
        %v7755 = vsinq.f32.pop %v7752
        %vm7756 = vweird.f32 %v1659
        %v7757 = vand.u32 %v7753, 3
        %vm7758 = vcmp.lt.s32.totalorder %v7757, 2
        %vm7759 = vcmp.eq.s32.totalorder %v7757, 0
        %v7760 = vxor.u32 %v7755, 2147483648
        %v7761 = vsel %vm7759, %v7754, %v7760
        %vm7762 = vcmp.eq.s32.totalorder %v7757, 2
        %v7763 = vxor.u32 %v7754, 2147483648
        %v7764 = vsel %vm7762, %v7763, %v7755
        %v7765 = vsel %vm7758, %v7761, %v7764
        %v7766 = vsel %vm7756, nan, %v7765
        %v7767 = vand.u32 2147483647, %v1660
        %vm7768 = vcmp.le.f32.partialorder %v7767, 0.7853982
        %vm7769 = vcmp.lt.s32.totalorder %v1660, 0
        %v7770 = vand.u32 %v1660, 2139095040
        %v7771 = vshrl.u32 %v7770, 23
        %v7772 = vsub.s32 %v7771, 127
        %v7773 = vand.u32 2147483647, %v1660
        %v7774 = vand.u32 %v7773, 8388607
        %v7775 = vor.u32 %v7774, 8388608
        %v7776 = vsub.s32 0, %v7775
        %v7777 = vadd.s32 %v7772, 1
        %vm7778 = vcmp.gt.s32.totalorder %v7777, 0
        %v7779 = vsel %vm7778, %v7777, 0
        %v7780 = vshrl.u32 %v7779, 5
        %v7781 = vand.u32 %v7779, 31
        %v7782 = vsub.s32 32, %v7781
        %v7783 = vshrl.u32 683565275, %v7782
        %v7784 = vshll.u32 683565275, %v7781
        %v7785 = vshrl.u32 2475754826, %v7782
        %v7786 = vor.u32 %v7784, %v7785
        %v7787 = vshll.u32 2475754826, %v7781
        %v7788 = vshrl.u32 2131351028, %v7782
        %v7789 = vor.u32 %v7787, %v7788
        %v7790 = vshll.u32 2131351028, %v7781
        %v7791 = vshrl.u32 2102212464, %v7782
        %v7792 = vor.u32 %v7790, %v7791
        %v7793 = vshll.u32 2102212464, %v7781
        %v7794 = vshrl.u32 920167782, %v7782
        %v7795 = vor.u32 %v7793, %v7794
        %v7796 = vshll.u32 920167782, %v7781
        %v7797 = vshrl.u32 1326507024, %v7782
        %v7798 = vor.u32 %v7796, %v7797
        %vm7799 = vcmp.lt.s32.totalorder %v7780, 1
        %vm7800 = vcmp.lt.s32.totalorder %v7780, 2
        %vm7801 = vcmp.lt.s32.totalorder %v7780, 3
        %vm7802 = vcmp.lt.s32.totalorder %v7780, 4
        %v7803 = vsel %vm7799, %v7783, %v7786
        %v7804 = vsel %vm7802, %v7792, 2102212464
        %v7805 = vsel %vm7801, %v7789, %v7804
        %v7806 = vsel %vm7800, %v7803, %v7805
        %v7807 = vsel %vm7799, %v7786, %v7789
        %v7808 = vsel %vm7802, %v7795, 920167782
        %v7809 = vsel %vm7801, %v7792, %v7808
        %v7810 = vsel %vm7800, %v7807, %v7809
        %v7811 = vsel %vm7799, %v7789, %v7792
        %v7812 = vsel %vm7802, %v7798, 1326507024
        %v7813 = vsel %vm7801, %v7795, %v7812
        %v7814 = vsel %vm7800, %v7811, %v7813
        %v7815 = vshll.u32 %v7775, 8
        %v7816 = vmul.u32.u64.compose %v7815, %v7814
        %v7817 = vextract.low.u32 %v7816
        %v7818 = vextract.high.u32 %v7816
        %v7819 = vmul.u32.u64.compose %v7815, %v7810
        %v7820 = vextract.low.u32 %v7819
        %v7821 = vextract.high.u32 %v7819
        %v7822 = vmul.u32 %v7815, %v7806
        %v7823 = vadd.s32 %v7818, %v7820
        %vm7824 = vc.u32 %v7818, %v7820
        %v7825 = vadd.s32 %v7821, 1
        %v7826 = vsel %vm7824, %v7825, %v7821
        %v7827 = vadd.s32 %v7822, %v7826
        %v7828 = vadd.s32 %v7827, 536870912
        %v7829 = vshrl.u32 %v7828, 30
        %v7830 = vshll.u32 %v7829, 30
        %v7831 = vsub.s32 %v7827, %v7830
        %vm7832 = vcmp.lt.s32.totalorder %v7831, 0
        %v7833 = vsub.s32 0, %v7831
        %v7834 = vsel %vm7832, %v7833, %v7831
        %v7835 = vclz %v7834
        %v7836 = vsub.s32 %v7835, 2
        %vm7837 = vcmp.gt.s32.totalorder 0, %v7836
        %v7838 = vsel %vm7837, 0, %v7836
        %v7839 = vsub.s32 32, %v7838
        %v7840 = vshll.u32 %v7831, %v7838
        %v7841 = vshrl.u32 %v7823, %v7839
        %v7842 = vor.u32 %v7840, %v7841
        %v7843 = vsub.s32 4294967266, %v7838
        %v7844 = vadd.s32 %v7843, 127
        %v7845 = vshll.u32 %v7844, 23
        %v7846 = vor.u32 4788187, %v7845
        %v7847 = vand.u32 2147483647, %v7846
        %v7849 = vcvt.s32.f32 %v7842
        %v7850 = vmul.f32 %v7849, %v7847
        %v7851 = vxor.u32 %v7850, 2147483648
        %v7852 = vsel %vm7769, %v7851, %v7850
        %v7853 = vsub.s32 4, %v7829
        %v7854 = vsel %vm7769, %v7853, %v7829
        %v7855 = vsel %vm7768, %v1660, %v7852
        %v7856 = vsel %vm7768, 0, %v7854
        %v7857 = vcosq.f32.pop %v7855
        %v7858 = vsinq.f32.pop %v7855
        %vm7859 = vweird.f32 %v1660
        %v7860 = vand.u32 %v7856, 3
        %vm7861 = vcmp.lt.s32.totalorder %v7860, 2
        %vm7862 = vcmp.eq.s32.totalorder %v7860, 0
        %v7863 = vxor.u32 %v7858, 2147483648
        %v7864 = vsel %vm7862, %v7857, %v7863
        %vm7865 = vcmp.eq.s32.totalorder %v7860, 2
        %v7866 = vxor.u32 %v7857, 2147483648
        %v7867 = vsel %vm7865, %v7866, %v7858
        %v7868 = vsel %vm7861, %v7864, %v7867
        %v7869 = vsel %vm7859, nan, %v7868
        %v7870 = vand.u32 2147483647, %v1661
        %vm7871 = vcmp.le.f32.partialorder %v7870, 0.7853982
        %vm7872 = vcmp.lt.s32.totalorder %v1661, 0
        %v7873 = vand.u32 %v1661, 2139095040
        %v7874 = vshrl.u32 %v7873, 23
        %v7875 = vsub.s32 %v7874, 127
        %v7876 = vand.u32 2147483647, %v1661
        %v7877 = vand.u32 %v7876, 8388607
        %v7878 = vor.u32 %v7877, 8388608
        %v7879 = vsub.s32 0, %v7878
        %v7880 = vadd.s32 %v7875, 1
        %vm7881 = vcmp.gt.s32.totalorder %v7880, 0
        %v7882 = vsel %vm7881, %v7880, 0
        %v7883 = vshrl.u32 %v7882, 5
        %v7884 = vand.u32 %v7882, 31
        %v7885 = vsub.s32 32, %v7884
        %v7886 = vshrl.u32 683565275, %v7885
        %v7887 = vshll.u32 683565275, %v7884
        %v7888 = vshrl.u32 2475754826, %v7885
        %v7889 = vor.u32 %v7887, %v7888
        %v7890 = vshll.u32 2475754826, %v7884
        %v7891 = vshrl.u32 2131351028, %v7885
        %v7892 = vor.u32 %v7890, %v7891
        %v7893 = vshll.u32 2131351028, %v7884
        %v7894 = vshrl.u32 2102212464, %v7885
        %v7895 = vor.u32 %v7893, %v7894
        %v7896 = vshll.u32 2102212464, %v7884
        %v7897 = vshrl.u32 920167782, %v7885
        %v7898 = vor.u32 %v7896, %v7897
        %v7899 = vshll.u32 920167782, %v7884
        %v7900 = vshrl.u32 1326507024, %v7885
        %v7901 = vor.u32 %v7899, %v7900
        %vm7902 = vcmp.lt.s32.totalorder %v7883, 1
        %vm7903 = vcmp.lt.s32.totalorder %v7883, 2
        %vm7904 = vcmp.lt.s32.totalorder %v7883, 3
        %vm7905 = vcmp.lt.s32.totalorder %v7883, 4
        %v7906 = vsel %vm7902, %v7886, %v7889
        %v7907 = vsel %vm7905, %v7895, 2102212464
        %v7908 = vsel %vm7904, %v7892, %v7907
        %v7909 = vsel %vm7903, %v7906, %v7908
        %v7910 = vsel %vm7902, %v7889, %v7892
        %v7911 = vsel %vm7905, %v7898, 920167782
        %v7912 = vsel %vm7904, %v7895, %v7911
        %v7913 = vsel %vm7903, %v7910, %v7912
        %v7914 = vsel %vm7902, %v7892, %v7895
        %v7915 = vsel %vm7905, %v7901, 1326507024
        %v7916 = vsel %vm7904, %v7898, %v7915
        %v7917 = vsel %vm7903, %v7914, %v7916
        %v7918 = vshll.u32 %v7878, 8
        %v7919 = vmul.u32.u64.compose %v7918, %v7917
        %v7920 = vextract.low.u32 %v7919
        %v7921 = vextract.high.u32 %v7919
        %v7922 = vmul.u32.u64.compose %v7918, %v7913
        %v7923 = vextract.low.u32 %v7922
        %v7924 = vextract.high.u32 %v7922
        %v7925 = vmul.u32 %v7918, %v7909
        %v7926 = vadd.s32 %v7921, %v7923
        %vm7927 = vc.u32 %v7921, %v7923
        %v7928 = vadd.s32 %v7924, 1
        %v7929 = vsel %vm7927, %v7928, %v7924
        %v7930 = vadd.s32 %v7925, %v7929
        %v7931 = vadd.s32 %v7930, 536870912
        %v7932 = vshrl.u32 %v7931, 30
        %v7933 = vshll.u32 %v7932, 30
        %v7934 = vsub.s32 %v7930, %v7933
        %vm7935 = vcmp.lt.s32.totalorder %v7934, 0
        %v7936 = vsub.s32 0, %v7934
        %v7937 = vsel %vm7935, %v7936, %v7934
        %v7938 = vclz %v7937
        %v7939 = vsub.s32 %v7938, 2
        %vm7940 = vcmp.gt.s32.totalorder 0, %v7939
        %v7941 = vsel %vm7940, 0, %v7939
        %v7942 = vsub.s32 32, %v7941
        %v7943 = vshll.u32 %v7934, %v7941
        %v7944 = vshrl.u32 %v7926, %v7942
        %v7945 = vor.u32 %v7943, %v7944
        %v7946 = vsub.s32 4294967266, %v7941
        %v7947 = vadd.s32 %v7946, 127
        %v7948 = vshll.u32 %v7947, 23
        %v7949 = vor.u32 4788187, %v7948
        %v7950 = vand.u32 2147483647, %v7949
        %v7952 = vcvt.s32.f32 %v7945
        %v7953 = vmul.f32 %v7952, %v7950
        %v7954 = vxor.u32 %v7953, 2147483648
        %v7955 = vsel %vm7872, %v7954, %v7953
        %v7956 = vsub.s32 4, %v7932
        %v7957 = vsel %vm7872, %v7956, %v7932
        %v7958 = vsel %vm7871, %v1661, %v7955
        %v7959 = vsel %vm7871, 0, %v7957
        %v7960 = vcosq.f32.pop %v7958
        %v7961 = vsinq.f32.pop %v7958
        %vm7962 = vweird.f32 %v1661
        %v7963 = vand.u32 %v7959, 3
        %vm7964 = vcmp.lt.s32.totalorder %v7963, 2
        %vm7965 = vcmp.eq.s32.totalorder %v7963, 0
        %v7966 = vxor.u32 %v7961, 2147483648
        %v7967 = vsel %vm7965, %v7960, %v7966
        %vm7968 = vcmp.eq.s32.totalorder %v7963, 2
        %v7969 = vxor.u32 %v7960, 2147483648
        %v7970 = vsel %vm7968, %v7969, %v7961
        %v7971 = vsel %vm7964, %v7967, %v7970
        %v7972 = vsel %vm7962, nan, %v7971
        %v7973 = vand.u32 2147483647, %v1662
        %vm7974 = vcmp.le.f32.partialorder %v7973, 0.7853982
        %vm7975 = vcmp.lt.s32.totalorder %v1662, 0
        %v7976 = vand.u32 %v1662, 2139095040
        %v7977 = vshrl.u32 %v7976, 23
        %v7978 = vsub.s32 %v7977, 127
        %v7979 = vand.u32 2147483647, %v1662
        %v7980 = vand.u32 %v7979, 8388607
        %v7981 = vor.u32 %v7980, 8388608
        %v7982 = vsub.s32 0, %v7981
        %v7983 = vadd.s32 %v7978, 1
        %vm7984 = vcmp.gt.s32.totalorder %v7983, 0
        %v7985 = vsel %vm7984, %v7983, 0
        %v7986 = vshrl.u32 %v7985, 5
        %v7987 = vand.u32 %v7985, 31
        %v7988 = vsub.s32 32, %v7987
        %v7989 = vshrl.u32 683565275, %v7988
        %v7990 = vshll.u32 683565275, %v7987
        %v7991 = vshrl.u32 2475754826, %v7988
        %v7992 = vor.u32 %v7990, %v7991
        %v7993 = vshll.u32 2475754826, %v7987
        %v7994 = vshrl.u32 2131351028, %v7988
        %v7995 = vor.u32 %v7993, %v7994
        %v7996 = vshll.u32 2131351028, %v7987
        %v7997 = vshrl.u32 2102212464, %v7988
        %v7998 = vor.u32 %v7996, %v7997
        %v7999 = vshll.u32 2102212464, %v7987
        %v8000 = vshrl.u32 920167782, %v7988
        %v8001 = vor.u32 %v7999, %v8000
        %v8002 = vshll.u32 920167782, %v7987
        %v8003 = vshrl.u32 1326507024, %v7988
        %v8004 = vor.u32 %v8002, %v8003
        %vm8005 = vcmp.lt.s32.totalorder %v7986, 1
        %vm8006 = vcmp.lt.s32.totalorder %v7986, 2
        %vm8007 = vcmp.lt.s32.totalorder %v7986, 3
        %vm8008 = vcmp.lt.s32.totalorder %v7986, 4
        %v8009 = vsel %vm8005, %v7989, %v7992
        %v8010 = vsel %vm8008, %v7998, 2102212464
        %v8011 = vsel %vm8007, %v7995, %v8010
        %v8012 = vsel %vm8006, %v8009, %v8011
        %v8013 = vsel %vm8005, %v7992, %v7995
        %v8014 = vsel %vm8008, %v8001, 920167782
        %v8015 = vsel %vm8007, %v7998, %v8014
        %v8016 = vsel %vm8006, %v8013, %v8015
        %v8017 = vsel %vm8005, %v7995, %v7998
        %v8018 = vsel %vm8008, %v8004, 1326507024
        %v8019 = vsel %vm8007, %v8001, %v8018
        %v8020 = vsel %vm8006, %v8017, %v8019
        %v8021 = vshll.u32 %v7981, 8
        %v8022 = vmul.u32.u64.compose %v8021, %v8020
        %v8023 = vextract.low.u32 %v8022
        %v8024 = vextract.high.u32 %v8022
        %v8025 = vmul.u32.u64.compose %v8021, %v8016
        %v8026 = vextract.low.u32 %v8025
        %v8027 = vextract.high.u32 %v8025
        %v8028 = vmul.u32 %v8021, %v8012
        %v8029 = vadd.s32 %v8024, %v8026
        %vm8030 = vc.u32 %v8024, %v8026
        %v8031 = vadd.s32 %v8027, 1
        %v8032 = vsel %vm8030, %v8031, %v8027
        %v8033 = vadd.s32 %v8028, %v8032
        %v8034 = vadd.s32 %v8033, 536870912
        %v8035 = vshrl.u32 %v8034, 30
        %v8036 = vshll.u32 %v8035, 30
        %v8037 = vsub.s32 %v8033, %v8036
        %vm8038 = vcmp.lt.s32.totalorder %v8037, 0
        %v8039 = vsub.s32 0, %v8037
        %v8040 = vsel %vm8038, %v8039, %v8037
        %v8041 = vclz %v8040
        %v8042 = vsub.s32 %v8041, 2
        %vm8043 = vcmp.gt.s32.totalorder 0, %v8042
        %v8044 = vsel %vm8043, 0, %v8042
        %v8045 = vsub.s32 32, %v8044
        %v8046 = vshll.u32 %v8037, %v8044
        %v8047 = vshrl.u32 %v8029, %v8045
        %v8048 = vor.u32 %v8046, %v8047
        %v8049 = vsub.s32 4294967266, %v8044
        %v8050 = vadd.s32 %v8049, 127
        %v8051 = vshll.u32 %v8050, 23
        %v8052 = vor.u32 4788187, %v8051
        %v8053 = vand.u32 2147483647, %v8052
        %v8055 = vcvt.s32.f32 %v8048
        %v8056 = vmul.f32 %v8055, %v8053
        %v8057 = vxor.u32 %v8056, 2147483648
        %v8058 = vsel %vm7975, %v8057, %v8056
        %v8059 = vsub.s32 4, %v8035
        %v8060 = vsel %vm7975, %v8059, %v8035
        %v8061 = vsel %vm7974, %v1662, %v8058
        %v8062 = vsel %vm7974, 0, %v8060
        %v8063 = vcosq.f32.pop %v8061
        %v8064 = vsinq.f32.pop %v8061
        %vm8065 = vweird.f32 %v1662
        %v8066 = vand.u32 %v8062, 3
        %vm8067 = vcmp.lt.s32.totalorder %v8066, 2
        %vm8068 = vcmp.eq.s32.totalorder %v8066, 0
        %v8069 = vxor.u32 %v8064, 2147483648
        %v8070 = vsel %vm8068, %v8063, %v8069
        %vm8071 = vcmp.eq.s32.totalorder %v8066, 2
        %v8072 = vxor.u32 %v8063, 2147483648
        %v8073 = vsel %vm8071, %v8072, %v8064
        %v8074 = vsel %vm8067, %v8070, %v8073
        %v8075 = vsel %vm8065, nan, %v8074
        %v8076 = vand.u32 2147483647, %v1663
        %vm8077 = vcmp.le.f32.partialorder %v8076, 0.7853982
        %vm8078 = vcmp.lt.s32.totalorder %v1663, 0
        %v8079 = vand.u32 %v1663, 2139095040
        %v8080 = vshrl.u32 %v8079, 23
        %v8081 = vsub.s32 %v8080, 127
        %v8082 = vand.u32 2147483647, %v1663
        %v8083 = vand.u32 %v8082, 8388607
        %v8084 = vor.u32 %v8083, 8388608
        %v8085 = vsub.s32 0, %v8084
        %v8086 = vadd.s32 %v8081, 1
        %vm8087 = vcmp.gt.s32.totalorder %v8086, 0
        %v8088 = vsel %vm8087, %v8086, 0
        %v8089 = vshrl.u32 %v8088, 5
        %v8090 = vand.u32 %v8088, 31
        %v8091 = vsub.s32 32, %v8090
        %v8092 = vshrl.u32 683565275, %v8091
        %v8093 = vshll.u32 683565275, %v8090
        %v8094 = vshrl.u32 2475754826, %v8091
        %v8095 = vor.u32 %v8093, %v8094
        %v8096 = vshll.u32 2475754826, %v8090
        %v8097 = vshrl.u32 2131351028, %v8091
        %v8098 = vor.u32 %v8096, %v8097
        %v8099 = vshll.u32 2131351028, %v8090
        %v8100 = vshrl.u32 2102212464, %v8091
        %v8101 = vor.u32 %v8099, %v8100
        %v8102 = vshll.u32 2102212464, %v8090
        %v8103 = vshrl.u32 920167782, %v8091
        %v8104 = vor.u32 %v8102, %v8103
        %v8105 = vshll.u32 920167782, %v8090
        %v8106 = vshrl.u32 1326507024, %v8091
        %v8107 = vor.u32 %v8105, %v8106
        %vm8108 = vcmp.lt.s32.totalorder %v8089, 1
        %vm8109 = vcmp.lt.s32.totalorder %v8089, 2
        %vm8110 = vcmp.lt.s32.totalorder %v8089, 3
        %vm8111 = vcmp.lt.s32.totalorder %v8089, 4
        %v8112 = vsel %vm8108, %v8092, %v8095
        %v8113 = vsel %vm8111, %v8101, 2102212464
        %v8114 = vsel %vm8110, %v8098, %v8113
        %v8115 = vsel %vm8109, %v8112, %v8114
        %v8116 = vsel %vm8108, %v8095, %v8098
        %v8117 = vsel %vm8111, %v8104, 920167782
        %v8118 = vsel %vm8110, %v8101, %v8117
        %v8119 = vsel %vm8109, %v8116, %v8118
        %v8120 = vsel %vm8108, %v8098, %v8101
        %v8121 = vsel %vm8111, %v8107, 1326507024
        %v8122 = vsel %vm8110, %v8104, %v8121
        %v8123 = vsel %vm8109, %v8120, %v8122
        %v8124 = vshll.u32 %v8084, 8
        %v8125 = vmul.u32.u64.compose %v8124, %v8123
        %v8126 = vextract.low.u32 %v8125
        %v8127 = vextract.high.u32 %v8125
        %v8128 = vmul.u32.u64.compose %v8124, %v8119
        %v8129 = vextract.low.u32 %v8128
        %v8130 = vextract.high.u32 %v8128
        %v8131 = vmul.u32 %v8124, %v8115
        %v8132 = vadd.s32 %v8127, %v8129
        %vm8133 = vc.u32 %v8127, %v8129
        %v8134 = vadd.s32 %v8130, 1
        %v8135 = vsel %vm8133, %v8134, %v8130
        %v8136 = vadd.s32 %v8131, %v8135
        %v8137 = vadd.s32 %v8136, 536870912
        %v8138 = vshrl.u32 %v8137, 30
        %v8139 = vshll.u32 %v8138, 30
        %v8140 = vsub.s32 %v8136, %v8139
        %vm8141 = vcmp.lt.s32.totalorder %v8140, 0
        %v8142 = vsub.s32 0, %v8140
        %v8143 = vsel %vm8141, %v8142, %v8140
        %v8144 = vclz %v8143
        %v8145 = vsub.s32 %v8144, 2
        %vm8146 = vcmp.gt.s32.totalorder 0, %v8145
        %v8147 = vsel %vm8146, 0, %v8145
        %v8148 = vsub.s32 32, %v8147
        %v8149 = vshll.u32 %v8140, %v8147
        %v8150 = vshrl.u32 %v8132, %v8148
        %v8151 = vor.u32 %v8149, %v8150
        %v8152 = vsub.s32 4294967266, %v8147
        %v8153 = vadd.s32 %v8152, 127
        %v8154 = vshll.u32 %v8153, 23
        %v8155 = vor.u32 4788187, %v8154
        %v8156 = vand.u32 2147483647, %v8155
        %v8158 = vcvt.s32.f32 %v8151
        %v8159 = vmul.f32 %v8158, %v8156
        %v8160 = vxor.u32 %v8159, 2147483648
        %v8161 = vsel %vm8078, %v8160, %v8159
        %v8162 = vsub.s32 4, %v8138
        %v8163 = vsel %vm8078, %v8162, %v8138
        %v8164 = vsel %vm8077, %v1663, %v8161
        %v8165 = vsel %vm8077, 0, %v8163
        %v8166 = vcosq.f32.pop %v8164
        %v8167 = vsinq.f32.pop %v8164
        %vm8168 = vweird.f32 %v1663
        %v8169 = vand.u32 %v8165, 3
        %vm8170 = vcmp.lt.s32.totalorder %v8169, 2
        %vm8171 = vcmp.eq.s32.totalorder %v8169, 0
        %v8172 = vxor.u32 %v8167, 2147483648
        %v8173 = vsel %vm8171, %v8166, %v8172
        %vm8174 = vcmp.eq.s32.totalorder %v8169, 2
        %v8175 = vxor.u32 %v8166, 2147483648
        %v8176 = vsel %vm8174, %v8175, %v8167
        %v8177 = vsel %vm8170, %v8173, %v8176
        %v8178 = vsel %vm8168, nan, %v8177
        %v8179 = vand.u32 2147483647, %v1664
        %vm8180 = vcmp.le.f32.partialorder %v8179, 0.7853982
        %vm8181 = vcmp.lt.s32.totalorder %v1664, 0
        %v8182 = vand.u32 %v1664, 2139095040
        %v8183 = vshrl.u32 %v8182, 23
        %v8184 = vsub.s32 %v8183, 127
        %v8185 = vand.u32 2147483647, %v1664
        %v8186 = vand.u32 %v8185, 8388607
        %v8187 = vor.u32 %v8186, 8388608
        %v8188 = vsub.s32 0, %v8187
        %v8189 = vadd.s32 %v8184, 1
        %vm8190 = vcmp.gt.s32.totalorder %v8189, 0
        %v8191 = vsel %vm8190, %v8189, 0
        %v8192 = vshrl.u32 %v8191, 5
        %v8193 = vand.u32 %v8191, 31
        %v8194 = vsub.s32 32, %v8193
        %v8195 = vshrl.u32 683565275, %v8194
        %v8196 = vshll.u32 683565275, %v8193
        %v8197 = vshrl.u32 2475754826, %v8194
        %v8198 = vor.u32 %v8196, %v8197
        %v8199 = vshll.u32 2475754826, %v8193
        %v8200 = vshrl.u32 2131351028, %v8194
        %v8201 = vor.u32 %v8199, %v8200
        %v8202 = vshll.u32 2131351028, %v8193
        %v8203 = vshrl.u32 2102212464, %v8194
        %v8204 = vor.u32 %v8202, %v8203
        %v8205 = vshll.u32 2102212464, %v8193
        %v8206 = vshrl.u32 920167782, %v8194
        %v8207 = vor.u32 %v8205, %v8206
        %v8208 = vshll.u32 920167782, %v8193
        %v8209 = vshrl.u32 1326507024, %v8194
        %v8210 = vor.u32 %v8208, %v8209
        %vm8211 = vcmp.lt.s32.totalorder %v8192, 1
        %vm8212 = vcmp.lt.s32.totalorder %v8192, 2
        %vm8213 = vcmp.lt.s32.totalorder %v8192, 3
        %vm8214 = vcmp.lt.s32.totalorder %v8192, 4
        %v8215 = vsel %vm8211, %v8195, %v8198
        %v8216 = vsel %vm8214, %v8204, 2102212464
        %v8217 = vsel %vm8213, %v8201, %v8216
        %v8218 = vsel %vm8212, %v8215, %v8217
        %v8219 = vsel %vm8211, %v8198, %v8201
        %v8220 = vsel %vm8214, %v8207, 920167782
        %v8221 = vsel %vm8213, %v8204, %v8220
        %v8222 = vsel %vm8212, %v8219, %v8221
        %v8223 = vsel %vm8211, %v8201, %v8204
        %v8224 = vsel %vm8214, %v8210, 1326507024
        %v8225 = vsel %vm8213, %v8207, %v8224
        %v8226 = vsel %vm8212, %v8223, %v8225
        %v8227 = vshll.u32 %v8187, 8
        %v8228 = vmul.u32.u64.compose %v8227, %v8226
        %v8229 = vextract.low.u32 %v8228
        %v8230 = vextract.high.u32 %v8228
        %v8231 = vmul.u32.u64.compose %v8227, %v8222
        %v8232 = vextract.low.u32 %v8231
        %v8233 = vextract.high.u32 %v8231
        %v8234 = vmul.u32 %v8227, %v8218
        %v8235 = vadd.s32 %v8230, %v8232
        %vm8236 = vc.u32 %v8230, %v8232
        %v8237 = vadd.s32 %v8233, 1
        %v8238 = vsel %vm8236, %v8237, %v8233
        %v8239 = vadd.s32 %v8234, %v8238
        %v8240 = vadd.s32 %v8239, 536870912
        %v8241 = vshrl.u32 %v8240, 30
        %v8242 = vshll.u32 %v8241, 30
        %v8243 = vsub.s32 %v8239, %v8242
        %vm8244 = vcmp.lt.s32.totalorder %v8243, 0
        %v8245 = vsub.s32 0, %v8243
        %v8246 = vsel %vm8244, %v8245, %v8243
        %v8247 = vclz %v8246
        %v8248 = vsub.s32 %v8247, 2
        %vm8249 = vcmp.gt.s32.totalorder 0, %v8248
        %v8250 = vsel %vm8249, 0, %v8248
        %v8251 = vsub.s32 32, %v8250
        %v8252 = vshll.u32 %v8243, %v8250
        %v8253 = vshrl.u32 %v8235, %v8251
        %v8254 = vor.u32 %v8252, %v8253
        %v8255 = vsub.s32 4294967266, %v8250
        %v8256 = vadd.s32 %v8255, 127
        %v8257 = vshll.u32 %v8256, 23
        %v8258 = vor.u32 4788187, %v8257
        %v8259 = vand.u32 2147483647, %v8258
        %v8261 = vcvt.s32.f32 %v8254
        %v8262 = vmul.f32 %v8261, %v8259
        %v8263 = vxor.u32 %v8262, 2147483648
        %v8264 = vsel %vm8181, %v8263, %v8262
        %v8265 = vsub.s32 4, %v8241
        %v8266 = vsel %vm8181, %v8265, %v8241
        %v8267 = vsel %vm8180, %v1664, %v8264
        %v8268 = vsel %vm8180, 0, %v8266
        %v8269 = vcosq.f32.pop %v8267
        %v8270 = vsinq.f32.pop %v8267
        %vm8271 = vweird.f32 %v1664
        %v8272 = vand.u32 %v8268, 3
        %vm8273 = vcmp.lt.s32.totalorder %v8272, 2
        %vm8274 = vcmp.eq.s32.totalorder %v8272, 0
        %v8275 = vxor.u32 %v8270, 2147483648
        %v8276 = vsel %vm8274, %v8269, %v8275
        %vm8277 = vcmp.eq.s32.totalorder %v8272, 2
        %v8278 = vxor.u32 %v8269, 2147483648
        %v8279 = vsel %vm8277, %v8278, %v8270
        %v8280 = vsel %vm8273, %v8276, %v8279
        %v8281 = vsel %vm8271, nan, %v8280
        %v8282 = vand.u32 2147483647, %v1665
        %vm8283 = vcmp.le.f32.partialorder %v8282, 0.7853982
        %vm8284 = vcmp.lt.s32.totalorder %v1665, 0
        %v8285 = vand.u32 %v1665, 2139095040
        %v8286 = vshrl.u32 %v8285, 23
        %v8287 = vsub.s32 %v8286, 127
        %v8288 = vand.u32 2147483647, %v1665
        %v8289 = vand.u32 %v8288, 8388607
        %v8290 = vor.u32 %v8289, 8388608
        %v8291 = vsub.s32 0, %v8290
        %v8292 = vadd.s32 %v8287, 1
        %vm8293 = vcmp.gt.s32.totalorder %v8292, 0
        %v8294 = vsel %vm8293, %v8292, 0
        %v8295 = vshrl.u32 %v8294, 5
        %v8296 = vand.u32 %v8294, 31
        %v8297 = vsub.s32 32, %v8296
        %v8298 = vshrl.u32 683565275, %v8297
        %v8299 = vshll.u32 683565275, %v8296
        %v8300 = vshrl.u32 2475754826, %v8297
        %v8301 = vor.u32 %v8299, %v8300
        %v8302 = vshll.u32 2475754826, %v8296
        %v8303 = vshrl.u32 2131351028, %v8297
        %v8304 = vor.u32 %v8302, %v8303
        %v8305 = vshll.u32 2131351028, %v8296
        %v8306 = vshrl.u32 2102212464, %v8297
        %v8307 = vor.u32 %v8305, %v8306
        %v8308 = vshll.u32 2102212464, %v8296
        %v8309 = vshrl.u32 920167782, %v8297
        %v8310 = vor.u32 %v8308, %v8309
        %v8311 = vshll.u32 920167782, %v8296
        %v8312 = vshrl.u32 1326507024, %v8297
        %v8313 = vor.u32 %v8311, %v8312
        %vm8314 = vcmp.lt.s32.totalorder %v8295, 1
        %vm8315 = vcmp.lt.s32.totalorder %v8295, 2
        %vm8316 = vcmp.lt.s32.totalorder %v8295, 3
        %vm8317 = vcmp.lt.s32.totalorder %v8295, 4
        %v8318 = vsel %vm8314, %v8298, %v8301
        %v8319 = vsel %vm8317, %v8307, 2102212464
        %v8320 = vsel %vm8316, %v8304, %v8319
        %v8321 = vsel %vm8315, %v8318, %v8320
        %v8322 = vsel %vm8314, %v8301, %v8304
        %v8323 = vsel %vm8317, %v8310, 920167782
        %v8324 = vsel %vm8316, %v8307, %v8323
        %v8325 = vsel %vm8315, %v8322, %v8324
        %v8326 = vsel %vm8314, %v8304, %v8307
        %v8327 = vsel %vm8317, %v8313, 1326507024
        %v8328 = vsel %vm8316, %v8310, %v8327
        %v8329 = vsel %vm8315, %v8326, %v8328
        %v8330 = vshll.u32 %v8290, 8
        %v8331 = vmul.u32.u64.compose %v8330, %v8329
        %v8332 = vextract.low.u32 %v8331
        %v8333 = vextract.high.u32 %v8331
        %v8334 = vmul.u32.u64.compose %v8330, %v8325
        %v8335 = vextract.low.u32 %v8334
        %v8336 = vextract.high.u32 %v8334
        %v8337 = vmul.u32 %v8330, %v8321
        %v8338 = vadd.s32 %v8333, %v8335
        %vm8339 = vc.u32 %v8333, %v8335
        %v8340 = vadd.s32 %v8336, 1
        %v8341 = vsel %vm8339, %v8340, %v8336
        %v8342 = vadd.s32 %v8337, %v8341
        %v8343 = vadd.s32 %v8342, 536870912
        %v8344 = vshrl.u32 %v8343, 30
        %v8345 = vshll.u32 %v8344, 30
        %v8346 = vsub.s32 %v8342, %v8345
        %vm8347 = vcmp.lt.s32.totalorder %v8346, 0
        %v8348 = vsub.s32 0, %v8346
        %v8349 = vsel %vm8347, %v8348, %v8346
        %v8350 = vclz %v8349
        %v8351 = vsub.s32 %v8350, 2
        %vm8352 = vcmp.gt.s32.totalorder 0, %v8351
        %v8353 = vsel %vm8352, 0, %v8351
        %v8354 = vsub.s32 32, %v8353
        %v8355 = vshll.u32 %v8346, %v8353
        %v8356 = vshrl.u32 %v8338, %v8354
        %v8357 = vor.u32 %v8355, %v8356
        %v8358 = vsub.s32 4294967266, %v8353
        %v8359 = vadd.s32 %v8358, 127
        %v8360 = vshll.u32 %v8359, 23
        %v8361 = vor.u32 4788187, %v8360
        %v8362 = vand.u32 2147483647, %v8361
        %v8364 = vcvt.s32.f32 %v8357
        %v8365 = vmul.f32 %v8364, %v8362
        %v8366 = vxor.u32 %v8365, 2147483648
        %v8367 = vsel %vm8284, %v8366, %v8365
        %v8368 = vsub.s32 4, %v8344
        %v8369 = vsel %vm8284, %v8368, %v8344
        %v8370 = vsel %vm8283, %v1665, %v8367
        %v8371 = vsel %vm8283, 0, %v8369
        %v8372 = vcosq.f32.pop %v8370
        %v8373 = vsinq.f32.pop %v8370
        %vm8374 = vweird.f32 %v1665
        %v8375 = vand.u32 %v8371, 3
        %vm8376 = vcmp.lt.s32.totalorder %v8375, 2
        %vm8377 = vcmp.eq.s32.totalorder %v8375, 0
        %v8378 = vxor.u32 %v8373, 2147483648
        %v8379 = vsel %vm8377, %v8372, %v8378
        %vm8380 = vcmp.eq.s32.totalorder %v8375, 2
        %v8381 = vxor.u32 %v8372, 2147483648
        %v8382 = vsel %vm8380, %v8381, %v8373
        %v8383 = vsel %vm8376, %v8379, %v8382
        %v8384 = vsel %vm8374, nan, %v8383
        %v8385 = vand.u32 2147483647, %v1666
        %vm8386 = vcmp.le.f32.partialorder %v8385, 0.7853982
        %vm8387 = vcmp.lt.s32.totalorder %v1666, 0
        %v8388 = vand.u32 %v1666, 2139095040
        %v8389 = vshrl.u32 %v8388, 23
        %v8390 = vsub.s32 %v8389, 127
        %v8391 = vand.u32 2147483647, %v1666
        %v8392 = vand.u32 %v8391, 8388607
        %v8393 = vor.u32 %v8392, 8388608
        %v8394 = vsub.s32 0, %v8393
        %v8395 = vadd.s32 %v8390, 1
        %vm8396 = vcmp.gt.s32.totalorder %v8395, 0
        %v8397 = vsel %vm8396, %v8395, 0
        %v8398 = vshrl.u32 %v8397, 5
        %v8399 = vand.u32 %v8397, 31
        %v8400 = vsub.s32 32, %v8399
        %v8401 = vshrl.u32 683565275, %v8400
        %v8402 = vshll.u32 683565275, %v8399
        %v8403 = vshrl.u32 2475754826, %v8400
        %v8404 = vor.u32 %v8402, %v8403
        %v8405 = vshll.u32 2475754826, %v8399
        %v8406 = vshrl.u32 2131351028, %v8400
        %v8407 = vor.u32 %v8405, %v8406
        %v8408 = vshll.u32 2131351028, %v8399
        %v8409 = vshrl.u32 2102212464, %v8400
        %v8410 = vor.u32 %v8408, %v8409
        %v8411 = vshll.u32 2102212464, %v8399
        %v8412 = vshrl.u32 920167782, %v8400
        %v8413 = vor.u32 %v8411, %v8412
        %v8414 = vshll.u32 920167782, %v8399
        %v8415 = vshrl.u32 1326507024, %v8400
        %v8416 = vor.u32 %v8414, %v8415
        %vm8417 = vcmp.lt.s32.totalorder %v8398, 1
        %vm8418 = vcmp.lt.s32.totalorder %v8398, 2
        %vm8419 = vcmp.lt.s32.totalorder %v8398, 3
        %vm8420 = vcmp.lt.s32.totalorder %v8398, 4
        %v8421 = vsel %vm8417, %v8401, %v8404
        %v8422 = vsel %vm8420, %v8410, 2102212464
        %v8423 = vsel %vm8419, %v8407, %v8422
        %v8424 = vsel %vm8418, %v8421, %v8423
        %v8425 = vsel %vm8417, %v8404, %v8407
        %v8426 = vsel %vm8420, %v8413, 920167782
        %v8427 = vsel %vm8419, %v8410, %v8426
        %v8428 = vsel %vm8418, %v8425, %v8427
        %v8429 = vsel %vm8417, %v8407, %v8410
        %v8430 = vsel %vm8420, %v8416, 1326507024
        %v8431 = vsel %vm8419, %v8413, %v8430
        %v8432 = vsel %vm8418, %v8429, %v8431
        %v8433 = vshll.u32 %v8393, 8
        %v8434 = vmul.u32.u64.compose %v8433, %v8432
        %v8435 = vextract.low.u32 %v8434
        %v8436 = vextract.high.u32 %v8434
        %v8437 = vmul.u32.u64.compose %v8433, %v8428
        %v8438 = vextract.low.u32 %v8437
        %v8439 = vextract.high.u32 %v8437
        %v8440 = vmul.u32 %v8433, %v8424
        %v8441 = vadd.s32 %v8436, %v8438
        %vm8442 = vc.u32 %v8436, %v8438
        %v8443 = vadd.s32 %v8439, 1
        %v8444 = vsel %vm8442, %v8443, %v8439
        %v8445 = vadd.s32 %v8440, %v8444
        %v8446 = vadd.s32 %v8445, 536870912
        %v8447 = vshrl.u32 %v8446, 30
        %v8448 = vshll.u32 %v8447, 30
        %v8449 = vsub.s32 %v8445, %v8448
        %vm8450 = vcmp.lt.s32.totalorder %v8449, 0
        %v8451 = vsub.s32 0, %v8449
        %v8452 = vsel %vm8450, %v8451, %v8449
        %v8453 = vclz %v8452
        %v8454 = vsub.s32 %v8453, 2
        %vm8455 = vcmp.gt.s32.totalorder 0, %v8454
        %v8456 = vsel %vm8455, 0, %v8454
        %v8457 = vsub.s32 32, %v8456
        %v8458 = vshll.u32 %v8449, %v8456
        %v8459 = vshrl.u32 %v8441, %v8457
        %v8460 = vor.u32 %v8458, %v8459
        %v8461 = vsub.s32 4294967266, %v8456
        %v8462 = vadd.s32 %v8461, 127
        %v8463 = vshll.u32 %v8462, 23
        %v8464 = vor.u32 4788187, %v8463
        %v8465 = vand.u32 2147483647, %v8464
        %v8467 = vcvt.s32.f32 %v8460
        %v8468 = vmul.f32 %v8467, %v8465
        %v8469 = vxor.u32 %v8468, 2147483648
        %v8470 = vsel %vm8387, %v8469, %v8468
        %v8471 = vsub.s32 4, %v8447
        %v8472 = vsel %vm8387, %v8471, %v8447
        %v8473 = vsel %vm8386, %v1666, %v8470
        %v8474 = vsel %vm8386, 0, %v8472
        %v8475 = vcosq.f32.pop %v8473
        %v8476 = vsinq.f32.pop %v8473
        %vm8477 = vweird.f32 %v1666
        %v8478 = vand.u32 %v8474, 3
        %vm8479 = vcmp.lt.s32.totalorder %v8478, 2
        %vm8480 = vcmp.eq.s32.totalorder %v8478, 0
        %v8481 = vxor.u32 %v8476, 2147483648
        %v8482 = vsel %vm8480, %v8475, %v8481
        %vm8483 = vcmp.eq.s32.totalorder %v8478, 2
        %v8484 = vxor.u32 %v8475, 2147483648
        %v8485 = vsel %vm8483, %v8484, %v8476
        %v8486 = vsel %vm8479, %v8482, %v8485
        %v8487 = vsel %vm8477, nan, %v8486
        %v8488 = vand.u32 2147483647, %v1667
        %vm8489 = vcmp.le.f32.partialorder %v8488, 0.7853982
        %vm8490 = vcmp.lt.s32.totalorder %v1667, 0
        %v8491 = vand.u32 %v1667, 2139095040
        %v8492 = vshrl.u32 %v8491, 23
        %v8493 = vsub.s32 %v8492, 127
        %v8494 = vand.u32 2147483647, %v1667
        %v8495 = vand.u32 %v8494, 8388607
        %v8496 = vor.u32 %v8495, 8388608
        %v8497 = vsub.s32 0, %v8496
        %v8498 = vadd.s32 %v8493, 1
        %vm8499 = vcmp.gt.s32.totalorder %v8498, 0
        %v8500 = vsel %vm8499, %v8498, 0
        %v8501 = vshrl.u32 %v8500, 5
        %v8502 = vand.u32 %v8500, 31
        %v8503 = vsub.s32 32, %v8502
        %v8504 = vshrl.u32 683565275, %v8503
        %v8505 = vshll.u32 683565275, %v8502
        %v8506 = vshrl.u32 2475754826, %v8503
        %v8507 = vor.u32 %v8505, %v8506
        %v8508 = vshll.u32 2475754826, %v8502
        %v8509 = vshrl.u32 2131351028, %v8503
        %v8510 = vor.u32 %v8508, %v8509
        %v8511 = vshll.u32 2131351028, %v8502
        %v8512 = vshrl.u32 2102212464, %v8503
        %v8513 = vor.u32 %v8511, %v8512
        %v8514 = vshll.u32 2102212464, %v8502
        %v8515 = vshrl.u32 920167782, %v8503
        %v8516 = vor.u32 %v8514, %v8515
        %v8517 = vshll.u32 920167782, %v8502
        %v8518 = vshrl.u32 1326507024, %v8503
        %v8519 = vor.u32 %v8517, %v8518
        %vm8520 = vcmp.lt.s32.totalorder %v8501, 1
        %vm8521 = vcmp.lt.s32.totalorder %v8501, 2
        %vm8522 = vcmp.lt.s32.totalorder %v8501, 3
        %vm8523 = vcmp.lt.s32.totalorder %v8501, 4
        %v8524 = vsel %vm8520, %v8504, %v8507
        %v8525 = vsel %vm8523, %v8513, 2102212464
        %v8526 = vsel %vm8522, %v8510, %v8525
        %v8527 = vsel %vm8521, %v8524, %v8526
        %v8528 = vsel %vm8520, %v8507, %v8510
        %v8529 = vsel %vm8523, %v8516, 920167782
        %v8530 = vsel %vm8522, %v8513, %v8529
        %v8531 = vsel %vm8521, %v8528, %v8530
        %v8532 = vsel %vm8520, %v8510, %v8513
        %v8533 = vsel %vm8523, %v8519, 1326507024
        %v8534 = vsel %vm8522, %v8516, %v8533
        %v8535 = vsel %vm8521, %v8532, %v8534
        %v8536 = vshll.u32 %v8496, 8
        %v8537 = vmul.u32.u64.compose %v8536, %v8535
        %v8538 = vextract.low.u32 %v8537
        %v8539 = vextract.high.u32 %v8537
        %v8540 = vmul.u32.u64.compose %v8536, %v8531
        %v8541 = vextract.low.u32 %v8540
        %v8542 = vextract.high.u32 %v8540
        %v8543 = vmul.u32 %v8536, %v8527
        %v8544 = vadd.s32 %v8539, %v8541
        %vm8545 = vc.u32 %v8539, %v8541
        %v8546 = vadd.s32 %v8542, 1
        %v8547 = vsel %vm8545, %v8546, %v8542
        %v8548 = vadd.s32 %v8543, %v8547
        %v8549 = vadd.s32 %v8548, 536870912
        %v8550 = vshrl.u32 %v8549, 30
        %v8551 = vshll.u32 %v8550, 30
        %v8552 = vsub.s32 %v8548, %v8551
        %vm8553 = vcmp.lt.s32.totalorder %v8552, 0
        %v8554 = vsub.s32 0, %v8552
        %v8555 = vsel %vm8553, %v8554, %v8552
        %v8556 = vclz %v8555
        %v8557 = vsub.s32 %v8556, 2
        %vm8558 = vcmp.gt.s32.totalorder 0, %v8557
        %v8559 = vsel %vm8558, 0, %v8557
        %v8560 = vsub.s32 32, %v8559
        %v8561 = vshll.u32 %v8552, %v8559
        %v8562 = vshrl.u32 %v8544, %v8560
        %v8563 = vor.u32 %v8561, %v8562
        %v8564 = vsub.s32 4294967266, %v8559
        %v8565 = vadd.s32 %v8564, 127
        %v8566 = vshll.u32 %v8565, 23
        %v8567 = vor.u32 4788187, %v8566
        %v8568 = vand.u32 2147483647, %v8567
        %v8570 = vcvt.s32.f32 %v8563
        %v8571 = vmul.f32 %v8570, %v8568
        %v8572 = vxor.u32 %v8571, 2147483648
        %v8573 = vsel %vm8490, %v8572, %v8571
        %v8574 = vsub.s32 4, %v8550
        %v8575 = vsel %vm8490, %v8574, %v8550
        %v8576 = vsel %vm8489, %v1667, %v8573
        %v8577 = vsel %vm8489, 0, %v8575
        %v8578 = vcosq.f32.pop %v8576
        %v8579 = vsinq.f32.pop %v8576
        %vm8580 = vweird.f32 %v1667
        %v8581 = vand.u32 %v8577, 3
        %vm8582 = vcmp.lt.s32.totalorder %v8581, 2
        %vm8583 = vcmp.eq.s32.totalorder %v8581, 0
        %v8584 = vxor.u32 %v8579, 2147483648
        %v8585 = vsel %vm8583, %v8578, %v8584
        %vm8586 = vcmp.eq.s32.totalorder %v8581, 2
        %v8587 = vxor.u32 %v8578, 2147483648
        %v8588 = vsel %vm8586, %v8587, %v8579
        %v8589 = vsel %vm8582, %v8585, %v8588
        %v8590 = vsel %vm8580, nan, %v8589
        %v8591 = vmul.f32 %v1935, 1.442695
        %v8592 = vpow.pop %v8591
        %v8593 = vmul.f32 %v1936, 1.442695
        %v8594 = vpow.pop %v8593
        %v8595 = vmul.f32 %v1937, 1.442695
        %v8596 = vpow.pop %v8595
        %v8597 = vmul.f32 %v1938, 1.442695
        %v8598 = vpow.pop %v8597
        %v8599 = vmul.f32 %v1939, 1.442695
        %v8600 = vpow.pop %v8599
        %v8601 = vmul.f32 %v1940, 1.442695
        %v8602 = vpow.pop %v8601
        %v8603 = vmul.f32 %v1941, 1.442695
        %v8604 = vpow.pop %v8603
        %v8605 = vmul.f32 %v1942, 1.442695
        %v8606 = vpow.pop %v8605
        %v8607 = vmul.f32 %v1943, 1.442695
        %v8608 = vpow.pop %v8607
        %v8609 = vmul.f32 %v1944, 1.442695
        %v8610 = vpow.pop %v8609
        %v8611 = vmul.f32 %v1945, 1.442695
        %v8612 = vpow.pop %v8611
        %v8613 = vmul.f32 %v1946, 1.442695
        %v8614 = vpow.pop %v8613
        %v8615 = vmul.f32 %v1947, 1.442695
        %v8616 = vpow.pop %v8615
        %v8617 = vmul.f32 %v1948, 1.442695
        %v8618 = vpow.pop %v8617
        %v8619 = vmul.f32 %v1949, 1.442695
        %v8620 = vpow.pop %v8619
        %v8621 = vmul.f32 %v1950, 1.442695
        %v8622 = vpow.pop %v8621
        %v8623 = vmul.f32 %v1951, 1.442695
        %v8624 = vpow.pop %v8623
        %v8625 = vmul.f32 %v1952, 1.442695
        %v8626 = vpow.pop %v8625
        %v8627 = vmul.f32 %v1953, 1.442695
        %v8628 = vpow.pop %v8627
        %v8629 = vmul.f32 %v1954, 1.442695
        %v8630 = vpow.pop %v8629
        %v8631 = vmul.f32 %v1955, 1.442695
        %v8632 = vpow.pop %v8631
        %v8633 = vmul.f32 %v1956, 1.442695
        %v8634 = vpow.pop %v8633
        %v8635 = vmul.f32 %v1957, 1.442695
        %v8636 = vpow.pop %v8635
        %v8637 = vmul.f32 %v1958, 1.442695
        %v8638 = vpow.pop %v8637
        %v8639 = vmul.f32 %v1959, 1.442695
        %v8640 = vpow.pop %v8639
        %v8641 = vmul.f32 %v1960, 1.442695
        %v8642 = vpow.pop %v8641
        %v8643 = vmul.f32 %v1961, 1.442695
        %v8644 = vpow.pop %v8643
        %v8645 = vmul.f32 %v1962, 1.442695
        %v8646 = vpow.pop %v8645
        %v8647 = vmul.f32 %v1963, 1.442695
        %v8648 = vpow.pop %v8647
        %v8649 = vmul.f32 %v1964, 1.442695
        %v8650 = vpow.pop %v8649
        %v8651 = vmul.f32 %v1965, 1.442695
        %v8652 = vpow.pop %v8651
        %v8653 = vmul.f32 %v1966, 1.442695
        %v8654 = vpow.pop %v8653
        %v8655 = vmul.f32 %v1967, 1.442695
        %v8656 = vpow.pop %v8655
        %v8657 = vmul.f32 %v1968, 1.442695
        %v8658 = vpow.pop %v8657
        %v8659 = vmul.f32 %v1969, 1.442695
        %v8660 = vpow.pop %v8659
        %v8661 = vmul.f32 %v1970, 1.442695
        %v8662 = vpow.pop %v8661
        %v8663 = vmul.f32 %v1971, 1.442695
        %v8664 = vpow.pop %v8663
        %v8665 = vmul.f32 %v1972, 1.442695
        %v8666 = vpow.pop %v8665
        %v8667 = vmul.f32 %v1973, 1.442695
        %v8668 = vpow.pop %v8667
        %v8669 = vmul.f32 %v1974, 1.442695
        %v8670 = vpow.pop %v8669
        %v8671 = vmul.f32 %v1975, 1.442695
        %v8672 = vpow.pop %v8671
        %v8673 = vmul.f32 %v1976, 1.442695
        %v8674 = vpow.pop %v8673
        %v8675 = vmul.f32 %v1977, 1.442695
        %v8676 = vpow.pop %v8675
        %v8677 = vmul.f32 %v1978, 1.442695
        %v8678 = vpow.pop %v8677
        %v8679 = vmul.f32 %v1979, 1.442695
        %v8680 = vpow.pop %v8679
        %v8681 = vmul.f32 %v1980, 1.442695
        %v8682 = vpow.pop %v8681
        %v8683 = vmul.f32 %v1981, 1.442695
        %v8684 = vpow.pop %v8683
        %v8685 = vmul.f32 %v1982, 1.442695
        %v8686 = vpow.pop %v8685
        %v8687 = vmul.f32 %v1983, 1.442695
        %v8688 = vpow.pop %v8687
        %v8689 = vmul.f32 %v1984, 1.442695
        %v8690 = vpow.pop %v8689
        %v8691 = vmul.f32 %v1985, 1.442695
        %v8692 = vpow.pop %v8691
        %v8693 = vmul.f32 %v1986, 1.442695
        %v8694 = vpow.pop %v8693
        %v8695 = vmul.f32 %v1987, 1.442695
        %v8696 = vpow.pop %v8695
        %v8697 = vmul.f32 %v1988, 1.442695
        %v8698 = vpow.pop %v8697
        %v8699 = vmul.f32 %v1989, 1.442695
        %v8700 = vpow.pop %v8699
        %v8701 = vmul.f32 %v1990, 1.442695
        %v8702 = vpow.pop %v8701
        %v8703 = vmul.f32 %v1991, 1.442695
        %v8704 = vpow.pop %v8703
        %v8705 = vmul.f32 %v1992, 1.442695
        %v8706 = vpow.pop %v8705
        %v8707 = vmul.f32 %v1993, 1.442695
        %v8708 = vpow.pop %v8707
        %v8709 = vmul.f32 %v1994, 1.442695
        %v8710 = vpow.pop %v8709
        %v8711 = vmul.f32 %v1995, 1.442695
        %v8712 = vpow.pop %v8711
        %v8713 = vmul.f32 %v1996, 1.442695
        %v8714 = vpow.pop %v8713
        %v8715 = vmul.f32 %v1997, 1.442695
        %v8716 = vpow.pop %v8715
        %v8717 = vmul.f32 %v1998, 1.442695
        %v8718 = vpow.pop %v8717
        %v8719 = vmul.f32 %v2101, %v8592
        %v8720 = vmul.f32 %v2204, %v8594
        %v8721 = vmul.f32 %v2307, %v8596
        %v8722 = vmul.f32 %v2410, %v8598
        %v8723 = vmul.f32 %v2513, %v8600
        %v8724 = vmul.f32 %v2616, %v8602
        %v8725 = vmul.f32 %v2719, %v8604
        %v8726 = vmul.f32 %v2822, %v8606
        %v8727 = vmul.f32 %v2925, %v8608
        %v8728 = vmul.f32 %v3028, %v8610
        %v8729 = vmul.f32 %v3131, %v8612
        %v8730 = vmul.f32 %v3234, %v8614
        %v8731 = vmul.f32 %v3337, %v8616
        %v8732 = vmul.f32 %v3440, %v8618
        %v8733 = vmul.f32 %v3543, %v8620
        %v8734 = vmul.f32 %v3646, %v8622
        %v8735 = vmul.f32 %v3749, %v8624
        %v8736 = vmul.f32 %v3852, %v8626
        %v8737 = vmul.f32 %v3955, %v8628
        %v8738 = vmul.f32 %v4058, %v8630
        %v8739 = vmul.f32 %v4161, %v8632
        %v8740 = vmul.f32 %v4264, %v8634
        %v8741 = vmul.f32 %v4367, %v8636
        %v8742 = vmul.f32 %v4470, %v8638
        %v8743 = vmul.f32 %v4573, %v8640
        %v8744 = vmul.f32 %v4676, %v8642
        %v8745 = vmul.f32 %v4779, %v8644
        %v8746 = vmul.f32 %v4882, %v8646
        %v8747 = vmul.f32 %v4985, %v8648
        %v8748 = vmul.f32 %v5088, %v8650
        %v8749 = vmul.f32 %v5191, %v8652
        %v8750 = vmul.f32 %v5294, %v8654
        %v8751 = vmul.f32 %v5397, %v8656
        %v8752 = vmul.f32 %v5500, %v8658
        %v8753 = vmul.f32 %v5603, %v8660
        %v8754 = vmul.f32 %v5706, %v8662
        %v8755 = vmul.f32 %v5809, %v8664
        %v8756 = vmul.f32 %v5912, %v8666
        %v8757 = vmul.f32 %v6015, %v8668
        %v8758 = vmul.f32 %v6118, %v8670
        %v8759 = vmul.f32 %v6221, %v8672
        %v8760 = vmul.f32 %v6324, %v8674
        %v8761 = vmul.f32 %v6427, %v8676
        %v8762 = vmul.f32 %v6530, %v8678
        %v8763 = vmul.f32 %v6633, %v8680
        %v8764 = vmul.f32 %v6736, %v8682
        %v8765 = vmul.f32 %v6839, %v8684
        %v8766 = vmul.f32 %v6942, %v8686
        %v8767 = vmul.f32 %v7045, %v8688
        %v8768 = vmul.f32 %v7148, %v8690
        %v8769 = vmul.f32 %v7251, %v8692
        %v8770 = vmul.f32 %v7354, %v8694
        %v8771 = vmul.f32 %v7457, %v8696
        %v8772 = vmul.f32 %v7560, %v8698
        %v8773 = vmul.f32 %v7663, %v8700
        %v8774 = vmul.f32 %v7766, %v8702
        %v8775 = vmul.f32 %v7869, %v8704
        %v8776 = vmul.f32 %v7972, %v8706
        %v8777 = vmul.f32 %v8075, %v8708
        %v8778 = vmul.f32 %v8178, %v8710
        %v8779 = vmul.f32 %v8281, %v8712
        %v8780 = vmul.f32 %v8384, %v8714
        %v8781 = vmul.f32 %v8487, %v8716
        %v8782 = vmul.f32 %v8590, %v8718
        %8783 = vst [vmem:[%s208] sm:$0xff] %v8719
        %8784 = vst [vmem:[%s208 + $0x8] sm:$0xff] %v8720
        %8785 = vst [vmem:[%s208 + $0x10] sm:$0xff] %v8721
        %8786 = vst [vmem:[%s208 + $0x18] sm:$0xff] %v8722
        %8787 = vst [vmem:[%s208 + $0x20] sm:$0xff] %v8723
        %8788 = vst [vmem:[%s208 + $0x28] sm:$0xff] %v8724
        %8789 = vst [vmem:[%s208 + $0x30] sm:$0xff] %v8725
        %8790 = vst [vmem:[%s208 + $0x38] sm:$0xff] %v8726
        %8791 = vst [vmem:[%s208 + $0x40] sm:$0xff] %v8727
        %8792 = vst [vmem:[%s208 + $0x48] sm:$0xff] %v8728
        %8793 = vst [vmem:[%s208 + $0x50] sm:$0xff] %v8729
        %8794 = vst [vmem:[%s208 + $0x58] sm:$0xff] %v8730
        %8795 = vst [vmem:[%s208 + $0x60] sm:$0xff] %v8731
        %8796 = vst [vmem:[%s208 + $0x68] sm:$0xff] %v8732
        %8797 = vst [vmem:[%s208 + $0x70] sm:$0xff] %v8733
        %8798 = vst [vmem:[%s208 + $0x78] sm:$0xff] %v8734
        %8799 = vst [vmem:[%s208 + $0x80] sm:$0xff] %v8735
        %8800 = vst [vmem:[%s208 + $0x88] sm:$0xff] %v8736
        %8801 = vst [vmem:[%s208 + $0x90] sm:$0xff] %v8737
        %8802 = vst [vmem:[%s208 + $0x98] sm:$0xff] %v8738
        %8803 = vst [vmem:[%s208 + $0xa0] sm:$0xff] %v8739
        %8804 = vst [vmem:[%s208 + $0xa8] sm:$0xff] %v8740
        %8805 = vst [vmem:[%s208 + $0xb0] sm:$0xff] %v8741
        %8806 = vst [vmem:[%s208 + $0xb8] sm:$0xff] %v8742
        %8807 = vst [vmem:[%s208 + $0xc0] sm:$0xff] %v8743
        %8808 = vst [vmem:[%s208 + $0xc8] sm:$0xff] %v8744
        %8809 = vst [vmem:[%s208 + $0xd0] sm:$0xff] %v8745
        %8810 = vst [vmem:[%s208 + $0xd8] sm:$0xff] %v8746
        %8811 = vst [vmem:[%s208 + $0xe0] sm:$0xff] %v8747
        %8812 = vst [vmem:[%s208 + $0xe8] sm:$0xff] %v8748
        %8813 = vst [vmem:[%s208 + $0xf0] sm:$0xff] %v8749
        %8814 = vst [vmem:[%s208 + $0xf8] sm:$0xff] %v8750
        %8815 = vst [vmem:[%s208 + $0x100] sm:$0xff] %v8751
        %8816 = vst [vmem:[%s208 + $0x108] sm:$0xff] %v8752
        %8817 = vst [vmem:[%s208 + $0x110] sm:$0xff] %v8753
        %8818 = vst [vmem:[%s208 + $0x118] sm:$0xff] %v8754
        %8819 = vst [vmem:[%s208 + $0x120] sm:$0xff] %v8755
        %8820 = vst [vmem:[%s208 + $0x128] sm:$0xff] %v8756
        %8821 = vst [vmem:[%s208 + $0x130] sm:$0xff] %v8757
        %8822 = vst [vmem:[%s208 + $0x138] sm:$0xff] %v8758
        %8823 = vst [vmem:[%s208 + $0x140] sm:$0xff] %v8759
        %8824 = vst [vmem:[%s208 + $0x148] sm:$0xff] %v8760
        %8825 = vst [vmem:[%s208 + $0x150] sm:$0xff] %v8761
        %8826 = vst [vmem:[%s208 + $0x158] sm:$0xff] %v8762
        %8827 = vst [vmem:[%s208 + $0x160] sm:$0xff] %v8763
        %8828 = vst [vmem:[%s208 + $0x168] sm:$0xff] %v8764
        %8829 = vst [vmem:[%s208 + $0x170] sm:$0xff] %v8765
        %8830 = vst [vmem:[%s208 + $0x178] sm:$0xff] %v8766
        %8831 = vst [vmem:[%s208 + $0x180] sm:$0xff] %v8767
        %8832 = vst [vmem:[%s208 + $0x188] sm:$0xff] %v8768
        %8833 = vst [vmem:[%s208 + $0x190] sm:$0xff] %v8769
        %8834 = vst [vmem:[%s208 + $0x198] sm:$0xff] %v8770
        %8835 = vst [vmem:[%s208 + $0x1a0] sm:$0xff] %v8771
        %8836 = vst [vmem:[%s208 + $0x1a8] sm:$0xff] %v8772
        %8837 = vst [vmem:[%s208 + $0x1b0] sm:$0xff] %v8773
        %8838 = vst [vmem:[%s208 + $0x1b8] sm:$0xff] %v8774
        %8839 = vst [vmem:[%s208 + $0x1c0] sm:$0xff] %v8775
        %8840 = vst [vmem:[%s208 + $0x1c8] sm:$0xff] %v8776
        %8841 = vst [vmem:[%s208 + $0x1d0] sm:$0xff] %v8777
        %8842 = vst [vmem:[%s208 + $0x1d8] sm:$0xff] %v8778
        %8843 = vst [vmem:[%s208 + $0x1e0] sm:$0xff] %v8779
        %8844 = vst [vmem:[%s208 + $0x1e8] sm:$0xff] %v8780
        %8845 = vst [vmem:[%s208 + $0x1f0] sm:$0xff] %v8781
        %8846 = vst [vmem:[%s208 + $0x1f8] sm:$0xff] %v8782
        %s8847 = sand.u32 %s117, 1
        %s8848 = scalar_lea.sflag [#allocation3], %s8847
        %s8849 = sand.u32 %s117, 1
        %s8850 = smul.addr %s8849, 512
        %s8851 = scalar_lea.vmem [#allocation2], %s8850
        // Predicated region
        $region33: #{tpu_custom_call.1} parent=31 // pred_check
          %p8852 = pneg %p127
        $region34: #{tpu_custom_call.1} parent=31 // pred_check_branch
          %8854 = sbr.rel (%p8852) target = $region36
        $region35: #{tpu_custom_call.1} parent=31 // pred_region
          %s8855 = smul.u32 32, %s21
          %s8856 = smul.u32 2, %s22
          %s8858 = ssub.s32 8192, 8192
          %8859 = vsyncadd %s8848, %s8858
          %s8860 = smul.addr %s8855, 2
          %s8861 = sadd.s32 %s8856, %s8860
          %s8862 = smul.addr %s8861, 128
          %s8863 = scalar_lea.hbm %s3, %s8862
          %s8864 = sshll.u32 %s8851, 4
          %s8865 = int_to_ptr.vmem [resolvable:$true] %s8864
          %8870 = dma.vmem_to_hbm [thread:$0]  %s8865, 8192, %s8863, %s8848, 256, 256, 16
        $region36: #{tpu_custom_call.1} parent=31 // pred_fallthru
          _
      $region32: #{tpu_custom_call.1} parent=5 // pred_fallthru
        _
      %p8871 = scmp.le.s32.totalorder 2, %s12
      // Predicated region
      $region37: #{tpu_custom_call.1} parent=5 // pred_check
        %p8872 = pneg %p8871
      $region38: #{tpu_custom_call.1} parent=5 // pred_check_branch
        %8874 = sbr.rel (%p8872) target = $region40
      $region39: #{tpu_custom_call.1} parent=5 // pred_region
        %s8875 = ssub.s32 %s12, 2
        // Predicated region
        $region41: #{tpu_custom_call.1} parent=39 // pred_check
          %p8876 = pneg %p133
        $region42: #{tpu_custom_call.1} parent=39 // pred_check_branch
          %8878 = sbr.rel (%p8876) target = $region44
        $region43: #{tpu_custom_call.1} parent=39 // pred_region
          %s8879 = sand.u32 %s118, 1
          %s8880 = scalar_lea.sflag [#allocation3], %s8879
          %s8881 = sand.u32 %s118, 1
          %s8882 = smul.addr %s8881, 512
          %s8883 = scalar_lea.vmem [#allocation2], %s8882
          %8884 = dma.done %s8880, 8192
        $region44: #{tpu_custom_call.1} parent=39 // pred_fallthru
          _
      $region40: #{tpu_custom_call.1} parent=5 // pred_fallthru
        _
    $region6: #{tpu_custom_call.1} parent=1 // loop_footer
      %s16 = sadd.s32 1, %s12
    $region7: #{tpu_custom_call.1} parent=1 // loop_footer_branch
      %11 = sbr.rel target = $region3
    $region8: #{tpu_custom_call.1} parent=1 // loop_exit
      _
    %8885 = vsyncpa [#allocation3], 1
    %s8886 = scalar_lea.sflag [#allocation3], 1
    %8887 = vsyncpa %s8886, 1

</llo_original>
